<compile_context>
chip_gen: v6e
topology: v6e:2x2x1
jax: 0.10.0
libtpu: 0.0.40
codegen_flags: <defaults>
</compile_context>

<pallas_src>
import jax
import jax.numpy as jnp
from jax.experimental import pallas as pl
from jax.experimental.pallas import tpu as pltpu

# Feature dims, padded to multiples of 128 (lane width).
IN = 3 * 32 * 32      # 3072 (already lane-aligned)
H1 = 1024             # fc1 out: 1000 -> 1024
H2 = 512              # fc2 out: 500  -> 512
H3 = 256              # fc3 out: 256  (aligned)
OUT_PAD = 128         # fc4 out: 10   -> 128
NUM_CLASSES = 10


def _round_up(x, m):
    return (x + m - 1) // m * m


def mlp_kernel(x_ref,
               w1_ref, b1_ref,
               w2_ref, b2_ref,
               w3_ref, b3_ref,
               w4_ref, b4_ref,
               o_ref):
    """One batch tile: 4 bf16 MXU matmuls + activations + masked log_softmax."""
    # fc1 (3072 -> 1024 padded) + f1 (ReLU).  Split/concat == whole-tensor
    # elementwise activation, so apply directly.
    h = jnp.dot(x_ref[...], w1_ref[...],
                preferred_element_type=jnp.float32) + b1_ref[...]
    h = jnp.maximum(h, 0.0)

    # fc2 (1024 -> 512 padded) + f2 (tanh)
    h = jnp.dot(h.astype(jnp.bfloat16), w2_ref[...],
                preferred_element_type=jnp.float32) + b2_ref[...]
    h = jnp.tanh(h)

    # fc3 (512 -> 256) + f3 (sigmoid)  (EUP exp + logistic, no VPU divide chain)
    h = jnp.dot(h.astype(jnp.bfloat16), w3_ref[...],
                preferred_element_type=jnp.float32) + b3_ref[...]
    h = jax.nn.sigmoid(h)

    # fc4 (256 -> 128 padded) + f4 (ReLU)
    h = jnp.dot(h.astype(jnp.bfloat16), w4_ref[...],
                preferred_element_type=jnp.float32) + b4_ref[...]
    h = jnp.maximum(h, 0.0)

    # Mask the 118 padded class lanes, then stable log_softmax over features.
    lane = jax.lax.broadcasted_iota(jnp.int32, h.shape, 1)
    h = jnp.where(lane < NUM_CLASSES, h, -1e30)
    m = jnp.max(h, axis=-1, keepdims=True)
    s = h - m
    lse = jnp.log(jnp.sum(jnp.exp(s), axis=-1, keepdims=True))
    o_ref[...] = (s - lse).astype(o_ref.dtype)


def prepare_params(params):
    """One-time prep (OUTSIDE jit): transpose to (in, out), zero-pad feature
    dims to lane multiples, cast weights to bf16, biases to f32 (1, out)."""
    dims = [(IN, H1), (H1, H2), (H2, H3), (H3, OUT_PAD)]
    prepared = []
    for (w, b), (in_pad, out_pad) in zip(params, dims):
        out_f, in_f = w.shape
        wt = jnp.pad(w.T, ((0, in_pad - in_f), (0, out_pad - out_f)))
        wt = wt.astype(jnp.bfloat16)
        bp = jnp.pad(b.astype(jnp.float32), (0, out_pad - out_f)).reshape(1, out_pad)
        prepared.append((wt, bp))
    return tuple(prepared)


@jax.jit
def mlpnet_modified_forward(x_nchw, prepared):
    """x_nchw: (B, 3, 32, 32) float32; prepared = prepare_params(params).
    Returns (B, 10) log-probabilities."""
    B = x_nchw.shape[0]
    x2d = x_nchw.reshape(B, IN)            # same as torch x.view(-1, 3*32*32)

    # Batch tiling: tile of >=8 sublanes, pad B so the grid divides evenly.
    TB = 256
    if B < TB:
        TB = _round_up(B, 8)
    B_pad = _round_up(B, TB)
    x2d = jnp.pad(x2d, ((0, B_pad - B), (0, 0))).astype(jnp.bfloat16)

    (w1, b1), (w2, b2), (w3, b3), (w4, b4) = prepared
    ops = (x2d, w1, b1, w2, b2, w3, b3, w4, b4)

    grid = (B_pad // TB,)

    def _const(shape):
        # Weight/bias block never changes across the batch grid -> stays resident.
        return pl.BlockSpec(shape, lambda i: (0, 0))

    in_specs = [
        pl.BlockSpec((TB, IN), lambda i: (i, 0)),   # x tile, pipelined per step
        _const((IN, H1)), _const((1, H1)),
        _const((H1, H2)), _const((1, H2)),
        _const((H2, H3)), _const((1, H3)),
        _const((H3, OUT_PAD)), _const((1, OUT_PAD)),
    ]
    out_specs = pl.BlockSpec((TB, OUT_PAD), lambda i: (i, 0))

    flops = 2 * B_pad * (IN * H1 + H1 * H2 + H2 * H3 + H3 * OUT_PAD)
    transcendentals = B_pad * (H2 + H3 + OUT_PAD)
    bytes_accessed = (sum(int(a.size) * a.dtype.itemsize for a in ops)
                      + B_pad * OUT_PAD * 4)

    out_padded = pl.pallas_call(
        mlp_kernel,
        out_shape=jax.ShapeDtypeStruct((B_pad, OUT_PAD), jnp.float32),
        grid=grid,
        in_specs=in_specs,
        out_specs=out_specs,
        compiler_params=pltpu.CompilerParams(
            dimension_semantics=("parallel",),
            vmem_limit_bytes=40 * 1024 * 1024),
        cost_estimate=pl.CostEstimate(
            flops=flops,
            transcendentals=transcendentals,
            bytes_accessed=bytes_accessed),
    )(*ops)

    return out_padded[:B, :NUM_CLASSES]


def init_linear(key, in_features, out_features):
    """Deterministic init mimicking torch.nn.Linear default (uniform +/- 1/sqrt(in))."""
    kw, kb = jax.random.split(key)
    bound = 1.0 / (in_features ** 0.5)
    w = jax.random.uniform(kw, (out_features, in_features), jnp.float32, -bound, bound)
    b = jax.random.uniform(kb, (out_features,), jnp.float32, -bound, bound)
    return w, b


def reference_forward(x_nchw, params):
    """Pure-JAX reference mirroring the torch forward exactly (incl. split/concat),
    with the same bf16 matmul operands / f32 accumulation as the kernel."""
    acts = [jax.nn.relu, jnp.tanh, jax.nn.sigmoid, jax.nn.relu]
    x = x_nchw.reshape(x_nchw.shape[0], -1)
    for (w, b), f in zip(params, acts):
        y = jnp.dot(x.astype(jnp.bfloat16), w.T.astype(jnp.bfloat16),
                    preferred_element_type=jnp.float32) + b
        half = y.shape[1] // 2
        x = jnp.concatenate([f(y[:, :half]), f(y[:, half:])], axis=1)
    return jax.nn.log_softmax(x, axis=1)


if __name__ == "__main__":
    key = jax.random.PRNGKey(0)
    kx, k1, k2, k3, k4 = jax.random.split(key, 5)

    B = 2
    x = jax.random.normal(kx, (B, 3, 32, 32), jnp.float32)

    params = (
        init_linear(k1, IN, 1000),
        init_linear(k2, 1000, 500),
        init_linear(k3, 500, 256),
        init_linear(k4, 256, 10),
    )
    prepared = prepare_params(params)

    out = mlpnet_modified_forward(x, prepared)
    out = jax.block_until_ready(out)

    ref = reference_forward(x, params)
    assert out.shape == (B, NUM_CLASSES)
    assert jnp.allclose(out, ref, atol=1e-2, rtol=1e-2), "mismatch vs reference"

    print("KERNEL_OK")
</pallas_src>

<mosaic_0001>
module attributes {stable_mosaic.version = 11 : i64} {
  func.func @mlp_kernel(%arg0: i32, %arg1: memref<8x3072xbf16, #tpu.memory_space<vmem>>, %arg2: memref<3072x1024xbf16, #tpu.memory_space<vmem>>, %arg3: memref<1x1024xf32, #tpu.memory_space<vmem>>, %arg4: memref<1024x512xbf16, #tpu.memory_space<vmem>>, %arg5: memref<1x512xf32, #tpu.memory_space<vmem>>, %arg6: memref<512x256xbf16, #tpu.memory_space<vmem>>, %arg7: memref<1x256xf32, #tpu.memory_space<vmem>>, %arg8: memref<256x128xbf16, #tpu.memory_space<vmem>>, %arg9: memref<1x128xf32, #tpu.memory_space<vmem>>, %arg10: memref<8x128xf32, #tpu.memory_space<vmem>>) attributes {dimension_semantics = [#tpu.dimension_semantics<parallel>], iteration_bounds = array<i64: 1>, scalar_prefetch = 0 : i64, scratch_operands = 0 : i64, tpu.core_type = #tpu.core_type<tc>, window_params = [{transform_indices = @transform_0, window_bounds = array<i64: 8, 3072>}, {pipeline_mode = #tpu.pipeline_mode<synchronous>, transform_indices = @transform_1, window_bounds = array<i64: 3072, 1024>}, {pipeline_mode = #tpu.pipeline_mode<synchronous>, transform_indices = @transform_2, window_bounds = array<i64: 1, 1024>}, {pipeline_mode = #tpu.pipeline_mode<synchronous>, transform_indices = @transform_3, window_bounds = array<i64: 1024, 512>}, {pipeline_mode = #tpu.pipeline_mode<synchronous>, transform_indices = @transform_4, window_bounds = array<i64: 1, 512>}, {pipeline_mode = #tpu.pipeline_mode<synchronous>, transform_indices = @transform_5, window_bounds = array<i64: 512, 256>}, {pipeline_mode = #tpu.pipeline_mode<synchronous>, transform_indices = @transform_6, window_bounds = array<i64: 1, 256>}, {pipeline_mode = #tpu.pipeline_mode<synchronous>, transform_indices = @transform_7, window_bounds = array<i64: 256, 128>}, {pipeline_mode = #tpu.pipeline_mode<synchronous>, transform_indices = @transform_8, window_bounds = array<i64: 1, 128>}, {transform_indices = @transform_9, window_bounds = array<i64: 8, 128>}]} {
    %c0 = arith.constant 0 : index
    %c0_0 = arith.constant 0 : index
    %0 = vector.load %arg1[%c0, %c0_0] : memref<8x3072xbf16, #tpu.memory_space<vmem>>, vector<8x3072xbf16>
    %c0_1 = arith.constant 0 : index
    %c0_2 = arith.constant 0 : index
    %1 = vector.load %arg2[%c0_1, %c0_2] : memref<3072x1024xbf16, #tpu.memory_space<vmem>>, vector<3072x1024xbf16>
    %cst = arith.constant dense<0.000000e+00> : vector<8x1024xf32>
    %2 = tpu.matmul %0, %1, %cst {dimension_numbers = #tpu.dot_dimension_numbers<[1], [0], [0], [1], [0, 0, 1, 1], [], []>} : vector<8x3072xbf16>, vector<3072x1024xbf16>, vector<8x1024xf32> -> vector<8x1024xf32>
    %c0_3 = arith.constant 0 : index
    %c0_4 = arith.constant 0 : index
    %3 = vector.load %arg3[%c0_3, %c0_4] : memref<1x1024xf32, #tpu.memory_space<vmem>>, vector<1x1024xf32>
    %4 = vector.broadcast %3 : vector<1x1024xf32> to vector<8x1024xf32>
    %5 = arith.addf %2, %4 : vector<8x1024xf32>
    %cst_5 = arith.constant 0.000000e+00 : f32
    %6 = vector.broadcast %cst_5 : f32 to vector<8x1024xf32>
    %7 = arith.maximumf %5, %6 : vector<8x1024xf32>
    %8 = arith.truncf %7 : vector<8x1024xf32> to vector<8x1024xbf16>
    %c0_6 = arith.constant 0 : index
    %c0_7 = arith.constant 0 : index
    %9 = vector.load %arg4[%c0_6, %c0_7] : memref<1024x512xbf16, #tpu.memory_space<vmem>>, vector<1024x512xbf16>
    %cst_8 = arith.constant dense<0.000000e+00> : vector<8x512xf32>
    %10 = tpu.matmul %8, %9, %cst_8 {dimension_numbers = #tpu.dot_dimension_numbers<[1], [0], [0], [1], [0, 0, 1, 1], [], []>} : vector<8x1024xbf16>, vector<1024x512xbf16>, vector<8x512xf32> -> vector<8x512xf32>
    %c0_9 = arith.constant 0 : index
    %c0_10 = arith.constant 0 : index
    %11 = vector.load %arg5[%c0_9, %c0_10] : memref<1x512xf32, #tpu.memory_space<vmem>>, vector<1x512xf32>
    %12 = vector.broadcast %11 : vector<1x512xf32> to vector<8x512xf32>
    %13 = arith.addf %10, %12 : vector<8x512xf32>
    %14 = math.tanh %13 : vector<8x512xf32>
    %15 = arith.truncf %14 : vector<8x512xf32> to vector<8x512xbf16>
    %c0_11 = arith.constant 0 : index
    %c0_12 = arith.constant 0 : index
    %16 = vector.load %arg6[%c0_11, %c0_12] : memref<512x256xbf16, #tpu.memory_space<vmem>>, vector<512x256xbf16>
    %cst_13 = arith.constant dense<0.000000e+00> : vector<8x256xf32>
    %17 = tpu.matmul %15, %16, %cst_13 {dimension_numbers = #tpu.dot_dimension_numbers<[1], [0], [0], [1], [0, 0, 1, 1], [], []>} : vector<8x512xbf16>, vector<512x256xbf16>, vector<8x256xf32> -> vector<8x256xf32>
    %c0_14 = arith.constant 0 : index
    %c0_15 = arith.constant 0 : index
    %18 = vector.load %arg7[%c0_14, %c0_15] : memref<1x256xf32, #tpu.memory_space<vmem>>, vector<1x256xf32>
    %19 = vector.broadcast %18 : vector<1x256xf32> to vector<8x256xf32>
    %20 = arith.addf %17, %19 : vector<8x256xf32>
    %21 = arith.negf %20 : vector<8x256xf32>
    %22 = math.exp %21 : vector<8x256xf32>
    %cst_16 = arith.constant 1.000000e+00 : f32
    %23 = vector.broadcast %cst_16 : f32 to vector<8x256xf32>
    %24 = arith.addf %23, %22 : vector<8x256xf32>
    %25 = arith.divf %23, %24 : vector<8x256xf32>
    %26 = arith.truncf %25 : vector<8x256xf32> to vector<8x256xbf16>
    %c0_17 = arith.constant 0 : index
    %c0_18 = arith.constant 0 : index
    %27 = vector.load %arg8[%c0_17, %c0_18] : memref<256x128xbf16, #tpu.memory_space<vmem>>, vector<256x128xbf16>
    %cst_19 = arith.constant dense<0.000000e+00> : vector<8x128xf32>
    %28 = tpu.matmul %26, %27, %cst_19 {dimension_numbers = #tpu.dot_dimension_numbers<[1], [0], [0], [1], [0, 0, 1, 1], [], []>} : vector<8x256xbf16>, vector<256x128xbf16>, vector<8x128xf32> -> vector<8x128xf32>
    %c0_20 = arith.constant 0 : index
    %c0_21 = arith.constant 0 : index
    %29 = vector.load %arg9[%c0_20, %c0_21] : memref<1x128xf32, #tpu.memory_space<vmem>>, vector<1x128xf32>
    %30 = vector.broadcast %29 : vector<1x128xf32> to vector<8x128xf32>
    %31 = arith.addf %28, %30 : vector<8x128xf32>
    %cst_22 = arith.constant 0.000000e+00 : f32
    %32 = vector.broadcast %cst_22 : f32 to vector<8x128xf32>
    %33 = arith.maximumf %31, %32 : vector<8x128xf32>
    %34 = tpu.iota {dimensions = array<i32: 1>} : vector<8x128xi32>
    %c10_i32 = arith.constant 10 : i32
    %35 = vector.broadcast %c10_i32 : i32 to vector<8x128xi32>
    %36 = arith.cmpi slt, %34, %35 : vector<8x128xi32>
    %cst_23 = arith.constant -1.000000e+30 : f32
    %37 = vector.broadcast %cst_23 : f32 to vector<8x128xf32>
    %38 = arith.select %36, %33, %37 : vector<8x128xi1>, vector<8x128xf32>
    %cst_24 = arith.constant dense<0xFF800000> : vector<8xf32>
    %39 = vector.multi_reduction <maximumf>, %38, %cst_24 [1] : vector<8x128xf32> to vector<8xf32>
    %40 = vector.shape_cast %39 : vector<8xf32> to vector<8x1xf32>
    %41 = vector.broadcast %40 : vector<8x1xf32> to vector<8x128xf32>
    %42 = arith.subf %38, %41 : vector<8x128xf32>
    %43 = math.exp %42 : vector<8x128xf32>
    %cst_25 = arith.constant dense<0.000000e+00> : vector<8xf32>
    %44 = vector.multi_reduction <add>, %43, %cst_25 [1] : vector<8x128xf32> to vector<8xf32>
    %45 = vector.shape_cast %44 : vector<8xf32> to vector<8x1xf32>
    %46 = math.log %45 : vector<8x1xf32>
    %47 = vector.broadcast %46 : vector<8x1xf32> to vector<8x128xf32>
    %48 = arith.subf %42, %47 : vector<8x128xf32>
    %c0_26 = arith.constant 0 : index
    %c0_27 = arith.constant 0 : index
    %49 = vector.load %arg10[%c0_26, %c0_27] : memref<8x128xf32, #tpu.memory_space<vmem>>, vector<8x128xf32>
    tpu.vector_store %arg10[%c0_26, %c0_27], %48 {strides = array<i32>} : memref<8x128xf32, #tpu.memory_space<vmem>>, vector<8x128xf32>,
    return
  }
  func.func @transform_0(%arg0: i32) -> (i32, i32) {
    %c0_i32 = arith.constant 0 : i32
    %c0_i32_0 = arith.constant 0 : i32
    return %arg0, %c0_i32 : i32, i32
  }
  func.func @transform_1(%arg0: i32) -> (i32, i32) {
    %c0_i32 = arith.constant 0 : i32
    %c0_i32_0 = arith.constant 0 : i32
    %c0_i32_1 = arith.constant 0 : i32
    return %c0_i32, %c0_i32_0 : i32, i32
  }
  func.func @transform_2(%arg0: i32) -> (i32, i32) {
    %c0_i32 = arith.constant 0 : i32
    %c0_i32_0 = arith.constant 0 : i32
    %c0_i32_1 = arith.constant 0 : i32
    return %c0_i32, %c0_i32_0 : i32, i32
  }
  func.func @transform_3(%arg0: i32) -> (i32, i32) {
    %c0_i32 = arith.constant 0 : i32
    %c0_i32_0 = arith.constant 0 : i32
    %c0_i32_1 = arith.constant 0 : i32
    return %c0_i32, %c0_i32_0 : i32, i32
  }
  func.func @transform_4(%arg0: i32) -> (i32, i32) {
    %c0_i32 = arith.constant 0 : i32
    %c0_i32_0 = arith.constant 0 : i32
    %c0_i32_1 = arith.constant 0 : i32
    return %c0_i32, %c0_i32_0 : i32, i32
  }
  func.func @transform_5(%arg0: i32) -> (i32, i32) {
    %c0_i32 = arith.constant 0 : i32
    %c0_i32_0 = arith.constant 0 : i32
    %c0_i32_1 = arith.constant 0 : i32
    return %c0_i32, %c0_i32_0 : i32, i32
  }
  func.func @transform_6(%arg0: i32) -> (i32, i32) {
    %c0_i32 = arith.constant 0 : i32
    %c0_i32_0 = arith.constant 0 : i32
    %c0_i32_1 = arith.constant 0 : i32
    return %c0_i32, %c0_i32_0 : i32, i32
  }
  func.func @transform_7(%arg0: i32) -> (i32, i32) {
    %c0_i32 = arith.constant 0 : i32
    %c0_i32_0 = arith.constant 0 : i32
    %c0_i32_1 = arith.constant 0 : i32
    return %c0_i32, %c0_i32_0 : i32, i32
  }
  func.func @transform_8(%arg0: i32) -> (i32, i32) {
    %c0_i32 = arith.constant 0 : i32
    %c0_i32_0 = arith.constant 0 : i32
    %c0_i32_1 = arith.constant 0 : i32
    return %c0_i32, %c0_i32_0 : i32, i32
  }
  func.func @transform_9(%arg0: i32) -> (i32, i32) {
    %c0_i32 = arith.constant 0 : i32
    %c0_i32_0 = arith.constant 0 : i32
    return %arg0, %c0_i32 : i32, i32
  }
}

</mosaic_0001>

<llo_original>
// kernel: mlpnet_modified_forward.1
$region0: #{mlpnet_modified_forward.1}
  #allocation0 [shape = 'u32[]', space=smem, size = 0x4, offset = 0x4, fixed_abs, tag = 'smem constant byte address 0x4 - core index']
  #allocation1 [shape = 'u32[144,128]{1,0:T(1,128)}', space=vmem, size = 0x12000, scoped, tag = 'internal scratch']
  %s0 = inlined_call_operand.vmem [shape: bf16[8,3072], index: 0, kind: input, shape index: {}]
  %s1 = inlined_call_operand.hbm [shape: bf16[3072,1024], index: 1, kind: input, shape index: {}]
  %s2 = inlined_call_operand.hbm [shape: f32[1,1024], index: 2, kind: input, shape index: {}]
  %s3 = inlined_call_operand.hbm [shape: bf16[1024,512], index: 3, kind: input, shape index: {}]
  %s4 = inlined_call_operand.hbm [shape: f32[1,512], index: 4, kind: input, shape index: {}]
  %s5 = inlined_call_operand.hbm [shape: bf16[512,256], index: 5, kind: input, shape index: {}]
  %s6 = inlined_call_operand.hbm [shape: f32[1,256], index: 6, kind: input, shape index: {}]
  %s7 = inlined_call_operand.hbm [shape: bf16[256,128], index: 7, kind: input, shape index: {}]
  %s8 = inlined_call_operand.hbm [shape: f32[1,128], index: 8, kind: input, shape index: {}]
  %s9 = inlined_call_operand.vmem [shape: f32[8,128], index: 9, kind: output, shape index: {}]
  %s10 = sld [smem:[#allocation0]]
  $region78: #{mlpnet_modified_forward.1} parent=0
    _
  %s12 = ssub.s32 1, %s10
  %s13 = scalar_select 0, %s12, %s10
  $region1: #{mlpnet_modified_forward.1} parent=0
    #allocation2 [shape = 'u8[6291456]{0}', space=vmem, size = 0x600000, scoped, tag = 'input window, operand 1, single buffered']
    #allocation3 [shape = 's32[1]{0}', space=sflag, size = 0x4, scoped, tag = 'scoped memory for mlpnet_modified_forward.1']
    #allocation4 [shape = 'u8[4096]{0}', space=vmem, size = 0x1000, scoped, tag = 'input window, operand 2, single buffered']
    #allocation5 [shape = 's32[1]{0}', space=sflag, size = 0x4, scoped, tag = 'scoped memory for mlpnet_modified_forward.1']
    #allocation6 [shape = 'u8[1048576]{0}', space=vmem, size = 0x100000, scoped, tag = 'input window, operand 3, single buffered']
    #allocation7 [shape = 'u8[2048]{0}', space=vmem, size = 0x800, scoped, tag = 'input window, operand 4, single buffered']
    #allocation8 [shape = 's32[1]{0}', space=sflag, size = 0x4, scoped, tag = 'scoped memory for mlpnet_modified_forward.1']
    #allocation9 [shape = 'u8[262144]{0}', space=vmem, size = 0x40000, scoped, tag = 'input window, operand 5, single buffered']
    #allocation10 [shape = 'u8[1024]{0}', space=vmem, size = 0x400, scoped, tag = 'input window, operand 6, single buffered']
    #allocation11 [shape = 's32[1]{0}', space=sflag, size = 0x4, scoped, tag = 'scoped memory for mlpnet_modified_forward.1']
    #allocation12 [shape = 'u8[65536]{0}', space=vmem, size = 0x10000, scoped, tag = 'input window, operand 7, single buffered']
    #allocation13 [shape = 'u8[512]{0}', space=vmem, size = 0x400, scoped, tag = 'input window, operand 8, single buffered']
    #allocation14 [shape = 's32[1]{0}', space=sflag, size = 0x4, scoped, tag = 'scoped memory for mlpnet_modified_forward.1']
    %14 = vsyncpa [#allocation3], 0
    %15 = vsyncpa [#allocation5], 0
    %16 = vsyncpa [#allocation8], 0
    %17 = vsyncpa [#allocation11], 0
    %18 = vsyncpa [#allocation14], 0
    // Predicated region
    $region2: #{mlpnet_modified_forward.1} parent=1 // pred_check
      _
    $region3: #{mlpnet_modified_forward.1} parent=1 // pred_check_branch
      %20 = sbr.rel (0) target = $region5
    $region4: #{mlpnet_modified_forward.1} parent=1 // pred_region
      _
    $region5: #{mlpnet_modified_forward.1} parent=1 // pred_fallthru
      _
    // Predicated region
    $region6: #{mlpnet_modified_forward.1} parent=1 // pred_check
      _
    $region7: #{mlpnet_modified_forward.1} parent=1 // pred_check_branch
      %22 = sbr.rel (0) target = $region9
    $region8: #{mlpnet_modified_forward.1} parent=1 // pred_region
      %s24 = ssub.s32 196608, 196608
      %25 = vsyncadd [#allocation3], %s24
      %s26 = sshll.u32 [#allocation2], 4
      %s27 = int_to_ptr.vmem [resolvable:$true] %s26
      %32 = dma.hbm_to_vmem [thread:$0]  %s1, 196608, %s27, [#allocation3], 512, 512, 32
    $region9: #{mlpnet_modified_forward.1} parent=1 // pred_fallthru
      _
    // Predicated region
    $region10: #{mlpnet_modified_forward.1} parent=1 // pred_check
      _
    $region11: #{mlpnet_modified_forward.1} parent=1 // pred_check_branch
      %34 = sbr.rel (0) target = $region13
    $region12: #{mlpnet_modified_forward.1} parent=1 // pred_region
      %s36 = ssub.s32 128, 128
      %37 = vsyncadd [#allocation5], %s36
      %s39 = sshll.u32 [#allocation4], 4
      %s40 = int_to_ptr.vmem [resolvable:$true] %s39
      %42 = dma.hbm_to_vmem [thread:$0]  %s2, 128, %s40, [#allocation5]
    $region13: #{mlpnet_modified_forward.1} parent=1 // pred_fallthru
      _
    // Predicated region
    $region14: #{mlpnet_modified_forward.1} parent=1 // pred_check
      _
    $region15: #{mlpnet_modified_forward.1} parent=1 // pred_check_branch
      %44 = sbr.rel (0) target = $region17
    $region16: #{mlpnet_modified_forward.1} parent=1 // pred_region
      %s46 = ssub.s32 32768, 32768
      %47 = vsyncadd [#allocation5], %s46
      %s48 = sshll.u32 [#allocation6], 4
      %s49 = int_to_ptr.vmem [resolvable:$true] %s48
      %54 = dma.hbm_to_vmem [thread:$0]  %s3, 32768, %s49, [#allocation5], 256, 256, 16
    $region17: #{mlpnet_modified_forward.1} parent=1 // pred_fallthru
      _
    // Predicated region
    $region18: #{mlpnet_modified_forward.1} parent=1 // pred_check
      _
    $region19: #{mlpnet_modified_forward.1} parent=1 // pred_check_branch
      %56 = sbr.rel (0) target = $region21
    $region20: #{mlpnet_modified_forward.1} parent=1 // pred_region
      %s58 = ssub.s32 64, 64
      %59 = vsyncadd [#allocation8], %s58
      %s61 = sshll.u32 [#allocation7], 4
      %s62 = int_to_ptr.vmem [resolvable:$true] %s61
      %64 = dma.hbm_to_vmem [thread:$0]  %s4, 64, %s62, [#allocation8]
    $region21: #{mlpnet_modified_forward.1} parent=1 // pred_fallthru
      _
    // Predicated region
    $region22: #{mlpnet_modified_forward.1} parent=1 // pred_check
      _
    $region23: #{mlpnet_modified_forward.1} parent=1 // pred_check_branch
      %66 = sbr.rel (0) target = $region25
    $region24: #{mlpnet_modified_forward.1} parent=1 // pred_region
      %s68 = ssub.s32 8192, 8192
      %69 = vsyncadd [#allocation8], %s68
      %s70 = sshll.u32 [#allocation9], 4
      %s71 = int_to_ptr.vmem [resolvable:$true] %s70
      %76 = dma.hbm_to_vmem [thread:$0]  %s5, 8192, %s71, [#allocation8], 128, 128, 8
    $region25: #{mlpnet_modified_forward.1} parent=1 // pred_fallthru
      _
    // Predicated region
    $region26: #{mlpnet_modified_forward.1} parent=1 // pred_check
      _
    $region27: #{mlpnet_modified_forward.1} parent=1 // pred_check_branch
      %78 = sbr.rel (0) target = $region29
    $region28: #{mlpnet_modified_forward.1} parent=1 // pred_region
      %s80 = ssub.s32 32, 32
      %81 = vsyncadd [#allocation11], %s80
      %s83 = sshll.u32 [#allocation10], 4
      %s84 = int_to_ptr.vmem [resolvable:$true] %s83
      %86 = dma.hbm_to_vmem [thread:$0]  %s6, 32, %s84, [#allocation11]
    $region29: #{mlpnet_modified_forward.1} parent=1 // pred_fallthru
      _
    // Predicated region
    $region30: #{mlpnet_modified_forward.1} parent=1 // pred_check
      _
    $region31: #{mlpnet_modified_forward.1} parent=1 // pred_check_branch
      %88 = sbr.rel (0) target = $region33
    $region32: #{mlpnet_modified_forward.1} parent=1 // pred_region
      %s90 = ssub.s32 2048, 2048
      %91 = vsyncadd [#allocation11], %s90
      %s92 = sshll.u32 [#allocation12], 4
      %s93 = int_to_ptr.vmem [resolvable:$true] %s92
      %98 = dma.hbm_to_vmem [thread:$0]  %s7, 2048, %s93, [#allocation11], 64, 64, 4
    $region33: #{mlpnet_modified_forward.1} parent=1 // pred_fallthru
      _
    // Predicated region
    $region34: #{mlpnet_modified_forward.1} parent=1 // pred_check
      _
    $region35: #{mlpnet_modified_forward.1} parent=1 // pred_check_branch
      %100 = sbr.rel (0) target = $region37
    $region36: #{mlpnet_modified_forward.1} parent=1 // pred_region
      %s102 = ssub.s32 16, 16
      %103 = vsyncadd [#allocation14], %s102
      %s105 = sshll.u32 [#allocation13], 4
      %s106 = int_to_ptr.vmem [resolvable:$true] %s105
      %108 = dma.hbm_to_vmem [thread:$0]  %s8, 16, %s106, [#allocation14]
    $region37: #{mlpnet_modified_forward.1} parent=1 // pred_fallthru
      _
    // Predicated region
    $region38: #{mlpnet_modified_forward.1} parent=1 // pred_check
      _
    $region39: #{mlpnet_modified_forward.1} parent=1 // pred_check_branch
      %110 = sbr.rel (0) target = $region41
    $region40: #{mlpnet_modified_forward.1} parent=1 // pred_region
      %111 = dma.done [#allocation3], 196608
    $region41: #{mlpnet_modified_forward.1} parent=1 // pred_fallthru
      _
    // Predicated region
    $region42: #{mlpnet_modified_forward.1} parent=1 // pred_check
      _
    $region43: #{mlpnet_modified_forward.1} parent=1 // pred_check_branch
      %113 = sbr.rel (0) target = $region45
    $region44: #{mlpnet_modified_forward.1} parent=1 // pred_region
      %114 = dma.done [#allocation5], 128
    $region45: #{mlpnet_modified_forward.1} parent=1 // pred_fallthru
      _
    // Predicated region
    $region46: #{mlpnet_modified_forward.1} parent=1 // pred_check
      _
    $region47: #{mlpnet_modified_forward.1} parent=1 // pred_check_branch
      %116 = sbr.rel (0) target = $region49
    $region48: #{mlpnet_modified_forward.1} parent=1 // pred_region
      %117 = dma.done [#allocation5], 32768
    $region49: #{mlpnet_modified_forward.1} parent=1 // pred_fallthru
      _
    // Predicated region
    $region50: #{mlpnet_modified_forward.1} parent=1 // pred_check
      _
    $region51: #{mlpnet_modified_forward.1} parent=1 // pred_check_branch
      %119 = sbr.rel (0) target = $region53
    $region52: #{mlpnet_modified_forward.1} parent=1 // pred_region
      %120 = dma.done [#allocation8], 64
    $region53: #{mlpnet_modified_forward.1} parent=1 // pred_fallthru
      _
    // Predicated region
    $region54: #{mlpnet_modified_forward.1} parent=1 // pred_check
      _
    $region55: #{mlpnet_modified_forward.1} parent=1 // pred_check_branch
      %122 = sbr.rel (0) target = $region57
    $region56: #{mlpnet_modified_forward.1} parent=1 // pred_region
      %123 = dma.done [#allocation8], 8192
    $region57: #{mlpnet_modified_forward.1} parent=1 // pred_fallthru
      _
    // Predicated region
    $region58: #{mlpnet_modified_forward.1} parent=1 // pred_check
      _
    $region59: #{mlpnet_modified_forward.1} parent=1 // pred_check_branch
      %125 = sbr.rel (0) target = $region61
    $region60: #{mlpnet_modified_forward.1} parent=1 // pred_region
      %126 = dma.done [#allocation11], 32
    $region61: #{mlpnet_modified_forward.1} parent=1 // pred_fallthru
      _
    // Predicated region
    $region62: #{mlpnet_modified_forward.1} parent=1 // pred_check
      _
    $region63: #{mlpnet_modified_forward.1} parent=1 // pred_check_branch
      %128 = sbr.rel (0) target = $region65
    $region64: #{mlpnet_modified_forward.1} parent=1 // pred_region
      %129 = dma.done [#allocation11], 2048
    $region65: #{mlpnet_modified_forward.1} parent=1 // pred_fallthru
      _
    // Predicated region
    $region66: #{mlpnet_modified_forward.1} parent=1 // pred_check
      _
    $region67: #{mlpnet_modified_forward.1} parent=1 // pred_check_branch
      %131 = sbr.rel (0) target = $region69
    $region68: #{mlpnet_modified_forward.1} parent=1 // pred_region
      %132 = dma.done [#allocation14], 16
    $region69: #{mlpnet_modified_forward.1} parent=1 // pred_fallthru
      _
    %v134 = vld [vmem:[%s0] sm:$0xff]
    %v135 = vld [vmem:[%s0 + $0x8] sm:$0xff]
    %v136 = vld [vmem:[%s0 + $0x10] sm:$0xff]
    %v137 = vld [vmem:[%s0 + $0x18] sm:$0xff]
    %v138 = vld [vmem:[%s0 + $0x20] sm:$0xff]
    %v139 = vld [vmem:[%s0 + $0x28] sm:$0xff]
    %v140 = vld [vmem:[%s0 + $0x30] sm:$0xff]
    %v141 = vld [vmem:[%s0 + $0x38] sm:$0xff]
    %v142 = vld [vmem:[%s0 + $0x40] sm:$0xff]
    %v143 = vld [vmem:[%s0 + $0x48] sm:$0xff]
    %v144 = vld [vmem:[%s0 + $0x50] sm:$0xff]
    %v145 = vld [vmem:[%s0 + $0x58] sm:$0xff]
    %v146 = vld [vmem:[#allocation2] sm:$0xff]
    %v147 = vld [vmem:[#allocation2 + $0x8] sm:$0xff]
    %v148 = vld [vmem:[#allocation2 + $0x10] sm:$0xff]
    %v149 = vld [vmem:[#allocation2 + $0x18] sm:$0xff]
    %v150 = vld [vmem:[#allocation2 + $0x20] sm:$0xff]
    %v151 = vld [vmem:[#allocation2 + $0x28] sm:$0xff]
    %v152 = vld [vmem:[#allocation2 + $0x30] sm:$0xff]
    %v153 = vld [vmem:[#allocation2 + $0x38] sm:$0xff]
    %v154 = vld [vmem:[#allocation2 + $0x40] sm:$0xff]
    %v155 = vld [vmem:[#allocation2 + $0x48] sm:$0xff]
    %v156 = vld [vmem:[#allocation2 + $0x50] sm:$0xff]
    %v157 = vld [vmem:[#allocation2 + $0x58] sm:$0xff]
    %v158 = vld [vmem:[#allocation2 + $0x60] sm:$0xff]
    %v159 = vld [vmem:[#allocation2 + $0x68] sm:$0xff]
    %v160 = vld [vmem:[#allocation2 + $0x70] sm:$0xff]
    %v161 = vld [vmem:[#allocation2 + $0x78] sm:$0xff]
    %v162 = vld [vmem:[#allocation2 + $0x80] sm:$0xff]
    %v163 = vld [vmem:[#allocation2 + $0x88] sm:$0xff]
    %v164 = vld [vmem:[#allocation2 + $0x90] sm:$0xff]
    %v165 = vld [vmem:[#allocation2 + $0x98] sm:$0xff]
    %v166 = vld [vmem:[#allocation2 + $0xa0] sm:$0xff]
    %v167 = vld [vmem:[#allocation2 + $0xa8] sm:$0xff]
    %v168 = vld [vmem:[#allocation2 + $0xb0] sm:$0xff]
    %v169 = vld [vmem:[#allocation2 + $0xb8] sm:$0xff]
    %v170 = vld [vmem:[#allocation2 + $0xc0] sm:$0xff]
    %v171 = vld [vmem:[#allocation2 + $0xc8] sm:$0xff]
    %v172 = vld [vmem:[#allocation2 + $0xd0] sm:$0xff]
    %v173 = vld [vmem:[#allocation2 + $0xd8] sm:$0xff]
    %v174 = vld [vmem:[#allocation2 + $0xe0] sm:$0xff]
    %v175 = vld [vmem:[#allocation2 + $0xe8] sm:$0xff]
    %v176 = vld [vmem:[#allocation2 + $0xf0] sm:$0xff]
    %v177 = vld [vmem:[#allocation2 + $0xf8] sm:$0xff]
    %v178 = vld [vmem:[#allocation2 + $0x100] sm:$0xff]
    %v179 = vld [vmem:[#allocation2 + $0x108] sm:$0xff]
    %v180 = vld [vmem:[#allocation2 + $0x110] sm:$0xff]
    %v181 = vld [vmem:[#allocation2 + $0x118] sm:$0xff]
    %v182 = vld [vmem:[#allocation2 + $0x120] sm:$0xff]
    %v183 = vld [vmem:[#allocation2 + $0x128] sm:$0xff]
    %v184 = vld [vmem:[#allocation2 + $0x130] sm:$0xff]
    %v185 = vld [vmem:[#allocation2 + $0x138] sm:$0xff]
    %v186 = vld [vmem:[#allocation2 + $0x140] sm:$0xff]
    %v187 = vld [vmem:[#allocation2 + $0x148] sm:$0xff]
    %v188 = vld [vmem:[#allocation2 + $0x150] sm:$0xff]
    %v189 = vld [vmem:[#allocation2 + $0x158] sm:$0xff]
    %v190 = vld [vmem:[#allocation2 + $0x160] sm:$0xff]
    %v191 = vld [vmem:[#allocation2 + $0x168] sm:$0xff]
    %v192 = vld [vmem:[#allocation2 + $0x170] sm:$0xff]
    %v193 = vld [vmem:[#allocation2 + $0x178] sm:$0xff]
    %v194 = vld [vmem:[#allocation2 + $0x180] sm:$0xff]
    %v195 = vld [vmem:[#allocation2 + $0x188] sm:$0xff]
    %v196 = vld [vmem:[#allocation2 + $0x190] sm:$0xff]
    %v197 = vld [vmem:[#allocation2 + $0x198] sm:$0xff]
    %v198 = vld [vmem:[#allocation2 + $0x1a0] sm:$0xff]
    %v199 = vld [vmem:[#allocation2 + $0x1a8] sm:$0xff]
    %v200 = vld [vmem:[#allocation2 + $0x1b0] sm:$0xff]
    %v201 = vld [vmem:[#allocation2 + $0x1b8] sm:$0xff]
    %v202 = vld [vmem:[#allocation2 + $0x1c0] sm:$0xff]
    %v203 = vld [vmem:[#allocation2 + $0x1c8] sm:$0xff]
    %v204 = vld [vmem:[#allocation2 + $0x1d0] sm:$0xff]
    %v205 = vld [vmem:[#allocation2 + $0x1d8] sm:$0xff]
    %v206 = vld [vmem:[#allocation2 + $0x1e0] sm:$0xff]
    %v207 = vld [vmem:[#allocation2 + $0x1e8] sm:$0xff]
    %v208 = vld [vmem:[#allocation2 + $0x1f0] sm:$0xff]
    %v209 = vld [vmem:[#allocation2 + $0x1f8] sm:$0xff]
    %v210 = vld [vmem:[#allocation2 + $0x200] sm:$0xff]
    %v211 = vld [vmem:[#allocation2 + $0x208] sm:$0xff]
    %v212 = vld [vmem:[#allocation2 + $0x210] sm:$0xff]
    %v213 = vld [vmem:[#allocation2 + $0x218] sm:$0xff]
    %v214 = vld [vmem:[#allocation2 + $0x220] sm:$0xff]
    %v215 = vld [vmem:[#allocation2 + $0x228] sm:$0xff]
    %v216 = vld [vmem:[#allocation2 + $0x230] sm:$0xff]
    %v217 = vld [vmem:[#allocation2 + $0x238] sm:$0xff]
    %v218 = vld [vmem:[#allocation2 + $0x240] sm:$0xff]
    %v219 = vld [vmem:[#allocation2 + $0x248] sm:$0xff]
    %v220 = vld [vmem:[#allocation2 + $0x250] sm:$0xff]
    %v221 = vld [vmem:[#allocation2 + $0x258] sm:$0xff]
    %v222 = vld [vmem:[#allocation2 + $0x260] sm:$0xff]
    %v223 = vld [vmem:[#allocation2 + $0x268] sm:$0xff]
    %v224 = vld [vmem:[#allocation2 + $0x270] sm:$0xff]
    %v225 = vld [vmem:[#allocation2 + $0x278] sm:$0xff]
    %v226 = vld [vmem:[#allocation2 + $0x280] sm:$0xff]
    %v227 = vld [vmem:[#allocation2 + $0x288] sm:$0xff]
    %v228 = vld [vmem:[#allocation2 + $0x290] sm:$0xff]
    %v229 = vld [vmem:[#allocation2 + $0x298] sm:$0xff]
    %v230 = vld [vmem:[#allocation2 + $0x2a0] sm:$0xff]
    %v231 = vld [vmem:[#allocation2 + $0x2a8] sm:$0xff]
    %v232 = vld [vmem:[#allocation2 + $0x2b0] sm:$0xff]
    %v233 = vld [vmem:[#allocation2 + $0x2b8] sm:$0xff]
    %v234 = vld [vmem:[#allocation2 + $0x2c0] sm:$0xff]
    %v235 = vld [vmem:[#allocation2 + $0x2c8] sm:$0xff]
    %v236 = vld [vmem:[#allocation2 + $0x2d0] sm:$0xff]
    %v237 = vld [vmem:[#allocation2 + $0x2d8] sm:$0xff]
    %v238 = vld [vmem:[#allocation2 + $0x2e0] sm:$0xff]
    %v239 = vld [vmem:[#allocation2 + $0x2e8] sm:$0xff]
    %v240 = vld [vmem:[#allocation2 + $0x2f0] sm:$0xff]
    %v241 = vld [vmem:[#allocation2 + $0x2f8] sm:$0xff]
    %v242 = vld [vmem:[#allocation2 + $0x300] sm:$0xff]
    %v243 = vld [vmem:[#allocation2 + $0x308] sm:$0xff]
    %v244 = vld [vmem:[#allocation2 + $0x310] sm:$0xff]
    %v245 = vld [vmem:[#allocation2 + $0x318] sm:$0xff]
    %v246 = vld [vmem:[#allocation2 + $0x320] sm:$0xff]
    %v247 = vld [vmem:[#allocation2 + $0x328] sm:$0xff]
    %v248 = vld [vmem:[#allocation2 + $0x330] sm:$0xff]
    %v249 = vld [vmem:[#allocation2 + $0x338] sm:$0xff]
    %v250 = vld [vmem:[#allocation2 + $0x340] sm:$0xff]
    %v251 = vld [vmem:[#allocation2 + $0x348] sm:$0xff]
    %v252 = vld [vmem:[#allocation2 + $0x350] sm:$0xff]
    %v253 = vld [vmem:[#allocation2 + $0x358] sm:$0xff]
    %v254 = vld [vmem:[#allocation2 + $0x360] sm:$0xff]
    %v255 = vld [vmem:[#allocation2 + $0x368] sm:$0xff]
    %v256 = vld [vmem:[#allocation2 + $0x370] sm:$0xff]
    %v257 = vld [vmem:[#allocation2 + $0x378] sm:$0xff]
    %v258 = vld [vmem:[#allocation2 + $0x380] sm:$0xff]
    %v259 = vld [vmem:[#allocation2 + $0x388] sm:$0xff]
    %v260 = vld [vmem:[#allocation2 + $0x390] sm:$0xff]
    %v261 = vld [vmem:[#allocation2 + $0x398] sm:$0xff]
    %v262 = vld [vmem:[#allocation2 + $0x3a0] sm:$0xff]
    %v263 = vld [vmem:[#allocation2 + $0x3a8] sm:$0xff]
    %v264 = vld [vmem:[#allocation2 + $0x3b0] sm:$0xff]
    %v265 = vld [vmem:[#allocation2 + $0x3b8] sm:$0xff]
    %v266 = vld [vmem:[#allocation2 + $0x3c0] sm:$0xff]
    %v267 = vld [vmem:[#allocation2 + $0x3c8] sm:$0xff]
    %v268 = vld [vmem:[#allocation2 + $0x3d0] sm:$0xff]
    %v269 = vld [vmem:[#allocation2 + $0x3d8] sm:$0xff]
    %v270 = vld [vmem:[#allocation2 + $0x3e0] sm:$0xff]
    %v271 = vld [vmem:[#allocation2 + $0x3e8] sm:$0xff]
    %v272 = vld [vmem:[#allocation2 + $0x3f0] sm:$0xff]
    %v273 = vld [vmem:[#allocation2 + $0x3f8] sm:$0xff]
    %v274 = vld [vmem:[#allocation2 + $0x400] sm:$0xff]
    %v275 = vld [vmem:[#allocation2 + $0x408] sm:$0xff]
    %v276 = vld [vmem:[#allocation2 + $0x410] sm:$0xff]
    %v277 = vld [vmem:[#allocation2 + $0x418] sm:$0xff]
    %v278 = vld [vmem:[#allocation2 + $0x420] sm:$0xff]
    %v279 = vld [vmem:[#allocation2 + $0x428] sm:$0xff]
    %v280 = vld [vmem:[#allocation2 + $0x430] sm:$0xff]
    %v281 = vld [vmem:[#allocation2 + $0x438] sm:$0xff]
    %v282 = vld [vmem:[#allocation2 + $0x440] sm:$0xff]
    %v283 = vld [vmem:[#allocation2 + $0x448] sm:$0xff]
    %v284 = vld [vmem:[#allocation2 + $0x450] sm:$0xff]
    %v285 = vld [vmem:[#allocation2 + $0x458] sm:$0xff]
    %v286 = vld [vmem:[#allocation2 + $0x460] sm:$0xff]
    %v287 = vld [vmem:[#allocation2 + $0x468] sm:$0xff]
    %v288 = vld [vmem:[#allocation2 + $0x470] sm:$0xff]
    %v289 = vld [vmem:[#allocation2 + $0x478] sm:$0xff]
    %v290 = vld [vmem:[#allocation2 + $0x480] sm:$0xff]
    %v291 = vld [vmem:[#allocation2 + $0x488] sm:$0xff]
    %v292 = vld [vmem:[#allocation2 + $0x490] sm:$0xff]
    %v293 = vld [vmem:[#allocation2 + $0x498] sm:$0xff]
    %v294 = vld [vmem:[#allocation2 + $0x4a0] sm:$0xff]
    %v295 = vld [vmem:[#allocation2 + $0x4a8] sm:$0xff]
    %v296 = vld [vmem:[#allocation2 + $0x4b0] sm:$0xff]
    %v297 = vld [vmem:[#allocation2 + $0x4b8] sm:$0xff]
    %v298 = vld [vmem:[#allocation2 + $0x4c0] sm:$0xff]
    %v299 = vld [vmem:[#allocation2 + $0x4c8] sm:$0xff]
    %v300 = vld [vmem:[#allocation2 + $0x4d0] sm:$0xff]
    %v301 = vld [vmem:[#allocation2 + $0x4d8] sm:$0xff]
    %v302 = vld [vmem:[#allocation2 + $0x4e0] sm:$0xff]
    %v303 = vld [vmem:[#allocation2 + $0x4e8] sm:$0xff]
    %v304 = vld [vmem:[#allocation2 + $0x4f0] sm:$0xff]
    %v305 = vld [vmem:[#allocation2 + $0x4f8] sm:$0xff]
    %v306 = vld [vmem:[#allocation2 + $0x500] sm:$0xff]
    %v307 = vld [vmem:[#allocation2 + $0x508] sm:$0xff]
    %v308 = vld [vmem:[#allocation2 + $0x510] sm:$0xff]
    %v309 = vld [vmem:[#allocation2 + $0x518] sm:$0xff]
    %v310 = vld [vmem:[#allocation2 + $0x520] sm:$0xff]
    %v311 = vld [vmem:[#allocation2 + $0x528] sm:$0xff]
    %v312 = vld [vmem:[#allocation2 + $0x530] sm:$0xff]
    %v313 = vld [vmem:[#allocation2 + $0x538] sm:$0xff]
    %v314 = vld [vmem:[#allocation2 + $0x540] sm:$0xff]
    %v315 = vld [vmem:[#allocation2 + $0x548] sm:$0xff]
    %v316 = vld [vmem:[#allocation2 + $0x550] sm:$0xff]
    %v317 = vld [vmem:[#allocation2 + $0x558] sm:$0xff]
    %v318 = vld [vmem:[#allocation2 + $0x560] sm:$0xff]
    %v319 = vld [vmem:[#allocation2 + $0x568] sm:$0xff]
    %v320 = vld [vmem:[#allocation2 + $0x570] sm:$0xff]
    %v321 = vld [vmem:[#allocation2 + $0x578] sm:$0xff]
    %v322 = vld [vmem:[#allocation2 + $0x580] sm:$0xff]
    %v323 = vld [vmem:[#allocation2 + $0x588] sm:$0xff]
    %v324 = vld [vmem:[#allocation2 + $0x590] sm:$0xff]
    %v325 = vld [vmem:[#allocation2 + $0x598] sm:$0xff]
    %v326 = vld [vmem:[#allocation2 + $0x5a0] sm:$0xff]
    %v327 = vld [vmem:[#allocation2 + $0x5a8] sm:$0xff]
    %v328 = vld [vmem:[#allocation2 + $0x5b0] sm:$0xff]
    %v329 = vld [vmem:[#allocation2 + $0x5b8] sm:$0xff]
    %v330 = vld [vmem:[#allocation2 + $0x5c0] sm:$0xff]
    %v331 = vld [vmem:[#allocation2 + $0x5c8] sm:$0xff]
    %v332 = vld [vmem:[#allocation2 + $0x5d0] sm:$0xff]
    %v333 = vld [vmem:[#allocation2 + $0x5d8] sm:$0xff]
    %v334 = vld [vmem:[#allocation2 + $0x5e0] sm:$0xff]
    %v335 = vld [vmem:[#allocation2 + $0x5e8] sm:$0xff]
    %v336 = vld [vmem:[#allocation2 + $0x5f0] sm:$0xff]
    %v337 = vld [vmem:[#allocation2 + $0x5f8] sm:$0xff]
    %v338 = vld [vmem:[#allocation2 + $0x600] sm:$0xff]
    %v339 = vld [vmem:[#allocation2 + $0x608] sm:$0xff]
    %v340 = vld [vmem:[#allocation2 + $0x610] sm:$0xff]
    %v341 = vld [vmem:[#allocation2 + $0x618] sm:$0xff]
    %v342 = vld [vmem:[#allocation2 + $0x620] sm:$0xff]
    %v343 = vld [vmem:[#allocation2 + $0x628] sm:$0xff]
    %v344 = vld [vmem:[#allocation2 + $0x630] sm:$0xff]
    %v345 = vld [vmem:[#allocation2 + $0x638] sm:$0xff]
    %v346 = vld [vmem:[#allocation2 + $0x640] sm:$0xff]
    %v347 = vld [vmem:[#allocation2 + $0x648] sm:$0xff]
    %v348 = vld [vmem:[#allocation2 + $0x650] sm:$0xff]
    %v349 = vld [vmem:[#allocation2 + $0x658] sm:$0xff]
    %v350 = vld [vmem:[#allocation2 + $0x660] sm:$0xff]
    %v351 = vld [vmem:[#allocation2 + $0x668] sm:$0xff]
    %v352 = vld [vmem:[#allocation2 + $0x670] sm:$0xff]
    %v353 = vld [vmem:[#allocation2 + $0x678] sm:$0xff]
    %v354 = vld [vmem:[#allocation2 + $0x680] sm:$0xff]
    %v355 = vld [vmem:[#allocation2 + $0x688] sm:$0xff]
    %v356 = vld [vmem:[#allocation2 + $0x690] sm:$0xff]
    %v357 = vld [vmem:[#allocation2 + $0x698] sm:$0xff]
    %v358 = vld [vmem:[#allocation2 + $0x6a0] sm:$0xff]
    %v359 = vld [vmem:[#allocation2 + $0x6a8] sm:$0xff]
    %v360 = vld [vmem:[#allocation2 + $0x6b0] sm:$0xff]
    %v361 = vld [vmem:[#allocation2 + $0x6b8] sm:$0xff]
    %v362 = vld [vmem:[#allocation2 + $0x6c0] sm:$0xff]
    %v363 = vld [vmem:[#allocation2 + $0x6c8] sm:$0xff]
    %v364 = vld [vmem:[#allocation2 + $0x6d0] sm:$0xff]
    %v365 = vld [vmem:[#allocation2 + $0x6d8] sm:$0xff]
    %v366 = vld [vmem:[#allocation2 + $0x6e0] sm:$0xff]
    %v367 = vld [vmem:[#allocation2 + $0x6e8] sm:$0xff]
    %v368 = vld [vmem:[#allocation2 + $0x6f0] sm:$0xff]
    %v369 = vld [vmem:[#allocation2 + $0x6f8] sm:$0xff]
    %v370 = vld [vmem:[#allocation2 + $0x700] sm:$0xff]
    %v371 = vld [vmem:[#allocation2 + $0x708] sm:$0xff]
    %v372 = vld [vmem:[#allocation2 + $0x710] sm:$0xff]
    %v373 = vld [vmem:[#allocation2 + $0x718] sm:$0xff]
    %v374 = vld [vmem:[#allocation2 + $0x720] sm:$0xff]
    %v375 = vld [vmem:[#allocation2 + $0x728] sm:$0xff]
    %v376 = vld [vmem:[#allocation2 + $0x730] sm:$0xff]
    %v377 = vld [vmem:[#allocation2 + $0x738] sm:$0xff]
    %v378 = vld [vmem:[#allocation2 + $0x740] sm:$0xff]
    %v379 = vld [vmem:[#allocation2 + $0x748] sm:$0xff]
    %v380 = vld [vmem:[#allocation2 + $0x750] sm:$0xff]
    %v381 = vld [vmem:[#allocation2 + $0x758] sm:$0xff]
    %v382 = vld [vmem:[#allocation2 + $0x760] sm:$0xff]
    %v383 = vld [vmem:[#allocation2 + $0x768] sm:$0xff]
    %v384 = vld [vmem:[#allocation2 + $0x770] sm:$0xff]
    %v385 = vld [vmem:[#allocation2 + $0x778] sm:$0xff]
    %v386 = vld [vmem:[#allocation2 + $0x780] sm:$0xff]
    %v387 = vld [vmem:[#allocation2 + $0x788] sm:$0xff]
    %v388 = vld [vmem:[#allocation2 + $0x790] sm:$0xff]
    %v389 = vld [vmem:[#allocation2 + $0x798] sm:$0xff]
    %v390 = vld [vmem:[#allocation2 + $0x7a0] sm:$0xff]
    %v391 = vld [vmem:[#allocation2 + $0x7a8] sm:$0xff]
    %v392 = vld [vmem:[#allocation2 + $0x7b0] sm:$0xff]
    %v393 = vld [vmem:[#allocation2 + $0x7b8] sm:$0xff]
    %v394 = vld [vmem:[#allocation2 + $0x7c0] sm:$0xff]
    %v395 = vld [vmem:[#allocation2 + $0x7c8] sm:$0xff]
    %v396 = vld [vmem:[#allocation2 + $0x7d0] sm:$0xff]
    %v397 = vld [vmem:[#allocation2 + $0x7d8] sm:$0xff]
    %v398 = vld [vmem:[#allocation2 + $0x7e0] sm:$0xff]
    %v399 = vld [vmem:[#allocation2 + $0x7e8] sm:$0xff]
    %v400 = vld [vmem:[#allocation2 + $0x7f0] sm:$0xff]
    %v401 = vld [vmem:[#allocation2 + $0x7f8] sm:$0xff]
    %v402 = vld [vmem:[#allocation2 + $0x800] sm:$0xff]
    %v403 = vld [vmem:[#allocation2 + $0x808] sm:$0xff]
    %v404 = vld [vmem:[#allocation2 + $0x810] sm:$0xff]
    %v405 = vld [vmem:[#allocation2 + $0x818] sm:$0xff]
    %v406 = vld [vmem:[#allocation2 + $0x820] sm:$0xff]
    %v407 = vld [vmem:[#allocation2 + $0x828] sm:$0xff]
    %v408 = vld [vmem:[#allocation2 + $0x830] sm:$0xff]
    %v409 = vld [vmem:[#allocation2 + $0x838] sm:$0xff]
    %v410 = vld [vmem:[#allocation2 + $0x840] sm:$0xff]
    %v411 = vld [vmem:[#allocation2 + $0x848] sm:$0xff]
    %v412 = vld [vmem:[#allocation2 + $0x850] sm:$0xff]
    %v413 = vld [vmem:[#allocation2 + $0x858] sm:$0xff]
    %v414 = vld [vmem:[#allocation2 + $0x860] sm:$0xff]
    %v415 = vld [vmem:[#allocation2 + $0x868] sm:$0xff]
    %v416 = vld [vmem:[#allocation2 + $0x870] sm:$0xff]
    %v417 = vld [vmem:[#allocation2 + $0x878] sm:$0xff]
    %v418 = vld [vmem:[#allocation2 + $0x880] sm:$0xff]
    %v419 = vld [vmem:[#allocation2 + $0x888] sm:$0xff]
    %v420 = vld [vmem:[#allocation2 + $0x890] sm:$0xff]
    %v421 = vld [vmem:[#allocation2 + $0x898] sm:$0xff]
    %v422 = vld [vmem:[#allocation2 + $0x8a0] sm:$0xff]
    %v423 = vld [vmem:[#allocation2 + $0x8a8] sm:$0xff]
    %v424 = vld [vmem:[#allocation2 + $0x8b0] sm:$0xff]
    %v425 = vld [vmem:[#allocation2 + $0x8b8] sm:$0xff]
    %v426 = vld [vmem:[#allocation2 + $0x8c0] sm:$0xff]
    %v427 = vld [vmem:[#allocation2 + $0x8c8] sm:$0xff]
    %v428 = vld [vmem:[#allocation2 + $0x8d0] sm:$0xff]
    %v429 = vld [vmem:[#allocation2 + $0x8d8] sm:$0xff]
    %v430 = vld [vmem:[#allocation2 + $0x8e0] sm:$0xff]
    %v431 = vld [vmem:[#allocation2 + $0x8e8] sm:$0xff]
    %v432 = vld [vmem:[#allocation2 + $0x8f0] sm:$0xff]
    %v433 = vld [vmem:[#allocation2 + $0x8f8] sm:$0xff]
    %v434 = vld [vmem:[#allocation2 + $0x900] sm:$0xff]
    %v435 = vld [vmem:[#allocation2 + $0x908] sm:$0xff]
    %v436 = vld [vmem:[#allocation2 + $0x910] sm:$0xff]
    %v437 = vld [vmem:[#allocation2 + $0x918] sm:$0xff]
    %v438 = vld [vmem:[#allocation2 + $0x920] sm:$0xff]
    %v439 = vld [vmem:[#allocation2 + $0x928] sm:$0xff]
    %v440 = vld [vmem:[#allocation2 + $0x930] sm:$0xff]
    %v441 = vld [vmem:[#allocation2 + $0x938] sm:$0xff]
    %v442 = vld [vmem:[#allocation2 + $0x940] sm:$0xff]
    %v443 = vld [vmem:[#allocation2 + $0x948] sm:$0xff]
    %v444 = vld [vmem:[#allocation2 + $0x950] sm:$0xff]
    %v445 = vld [vmem:[#allocation2 + $0x958] sm:$0xff]
    %v446 = vld [vmem:[#allocation2 + $0x960] sm:$0xff]
    %v447 = vld [vmem:[#allocation2 + $0x968] sm:$0xff]
    %v448 = vld [vmem:[#allocation2 + $0x970] sm:$0xff]
    %v449 = vld [vmem:[#allocation2 + $0x978] sm:$0xff]
    %v450 = vld [vmem:[#allocation2 + $0x980] sm:$0xff]
    %v451 = vld [vmem:[#allocation2 + $0x988] sm:$0xff]
    %v452 = vld [vmem:[#allocation2 + $0x990] sm:$0xff]
    %v453 = vld [vmem:[#allocation2 + $0x998] sm:$0xff]
    %v454 = vld [vmem:[#allocation2 + $0x9a0] sm:$0xff]
    %v455 = vld [vmem:[#allocation2 + $0x9a8] sm:$0xff]
    %v456 = vld [vmem:[#allocation2 + $0x9b0] sm:$0xff]
    %v457 = vld [vmem:[#allocation2 + $0x9b8] sm:$0xff]
    %v458 = vld [vmem:[#allocation2 + $0x9c0] sm:$0xff]
    %v459 = vld [vmem:[#allocation2 + $0x9c8] sm:$0xff]
    %v460 = vld [vmem:[#allocation2 + $0x9d0] sm:$0xff]
    %v461 = vld [vmem:[#allocation2 + $0x9d8] sm:$0xff]
    %v462 = vld [vmem:[#allocation2 + $0x9e0] sm:$0xff]
    %v463 = vld [vmem:[#allocation2 + $0x9e8] sm:$0xff]
    %v464 = vld [vmem:[#allocation2 + $0x9f0] sm:$0xff]
    %v465 = vld [vmem:[#allocation2 + $0x9f8] sm:$0xff]
    %v466 = vld [vmem:[#allocation2 + $0xa00] sm:$0xff]
    %v467 = vld [vmem:[#allocation2 + $0xa08] sm:$0xff]
    %v468 = vld [vmem:[#allocation2 + $0xa10] sm:$0xff]
    %v469 = vld [vmem:[#allocation2 + $0xa18] sm:$0xff]
    %v470 = vld [vmem:[#allocation2 + $0xa20] sm:$0xff]
    %v471 = vld [vmem:[#allocation2 + $0xa28] sm:$0xff]
    %v472 = vld [vmem:[#allocation2 + $0xa30] sm:$0xff]
    %v473 = vld [vmem:[#allocation2 + $0xa38] sm:$0xff]
    %v474 = vld [vmem:[#allocation2 + $0xa40] sm:$0xff]
    %v475 = vld [vmem:[#allocation2 + $0xa48] sm:$0xff]
    %v476 = vld [vmem:[#allocation2 + $0xa50] sm:$0xff]
    %v477 = vld [vmem:[#allocation2 + $0xa58] sm:$0xff]
    %v478 = vld [vmem:[#allocation2 + $0xa60] sm:$0xff]
    %v479 = vld [vmem:[#allocation2 + $0xa68] sm:$0xff]
    %v480 = vld [vmem:[#allocation2 + $0xa70] sm:$0xff]
    %v481 = vld [vmem:[#allocation2 + $0xa78] sm:$0xff]
    %v482 = vld [vmem:[#allocation2 + $0xa80] sm:$0xff]
    %v483 = vld [vmem:[#allocation2 + $0xa88] sm:$0xff]
    %v484 = vld [vmem:[#allocation2 + $0xa90] sm:$0xff]
    %v485 = vld [vmem:[#allocation2 + $0xa98] sm:$0xff]
    %v486 = vld [vmem:[#allocation2 + $0xaa0] sm:$0xff]
    %v487 = vld [vmem:[#allocation2 + $0xaa8] sm:$0xff]
    %v488 = vld [vmem:[#allocation2 + $0xab0] sm:$0xff]
    %v489 = vld [vmem:[#allocation2 + $0xab8] sm:$0xff]
    %v490 = vld [vmem:[#allocation2 + $0xac0] sm:$0xff]
    %v491 = vld [vmem:[#allocation2 + $0xac8] sm:$0xff]
    %v492 = vld [vmem:[#allocation2 + $0xad0] sm:$0xff]
    %v493 = vld [vmem:[#allocation2 + $0xad8] sm:$0xff]
    %v494 = vld [vmem:[#allocation2 + $0xae0] sm:$0xff]
    %v495 = vld [vmem:[#allocation2 + $0xae8] sm:$0xff]
    %v496 = vld [vmem:[#allocation2 + $0xaf0] sm:$0xff]
    %v497 = vld [vmem:[#allocation2 + $0xaf8] sm:$0xff]
    %v498 = vld [vmem:[#allocation2 + $0xb00] sm:$0xff]
    %v499 = vld [vmem:[#allocation2 + $0xb08] sm:$0xff]
    %v500 = vld [vmem:[#allocation2 + $0xb10] sm:$0xff]
    %v501 = vld [vmem:[#allocation2 + $0xb18] sm:$0xff]
    %v502 = vld [vmem:[#allocation2 + $0xb20] sm:$0xff]
    %v503 = vld [vmem:[#allocation2 + $0xb28] sm:$0xff]
    %v504 = vld [vmem:[#allocation2 + $0xb30] sm:$0xff]
    %v505 = vld [vmem:[#allocation2 + $0xb38] sm:$0xff]
    %v506 = vld [vmem:[#allocation2 + $0xb40] sm:$0xff]
    %v507 = vld [vmem:[#allocation2 + $0xb48] sm:$0xff]
    %v508 = vld [vmem:[#allocation2 + $0xb50] sm:$0xff]
    %v509 = vld [vmem:[#allocation2 + $0xb58] sm:$0xff]
    %v510 = vld [vmem:[#allocation2 + $0xb60] sm:$0xff]
    %v511 = vld [vmem:[#allocation2 + $0xb68] sm:$0xff]
    %v512 = vld [vmem:[#allocation2 + $0xb70] sm:$0xff]
    %v513 = vld [vmem:[#allocation2 + $0xb78] sm:$0xff]
    %v514 = vld [vmem:[#allocation2 + $0xb80] sm:$0xff]
    %v515 = vld [vmem:[#allocation2 + $0xb88] sm:$0xff]
    %v516 = vld [vmem:[#allocation2 + $0xb90] sm:$0xff]
    %v517 = vld [vmem:[#allocation2 + $0xb98] sm:$0xff]
    %v518 = vld [vmem:[#allocation2 + $0xba0] sm:$0xff]
    %v519 = vld [vmem:[#allocation2 + $0xba8] sm:$0xff]
    %v520 = vld [vmem:[#allocation2 + $0xbb0] sm:$0xff]
    %v521 = vld [vmem:[#allocation2 + $0xbb8] sm:$0xff]
    %v522 = vld [vmem:[#allocation2 + $0xbc0] sm:$0xff]
    %v523 = vld [vmem:[#allocation2 + $0xbc8] sm:$0xff]
    %v524 = vld [vmem:[#allocation2 + $0xbd0] sm:$0xff]
    %v525 = vld [vmem:[#allocation2 + $0xbd8] sm:$0xff]
    %v526 = vld [vmem:[#allocation2 + $0xbe0] sm:$0xff]
    %v527 = vld [vmem:[#allocation2 + $0xbe8] sm:$0xff]
    %v528 = vld [vmem:[#allocation2 + $0xbf0] sm:$0xff]
    %v529 = vld [vmem:[#allocation2 + $0xbf8] sm:$0xff]
    %v530 = vld [vmem:[#allocation2 + $0xc00] sm:$0xff]
    %v531 = vld [vmem:[#allocation2 + $0xc08] sm:$0xff]
    %v532 = vld [vmem:[#allocation2 + $0xc10] sm:$0xff]
    %v533 = vld [vmem:[#allocation2 + $0xc18] sm:$0xff]
    %v534 = vld [vmem:[#allocation2 + $0xc20] sm:$0xff]
    %v535 = vld [vmem:[#allocation2 + $0xc28] sm:$0xff]
    %v536 = vld [vmem:[#allocation2 + $0xc30] sm:$0xff]
    %v537 = vld [vmem:[#allocation2 + $0xc38] sm:$0xff]
    %v538 = vld [vmem:[#allocation2 + $0xc40] sm:$0xff]
    %v539 = vld [vmem:[#allocation2 + $0xc48] sm:$0xff]
    %v540 = vld [vmem:[#allocation2 + $0xc50] sm:$0xff]
    %v541 = vld [vmem:[#allocation2 + $0xc58] sm:$0xff]
    %v542 = vld [vmem:[#allocation2 + $0xc60] sm:$0xff]
    %v543 = vld [vmem:[#allocation2 + $0xc68] sm:$0xff]
    %v544 = vld [vmem:[#allocation2 + $0xc70] sm:$0xff]
    %v545 = vld [vmem:[#allocation2 + $0xc78] sm:$0xff]
    %v546 = vld [vmem:[#allocation2 + $0xc80] sm:$0xff]
    %v547 = vld [vmem:[#allocation2 + $0xc88] sm:$0xff]
    %v548 = vld [vmem:[#allocation2 + $0xc90] sm:$0xff]
    %v549 = vld [vmem:[#allocation2 + $0xc98] sm:$0xff]
    %v550 = vld [vmem:[#allocation2 + $0xca0] sm:$0xff]
    %v551 = vld [vmem:[#allocation2 + $0xca8] sm:$0xff]
    %v552 = vld [vmem:[#allocation2 + $0xcb0] sm:$0xff]
    %v553 = vld [vmem:[#allocation2 + $0xcb8] sm:$0xff]
    %v554 = vld [vmem:[#allocation2 + $0xcc0] sm:$0xff]
    %v555 = vld [vmem:[#allocation2 + $0xcc8] sm:$0xff]
    %v556 = vld [vmem:[#allocation2 + $0xcd0] sm:$0xff]
    %v557 = vld [vmem:[#allocation2 + $0xcd8] sm:$0xff]
    %v558 = vld [vmem:[#allocation2 + $0xce0] sm:$0xff]
    %v559 = vld [vmem:[#allocation2 + $0xce8] sm:$0xff]
    %v560 = vld [vmem:[#allocation2 + $0xcf0] sm:$0xff]
    %v561 = vld [vmem:[#allocation2 + $0xcf8] sm:$0xff]
    %v562 = vld [vmem:[#allocation2 + $0xd00] sm:$0xff]
    %v563 = vld [vmem:[#allocation2 + $0xd08] sm:$0xff]
    %v564 = vld [vmem:[#allocation2 + $0xd10] sm:$0xff]
    %v565 = vld [vmem:[#allocation2 + $0xd18] sm:$0xff]
    %v566 = vld [vmem:[#allocation2 + $0xd20] sm:$0xff]
    %v567 = vld [vmem:[#allocation2 + $0xd28] sm:$0xff]
    %v568 = vld [vmem:[#allocation2 + $0xd30] sm:$0xff]
    %v569 = vld [vmem:[#allocation2 + $0xd38] sm:$0xff]
    %v570 = vld [vmem:[#allocation2 + $0xd40] sm:$0xff]
    %v571 = vld [vmem:[#allocation2 + $0xd48] sm:$0xff]
    %v572 = vld [vmem:[#allocation2 + $0xd50] sm:$0xff]
    %v573 = vld [vmem:[#allocation2 + $0xd58] sm:$0xff]
    %v574 = vld [vmem:[#allocation2 + $0xd60] sm:$0xff]
    %v575 = vld [vmem:[#allocation2 + $0xd68] sm:$0xff]
    %v576 = vld [vmem:[#allocation2 + $0xd70] sm:$0xff]
    %v577 = vld [vmem:[#allocation2 + $0xd78] sm:$0xff]
    %v578 = vld [vmem:[#allocation2 + $0xd80] sm:$0xff]
    %v579 = vld [vmem:[#allocation2 + $0xd88] sm:$0xff]
    %v580 = vld [vmem:[#allocation2 + $0xd90] sm:$0xff]
    %v581 = vld [vmem:[#allocation2 + $0xd98] sm:$0xff]
    %v582 = vld [vmem:[#allocation2 + $0xda0] sm:$0xff]
    %v583 = vld [vmem:[#allocation2 + $0xda8] sm:$0xff]
    %v584 = vld [vmem:[#allocation2 + $0xdb0] sm:$0xff]
    %v585 = vld [vmem:[#allocation2 + $0xdb8] sm:$0xff]
    %v586 = vld [vmem:[#allocation2 + $0xdc0] sm:$0xff]
    %v587 = vld [vmem:[#allocation2 + $0xdc8] sm:$0xff]
    %v588 = vld [vmem:[#allocation2 + $0xdd0] sm:$0xff]
    %v589 = vld [vmem:[#allocation2 + $0xdd8] sm:$0xff]
    %v590 = vld [vmem:[#allocation2 + $0xde0] sm:$0xff]
    %v591 = vld [vmem:[#allocation2 + $0xde8] sm:$0xff]
    %v592 = vld [vmem:[#allocation2 + $0xdf0] sm:$0xff]
    %v593 = vld [vmem:[#allocation2 + $0xdf8] sm:$0xff]
    %v594 = vld [vmem:[#allocation2 + $0xe00] sm:$0xff]
    %v595 = vld [vmem:[#allocation2 + $0xe08] sm:$0xff]
    %v596 = vld [vmem:[#allocation2 + $0xe10] sm:$0xff]
    %v597 = vld [vmem:[#allocation2 + $0xe18] sm:$0xff]
    %v598 = vld [vmem:[#allocation2 + $0xe20] sm:$0xff]
    %v599 = vld [vmem:[#allocation2 + $0xe28] sm:$0xff]
    %v600 = vld [vmem:[#allocation2 + $0xe30] sm:$0xff]
    %v601 = vld [vmem:[#allocation2 + $0xe38] sm:$0xff]
    %v602 = vld [vmem:[#allocation2 + $0xe40] sm:$0xff]
    %v603 = vld [vmem:[#allocation2 + $0xe48] sm:$0xff]
    %v604 = vld [vmem:[#allocation2 + $0xe50] sm:$0xff]
    %v605 = vld [vmem:[#allocation2 + $0xe58] sm:$0xff]
    %v606 = vld [vmem:[#allocation2 + $0xe60] sm:$0xff]
    %v607 = vld [vmem:[#allocation2 + $0xe68] sm:$0xff]
    %v608 = vld [vmem:[#allocation2 + $0xe70] sm:$0xff]
    %v609 = vld [vmem:[#allocation2 + $0xe78] sm:$0xff]
    %v610 = vld [vmem:[#allocation2 + $0xe80] sm:$0xff]
    %v611 = vld [vmem:[#allocation2 + $0xe88] sm:$0xff]
    %v612 = vld [vmem:[#allocation2 + $0xe90] sm:$0xff]
    %v613 = vld [vmem:[#allocation2 + $0xe98] sm:$0xff]
    %v614 = vld [vmem:[#allocation2 + $0xea0] sm:$0xff]
    %v615 = vld [vmem:[#allocation2 + $0xea8] sm:$0xff]
    %v616 = vld [vmem:[#allocation2 + $0xeb0] sm:$0xff]
    %v617 = vld [vmem:[#allocation2 + $0xeb8] sm:$0xff]
    %v618 = vld [vmem:[#allocation2 + $0xec0] sm:$0xff]
    %v619 = vld [vmem:[#allocation2 + $0xec8] sm:$0xff]
    %v620 = vld [vmem:[#allocation2 + $0xed0] sm:$0xff]
    %v621 = vld [vmem:[#allocation2 + $0xed8] sm:$0xff]
    %v622 = vld [vmem:[#allocation2 + $0xee0] sm:$0xff]
    %v623 = vld [vmem:[#allocation2 + $0xee8] sm:$0xff]
    %v624 = vld [vmem:[#allocation2 + $0xef0] sm:$0xff]
    %v625 = vld [vmem:[#allocation2 + $0xef8] sm:$0xff]
    %v626 = vld [vmem:[#allocation2 + $0xf00] sm:$0xff]
    %v627 = vld [vmem:[#allocation2 + $0xf08] sm:$0xff]
    %v628 = vld [vmem:[#allocation2 + $0xf10] sm:$0xff]
    %v629 = vld [vmem:[#allocation2 + $0xf18] sm:$0xff]
    %v630 = vld [vmem:[#allocation2 + $0xf20] sm:$0xff]
    %v631 = vld [vmem:[#allocation2 + $0xf28] sm:$0xff]
    %v632 = vld [vmem:[#allocation2 + $0xf30] sm:$0xff]
    %v633 = vld [vmem:[#allocation2 + $0xf38] sm:$0xff]
    %v634 = vld [vmem:[#allocation2 + $0xf40] sm:$0xff]
    %v635 = vld [vmem:[#allocation2 + $0xf48] sm:$0xff]
    %v636 = vld [vmem:[#allocation2 + $0xf50] sm:$0xff]
    %v637 = vld [vmem:[#allocation2 + $0xf58] sm:$0xff]
    %v638 = vld [vmem:[#allocation2 + $0xf60] sm:$0xff]
    %v639 = vld [vmem:[#allocation2 + $0xf68] sm:$0xff]
    %v640 = vld [vmem:[#allocation2 + $0xf70] sm:$0xff]
    %v641 = vld [vmem:[#allocation2 + $0xf78] sm:$0xff]
    %v642 = vld [vmem:[#allocation2 + $0xf80] sm:$0xff]
    %v643 = vld [vmem:[#allocation2 + $0xf88] sm:$0xff]
    %v644 = vld [vmem:[#allocation2 + $0xf90] sm:$0xff]
    %v645 = vld [vmem:[#allocation2 + $0xf98] sm:$0xff]
    %v646 = vld [vmem:[#allocation2 + $0xfa0] sm:$0xff]
    %v647 = vld [vmem:[#allocation2 + $0xfa8] sm:$0xff]
    %v648 = vld [vmem:[#allocation2 + $0xfb0] sm:$0xff]
    %v649 = vld [vmem:[#allocation2 + $0xfb8] sm:$0xff]
    %v650 = vld [vmem:[#allocation2 + $0xfc0] sm:$0xff]
    %v651 = vld [vmem:[#allocation2 + $0xfc8] sm:$0xff]
    %v652 = vld [vmem:[#allocation2 + $0xfd0] sm:$0xff]
    %v653 = vld [vmem:[#allocation2 + $0xfd8] sm:$0xff]
    %v654 = vld [vmem:[#allocation2 + $0xfe0] sm:$0xff]
    %v655 = vld [vmem:[#allocation2 + $0xfe8] sm:$0xff]
    %v656 = vld [vmem:[#allocation2 + $0xff0] sm:$0xff]
    %v657 = vld [vmem:[#allocation2 + $0xff8] sm:$0xff]
    %v658 = vld [vmem:[#allocation2 + $0x1000] sm:$0xff]
    %v659 = vld [vmem:[#allocation2 + $0x1008] sm:$0xff]
    %v660 = vld [vmem:[#allocation2 + $0x1010] sm:$0xff]
    %v661 = vld [vmem:[#allocation2 + $0x1018] sm:$0xff]
    %v662 = vld [vmem:[#allocation2 + $0x1020] sm:$0xff]
    %v663 = vld [vmem:[#allocation2 + $0x1028] sm:$0xff]
    %v664 = vld [vmem:[#allocation2 + $0x1030] sm:$0xff]
    %v665 = vld [vmem:[#allocation2 + $0x1038] sm:$0xff]
    %v666 = vld [vmem:[#allocation2 + $0x1040] sm:$0xff]
    %v667 = vld [vmem:[#allocation2 + $0x1048] sm:$0xff]
    %v668 = vld [vmem:[#allocation2 + $0x1050] sm:$0xff]
    %v669 = vld [vmem:[#allocation2 + $0x1058] sm:$0xff]
    %v670 = vld [vmem:[#allocation2 + $0x1060] sm:$0xff]
    %v671 = vld [vmem:[#allocation2 + $0x1068] sm:$0xff]
    %v672 = vld [vmem:[#allocation2 + $0x1070] sm:$0xff]
    %v673 = vld [vmem:[#allocation2 + $0x1078] sm:$0xff]
    %v674 = vld [vmem:[#allocation2 + $0x1080] sm:$0xff]
    %v675 = vld [vmem:[#allocation2 + $0x1088] sm:$0xff]
    %v676 = vld [vmem:[#allocation2 + $0x1090] sm:$0xff]
    %v677 = vld [vmem:[#allocation2 + $0x1098] sm:$0xff]
    %v678 = vld [vmem:[#allocation2 + $0x10a0] sm:$0xff]
    %v679 = vld [vmem:[#allocation2 + $0x10a8] sm:$0xff]
    %v680 = vld [vmem:[#allocation2 + $0x10b0] sm:$0xff]
    %v681 = vld [vmem:[#allocation2 + $0x10b8] sm:$0xff]
    %v682 = vld [vmem:[#allocation2 + $0x10c0] sm:$0xff]
    %v683 = vld [vmem:[#allocation2 + $0x10c8] sm:$0xff]
    %v684 = vld [vmem:[#allocation2 + $0x10d0] sm:$0xff]
    %v685 = vld [vmem:[#allocation2 + $0x10d8] sm:$0xff]
    %v686 = vld [vmem:[#allocation2 + $0x10e0] sm:$0xff]
    %v687 = vld [vmem:[#allocation2 + $0x10e8] sm:$0xff]
    %v688 = vld [vmem:[#allocation2 + $0x10f0] sm:$0xff]
    %v689 = vld [vmem:[#allocation2 + $0x10f8] sm:$0xff]
    %v690 = vld [vmem:[#allocation2 + $0x1100] sm:$0xff]
    %v691 = vld [vmem:[#allocation2 + $0x1108] sm:$0xff]
    %v692 = vld [vmem:[#allocation2 + $0x1110] sm:$0xff]
    %v693 = vld [vmem:[#allocation2 + $0x1118] sm:$0xff]
    %v694 = vld [vmem:[#allocation2 + $0x1120] sm:$0xff]
    %v695 = vld [vmem:[#allocation2 + $0x1128] sm:$0xff]
    %v696 = vld [vmem:[#allocation2 + $0x1130] sm:$0xff]
    %v697 = vld [vmem:[#allocation2 + $0x1138] sm:$0xff]
    %v698 = vld [vmem:[#allocation2 + $0x1140] sm:$0xff]
    %v699 = vld [vmem:[#allocation2 + $0x1148] sm:$0xff]
    %v700 = vld [vmem:[#allocation2 + $0x1150] sm:$0xff]
    %v701 = vld [vmem:[#allocation2 + $0x1158] sm:$0xff]
    %v702 = vld [vmem:[#allocation2 + $0x1160] sm:$0xff]
    %v703 = vld [vmem:[#allocation2 + $0x1168] sm:$0xff]
    %v704 = vld [vmem:[#allocation2 + $0x1170] sm:$0xff]
    %v705 = vld [vmem:[#allocation2 + $0x1178] sm:$0xff]
    %v706 = vld [vmem:[#allocation2 + $0x1180] sm:$0xff]
    %v707 = vld [vmem:[#allocation2 + $0x1188] sm:$0xff]
    %v708 = vld [vmem:[#allocation2 + $0x1190] sm:$0xff]
    %v709 = vld [vmem:[#allocation2 + $0x1198] sm:$0xff]
    %v710 = vld [vmem:[#allocation2 + $0x11a0] sm:$0xff]
    %v711 = vld [vmem:[#allocation2 + $0x11a8] sm:$0xff]
    %v712 = vld [vmem:[#allocation2 + $0x11b0] sm:$0xff]
    %v713 = vld [vmem:[#allocation2 + $0x11b8] sm:$0xff]
    %v714 = vld [vmem:[#allocation2 + $0x11c0] sm:$0xff]
    %v715 = vld [vmem:[#allocation2 + $0x11c8] sm:$0xff]
    %v716 = vld [vmem:[#allocation2 + $0x11d0] sm:$0xff]
    %v717 = vld [vmem:[#allocation2 + $0x11d8] sm:$0xff]
    %v718 = vld [vmem:[#allocation2 + $0x11e0] sm:$0xff]
    %v719 = vld [vmem:[#allocation2 + $0x11e8] sm:$0xff]
    %v720 = vld [vmem:[#allocation2 + $0x11f0] sm:$0xff]
    %v721 = vld [vmem:[#allocation2 + $0x11f8] sm:$0xff]
    %v722 = vld [vmem:[#allocation2 + $0x1200] sm:$0xff]
    %v723 = vld [vmem:[#allocation2 + $0x1208] sm:$0xff]
    %v724 = vld [vmem:[#allocation2 + $0x1210] sm:$0xff]
    %v725 = vld [vmem:[#allocation2 + $0x1218] sm:$0xff]
    %v726 = vld [vmem:[#allocation2 + $0x1220] sm:$0xff]
    %v727 = vld [vmem:[#allocation2 + $0x1228] sm:$0xff]
    %v728 = vld [vmem:[#allocation2 + $0x1230] sm:$0xff]
    %v729 = vld [vmem:[#allocation2 + $0x1238] sm:$0xff]
    %v730 = vld [vmem:[#allocation2 + $0x1240] sm:$0xff]
    %v731 = vld [vmem:[#allocation2 + $0x1248] sm:$0xff]
    %v732 = vld [vmem:[#allocation2 + $0x1250] sm:$0xff]
    %v733 = vld [vmem:[#allocation2 + $0x1258] sm:$0xff]
    %v734 = vld [vmem:[#allocation2 + $0x1260] sm:$0xff]
    %v735 = vld [vmem:[#allocation2 + $0x1268] sm:$0xff]
    %v736 = vld [vmem:[#allocation2 + $0x1270] sm:$0xff]
    %v737 = vld [vmem:[#allocation2 + $0x1278] sm:$0xff]
    %v738 = vld [vmem:[#allocation2 + $0x1280] sm:$0xff]
    %v739 = vld [vmem:[#allocation2 + $0x1288] sm:$0xff]
    %v740 = vld [vmem:[#allocation2 + $0x1290] sm:$0xff]
    %v741 = vld [vmem:[#allocation2 + $0x1298] sm:$0xff]
    %v742 = vld [vmem:[#allocation2 + $0x12a0] sm:$0xff]
    %v743 = vld [vmem:[#allocation2 + $0x12a8] sm:$0xff]
    %v744 = vld [vmem:[#allocation2 + $0x12b0] sm:$0xff]
    %v745 = vld [vmem:[#allocation2 + $0x12b8] sm:$0xff]
    %v746 = vld [vmem:[#allocation2 + $0x12c0] sm:$0xff]
    %v747 = vld [vmem:[#allocation2 + $0x12c8] sm:$0xff]
    %v748 = vld [vmem:[#allocation2 + $0x12d0] sm:$0xff]
    %v749 = vld [vmem:[#allocation2 + $0x12d8] sm:$0xff]
    %v750 = vld [vmem:[#allocation2 + $0x12e0] sm:$0xff]
    %v751 = vld [vmem:[#allocation2 + $0x12e8] sm:$0xff]
    %v752 = vld [vmem:[#allocation2 + $0x12f0] sm:$0xff]
    %v753 = vld [vmem:[#allocation2 + $0x12f8] sm:$0xff]
    %v754 = vld [vmem:[#allocation2 + $0x1300] sm:$0xff]
    %v755 = vld [vmem:[#allocation2 + $0x1308] sm:$0xff]
    %v756 = vld [vmem:[#allocation2 + $0x1310] sm:$0xff]
    %v757 = vld [vmem:[#allocation2 + $0x1318] sm:$0xff]
    %v758 = vld [vmem:[#allocation2 + $0x1320] sm:$0xff]
    %v759 = vld [vmem:[#allocation2 + $0x1328] sm:$0xff]
    %v760 = vld [vmem:[#allocation2 + $0x1330] sm:$0xff]
    %v761 = vld [vmem:[#allocation2 + $0x1338] sm:$0xff]
    %v762 = vld [vmem:[#allocation2 + $0x1340] sm:$0xff]
    %v763 = vld [vmem:[#allocation2 + $0x1348] sm:$0xff]
    %v764 = vld [vmem:[#allocation2 + $0x1350] sm:$0xff]
    %v765 = vld [vmem:[#allocation2 + $0x1358] sm:$0xff]
    %v766 = vld [vmem:[#allocation2 + $0x1360] sm:$0xff]
    %v767 = vld [vmem:[#allocation2 + $0x1368] sm:$0xff]
    %v768 = vld [vmem:[#allocation2 + $0x1370] sm:$0xff]
    %v769 = vld [vmem:[#allocation2 + $0x1378] sm:$0xff]
    %v770 = vld [vmem:[#allocation2 + $0x1380] sm:$0xff]
    %v771 = vld [vmem:[#allocation2 + $0x1388] sm:$0xff]
    %v772 = vld [vmem:[#allocation2 + $0x1390] sm:$0xff]
    %v773 = vld [vmem:[#allocation2 + $0x1398] sm:$0xff]
    %v774 = vld [vmem:[#allocation2 + $0x13a0] sm:$0xff]
    %v775 = vld [vmem:[#allocation2 + $0x13a8] sm:$0xff]
    %v776 = vld [vmem:[#allocation2 + $0x13b0] sm:$0xff]
    %v777 = vld [vmem:[#allocation2 + $0x13b8] sm:$0xff]
    %v778 = vld [vmem:[#allocation2 + $0x13c0] sm:$0xff]
    %v779 = vld [vmem:[#allocation2 + $0x13c8] sm:$0xff]
    %v780 = vld [vmem:[#allocation2 + $0x13d0] sm:$0xff]
    %v781 = vld [vmem:[#allocation2 + $0x13d8] sm:$0xff]
    %v782 = vld [vmem:[#allocation2 + $0x13e0] sm:$0xff]
    %v783 = vld [vmem:[#allocation2 + $0x13e8] sm:$0xff]
    %v784 = vld [vmem:[#allocation2 + $0x13f0] sm:$0xff]
    %v785 = vld [vmem:[#allocation2 + $0x13f8] sm:$0xff]
    %v786 = vld [vmem:[#allocation2 + $0x1400] sm:$0xff]
    %v787 = vld [vmem:[#allocation2 + $0x1408] sm:$0xff]
    %v788 = vld [vmem:[#allocation2 + $0x1410] sm:$0xff]
    %v789 = vld [vmem:[#allocation2 + $0x1418] sm:$0xff]
    %v790 = vld [vmem:[#allocation2 + $0x1420] sm:$0xff]
    %v791 = vld [vmem:[#allocation2 + $0x1428] sm:$0xff]
    %v792 = vld [vmem:[#allocation2 + $0x1430] sm:$0xff]
    %v793 = vld [vmem:[#allocation2 + $0x1438] sm:$0xff]
    %v794 = vld [vmem:[#allocation2 + $0x1440] sm:$0xff]
    %v795 = vld [vmem:[#allocation2 + $0x1448] sm:$0xff]
    %v796 = vld [vmem:[#allocation2 + $0x1450] sm:$0xff]
    %v797 = vld [vmem:[#allocation2 + $0x1458] sm:$0xff]
    %v798 = vld [vmem:[#allocation2 + $0x1460] sm:$0xff]
    %v799 = vld [vmem:[#allocation2 + $0x1468] sm:$0xff]
    %v800 = vld [vmem:[#allocation2 + $0x1470] sm:$0xff]
    %v801 = vld [vmem:[#allocation2 + $0x1478] sm:$0xff]
    %v802 = vld [vmem:[#allocation2 + $0x1480] sm:$0xff]
    %v803 = vld [vmem:[#allocation2 + $0x1488] sm:$0xff]
    %v804 = vld [vmem:[#allocation2 + $0x1490] sm:$0xff]
    %v805 = vld [vmem:[#allocation2 + $0x1498] sm:$0xff]
    %v806 = vld [vmem:[#allocation2 + $0x14a0] sm:$0xff]
    %v807 = vld [vmem:[#allocation2 + $0x14a8] sm:$0xff]
    %v808 = vld [vmem:[#allocation2 + $0x14b0] sm:$0xff]
    %v809 = vld [vmem:[#allocation2 + $0x14b8] sm:$0xff]
    %v810 = vld [vmem:[#allocation2 + $0x14c0] sm:$0xff]
    %v811 = vld [vmem:[#allocation2 + $0x14c8] sm:$0xff]
    %v812 = vld [vmem:[#allocation2 + $0x14d0] sm:$0xff]
    %v813 = vld [vmem:[#allocation2 + $0x14d8] sm:$0xff]
    %v814 = vld [vmem:[#allocation2 + $0x14e0] sm:$0xff]
    %v815 = vld [vmem:[#allocation2 + $0x14e8] sm:$0xff]
    %v816 = vld [vmem:[#allocation2 + $0x14f0] sm:$0xff]
    %v817 = vld [vmem:[#allocation2 + $0x14f8] sm:$0xff]
    %v818 = vld [vmem:[#allocation2 + $0x1500] sm:$0xff]
    %v819 = vld [vmem:[#allocation2 + $0x1508] sm:$0xff]
    %v820 = vld [vmem:[#allocation2 + $0x1510] sm:$0xff]
    %v821 = vld [vmem:[#allocation2 + $0x1518] sm:$0xff]
    %v822 = vld [vmem:[#allocation2 + $0x1520] sm:$0xff]
    %v823 = vld [vmem:[#allocation2 + $0x1528] sm:$0xff]
    %v824 = vld [vmem:[#allocation2 + $0x1530] sm:$0xff]
    %v825 = vld [vmem:[#allocation2 + $0x1538] sm:$0xff]
    %v826 = vld [vmem:[#allocation2 + $0x1540] sm:$0xff]
    %v827 = vld [vmem:[#allocation2 + $0x1548] sm:$0xff]
    %v828 = vld [vmem:[#allocation2 + $0x1550] sm:$0xff]
    %v829 = vld [vmem:[#allocation2 + $0x1558] sm:$0xff]
    %v830 = vld [vmem:[#allocation2 + $0x1560] sm:$0xff]
    %v831 = vld [vmem:[#allocation2 + $0x1568] sm:$0xff]
    %v832 = vld [vmem:[#allocation2 + $0x1570] sm:$0xff]
    %v833 = vld [vmem:[#allocation2 + $0x1578] sm:$0xff]
    %v834 = vld [vmem:[#allocation2 + $0x1580] sm:$0xff]
    %v835 = vld [vmem:[#allocation2 + $0x1588] sm:$0xff]
    %v836 = vld [vmem:[#allocation2 + $0x1590] sm:$0xff]
    %v837 = vld [vmem:[#allocation2 + $0x1598] sm:$0xff]
    %v838 = vld [vmem:[#allocation2 + $0x15a0] sm:$0xff]
    %v839 = vld [vmem:[#allocation2 + $0x15a8] sm:$0xff]
    %v840 = vld [vmem:[#allocation2 + $0x15b0] sm:$0xff]
    %v841 = vld [vmem:[#allocation2 + $0x15b8] sm:$0xff]
    %v842 = vld [vmem:[#allocation2 + $0x15c0] sm:$0xff]
    %v843 = vld [vmem:[#allocation2 + $0x15c8] sm:$0xff]
    %v844 = vld [vmem:[#allocation2 + $0x15d0] sm:$0xff]
    %v845 = vld [vmem:[#allocation2 + $0x15d8] sm:$0xff]
    %v846 = vld [vmem:[#allocation2 + $0x15e0] sm:$0xff]
    %v847 = vld [vmem:[#allocation2 + $0x15e8] sm:$0xff]
    %v848 = vld [vmem:[#allocation2 + $0x15f0] sm:$0xff]
    %v849 = vld [vmem:[#allocation2 + $0x15f8] sm:$0xff]
    %v850 = vld [vmem:[#allocation2 + $0x1600] sm:$0xff]
    %v851 = vld [vmem:[#allocation2 + $0x1608] sm:$0xff]
    %v852 = vld [vmem:[#allocation2 + $0x1610] sm:$0xff]
    %v853 = vld [vmem:[#allocation2 + $0x1618] sm:$0xff]
    %v854 = vld [vmem:[#allocation2 + $0x1620] sm:$0xff]
    %v855 = vld [vmem:[#allocation2 + $0x1628] sm:$0xff]
    %v856 = vld [vmem:[#allocation2 + $0x1630] sm:$0xff]
    %v857 = vld [vmem:[#allocation2 + $0x1638] sm:$0xff]
    %v858 = vld [vmem:[#allocation2 + $0x1640] sm:$0xff]
    %v859 = vld [vmem:[#allocation2 + $0x1648] sm:$0xff]
    %v860 = vld [vmem:[#allocation2 + $0x1650] sm:$0xff]
    %v861 = vld [vmem:[#allocation2 + $0x1658] sm:$0xff]
    %v862 = vld [vmem:[#allocation2 + $0x1660] sm:$0xff]
    %v863 = vld [vmem:[#allocation2 + $0x1668] sm:$0xff]
    %v864 = vld [vmem:[#allocation2 + $0x1670] sm:$0xff]
    %v865 = vld [vmem:[#allocation2 + $0x1678] sm:$0xff]
    %v866 = vld [vmem:[#allocation2 + $0x1680] sm:$0xff]
    %v867 = vld [vmem:[#allocation2 + $0x1688] sm:$0xff]
    %v868 = vld [vmem:[#allocation2 + $0x1690] sm:$0xff]
    %v869 = vld [vmem:[#allocation2 + $0x1698] sm:$0xff]
    %v870 = vld [vmem:[#allocation2 + $0x16a0] sm:$0xff]
    %v871 = vld [vmem:[#allocation2 + $0x16a8] sm:$0xff]
    %v872 = vld [vmem:[#allocation2 + $0x16b0] sm:$0xff]
    %v873 = vld [vmem:[#allocation2 + $0x16b8] sm:$0xff]
    %v874 = vld [vmem:[#allocation2 + $0x16c0] sm:$0xff]
    %v875 = vld [vmem:[#allocation2 + $0x16c8] sm:$0xff]
    %v876 = vld [vmem:[#allocation2 + $0x16d0] sm:$0xff]
    %v877 = vld [vmem:[#allocation2 + $0x16d8] sm:$0xff]
    %v878 = vld [vmem:[#allocation2 + $0x16e0] sm:$0xff]
    %v879 = vld [vmem:[#allocation2 + $0x16e8] sm:$0xff]
    %v880 = vld [vmem:[#allocation2 + $0x16f0] sm:$0xff]
    %v881 = vld [vmem:[#allocation2 + $0x16f8] sm:$0xff]
    %v882 = vld [vmem:[#allocation2 + $0x1700] sm:$0xff]
    %v883 = vld [vmem:[#allocation2 + $0x1708] sm:$0xff]
    %v884 = vld [vmem:[#allocation2 + $0x1710] sm:$0xff]
    %v885 = vld [vmem:[#allocation2 + $0x1718] sm:$0xff]
    %v886 = vld [vmem:[#allocation2 + $0x1720] sm:$0xff]
    %v887 = vld [vmem:[#allocation2 + $0x1728] sm:$0xff]
    %v888 = vld [vmem:[#allocation2 + $0x1730] sm:$0xff]
    %v889 = vld [vmem:[#allocation2 + $0x1738] sm:$0xff]
    %v890 = vld [vmem:[#allocation2 + $0x1740] sm:$0xff]
    %v891 = vld [vmem:[#allocation2 + $0x1748] sm:$0xff]
    %v892 = vld [vmem:[#allocation2 + $0x1750] sm:$0xff]
    %v893 = vld [vmem:[#allocation2 + $0x1758] sm:$0xff]
    %v894 = vld [vmem:[#allocation2 + $0x1760] sm:$0xff]
    %v895 = vld [vmem:[#allocation2 + $0x1768] sm:$0xff]
    %v896 = vld [vmem:[#allocation2 + $0x1770] sm:$0xff]
    %v897 = vld [vmem:[#allocation2 + $0x1778] sm:$0xff]
    %v898 = vld [vmem:[#allocation2 + $0x1780] sm:$0xff]
    %v899 = vld [vmem:[#allocation2 + $0x1788] sm:$0xff]
    %v900 = vld [vmem:[#allocation2 + $0x1790] sm:$0xff]
    %v901 = vld [vmem:[#allocation2 + $0x1798] sm:$0xff]
    %v902 = vld [vmem:[#allocation2 + $0x17a0] sm:$0xff]
    %v903 = vld [vmem:[#allocation2 + $0x17a8] sm:$0xff]
    %v904 = vld [vmem:[#allocation2 + $0x17b0] sm:$0xff]
    %v905 = vld [vmem:[#allocation2 + $0x17b8] sm:$0xff]
    %v906 = vld [vmem:[#allocation2 + $0x17c0] sm:$0xff]
    %v907 = vld [vmem:[#allocation2 + $0x17c8] sm:$0xff]
    %v908 = vld [vmem:[#allocation2 + $0x17d0] sm:$0xff]
    %v909 = vld [vmem:[#allocation2 + $0x17d8] sm:$0xff]
    %v910 = vld [vmem:[#allocation2 + $0x17e0] sm:$0xff]
    %v911 = vld [vmem:[#allocation2 + $0x17e8] sm:$0xff]
    %v912 = vld [vmem:[#allocation2 + $0x17f0] sm:$0xff]
    %v913 = vld [vmem:[#allocation2 + $0x17f8] sm:$0xff]
    %v914 = vld [vmem:[#allocation2 + $0x1800] sm:$0xff]
    %v915 = vld [vmem:[#allocation2 + $0x1808] sm:$0xff]
    %v916 = vld [vmem:[#allocation2 + $0x1810] sm:$0xff]
    %v917 = vld [vmem:[#allocation2 + $0x1818] sm:$0xff]
    %v918 = vld [vmem:[#allocation2 + $0x1820] sm:$0xff]
    %v919 = vld [vmem:[#allocation2 + $0x1828] sm:$0xff]
    %v920 = vld [vmem:[#allocation2 + $0x1830] sm:$0xff]
    %v921 = vld [vmem:[#allocation2 + $0x1838] sm:$0xff]
    %v922 = vld [vmem:[#allocation2 + $0x1840] sm:$0xff]
    %v923 = vld [vmem:[#allocation2 + $0x1848] sm:$0xff]
    %v924 = vld [vmem:[#allocation2 + $0x1850] sm:$0xff]
    %v925 = vld [vmem:[#allocation2 + $0x1858] sm:$0xff]
    %v926 = vld [vmem:[#allocation2 + $0x1860] sm:$0xff]
    %v927 = vld [vmem:[#allocation2 + $0x1868] sm:$0xff]
    %v928 = vld [vmem:[#allocation2 + $0x1870] sm:$0xff]
    %v929 = vld [vmem:[#allocation2 + $0x1878] sm:$0xff]
    %v930 = vld [vmem:[#allocation2 + $0x1880] sm:$0xff]
    %v931 = vld [vmem:[#allocation2 + $0x1888] sm:$0xff]
    %v932 = vld [vmem:[#allocation2 + $0x1890] sm:$0xff]
    %v933 = vld [vmem:[#allocation2 + $0x1898] sm:$0xff]
    %v934 = vld [vmem:[#allocation2 + $0x18a0] sm:$0xff]
    %v935 = vld [vmem:[#allocation2 + $0x18a8] sm:$0xff]
    %v936 = vld [vmem:[#allocation2 + $0x18b0] sm:$0xff]
    %v937 = vld [vmem:[#allocation2 + $0x18b8] sm:$0xff]
    %v938 = vld [vmem:[#allocation2 + $0x18c0] sm:$0xff]
    %v939 = vld [vmem:[#allocation2 + $0x18c8] sm:$0xff]
    %v940 = vld [vmem:[#allocation2 + $0x18d0] sm:$0xff]
    %v941 = vld [vmem:[#allocation2 + $0x18d8] sm:$0xff]
    %v942 = vld [vmem:[#allocation2 + $0x18e0] sm:$0xff]
    %v943 = vld [vmem:[#allocation2 + $0x18e8] sm:$0xff]
    %v944 = vld [vmem:[#allocation2 + $0x18f0] sm:$0xff]
    %v945 = vld [vmem:[#allocation2 + $0x18f8] sm:$0xff]
    %v946 = vld [vmem:[#allocation2 + $0x1900] sm:$0xff]
    %v947 = vld [vmem:[#allocation2 + $0x1908] sm:$0xff]
    %v948 = vld [vmem:[#allocation2 + $0x1910] sm:$0xff]
    %v949 = vld [vmem:[#allocation2 + $0x1918] sm:$0xff]
    %v950 = vld [vmem:[#allocation2 + $0x1920] sm:$0xff]
    %v951 = vld [vmem:[#allocation2 + $0x1928] sm:$0xff]
    %v952 = vld [vmem:[#allocation2 + $0x1930] sm:$0xff]
    %v953 = vld [vmem:[#allocation2 + $0x1938] sm:$0xff]
    %v954 = vld [vmem:[#allocation2 + $0x1940] sm:$0xff]
    %v955 = vld [vmem:[#allocation2 + $0x1948] sm:$0xff]
    %v956 = vld [vmem:[#allocation2 + $0x1950] sm:$0xff]
    %v957 = vld [vmem:[#allocation2 + $0x1958] sm:$0xff]
    %v958 = vld [vmem:[#allocation2 + $0x1960] sm:$0xff]
    %v959 = vld [vmem:[#allocation2 + $0x1968] sm:$0xff]
    %v960 = vld [vmem:[#allocation2 + $0x1970] sm:$0xff]
    %v961 = vld [vmem:[#allocation2 + $0x1978] sm:$0xff]
    %v962 = vld [vmem:[#allocation2 + $0x1980] sm:$0xff]
    %v963 = vld [vmem:[#allocation2 + $0x1988] sm:$0xff]
    %v964 = vld [vmem:[#allocation2 + $0x1990] sm:$0xff]
    %v965 = vld [vmem:[#allocation2 + $0x1998] sm:$0xff]
    %v966 = vld [vmem:[#allocation2 + $0x19a0] sm:$0xff]
    %v967 = vld [vmem:[#allocation2 + $0x19a8] sm:$0xff]
    %v968 = vld [vmem:[#allocation2 + $0x19b0] sm:$0xff]
    %v969 = vld [vmem:[#allocation2 + $0x19b8] sm:$0xff]
    %v970 = vld [vmem:[#allocation2 + $0x19c0] sm:$0xff]
    %v971 = vld [vmem:[#allocation2 + $0x19c8] sm:$0xff]
    %v972 = vld [vmem:[#allocation2 + $0x19d0] sm:$0xff]
    %v973 = vld [vmem:[#allocation2 + $0x19d8] sm:$0xff]
    %v974 = vld [vmem:[#allocation2 + $0x19e0] sm:$0xff]
    %v975 = vld [vmem:[#allocation2 + $0x19e8] sm:$0xff]
    %v976 = vld [vmem:[#allocation2 + $0x19f0] sm:$0xff]
    %v977 = vld [vmem:[#allocation2 + $0x19f8] sm:$0xff]
    %v978 = vld [vmem:[#allocation2 + $0x1a00] sm:$0xff]
    %v979 = vld [vmem:[#allocation2 + $0x1a08] sm:$0xff]
    %v980 = vld [vmem:[#allocation2 + $0x1a10] sm:$0xff]
    %v981 = vld [vmem:[#allocation2 + $0x1a18] sm:$0xff]
    %v982 = vld [vmem:[#allocation2 + $0x1a20] sm:$0xff]
    %v983 = vld [vmem:[#allocation2 + $0x1a28] sm:$0xff]
    %v984 = vld [vmem:[#allocation2 + $0x1a30] sm:$0xff]
    %v985 = vld [vmem:[#allocation2 + $0x1a38] sm:$0xff]
    %v986 = vld [vmem:[#allocation2 + $0x1a40] sm:$0xff]
    %v987 = vld [vmem:[#allocation2 + $0x1a48] sm:$0xff]
    %v988 = vld [vmem:[#allocation2 + $0x1a50] sm:$0xff]
    %v989 = vld [vmem:[#allocation2 + $0x1a58] sm:$0xff]
    %v990 = vld [vmem:[#allocation2 + $0x1a60] sm:$0xff]
    %v991 = vld [vmem:[#allocation2 + $0x1a68] sm:$0xff]
    %v992 = vld [vmem:[#allocation2 + $0x1a70] sm:$0xff]
    %v993 = vld [vmem:[#allocation2 + $0x1a78] sm:$0xff]
    %v994 = vld [vmem:[#allocation2 + $0x1a80] sm:$0xff]
    %v995 = vld [vmem:[#allocation2 + $0x1a88] sm:$0xff]
    %v996 = vld [vmem:[#allocation2 + $0x1a90] sm:$0xff]
    %v997 = vld [vmem:[#allocation2 + $0x1a98] sm:$0xff]
    %v998 = vld [vmem:[#allocation2 + $0x1aa0] sm:$0xff]
    %v999 = vld [vmem:[#allocation2 + $0x1aa8] sm:$0xff]
    %v1000 = vld [vmem:[#allocation2 + $0x1ab0] sm:$0xff]
    %v1001 = vld [vmem:[#allocation2 + $0x1ab8] sm:$0xff]
    %v1002 = vld [vmem:[#allocation2 + $0x1ac0] sm:$0xff]
    %v1003 = vld [vmem:[#allocation2 + $0x1ac8] sm:$0xff]
    %v1004 = vld [vmem:[#allocation2 + $0x1ad0] sm:$0xff]
    %v1005 = vld [vmem:[#allocation2 + $0x1ad8] sm:$0xff]
    %v1006 = vld [vmem:[#allocation2 + $0x1ae0] sm:$0xff]
    %v1007 = vld [vmem:[#allocation2 + $0x1ae8] sm:$0xff]
    %v1008 = vld [vmem:[#allocation2 + $0x1af0] sm:$0xff]
    %v1009 = vld [vmem:[#allocation2 + $0x1af8] sm:$0xff]
    %v1010 = vld [vmem:[#allocation2 + $0x1b00] sm:$0xff]
    %v1011 = vld [vmem:[#allocation2 + $0x1b08] sm:$0xff]
    %v1012 = vld [vmem:[#allocation2 + $0x1b10] sm:$0xff]
    %v1013 = vld [vmem:[#allocation2 + $0x1b18] sm:$0xff]
    %v1014 = vld [vmem:[#allocation2 + $0x1b20] sm:$0xff]
    %v1015 = vld [vmem:[#allocation2 + $0x1b28] sm:$0xff]
    %v1016 = vld [vmem:[#allocation2 + $0x1b30] sm:$0xff]
    %v1017 = vld [vmem:[#allocation2 + $0x1b38] sm:$0xff]
    %v1018 = vld [vmem:[#allocation2 + $0x1b40] sm:$0xff]
    %v1019 = vld [vmem:[#allocation2 + $0x1b48] sm:$0xff]
    %v1020 = vld [vmem:[#allocation2 + $0x1b50] sm:$0xff]
    %v1021 = vld [vmem:[#allocation2 + $0x1b58] sm:$0xff]
    %v1022 = vld [vmem:[#allocation2 + $0x1b60] sm:$0xff]
    %v1023 = vld [vmem:[#allocation2 + $0x1b68] sm:$0xff]
    %v1024 = vld [vmem:[#allocation2 + $0x1b70] sm:$0xff]
    %v1025 = vld [vmem:[#allocation2 + $0x1b78] sm:$0xff]
    %v1026 = vld [vmem:[#allocation2 + $0x1b80] sm:$0xff]
    %v1027 = vld [vmem:[#allocation2 + $0x1b88] sm:$0xff]
    %v1028 = vld [vmem:[#allocation2 + $0x1b90] sm:$0xff]
    %v1029 = vld [vmem:[#allocation2 + $0x1b98] sm:$0xff]
    %v1030 = vld [vmem:[#allocation2 + $0x1ba0] sm:$0xff]
    %v1031 = vld [vmem:[#allocation2 + $0x1ba8] sm:$0xff]
    %v1032 = vld [vmem:[#allocation2 + $0x1bb0] sm:$0xff]
    %v1033 = vld [vmem:[#allocation2 + $0x1bb8] sm:$0xff]
    %v1034 = vld [vmem:[#allocation2 + $0x1bc0] sm:$0xff]
    %v1035 = vld [vmem:[#allocation2 + $0x1bc8] sm:$0xff]
    %v1036 = vld [vmem:[#allocation2 + $0x1bd0] sm:$0xff]
    %v1037 = vld [vmem:[#allocation2 + $0x1bd8] sm:$0xff]
    %v1038 = vld [vmem:[#allocation2 + $0x1be0] sm:$0xff]
    %v1039 = vld [vmem:[#allocation2 + $0x1be8] sm:$0xff]
    %v1040 = vld [vmem:[#allocation2 + $0x1bf0] sm:$0xff]
    %v1041 = vld [vmem:[#allocation2 + $0x1bf8] sm:$0xff]
    %v1042 = vld [vmem:[#allocation2 + $0x1c00] sm:$0xff]
    %v1043 = vld [vmem:[#allocation2 + $0x1c08] sm:$0xff]
    %v1044 = vld [vmem:[#allocation2 + $0x1c10] sm:$0xff]
    %v1045 = vld [vmem:[#allocation2 + $0x1c18] sm:$0xff]
    %v1046 = vld [vmem:[#allocation2 + $0x1c20] sm:$0xff]
    %v1047 = vld [vmem:[#allocation2 + $0x1c28] sm:$0xff]
    %v1048 = vld [vmem:[#allocation2 + $0x1c30] sm:$0xff]
    %v1049 = vld [vmem:[#allocation2 + $0x1c38] sm:$0xff]
    %v1050 = vld [vmem:[#allocation2 + $0x1c40] sm:$0xff]
    %v1051 = vld [vmem:[#allocation2 + $0x1c48] sm:$0xff]
    %v1052 = vld [vmem:[#allocation2 + $0x1c50] sm:$0xff]
    %v1053 = vld [vmem:[#allocation2 + $0x1c58] sm:$0xff]
    %v1054 = vld [vmem:[#allocation2 + $0x1c60] sm:$0xff]
    %v1055 = vld [vmem:[#allocation2 + $0x1c68] sm:$0xff]
    %v1056 = vld [vmem:[#allocation2 + $0x1c70] sm:$0xff]
    %v1057 = vld [vmem:[#allocation2 + $0x1c78] sm:$0xff]
    %v1058 = vld [vmem:[#allocation2 + $0x1c80] sm:$0xff]
    %v1059 = vld [vmem:[#allocation2 + $0x1c88] sm:$0xff]
    %v1060 = vld [vmem:[#allocation2 + $0x1c90] sm:$0xff]
    %v1061 = vld [vmem:[#allocation2 + $0x1c98] sm:$0xff]
    %v1062 = vld [vmem:[#allocation2 + $0x1ca0] sm:$0xff]
    %v1063 = vld [vmem:[#allocation2 + $0x1ca8] sm:$0xff]
    %v1064 = vld [vmem:[#allocation2 + $0x1cb0] sm:$0xff]
    %v1065 = vld [vmem:[#allocation2 + $0x1cb8] sm:$0xff]
    %v1066 = vld [vmem:[#allocation2 + $0x1cc0] sm:$0xff]
    %v1067 = vld [vmem:[#allocation2 + $0x1cc8] sm:$0xff]
    %v1068 = vld [vmem:[#allocation2 + $0x1cd0] sm:$0xff]
    %v1069 = vld [vmem:[#allocation2 + $0x1cd8] sm:$0xff]
    %v1070 = vld [vmem:[#allocation2 + $0x1ce0] sm:$0xff]
    %v1071 = vld [vmem:[#allocation2 + $0x1ce8] sm:$0xff]
    %v1072 = vld [vmem:[#allocation2 + $0x1cf0] sm:$0xff]
    %v1073 = vld [vmem:[#allocation2 + $0x1cf8] sm:$0xff]
    %v1074 = vld [vmem:[#allocation2 + $0x1d00] sm:$0xff]
    %v1075 = vld [vmem:[#allocation2 + $0x1d08] sm:$0xff]
    %v1076 = vld [vmem:[#allocation2 + $0x1d10] sm:$0xff]
    %v1077 = vld [vmem:[#allocation2 + $0x1d18] sm:$0xff]
    %v1078 = vld [vmem:[#allocation2 + $0x1d20] sm:$0xff]
    %v1079 = vld [vmem:[#allocation2 + $0x1d28] sm:$0xff]
    %v1080 = vld [vmem:[#allocation2 + $0x1d30] sm:$0xff]
    %v1081 = vld [vmem:[#allocation2 + $0x1d38] sm:$0xff]
    %v1082 = vld [vmem:[#allocation2 + $0x1d40] sm:$0xff]
    %v1083 = vld [vmem:[#allocation2 + $0x1d48] sm:$0xff]
    %v1084 = vld [vmem:[#allocation2 + $0x1d50] sm:$0xff]
    %v1085 = vld [vmem:[#allocation2 + $0x1d58] sm:$0xff]
    %v1086 = vld [vmem:[#allocation2 + $0x1d60] sm:$0xff]
    %v1087 = vld [vmem:[#allocation2 + $0x1d68] sm:$0xff]
    %v1088 = vld [vmem:[#allocation2 + $0x1d70] sm:$0xff]
    %v1089 = vld [vmem:[#allocation2 + $0x1d78] sm:$0xff]
    %v1090 = vld [vmem:[#allocation2 + $0x1d80] sm:$0xff]
    %v1091 = vld [vmem:[#allocation2 + $0x1d88] sm:$0xff]
    %v1092 = vld [vmem:[#allocation2 + $0x1d90] sm:$0xff]
    %v1093 = vld [vmem:[#allocation2 + $0x1d98] sm:$0xff]
    %v1094 = vld [vmem:[#allocation2 + $0x1da0] sm:$0xff]
    %v1095 = vld [vmem:[#allocation2 + $0x1da8] sm:$0xff]
    %v1096 = vld [vmem:[#allocation2 + $0x1db0] sm:$0xff]
    %v1097 = vld [vmem:[#allocation2 + $0x1db8] sm:$0xff]
    %v1098 = vld [vmem:[#allocation2 + $0x1dc0] sm:$0xff]
    %v1099 = vld [vmem:[#allocation2 + $0x1dc8] sm:$0xff]
    %v1100 = vld [vmem:[#allocation2 + $0x1dd0] sm:$0xff]
    %v1101 = vld [vmem:[#allocation2 + $0x1dd8] sm:$0xff]
    %v1102 = vld [vmem:[#allocation2 + $0x1de0] sm:$0xff]
    %v1103 = vld [vmem:[#allocation2 + $0x1de8] sm:$0xff]
    %v1104 = vld [vmem:[#allocation2 + $0x1df0] sm:$0xff]
    %v1105 = vld [vmem:[#allocation2 + $0x1df8] sm:$0xff]
    %v1106 = vld [vmem:[#allocation2 + $0x1e00] sm:$0xff]
    %v1107 = vld [vmem:[#allocation2 + $0x1e08] sm:$0xff]
    %v1108 = vld [vmem:[#allocation2 + $0x1e10] sm:$0xff]
    %v1109 = vld [vmem:[#allocation2 + $0x1e18] sm:$0xff]
    %v1110 = vld [vmem:[#allocation2 + $0x1e20] sm:$0xff]
    %v1111 = vld [vmem:[#allocation2 + $0x1e28] sm:$0xff]
    %v1112 = vld [vmem:[#allocation2 + $0x1e30] sm:$0xff]
    %v1113 = vld [vmem:[#allocation2 + $0x1e38] sm:$0xff]
    %v1114 = vld [vmem:[#allocation2 + $0x1e40] sm:$0xff]
    %v1115 = vld [vmem:[#allocation2 + $0x1e48] sm:$0xff]
    %v1116 = vld [vmem:[#allocation2 + $0x1e50] sm:$0xff]
    %v1117 = vld [vmem:[#allocation2 + $0x1e58] sm:$0xff]
    %v1118 = vld [vmem:[#allocation2 + $0x1e60] sm:$0xff]
    %v1119 = vld [vmem:[#allocation2 + $0x1e68] sm:$0xff]
    %v1120 = vld [vmem:[#allocation2 + $0x1e70] sm:$0xff]
    %v1121 = vld [vmem:[#allocation2 + $0x1e78] sm:$0xff]
    %v1122 = vld [vmem:[#allocation2 + $0x1e80] sm:$0xff]
    %v1123 = vld [vmem:[#allocation2 + $0x1e88] sm:$0xff]
    %v1124 = vld [vmem:[#allocation2 + $0x1e90] sm:$0xff]
    %v1125 = vld [vmem:[#allocation2 + $0x1e98] sm:$0xff]
    %v1126 = vld [vmem:[#allocation2 + $0x1ea0] sm:$0xff]
    %v1127 = vld [vmem:[#allocation2 + $0x1ea8] sm:$0xff]
    %v1128 = vld [vmem:[#allocation2 + $0x1eb0] sm:$0xff]
    %v1129 = vld [vmem:[#allocation2 + $0x1eb8] sm:$0xff]
    %v1130 = vld [vmem:[#allocation2 + $0x1ec0] sm:$0xff]
    %v1131 = vld [vmem:[#allocation2 + $0x1ec8] sm:$0xff]
    %v1132 = vld [vmem:[#allocation2 + $0x1ed0] sm:$0xff]
    %v1133 = vld [vmem:[#allocation2 + $0x1ed8] sm:$0xff]
    %v1134 = vld [vmem:[#allocation2 + $0x1ee0] sm:$0xff]
    %v1135 = vld [vmem:[#allocation2 + $0x1ee8] sm:$0xff]
    %v1136 = vld [vmem:[#allocation2 + $0x1ef0] sm:$0xff]
    %v1137 = vld [vmem:[#allocation2 + $0x1ef8] sm:$0xff]
    %v1138 = vld [vmem:[#allocation2 + $0x1f00] sm:$0xff]
    %v1139 = vld [vmem:[#allocation2 + $0x1f08] sm:$0xff]
    %v1140 = vld [vmem:[#allocation2 + $0x1f10] sm:$0xff]
    %v1141 = vld [vmem:[#allocation2 + $0x1f18] sm:$0xff]
    %v1142 = vld [vmem:[#allocation2 + $0x1f20] sm:$0xff]
    %v1143 = vld [vmem:[#allocation2 + $0x1f28] sm:$0xff]
    %v1144 = vld [vmem:[#allocation2 + $0x1f30] sm:$0xff]
    %v1145 = vld [vmem:[#allocation2 + $0x1f38] sm:$0xff]
    %v1146 = vld [vmem:[#allocation2 + $0x1f40] sm:$0xff]
    %v1147 = vld [vmem:[#allocation2 + $0x1f48] sm:$0xff]
    %v1148 = vld [vmem:[#allocation2 + $0x1f50] sm:$0xff]
    %v1149 = vld [vmem:[#allocation2 + $0x1f58] sm:$0xff]
    %v1150 = vld [vmem:[#allocation2 + $0x1f60] sm:$0xff]
    %v1151 = vld [vmem:[#allocation2 + $0x1f68] sm:$0xff]
    %v1152 = vld [vmem:[#allocation2 + $0x1f70] sm:$0xff]
    %v1153 = vld [vmem:[#allocation2 + $0x1f78] sm:$0xff]
    %v1154 = vld [vmem:[#allocation2 + $0x1f80] sm:$0xff]
    %v1155 = vld [vmem:[#allocation2 + $0x1f88] sm:$0xff]
    %v1156 = vld [vmem:[#allocation2 + $0x1f90] sm:$0xff]
    %v1157 = vld [vmem:[#allocation2 + $0x1f98] sm:$0xff]
    %v1158 = vld [vmem:[#allocation2 + $0x1fa0] sm:$0xff]
    %v1159 = vld [vmem:[#allocation2 + $0x1fa8] sm:$0xff]
    %v1160 = vld [vmem:[#allocation2 + $0x1fb0] sm:$0xff]
    %v1161 = vld [vmem:[#allocation2 + $0x1fb8] sm:$0xff]
    %v1162 = vld [vmem:[#allocation2 + $0x1fc0] sm:$0xff]
    %v1163 = vld [vmem:[#allocation2 + $0x1fc8] sm:$0xff]
    %v1164 = vld [vmem:[#allocation2 + $0x1fd0] sm:$0xff]
    %v1165 = vld [vmem:[#allocation2 + $0x1fd8] sm:$0xff]
    %v1166 = vld [vmem:[#allocation2 + $0x1fe0] sm:$0xff]
    %v1167 = vld [vmem:[#allocation2 + $0x1fe8] sm:$0xff]
    %v1168 = vld [vmem:[#allocation2 + $0x1ff0] sm:$0xff]
    %v1169 = vld [vmem:[#allocation2 + $0x1ff8] sm:$0xff]
    %v1170 = vld [vmem:[#allocation2 + $0x2000] sm:$0xff]
    %v1171 = vld [vmem:[#allocation2 + $0x2008] sm:$0xff]
    %v1172 = vld [vmem:[#allocation2 + $0x2010] sm:$0xff]
    %v1173 = vld [vmem:[#allocation2 + $0x2018] sm:$0xff]
    %v1174 = vld [vmem:[#allocation2 + $0x2020] sm:$0xff]
    %v1175 = vld [vmem:[#allocation2 + $0x2028] sm:$0xff]
    %v1176 = vld [vmem:[#allocation2 + $0x2030] sm:$0xff]
    %v1177 = vld [vmem:[#allocation2 + $0x2038] sm:$0xff]
    %v1178 = vld [vmem:[#allocation2 + $0x2040] sm:$0xff]
    %v1179 = vld [vmem:[#allocation2 + $0x2048] sm:$0xff]
    %v1180 = vld [vmem:[#allocation2 + $0x2050] sm:$0xff]
    %v1181 = vld [vmem:[#allocation2 + $0x2058] sm:$0xff]
    %v1182 = vld [vmem:[#allocation2 + $0x2060] sm:$0xff]
    %v1183 = vld [vmem:[#allocation2 + $0x2068] sm:$0xff]
    %v1184 = vld [vmem:[#allocation2 + $0x2070] sm:$0xff]
    %v1185 = vld [vmem:[#allocation2 + $0x2078] sm:$0xff]
    %v1186 = vld [vmem:[#allocation2 + $0x2080] sm:$0xff]
    %v1187 = vld [vmem:[#allocation2 + $0x2088] sm:$0xff]
    %v1188 = vld [vmem:[#allocation2 + $0x2090] sm:$0xff]
    %v1189 = vld [vmem:[#allocation2 + $0x2098] sm:$0xff]
    %v1190 = vld [vmem:[#allocation2 + $0x20a0] sm:$0xff]
    %v1191 = vld [vmem:[#allocation2 + $0x20a8] sm:$0xff]
    %v1192 = vld [vmem:[#allocation2 + $0x20b0] sm:$0xff]
    %v1193 = vld [vmem:[#allocation2 + $0x20b8] sm:$0xff]
    %v1194 = vld [vmem:[#allocation2 + $0x20c0] sm:$0xff]
    %v1195 = vld [vmem:[#allocation2 + $0x20c8] sm:$0xff]
    %v1196 = vld [vmem:[#allocation2 + $0x20d0] sm:$0xff]
    %v1197 = vld [vmem:[#allocation2 + $0x20d8] sm:$0xff]
    %v1198 = vld [vmem:[#allocation2 + $0x20e0] sm:$0xff]
    %v1199 = vld [vmem:[#allocation2 + $0x20e8] sm:$0xff]
    %v1200 = vld [vmem:[#allocation2 + $0x20f0] sm:$0xff]
    %v1201 = vld [vmem:[#allocation2 + $0x20f8] sm:$0xff]
    %v1202 = vld [vmem:[#allocation2 + $0x2100] sm:$0xff]
    %v1203 = vld [vmem:[#allocation2 + $0x2108] sm:$0xff]
    %v1204 = vld [vmem:[#allocation2 + $0x2110] sm:$0xff]
    %v1205 = vld [vmem:[#allocation2 + $0x2118] sm:$0xff]
    %v1206 = vld [vmem:[#allocation2 + $0x2120] sm:$0xff]
    %v1207 = vld [vmem:[#allocation2 + $0x2128] sm:$0xff]
    %v1208 = vld [vmem:[#allocation2 + $0x2130] sm:$0xff]
    %v1209 = vld [vmem:[#allocation2 + $0x2138] sm:$0xff]
    %v1210 = vld [vmem:[#allocation2 + $0x2140] sm:$0xff]
    %v1211 = vld [vmem:[#allocation2 + $0x2148] sm:$0xff]
    %v1212 = vld [vmem:[#allocation2 + $0x2150] sm:$0xff]
    %v1213 = vld [vmem:[#allocation2 + $0x2158] sm:$0xff]
    %v1214 = vld [vmem:[#allocation2 + $0x2160] sm:$0xff]
    %v1215 = vld [vmem:[#allocation2 + $0x2168] sm:$0xff]
    %v1216 = vld [vmem:[#allocation2 + $0x2170] sm:$0xff]
    %v1217 = vld [vmem:[#allocation2 + $0x2178] sm:$0xff]
    %v1218 = vld [vmem:[#allocation2 + $0x2180] sm:$0xff]
    %v1219 = vld [vmem:[#allocation2 + $0x2188] sm:$0xff]
    %v1220 = vld [vmem:[#allocation2 + $0x2190] sm:$0xff]
    %v1221 = vld [vmem:[#allocation2 + $0x2198] sm:$0xff]
    %v1222 = vld [vmem:[#allocation2 + $0x21a0] sm:$0xff]
    %v1223 = vld [vmem:[#allocation2 + $0x21a8] sm:$0xff]
    %v1224 = vld [vmem:[#allocation2 + $0x21b0] sm:$0xff]
    %v1225 = vld [vmem:[#allocation2 + $0x21b8] sm:$0xff]
    %v1226 = vld [vmem:[#allocation2 + $0x21c0] sm:$0xff]
    %v1227 = vld [vmem:[#allocation2 + $0x21c8] sm:$0xff]
    %v1228 = vld [vmem:[#allocation2 + $0x21d0] sm:$0xff]
    %v1229 = vld [vmem:[#allocation2 + $0x21d8] sm:$0xff]
    %v1230 = vld [vmem:[#allocation2 + $0x21e0] sm:$0xff]
    %v1231 = vld [vmem:[#allocation2 + $0x21e8] sm:$0xff]
    %v1232 = vld [vmem:[#allocation2 + $0x21f0] sm:$0xff]
    %v1233 = vld [vmem:[#allocation2 + $0x21f8] sm:$0xff]
    %v1234 = vld [vmem:[#allocation2 + $0x2200] sm:$0xff]
    %v1235 = vld [vmem:[#allocation2 + $0x2208] sm:$0xff]
    %v1236 = vld [vmem:[#allocation2 + $0x2210] sm:$0xff]
    %v1237 = vld [vmem:[#allocation2 + $0x2218] sm:$0xff]
    %v1238 = vld [vmem:[#allocation2 + $0x2220] sm:$0xff]
    %v1239 = vld [vmem:[#allocation2 + $0x2228] sm:$0xff]
    %v1240 = vld [vmem:[#allocation2 + $0x2230] sm:$0xff]
    %v1241 = vld [vmem:[#allocation2 + $0x2238] sm:$0xff]
    %v1242 = vld [vmem:[#allocation2 + $0x2240] sm:$0xff]
    %v1243 = vld [vmem:[#allocation2 + $0x2248] sm:$0xff]
    %v1244 = vld [vmem:[#allocation2 + $0x2250] sm:$0xff]
    %v1245 = vld [vmem:[#allocation2 + $0x2258] sm:$0xff]
    %v1246 = vld [vmem:[#allocation2 + $0x2260] sm:$0xff]
    %v1247 = vld [vmem:[#allocation2 + $0x2268] sm:$0xff]
    %v1248 = vld [vmem:[#allocation2 + $0x2270] sm:$0xff]
    %v1249 = vld [vmem:[#allocation2 + $0x2278] sm:$0xff]
    %v1250 = vld [vmem:[#allocation2 + $0x2280] sm:$0xff]
    %v1251 = vld [vmem:[#allocation2 + $0x2288] sm:$0xff]
    %v1252 = vld [vmem:[#allocation2 + $0x2290] sm:$0xff]
    %v1253 = vld [vmem:[#allocation2 + $0x2298] sm:$0xff]
    %v1254 = vld [vmem:[#allocation2 + $0x22a0] sm:$0xff]
    %v1255 = vld [vmem:[#allocation2 + $0x22a8] sm:$0xff]
    %v1256 = vld [vmem:[#allocation2 + $0x22b0] sm:$0xff]
    %v1257 = vld [vmem:[#allocation2 + $0x22b8] sm:$0xff]
    %v1258 = vld [vmem:[#allocation2 + $0x22c0] sm:$0xff]
    %v1259 = vld [vmem:[#allocation2 + $0x22c8] sm:$0xff]
    %v1260 = vld [vmem:[#allocation2 + $0x22d0] sm:$0xff]
    %v1261 = vld [vmem:[#allocation2 + $0x22d8] sm:$0xff]
    %v1262 = vld [vmem:[#allocation2 + $0x22e0] sm:$0xff]
    %v1263 = vld [vmem:[#allocation2 + $0x22e8] sm:$0xff]
    %v1264 = vld [vmem:[#allocation2 + $0x22f0] sm:$0xff]
    %v1265 = vld [vmem:[#allocation2 + $0x22f8] sm:$0xff]
    %v1266 = vld [vmem:[#allocation2 + $0x2300] sm:$0xff]
    %v1267 = vld [vmem:[#allocation2 + $0x2308] sm:$0xff]
    %v1268 = vld [vmem:[#allocation2 + $0x2310] sm:$0xff]
    %v1269 = vld [vmem:[#allocation2 + $0x2318] sm:$0xff]
    %v1270 = vld [vmem:[#allocation2 + $0x2320] sm:$0xff]
    %v1271 = vld [vmem:[#allocation2 + $0x2328] sm:$0xff]
    %v1272 = vld [vmem:[#allocation2 + $0x2330] sm:$0xff]
    %v1273 = vld [vmem:[#allocation2 + $0x2338] sm:$0xff]
    %v1274 = vld [vmem:[#allocation2 + $0x2340] sm:$0xff]
    %v1275 = vld [vmem:[#allocation2 + $0x2348] sm:$0xff]
    %v1276 = vld [vmem:[#allocation2 + $0x2350] sm:$0xff]
    %v1277 = vld [vmem:[#allocation2 + $0x2358] sm:$0xff]
    %v1278 = vld [vmem:[#allocation2 + $0x2360] sm:$0xff]
    %v1279 = vld [vmem:[#allocation2 + $0x2368] sm:$0xff]
    %v1280 = vld [vmem:[#allocation2 + $0x2370] sm:$0xff]
    %v1281 = vld [vmem:[#allocation2 + $0x2378] sm:$0xff]
    %v1282 = vld [vmem:[#allocation2 + $0x2380] sm:$0xff]
    %v1283 = vld [vmem:[#allocation2 + $0x2388] sm:$0xff]
    %v1284 = vld [vmem:[#allocation2 + $0x2390] sm:$0xff]
    %v1285 = vld [vmem:[#allocation2 + $0x2398] sm:$0xff]
    %v1286 = vld [vmem:[#allocation2 + $0x23a0] sm:$0xff]
    %v1287 = vld [vmem:[#allocation2 + $0x23a8] sm:$0xff]
    %v1288 = vld [vmem:[#allocation2 + $0x23b0] sm:$0xff]
    %v1289 = vld [vmem:[#allocation2 + $0x23b8] sm:$0xff]
    %v1290 = vld [vmem:[#allocation2 + $0x23c0] sm:$0xff]
    %v1291 = vld [vmem:[#allocation2 + $0x23c8] sm:$0xff]
    %v1292 = vld [vmem:[#allocation2 + $0x23d0] sm:$0xff]
    %v1293 = vld [vmem:[#allocation2 + $0x23d8] sm:$0xff]
    %v1294 = vld [vmem:[#allocation2 + $0x23e0] sm:$0xff]
    %v1295 = vld [vmem:[#allocation2 + $0x23e8] sm:$0xff]
    %v1296 = vld [vmem:[#allocation2 + $0x23f0] sm:$0xff]
    %v1297 = vld [vmem:[#allocation2 + $0x23f8] sm:$0xff]
    %v1298 = vld [vmem:[#allocation2 + $0x2400] sm:$0xff]
    %v1299 = vld [vmem:[#allocation2 + $0x2408] sm:$0xff]
    %v1300 = vld [vmem:[#allocation2 + $0x2410] sm:$0xff]
    %v1301 = vld [vmem:[#allocation2 + $0x2418] sm:$0xff]
    %v1302 = vld [vmem:[#allocation2 + $0x2420] sm:$0xff]
    %v1303 = vld [vmem:[#allocation2 + $0x2428] sm:$0xff]
    %v1304 = vld [vmem:[#allocation2 + $0x2430] sm:$0xff]
    %v1305 = vld [vmem:[#allocation2 + $0x2438] sm:$0xff]
    %v1306 = vld [vmem:[#allocation2 + $0x2440] sm:$0xff]
    %v1307 = vld [vmem:[#allocation2 + $0x2448] sm:$0xff]
    %v1308 = vld [vmem:[#allocation2 + $0x2450] sm:$0xff]
    %v1309 = vld [vmem:[#allocation2 + $0x2458] sm:$0xff]
    %v1310 = vld [vmem:[#allocation2 + $0x2460] sm:$0xff]
    %v1311 = vld [vmem:[#allocation2 + $0x2468] sm:$0xff]
    %v1312 = vld [vmem:[#allocation2 + $0x2470] sm:$0xff]
    %v1313 = vld [vmem:[#allocation2 + $0x2478] sm:$0xff]
    %v1314 = vld [vmem:[#allocation2 + $0x2480] sm:$0xff]
    %v1315 = vld [vmem:[#allocation2 + $0x2488] sm:$0xff]
    %v1316 = vld [vmem:[#allocation2 + $0x2490] sm:$0xff]
    %v1317 = vld [vmem:[#allocation2 + $0x2498] sm:$0xff]
    %v1318 = vld [vmem:[#allocation2 + $0x24a0] sm:$0xff]
    %v1319 = vld [vmem:[#allocation2 + $0x24a8] sm:$0xff]
    %v1320 = vld [vmem:[#allocation2 + $0x24b0] sm:$0xff]
    %v1321 = vld [vmem:[#allocation2 + $0x24b8] sm:$0xff]
    %v1322 = vld [vmem:[#allocation2 + $0x24c0] sm:$0xff]
    %v1323 = vld [vmem:[#allocation2 + $0x24c8] sm:$0xff]
    %v1324 = vld [vmem:[#allocation2 + $0x24d0] sm:$0xff]
    %v1325 = vld [vmem:[#allocation2 + $0x24d8] sm:$0xff]
    %v1326 = vld [vmem:[#allocation2 + $0x24e0] sm:$0xff]
    %v1327 = vld [vmem:[#allocation2 + $0x24e8] sm:$0xff]
    %v1328 = vld [vmem:[#allocation2 + $0x24f0] sm:$0xff]
    %v1329 = vld [vmem:[#allocation2 + $0x24f8] sm:$0xff]
    %v1330 = vld [vmem:[#allocation2 + $0x2500] sm:$0xff]
    %v1331 = vld [vmem:[#allocation2 + $0x2508] sm:$0xff]
    %v1332 = vld [vmem:[#allocation2 + $0x2510] sm:$0xff]
    %v1333 = vld [vmem:[#allocation2 + $0x2518] sm:$0xff]
    %v1334 = vld [vmem:[#allocation2 + $0x2520] sm:$0xff]
    %v1335 = vld [vmem:[#allocation2 + $0x2528] sm:$0xff]
    %v1336 = vld [vmem:[#allocation2 + $0x2530] sm:$0xff]
    %v1337 = vld [vmem:[#allocation2 + $0x2538] sm:$0xff]
    %v1338 = vld [vmem:[#allocation2 + $0x2540] sm:$0xff]
    %v1339 = vld [vmem:[#allocation2 + $0x2548] sm:$0xff]
    %v1340 = vld [vmem:[#allocation2 + $0x2550] sm:$0xff]
    %v1341 = vld [vmem:[#allocation2 + $0x2558] sm:$0xff]
    %v1342 = vld [vmem:[#allocation2 + $0x2560] sm:$0xff]
    %v1343 = vld [vmem:[#allocation2 + $0x2568] sm:$0xff]
    %v1344 = vld [vmem:[#allocation2 + $0x2570] sm:$0xff]
    %v1345 = vld [vmem:[#allocation2 + $0x2578] sm:$0xff]
    %v1346 = vld [vmem:[#allocation2 + $0x2580] sm:$0xff]
    %v1347 = vld [vmem:[#allocation2 + $0x2588] sm:$0xff]
    %v1348 = vld [vmem:[#allocation2 + $0x2590] sm:$0xff]
    %v1349 = vld [vmem:[#allocation2 + $0x2598] sm:$0xff]
    %v1350 = vld [vmem:[#allocation2 + $0x25a0] sm:$0xff]
    %v1351 = vld [vmem:[#allocation2 + $0x25a8] sm:$0xff]
    %v1352 = vld [vmem:[#allocation2 + $0x25b0] sm:$0xff]
    %v1353 = vld [vmem:[#allocation2 + $0x25b8] sm:$0xff]
    %v1354 = vld [vmem:[#allocation2 + $0x25c0] sm:$0xff]
    %v1355 = vld [vmem:[#allocation2 + $0x25c8] sm:$0xff]
    %v1356 = vld [vmem:[#allocation2 + $0x25d0] sm:$0xff]
    %v1357 = vld [vmem:[#allocation2 + $0x25d8] sm:$0xff]
    %v1358 = vld [vmem:[#allocation2 + $0x25e0] sm:$0xff]
    %v1359 = vld [vmem:[#allocation2 + $0x25e8] sm:$0xff]
    %v1360 = vld [vmem:[#allocation2 + $0x25f0] sm:$0xff]
    %v1361 = vld [vmem:[#allocation2 + $0x25f8] sm:$0xff]
    %v1362 = vld [vmem:[#allocation2 + $0x2600] sm:$0xff]
    %v1363 = vld [vmem:[#allocation2 + $0x2608] sm:$0xff]
    %v1364 = vld [vmem:[#allocation2 + $0x2610] sm:$0xff]
    %v1365 = vld [vmem:[#allocation2 + $0x2618] sm:$0xff]
    %v1366 = vld [vmem:[#allocation2 + $0x2620] sm:$0xff]
    %v1367 = vld [vmem:[#allocation2 + $0x2628] sm:$0xff]
    %v1368 = vld [vmem:[#allocation2 + $0x2630] sm:$0xff]
    %v1369 = vld [vmem:[#allocation2 + $0x2638] sm:$0xff]
    %v1370 = vld [vmem:[#allocation2 + $0x2640] sm:$0xff]
    %v1371 = vld [vmem:[#allocation2 + $0x2648] sm:$0xff]
    %v1372 = vld [vmem:[#allocation2 + $0x2650] sm:$0xff]
    %v1373 = vld [vmem:[#allocation2 + $0x2658] sm:$0xff]
    %v1374 = vld [vmem:[#allocation2 + $0x2660] sm:$0xff]
    %v1375 = vld [vmem:[#allocation2 + $0x2668] sm:$0xff]
    %v1376 = vld [vmem:[#allocation2 + $0x2670] sm:$0xff]
    %v1377 = vld [vmem:[#allocation2 + $0x2678] sm:$0xff]
    %v1378 = vld [vmem:[#allocation2 + $0x2680] sm:$0xff]
    %v1379 = vld [vmem:[#allocation2 + $0x2688] sm:$0xff]
    %v1380 = vld [vmem:[#allocation2 + $0x2690] sm:$0xff]
    %v1381 = vld [vmem:[#allocation2 + $0x2698] sm:$0xff]
    %v1382 = vld [vmem:[#allocation2 + $0x26a0] sm:$0xff]
    %v1383 = vld [vmem:[#allocation2 + $0x26a8] sm:$0xff]
    %v1384 = vld [vmem:[#allocation2 + $0x26b0] sm:$0xff]
    %v1385 = vld [vmem:[#allocation2 + $0x26b8] sm:$0xff]
    %v1386 = vld [vmem:[#allocation2 + $0x26c0] sm:$0xff]
    %v1387 = vld [vmem:[#allocation2 + $0x26c8] sm:$0xff]
    %v1388 = vld [vmem:[#allocation2 + $0x26d0] sm:$0xff]
    %v1389 = vld [vmem:[#allocation2 + $0x26d8] sm:$0xff]
    %v1390 = vld [vmem:[#allocation2 + $0x26e0] sm:$0xff]
    %v1391 = vld [vmem:[#allocation2 + $0x26e8] sm:$0xff]
    %v1392 = vld [vmem:[#allocation2 + $0x26f0] sm:$0xff]
    %v1393 = vld [vmem:[#allocation2 + $0x26f8] sm:$0xff]
    %v1394 = vld [vmem:[#allocation2 + $0x2700] sm:$0xff]
    %v1395 = vld [vmem:[#allocation2 + $0x2708] sm:$0xff]
    %v1396 = vld [vmem:[#allocation2 + $0x2710] sm:$0xff]
    %v1397 = vld [vmem:[#allocation2 + $0x2718] sm:$0xff]
    %v1398 = vld [vmem:[#allocation2 + $0x2720] sm:$0xff]
    %v1399 = vld [vmem:[#allocation2 + $0x2728] sm:$0xff]
    %v1400 = vld [vmem:[#allocation2 + $0x2730] sm:$0xff]
    %v1401 = vld [vmem:[#allocation2 + $0x2738] sm:$0xff]
    %v1402 = vld [vmem:[#allocation2 + $0x2740] sm:$0xff]
    %v1403 = vld [vmem:[#allocation2 + $0x2748] sm:$0xff]
    %v1404 = vld [vmem:[#allocation2 + $0x2750] sm:$0xff]
    %v1405 = vld [vmem:[#allocation2 + $0x2758] sm:$0xff]
    %v1406 = vld [vmem:[#allocation2 + $0x2760] sm:$0xff]
    %v1407 = vld [vmem:[#allocation2 + $0x2768] sm:$0xff]
    %v1408 = vld [vmem:[#allocation2 + $0x2770] sm:$0xff]
    %v1409 = vld [vmem:[#allocation2 + $0x2778] sm:$0xff]
    %v1410 = vld [vmem:[#allocation2 + $0x2780] sm:$0xff]
    %v1411 = vld [vmem:[#allocation2 + $0x2788] sm:$0xff]
    %v1412 = vld [vmem:[#allocation2 + $0x2790] sm:$0xff]
    %v1413 = vld [vmem:[#allocation2 + $0x2798] sm:$0xff]
    %v1414 = vld [vmem:[#allocation2 + $0x27a0] sm:$0xff]
    %v1415 = vld [vmem:[#allocation2 + $0x27a8] sm:$0xff]
    %v1416 = vld [vmem:[#allocation2 + $0x27b0] sm:$0xff]
    %v1417 = vld [vmem:[#allocation2 + $0x27b8] sm:$0xff]
    %v1418 = vld [vmem:[#allocation2 + $0x27c0] sm:$0xff]
    %v1419 = vld [vmem:[#allocation2 + $0x27c8] sm:$0xff]
    %v1420 = vld [vmem:[#allocation2 + $0x27d0] sm:$0xff]
    %v1421 = vld [vmem:[#allocation2 + $0x27d8] sm:$0xff]
    %v1422 = vld [vmem:[#allocation2 + $0x27e0] sm:$0xff]
    %v1423 = vld [vmem:[#allocation2 + $0x27e8] sm:$0xff]
    %v1424 = vld [vmem:[#allocation2 + $0x27f0] sm:$0xff]
    %v1425 = vld [vmem:[#allocation2 + $0x27f8] sm:$0xff]
    %v1426 = vld [vmem:[#allocation2 + $0x2800] sm:$0xff]
    %v1427 = vld [vmem:[#allocation2 + $0x2808] sm:$0xff]
    %v1428 = vld [vmem:[#allocation2 + $0x2810] sm:$0xff]
    %v1429 = vld [vmem:[#allocation2 + $0x2818] sm:$0xff]
    %v1430 = vld [vmem:[#allocation2 + $0x2820] sm:$0xff]
    %v1431 = vld [vmem:[#allocation2 + $0x2828] sm:$0xff]
    %v1432 = vld [vmem:[#allocation2 + $0x2830] sm:$0xff]
    %v1433 = vld [vmem:[#allocation2 + $0x2838] sm:$0xff]
    %v1434 = vld [vmem:[#allocation2 + $0x2840] sm:$0xff]
    %v1435 = vld [vmem:[#allocation2 + $0x2848] sm:$0xff]
    %v1436 = vld [vmem:[#allocation2 + $0x2850] sm:$0xff]
    %v1437 = vld [vmem:[#allocation2 + $0x2858] sm:$0xff]
    %v1438 = vld [vmem:[#allocation2 + $0x2860] sm:$0xff]
    %v1439 = vld [vmem:[#allocation2 + $0x2868] sm:$0xff]
    %v1440 = vld [vmem:[#allocation2 + $0x2870] sm:$0xff]
    %v1441 = vld [vmem:[#allocation2 + $0x2878] sm:$0xff]
    %v1442 = vld [vmem:[#allocation2 + $0x2880] sm:$0xff]
    %v1443 = vld [vmem:[#allocation2 + $0x2888] sm:$0xff]
    %v1444 = vld [vmem:[#allocation2 + $0x2890] sm:$0xff]
    %v1445 = vld [vmem:[#allocation2 + $0x2898] sm:$0xff]
    %v1446 = vld [vmem:[#allocation2 + $0x28a0] sm:$0xff]
    %v1447 = vld [vmem:[#allocation2 + $0x28a8] sm:$0xff]
    %v1448 = vld [vmem:[#allocation2 + $0x28b0] sm:$0xff]
    %v1449 = vld [vmem:[#allocation2 + $0x28b8] sm:$0xff]
    %v1450 = vld [vmem:[#allocation2 + $0x28c0] sm:$0xff]
    %v1451 = vld [vmem:[#allocation2 + $0x28c8] sm:$0xff]
    %v1452 = vld [vmem:[#allocation2 + $0x28d0] sm:$0xff]
    %v1453 = vld [vmem:[#allocation2 + $0x28d8] sm:$0xff]
    %v1454 = vld [vmem:[#allocation2 + $0x28e0] sm:$0xff]
    %v1455 = vld [vmem:[#allocation2 + $0x28e8] sm:$0xff]
    %v1456 = vld [vmem:[#allocation2 + $0x28f0] sm:$0xff]
    %v1457 = vld [vmem:[#allocation2 + $0x28f8] sm:$0xff]
    %v1458 = vld [vmem:[#allocation2 + $0x2900] sm:$0xff]
    %v1459 = vld [vmem:[#allocation2 + $0x2908] sm:$0xff]
    %v1460 = vld [vmem:[#allocation2 + $0x2910] sm:$0xff]
    %v1461 = vld [vmem:[#allocation2 + $0x2918] sm:$0xff]
    %v1462 = vld [vmem:[#allocation2 + $0x2920] sm:$0xff]
    %v1463 = vld [vmem:[#allocation2 + $0x2928] sm:$0xff]
    %v1464 = vld [vmem:[#allocation2 + $0x2930] sm:$0xff]
    %v1465 = vld [vmem:[#allocation2 + $0x2938] sm:$0xff]
    %v1466 = vld [vmem:[#allocation2 + $0x2940] sm:$0xff]
    %v1467 = vld [vmem:[#allocation2 + $0x2948] sm:$0xff]
    %v1468 = vld [vmem:[#allocation2 + $0x2950] sm:$0xff]
    %v1469 = vld [vmem:[#allocation2 + $0x2958] sm:$0xff]
    %v1470 = vld [vmem:[#allocation2 + $0x2960] sm:$0xff]
    %v1471 = vld [vmem:[#allocation2 + $0x2968] sm:$0xff]
    %v1472 = vld [vmem:[#allocation2 + $0x2970] sm:$0xff]
    %v1473 = vld [vmem:[#allocation2 + $0x2978] sm:$0xff]
    %v1474 = vld [vmem:[#allocation2 + $0x2980] sm:$0xff]
    %v1475 = vld [vmem:[#allocation2 + $0x2988] sm:$0xff]
    %v1476 = vld [vmem:[#allocation2 + $0x2990] sm:$0xff]
    %v1477 = vld [vmem:[#allocation2 + $0x2998] sm:$0xff]
    %v1478 = vld [vmem:[#allocation2 + $0x29a0] sm:$0xff]
    %v1479 = vld [vmem:[#allocation2 + $0x29a8] sm:$0xff]
    %v1480 = vld [vmem:[#allocation2 + $0x29b0] sm:$0xff]
    %v1481 = vld [vmem:[#allocation2 + $0x29b8] sm:$0xff]
    %v1482 = vld [vmem:[#allocation2 + $0x29c0] sm:$0xff]
    %v1483 = vld [vmem:[#allocation2 + $0x29c8] sm:$0xff]
    %v1484 = vld [vmem:[#allocation2 + $0x29d0] sm:$0xff]
    %v1485 = vld [vmem:[#allocation2 + $0x29d8] sm:$0xff]
    %v1486 = vld [vmem:[#allocation2 + $0x29e0] sm:$0xff]
    %v1487 = vld [vmem:[#allocation2 + $0x29e8] sm:$0xff]
    %v1488 = vld [vmem:[#allocation2 + $0x29f0] sm:$0xff]
    %v1489 = vld [vmem:[#allocation2 + $0x29f8] sm:$0xff]
    %v1490 = vld [vmem:[#allocation2 + $0x2a00] sm:$0xff]
    %v1491 = vld [vmem:[#allocation2 + $0x2a08] sm:$0xff]
    %v1492 = vld [vmem:[#allocation2 + $0x2a10] sm:$0xff]
    %v1493 = vld [vmem:[#allocation2 + $0x2a18] sm:$0xff]
    %v1494 = vld [vmem:[#allocation2 + $0x2a20] sm:$0xff]
    %v1495 = vld [vmem:[#allocation2 + $0x2a28] sm:$0xff]
    %v1496 = vld [vmem:[#allocation2 + $0x2a30] sm:$0xff]
    %v1497 = vld [vmem:[#allocation2 + $0x2a38] sm:$0xff]
    %v1498 = vld [vmem:[#allocation2 + $0x2a40] sm:$0xff]
    %v1499 = vld [vmem:[#allocation2 + $0x2a48] sm:$0xff]
    %v1500 = vld [vmem:[#allocation2 + $0x2a50] sm:$0xff]
    %v1501 = vld [vmem:[#allocation2 + $0x2a58] sm:$0xff]
    %v1502 = vld [vmem:[#allocation2 + $0x2a60] sm:$0xff]
    %v1503 = vld [vmem:[#allocation2 + $0x2a68] sm:$0xff]
    %v1504 = vld [vmem:[#allocation2 + $0x2a70] sm:$0xff]
    %v1505 = vld [vmem:[#allocation2 + $0x2a78] sm:$0xff]
    %v1506 = vld [vmem:[#allocation2 + $0x2a80] sm:$0xff]
    %v1507 = vld [vmem:[#allocation2 + $0x2a88] sm:$0xff]
    %v1508 = vld [vmem:[#allocation2 + $0x2a90] sm:$0xff]
    %v1509 = vld [vmem:[#allocation2 + $0x2a98] sm:$0xff]
    %v1510 = vld [vmem:[#allocation2 + $0x2aa0] sm:$0xff]
    %v1511 = vld [vmem:[#allocation2 + $0x2aa8] sm:$0xff]
    %v1512 = vld [vmem:[#allocation2 + $0x2ab0] sm:$0xff]
    %v1513 = vld [vmem:[#allocation2 + $0x2ab8] sm:$0xff]
    %v1514 = vld [vmem:[#allocation2 + $0x2ac0] sm:$0xff]
    %v1515 = vld [vmem:[#allocation2 + $0x2ac8] sm:$0xff]
    %v1516 = vld [vmem:[#allocation2 + $0x2ad0] sm:$0xff]
    %v1517 = vld [vmem:[#allocation2 + $0x2ad8] sm:$0xff]
    %v1518 = vld [vmem:[#allocation2 + $0x2ae0] sm:$0xff]
    %v1519 = vld [vmem:[#allocation2 + $0x2ae8] sm:$0xff]
    %v1520 = vld [vmem:[#allocation2 + $0x2af0] sm:$0xff]
    %v1521 = vld [vmem:[#allocation2 + $0x2af8] sm:$0xff]
    %v1522 = vld [vmem:[#allocation2 + $0x2b00] sm:$0xff]
    %v1523 = vld [vmem:[#allocation2 + $0x2b08] sm:$0xff]
    %v1524 = vld [vmem:[#allocation2 + $0x2b10] sm:$0xff]
    %v1525 = vld [vmem:[#allocation2 + $0x2b18] sm:$0xff]
    %v1526 = vld [vmem:[#allocation2 + $0x2b20] sm:$0xff]
    %v1527 = vld [vmem:[#allocation2 + $0x2b28] sm:$0xff]
    %v1528 = vld [vmem:[#allocation2 + $0x2b30] sm:$0xff]
    %v1529 = vld [vmem:[#allocation2 + $0x2b38] sm:$0xff]
    %v1530 = vld [vmem:[#allocation2 + $0x2b40] sm:$0xff]
    %v1531 = vld [vmem:[#allocation2 + $0x2b48] sm:$0xff]
    %v1532 = vld [vmem:[#allocation2 + $0x2b50] sm:$0xff]
    %v1533 = vld [vmem:[#allocation2 + $0x2b58] sm:$0xff]
    %v1534 = vld [vmem:[#allocation2 + $0x2b60] sm:$0xff]
    %v1535 = vld [vmem:[#allocation2 + $0x2b68] sm:$0xff]
    %v1536 = vld [vmem:[#allocation2 + $0x2b70] sm:$0xff]
    %v1537 = vld [vmem:[#allocation2 + $0x2b78] sm:$0xff]
    %v1538 = vld [vmem:[#allocation2 + $0x2b80] sm:$0xff]
    %v1539 = vld [vmem:[#allocation2 + $0x2b88] sm:$0xff]
    %v1540 = vld [vmem:[#allocation2 + $0x2b90] sm:$0xff]
    %v1541 = vld [vmem:[#allocation2 + $0x2b98] sm:$0xff]
    %v1542 = vld [vmem:[#allocation2 + $0x2ba0] sm:$0xff]
    %v1543 = vld [vmem:[#allocation2 + $0x2ba8] sm:$0xff]
    %v1544 = vld [vmem:[#allocation2 + $0x2bb0] sm:$0xff]
    %v1545 = vld [vmem:[#allocation2 + $0x2bb8] sm:$0xff]
    %v1546 = vld [vmem:[#allocation2 + $0x2bc0] sm:$0xff]
    %v1547 = vld [vmem:[#allocation2 + $0x2bc8] sm:$0xff]
    %v1548 = vld [vmem:[#allocation2 + $0x2bd0] sm:$0xff]
    %v1549 = vld [vmem:[#allocation2 + $0x2bd8] sm:$0xff]
    %v1550 = vld [vmem:[#allocation2 + $0x2be0] sm:$0xff]
    %v1551 = vld [vmem:[#allocation2 + $0x2be8] sm:$0xff]
    %v1552 = vld [vmem:[#allocation2 + $0x2bf0] sm:$0xff]
    %v1553 = vld [vmem:[#allocation2 + $0x2bf8] sm:$0xff]
    %v1554 = vld [vmem:[#allocation2 + $0x2c00] sm:$0xff]
    %v1555 = vld [vmem:[#allocation2 + $0x2c08] sm:$0xff]
    %v1556 = vld [vmem:[#allocation2 + $0x2c10] sm:$0xff]
    %v1557 = vld [vmem:[#allocation2 + $0x2c18] sm:$0xff]
    %v1558 = vld [vmem:[#allocation2 + $0x2c20] sm:$0xff]
    %v1559 = vld [vmem:[#allocation2 + $0x2c28] sm:$0xff]
    %v1560 = vld [vmem:[#allocation2 + $0x2c30] sm:$0xff]
    %v1561 = vld [vmem:[#allocation2 + $0x2c38] sm:$0xff]
    %v1562 = vld [vmem:[#allocation2 + $0x2c40] sm:$0xff]
    %v1563 = vld [vmem:[#allocation2 + $0x2c48] sm:$0xff]
    %v1564 = vld [vmem:[#allocation2 + $0x2c50] sm:$0xff]
    %v1565 = vld [vmem:[#allocation2 + $0x2c58] sm:$0xff]
    %v1566 = vld [vmem:[#allocation2 + $0x2c60] sm:$0xff]
    %v1567 = vld [vmem:[#allocation2 + $0x2c68] sm:$0xff]
    %v1568 = vld [vmem:[#allocation2 + $0x2c70] sm:$0xff]
    %v1569 = vld [vmem:[#allocation2 + $0x2c78] sm:$0xff]
    %v1570 = vld [vmem:[#allocation2 + $0x2c80] sm:$0xff]
    %v1571 = vld [vmem:[#allocation2 + $0x2c88] sm:$0xff]
    %v1572 = vld [vmem:[#allocation2 + $0x2c90] sm:$0xff]
    %v1573 = vld [vmem:[#allocation2 + $0x2c98] sm:$0xff]
    %v1574 = vld [vmem:[#allocation2 + $0x2ca0] sm:$0xff]
    %v1575 = vld [vmem:[#allocation2 + $0x2ca8] sm:$0xff]
    %v1576 = vld [vmem:[#allocation2 + $0x2cb0] sm:$0xff]
    %v1577 = vld [vmem:[#allocation2 + $0x2cb8] sm:$0xff]
    %v1578 = vld [vmem:[#allocation2 + $0x2cc0] sm:$0xff]
    %v1579 = vld [vmem:[#allocation2 + $0x2cc8] sm:$0xff]
    %v1580 = vld [vmem:[#allocation2 + $0x2cd0] sm:$0xff]
    %v1581 = vld [vmem:[#allocation2 + $0x2cd8] sm:$0xff]
    %v1582 = vld [vmem:[#allocation2 + $0x2ce0] sm:$0xff]
    %v1583 = vld [vmem:[#allocation2 + $0x2ce8] sm:$0xff]
    %v1584 = vld [vmem:[#allocation2 + $0x2cf0] sm:$0xff]
    %v1585 = vld [vmem:[#allocation2 + $0x2cf8] sm:$0xff]
    %v1586 = vld [vmem:[#allocation2 + $0x2d00] sm:$0xff]
    %v1587 = vld [vmem:[#allocation2 + $0x2d08] sm:$0xff]
    %v1588 = vld [vmem:[#allocation2 + $0x2d10] sm:$0xff]
    %v1589 = vld [vmem:[#allocation2 + $0x2d18] sm:$0xff]
    %v1590 = vld [vmem:[#allocation2 + $0x2d20] sm:$0xff]
    %v1591 = vld [vmem:[#allocation2 + $0x2d28] sm:$0xff]
    %v1592 = vld [vmem:[#allocation2 + $0x2d30] sm:$0xff]
    %v1593 = vld [vmem:[#allocation2 + $0x2d38] sm:$0xff]
    %v1594 = vld [vmem:[#allocation2 + $0x2d40] sm:$0xff]
    %v1595 = vld [vmem:[#allocation2 + $0x2d48] sm:$0xff]
    %v1596 = vld [vmem:[#allocation2 + $0x2d50] sm:$0xff]
    %v1597 = vld [vmem:[#allocation2 + $0x2d58] sm:$0xff]
    %v1598 = vld [vmem:[#allocation2 + $0x2d60] sm:$0xff]
    %v1599 = vld [vmem:[#allocation2 + $0x2d68] sm:$0xff]
    %v1600 = vld [vmem:[#allocation2 + $0x2d70] sm:$0xff]
    %v1601 = vld [vmem:[#allocation2 + $0x2d78] sm:$0xff]
    %v1602 = vld [vmem:[#allocation2 + $0x2d80] sm:$0xff]
    %v1603 = vld [vmem:[#allocation2 + $0x2d88] sm:$0xff]
    %v1604 = vld [vmem:[#allocation2 + $0x2d90] sm:$0xff]
    %v1605 = vld [vmem:[#allocation2 + $0x2d98] sm:$0xff]
    %v1606 = vld [vmem:[#allocation2 + $0x2da0] sm:$0xff]
    %v1607 = vld [vmem:[#allocation2 + $0x2da8] sm:$0xff]
    %v1608 = vld [vmem:[#allocation2 + $0x2db0] sm:$0xff]
    %v1609 = vld [vmem:[#allocation2 + $0x2db8] sm:$0xff]
    %v1610 = vld [vmem:[#allocation2 + $0x2dc0] sm:$0xff]
    %v1611 = vld [vmem:[#allocation2 + $0x2dc8] sm:$0xff]
    %v1612 = vld [vmem:[#allocation2 + $0x2dd0] sm:$0xff]
    %v1613 = vld [vmem:[#allocation2 + $0x2dd8] sm:$0xff]
    %v1614 = vld [vmem:[#allocation2 + $0x2de0] sm:$0xff]
    %v1615 = vld [vmem:[#allocation2 + $0x2de8] sm:$0xff]
    %v1616 = vld [vmem:[#allocation2 + $0x2df0] sm:$0xff]
    %v1617 = vld [vmem:[#allocation2 + $0x2df8] sm:$0xff]
    %v1618 = vld [vmem:[#allocation2 + $0x2e00] sm:$0xff]
    %v1619 = vld [vmem:[#allocation2 + $0x2e08] sm:$0xff]
    %v1620 = vld [vmem:[#allocation2 + $0x2e10] sm:$0xff]
    %v1621 = vld [vmem:[#allocation2 + $0x2e18] sm:$0xff]
    %v1622 = vld [vmem:[#allocation2 + $0x2e20] sm:$0xff]
    %v1623 = vld [vmem:[#allocation2 + $0x2e28] sm:$0xff]
    %v1624 = vld [vmem:[#allocation2 + $0x2e30] sm:$0xff]
    %v1625 = vld [vmem:[#allocation2 + $0x2e38] sm:$0xff]
    %v1626 = vld [vmem:[#allocation2 + $0x2e40] sm:$0xff]
    %v1627 = vld [vmem:[#allocation2 + $0x2e48] sm:$0xff]
    %v1628 = vld [vmem:[#allocation2 + $0x2e50] sm:$0xff]
    %v1629 = vld [vmem:[#allocation2 + $0x2e58] sm:$0xff]
    %v1630 = vld [vmem:[#allocation2 + $0x2e60] sm:$0xff]
    %v1631 = vld [vmem:[#allocation2 + $0x2e68] sm:$0xff]
    %v1632 = vld [vmem:[#allocation2 + $0x2e70] sm:$0xff]
    %v1633 = vld [vmem:[#allocation2 + $0x2e78] sm:$0xff]
    %v1634 = vld [vmem:[#allocation2 + $0x2e80] sm:$0xff]
    %v1635 = vld [vmem:[#allocation2 + $0x2e88] sm:$0xff]
    %v1636 = vld [vmem:[#allocation2 + $0x2e90] sm:$0xff]
    %v1637 = vld [vmem:[#allocation2 + $0x2e98] sm:$0xff]
    %v1638 = vld [vmem:[#allocation2 + $0x2ea0] sm:$0xff]
    %v1639 = vld [vmem:[#allocation2 + $0x2ea8] sm:$0xff]
    %v1640 = vld [vmem:[#allocation2 + $0x2eb0] sm:$0xff]
    %v1641 = vld [vmem:[#allocation2 + $0x2eb8] sm:$0xff]
    %v1642 = vld [vmem:[#allocation2 + $0x2ec0] sm:$0xff]
    %v1643 = vld [vmem:[#allocation2 + $0x2ec8] sm:$0xff]
    %v1644 = vld [vmem:[#allocation2 + $0x2ed0] sm:$0xff]
    %v1645 = vld [vmem:[#allocation2 + $0x2ed8] sm:$0xff]
    %v1646 = vld [vmem:[#allocation2 + $0x2ee0] sm:$0xff]
    %v1647 = vld [vmem:[#allocation2 + $0x2ee8] sm:$0xff]
    %v1648 = vld [vmem:[#allocation2 + $0x2ef0] sm:$0xff]
    %v1649 = vld [vmem:[#allocation2 + $0x2ef8] sm:$0xff]
    %v1650 = vld [vmem:[#allocation2 + $0x2f00] sm:$0xff]
    %v1651 = vld [vmem:[#allocation2 + $0x2f08] sm:$0xff]
    %v1652 = vld [vmem:[#allocation2 + $0x2f10] sm:$0xff]
    %v1653 = vld [vmem:[#allocation2 + $0x2f18] sm:$0xff]
    %v1654 = vld [vmem:[#allocation2 + $0x2f20] sm:$0xff]
    %v1655 = vld [vmem:[#allocation2 + $0x2f28] sm:$0xff]
    %v1656 = vld [vmem:[#allocation2 + $0x2f30] sm:$0xff]
    %v1657 = vld [vmem:[#allocation2 + $0x2f38] sm:$0xff]
    %v1658 = vld [vmem:[#allocation2 + $0x2f40] sm:$0xff]
    %v1659 = vld [vmem:[#allocation2 + $0x2f48] sm:$0xff]
    %v1660 = vld [vmem:[#allocation2 + $0x2f50] sm:$0xff]
    %v1661 = vld [vmem:[#allocation2 + $0x2f58] sm:$0xff]
    %v1662 = vld [vmem:[#allocation2 + $0x2f60] sm:$0xff]
    %v1663 = vld [vmem:[#allocation2 + $0x2f68] sm:$0xff]
    %v1664 = vld [vmem:[#allocation2 + $0x2f70] sm:$0xff]
    %v1665 = vld [vmem:[#allocation2 + $0x2f78] sm:$0xff]
    %v1666 = vld [vmem:[#allocation2 + $0x2f80] sm:$0xff]
    %v1667 = vld [vmem:[#allocation2 + $0x2f88] sm:$0xff]
    %v1668 = vld [vmem:[#allocation2 + $0x2f90] sm:$0xff]
    %v1669 = vld [vmem:[#allocation2 + $0x2f98] sm:$0xff]
    %v1670 = vld [vmem:[#allocation2 + $0x2fa0] sm:$0xff]
    %v1671 = vld [vmem:[#allocation2 + $0x2fa8] sm:$0xff]
    %v1672 = vld [vmem:[#allocation2 + $0x2fb0] sm:$0xff]
    %v1673 = vld [vmem:[#allocation2 + $0x2fb8] sm:$0xff]
    %v1674 = vld [vmem:[#allocation2 + $0x2fc0] sm:$0xff]
    %v1675 = vld [vmem:[#allocation2 + $0x2fc8] sm:$0xff]
    %v1676 = vld [vmem:[#allocation2 + $0x2fd0] sm:$0xff]
    %v1677 = vld [vmem:[#allocation2 + $0x2fd8] sm:$0xff]
    %v1678 = vld [vmem:[#allocation2 + $0x2fe0] sm:$0xff]
    %v1679 = vld [vmem:[#allocation2 + $0x2fe8] sm:$0xff]
    %v1680 = vld [vmem:[#allocation2 + $0x2ff0] sm:$0xff]
    %v1681 = vld [vmem:[#allocation2 + $0x2ff8] sm:$0xff]
    %v1682 = vld [vmem:[#allocation4] sm:$0xff]
    %v1684 = vlaneseq
    %v1685 = vshrl.u32 %v1684, 7
    %v1686 = vsub.s32 0, %v1685
    %v1687 = vrot.slane %v1682, %v1686
    %v1688 = vlaneseq
    %v1689 = vshrl.u32 %v1688, 7
    %v1690 = vsub.s32 1, %v1689
    %v1691 = vrot.slane %v1682, %v1690
    %v1692 = vlaneseq
    %v1693 = vshrl.u32 %v1692, 7
    %v1694 = vsub.s32 2, %v1693
    %v1695 = vrot.slane %v1682, %v1694
    %v1696 = vlaneseq
    %v1697 = vshrl.u32 %v1696, 7
    %v1698 = vsub.s32 3, %v1697
    %v1699 = vrot.slane %v1682, %v1698
    %v1700 = vlaneseq
    %v1701 = vshrl.u32 %v1700, 7
    %v1702 = vsub.s32 4, %v1701
    %v1703 = vrot.slane %v1682, %v1702
    %v1704 = vlaneseq
    %v1705 = vshrl.u32 %v1704, 7
    %v1706 = vsub.s32 5, %v1705
    %v1707 = vrot.slane %v1682, %v1706
    %v1708 = vlaneseq
    %v1709 = vshrl.u32 %v1708, 7
    %v1710 = vsub.s32 6, %v1709
    %v1711 = vrot.slane %v1682, %v1710
    %v1712 = vlaneseq
    %v1713 = vshrl.u32 %v1712, 7
    %v1714 = vsub.s32 7, %v1713
    %v1715 = vrot.slane %v1682, %v1714
    %v1736 = vunpack.c.l.b16 %v134
    %v1737 = vunpack.c.h.b16 %v134
    %v1738 = vunpack.c.l.b16 %v135
    %v1739 = vunpack.c.h.b16 %v135
    %v1740 = vunpack.c.l.b16 %v136
    %v1741 = vunpack.c.h.b16 %v136
    %v1742 = vunpack.c.l.b16 %v137
    %v1743 = vunpack.c.h.b16 %v137
    %v1744 = vunpack.c.l.b16 %v138
    %v1745 = vunpack.c.h.b16 %v138
    %v1746 = vunpack.c.l.b16 %v139
    %v1747 = vunpack.c.h.b16 %v139
    %v1748 = vunpack.c.l.b16 %v140
    %v1749 = vunpack.c.h.b16 %v140
    %v1750 = vunpack.c.l.b16 %v141
    %v1751 = vunpack.c.h.b16 %v141
    %v1752 = vunpack.c.l.b16 %v142
    %v1753 = vunpack.c.h.b16 %v142
    %v1754 = vunpack.c.l.b16 %v143
    %v1755 = vunpack.c.h.b16 %v143
    %v1756 = vunpack.c.l.b16 %v144
    %v1757 = vunpack.c.h.b16 %v144
    %v1758 = vunpack.c.l.b16 %v145
    %v1759 = vunpack.c.h.b16 %v145
    %v1760 = vpack.c.b16 %v1736, %v1736
    %v1761 = vpack.c.b16 %v1737, %v1737
    %v1762 = vpack.c.b16 %v1738, %v1738
    %v1763 = vpack.c.b16 %v1739, %v1739
    %v1764 = vpack.c.b16 %v1740, %v1740
    %v1765 = vpack.c.b16 %v1741, %v1741
    %v1766 = vpack.c.b16 %v1742, %v1742
    %v1767 = vpack.c.b16 %v1743, %v1743
    %v1768 = vpack.c.b16 %v1744, %v1744
    %v1769 = vpack.c.b16 %v1745, %v1745
    %v1770 = vpack.c.b16 %v1746, %v1746
    %v1771 = vpack.c.b16 %v1747, %v1747
    %v1772 = vpack.c.b16 %v1748, %v1748
    %v1773 = vpack.c.b16 %v1749, %v1749
    %v1774 = vpack.c.b16 %v1750, %v1750
    %v1775 = vpack.c.b16 %v1751, %v1751
    %v1776 = vpack.c.b16 %v1752, %v1752
    %v1777 = vpack.c.b16 %v1753, %v1753
    %v1778 = vpack.c.b16 %v1754, %v1754
    %v1779 = vpack.c.b16 %v1755, %v1755
    %v1780 = vpack.c.b16 %v1756, %v1756
    %v1781 = vpack.c.b16 %v1757, %v1757
    %v1782 = vpack.c.b16 %v1758, %v1758
    %v1783 = vpack.c.b16 %v1759, %v1759
    %v3344 = vunpack.c.l.b16 %v146
    %v3345 = vunpack.c.h.b16 %v146
    %v3346 = vunpack.c.l.b16 %v147
    %v3347 = vunpack.c.h.b16 %v147
    %v3348 = vunpack.c.l.b16 %v148
    %v3349 = vunpack.c.h.b16 %v148
    %v3350 = vunpack.c.l.b16 %v149
    %v3351 = vunpack.c.h.b16 %v149
    %v3352 = vunpack.c.l.b16 %v150
    %v3353 = vunpack.c.h.b16 %v150
    %v3354 = vunpack.c.l.b16 %v151
    %v3355 = vunpack.c.h.b16 %v151
    %v3356 = vunpack.c.l.b16 %v152
    %v3357 = vunpack.c.h.b16 %v152
    %v3358 = vunpack.c.l.b16 %v153
    %v3359 = vunpack.c.h.b16 %v153
    %v3360 = vunpack.c.l.b16 %v154
    %v3361 = vunpack.c.h.b16 %v154
    %v3362 = vunpack.c.l.b16 %v155
    %v3363 = vunpack.c.h.b16 %v155
    %v3364 = vunpack.c.l.b16 %v156
    %v3365 = vunpack.c.h.b16 %v156
    %v3366 = vunpack.c.l.b16 %v157
    %v3367 = vunpack.c.h.b16 %v157
    %v3368 = vunpack.c.l.b16 %v158
    %v3369 = vunpack.c.h.b16 %v158
    %v3370 = vunpack.c.l.b16 %v159
    %v3371 = vunpack.c.h.b16 %v159
    %v3372 = vunpack.c.l.b16 %v160
    %v3373 = vunpack.c.h.b16 %v160
    %v3374 = vunpack.c.l.b16 %v161
    %v3375 = vunpack.c.h.b16 %v161
    %v3376 = vunpack.c.l.b16 %v162
    %v3377 = vunpack.c.h.b16 %v162
    %v3378 = vunpack.c.l.b16 %v163
    %v3379 = vunpack.c.h.b16 %v163
    %v3380 = vunpack.c.l.b16 %v164
    %v3381 = vunpack.c.h.b16 %v164
    %v3382 = vunpack.c.l.b16 %v165
    %v3383 = vunpack.c.h.b16 %v165
    %v3384 = vunpack.c.l.b16 %v166
    %v3385 = vunpack.c.h.b16 %v166
    %v3386 = vunpack.c.l.b16 %v167
    %v3387 = vunpack.c.h.b16 %v167
    %v3388 = vunpack.c.l.b16 %v168
    %v3389 = vunpack.c.h.b16 %v168
    %v3390 = vunpack.c.l.b16 %v169
    %v3391 = vunpack.c.h.b16 %v169
    %v3392 = vunpack.c.l.b16 %v170
    %v3393 = vunpack.c.h.b16 %v170
    %v3394 = vunpack.c.l.b16 %v171
    %v3395 = vunpack.c.h.b16 %v171
    %v3396 = vunpack.c.l.b16 %v172
    %v3397 = vunpack.c.h.b16 %v172
    %v3398 = vunpack.c.l.b16 %v173
    %v3399 = vunpack.c.h.b16 %v173
    %v3400 = vunpack.c.l.b16 %v174
    %v3401 = vunpack.c.h.b16 %v174
    %v3402 = vunpack.c.l.b16 %v175
    %v3403 = vunpack.c.h.b16 %v175
    %v3404 = vunpack.c.l.b16 %v176
    %v3405 = vunpack.c.h.b16 %v176
    %v3406 = vunpack.c.l.b16 %v177
    %v3407 = vunpack.c.h.b16 %v177
    %v3408 = vunpack.c.l.b16 %v178
    %v3409 = vunpack.c.h.b16 %v178
    %v3410 = vunpack.c.l.b16 %v179
    %v3411 = vunpack.c.h.b16 %v179
    %v3412 = vunpack.c.l.b16 %v180
    %v3413 = vunpack.c.h.b16 %v180
    %v3414 = vunpack.c.l.b16 %v181
    %v3415 = vunpack.c.h.b16 %v181
    %v3416 = vunpack.c.l.b16 %v182
    %v3417 = vunpack.c.h.b16 %v182
    %v3418 = vunpack.c.l.b16 %v183
    %v3419 = vunpack.c.h.b16 %v183
    %v3420 = vunpack.c.l.b16 %v184
    %v3421 = vunpack.c.h.b16 %v184
    %v3422 = vunpack.c.l.b16 %v185
    %v3423 = vunpack.c.h.b16 %v185
    %v3424 = vunpack.c.l.b16 %v186
    %v3425 = vunpack.c.h.b16 %v186
    %v3426 = vunpack.c.l.b16 %v187
    %v3427 = vunpack.c.h.b16 %v187
    %v3428 = vunpack.c.l.b16 %v188
    %v3429 = vunpack.c.h.b16 %v188
    %v3430 = vunpack.c.l.b16 %v189
    %v3431 = vunpack.c.h.b16 %v189
    %v3432 = vunpack.c.l.b16 %v190
    %v3433 = vunpack.c.h.b16 %v190
    %v3434 = vunpack.c.l.b16 %v191
    %v3435 = vunpack.c.h.b16 %v191
    %v3436 = vunpack.c.l.b16 %v192
    %v3437 = vunpack.c.h.b16 %v192
    %v3438 = vunpack.c.l.b16 %v193
    %v3439 = vunpack.c.h.b16 %v193
    %v3440 = vunpack.c.l.b16 %v194
    %v3441 = vunpack.c.h.b16 %v194
    %v3442 = vunpack.c.l.b16 %v195
    %v3443 = vunpack.c.h.b16 %v195
    %v3444 = vunpack.c.l.b16 %v196
    %v3445 = vunpack.c.h.b16 %v196
    %v3446 = vunpack.c.l.b16 %v197
    %v3447 = vunpack.c.h.b16 %v197
    %v3448 = vunpack.c.l.b16 %v198
    %v3449 = vunpack.c.h.b16 %v198
    %v3450 = vunpack.c.l.b16 %v199
    %v3451 = vunpack.c.h.b16 %v199
    %v3452 = vunpack.c.l.b16 %v200
    %v3453 = vunpack.c.h.b16 %v200
    %v3454 = vunpack.c.l.b16 %v201
    %v3455 = vunpack.c.h.b16 %v201
    %v3456 = vunpack.c.l.b16 %v202
    %v3457 = vunpack.c.h.b16 %v202
    %v3458 = vunpack.c.l.b16 %v203
    %v3459 = vunpack.c.h.b16 %v203
    %v3460 = vunpack.c.l.b16 %v204
    %v3461 = vunpack.c.h.b16 %v204
    %v3462 = vunpack.c.l.b16 %v205
    %v3463 = vunpack.c.h.b16 %v205
    %v3464 = vunpack.c.l.b16 %v206
    %v3465 = vunpack.c.h.b16 %v206
    %v3466 = vunpack.c.l.b16 %v207
    %v3467 = vunpack.c.h.b16 %v207
    %v3468 = vunpack.c.l.b16 %v208
    %v3469 = vunpack.c.h.b16 %v208
    %v3470 = vunpack.c.l.b16 %v209
    %v3471 = vunpack.c.h.b16 %v209
    %v3472 = vunpack.c.l.b16 %v210
    %v3473 = vunpack.c.h.b16 %v210
    %v3474 = vunpack.c.l.b16 %v211
    %v3475 = vunpack.c.h.b16 %v211
    %v3476 = vunpack.c.l.b16 %v212
    %v3477 = vunpack.c.h.b16 %v212
    %v3478 = vunpack.c.l.b16 %v213
    %v3479 = vunpack.c.h.b16 %v213
    %v3480 = vunpack.c.l.b16 %v214
    %v3481 = vunpack.c.h.b16 %v214
    %v3482 = vunpack.c.l.b16 %v215
    %v3483 = vunpack.c.h.b16 %v215
    %v3484 = vunpack.c.l.b16 %v216
    %v3485 = vunpack.c.h.b16 %v216
    %v3486 = vunpack.c.l.b16 %v217
    %v3487 = vunpack.c.h.b16 %v217
    %v3488 = vunpack.c.l.b16 %v218
    %v3489 = vunpack.c.h.b16 %v218
    %v3490 = vunpack.c.l.b16 %v219
    %v3491 = vunpack.c.h.b16 %v219
    %v3492 = vunpack.c.l.b16 %v220
    %v3493 = vunpack.c.h.b16 %v220
    %v3494 = vunpack.c.l.b16 %v221
    %v3495 = vunpack.c.h.b16 %v221
    %v3496 = vunpack.c.l.b16 %v222
    %v3497 = vunpack.c.h.b16 %v222
    %v3498 = vunpack.c.l.b16 %v223
    %v3499 = vunpack.c.h.b16 %v223
    %v3500 = vunpack.c.l.b16 %v224
    %v3501 = vunpack.c.h.b16 %v224
    %v3502 = vunpack.c.l.b16 %v225
    %v3503 = vunpack.c.h.b16 %v225
    %v3504 = vunpack.c.l.b16 %v226
    %v3505 = vunpack.c.h.b16 %v226
    %v3506 = vunpack.c.l.b16 %v227
    %v3507 = vunpack.c.h.b16 %v227
    %v3508 = vunpack.c.l.b16 %v228
    %v3509 = vunpack.c.h.b16 %v228
    %v3510 = vunpack.c.l.b16 %v229
    %v3511 = vunpack.c.h.b16 %v229
    %v3512 = vunpack.c.l.b16 %v230
    %v3513 = vunpack.c.h.b16 %v230
    %v3514 = vunpack.c.l.b16 %v231
    %v3515 = vunpack.c.h.b16 %v231
    %v3516 = vunpack.c.l.b16 %v232
    %v3517 = vunpack.c.h.b16 %v232
    %v3518 = vunpack.c.l.b16 %v233
    %v3519 = vunpack.c.h.b16 %v233
    %v3520 = vunpack.c.l.b16 %v234
    %v3521 = vunpack.c.h.b16 %v234
    %v3522 = vunpack.c.l.b16 %v235
    %v3523 = vunpack.c.h.b16 %v235
    %v3524 = vunpack.c.l.b16 %v236
    %v3525 = vunpack.c.h.b16 %v236
    %v3526 = vunpack.c.l.b16 %v237
    %v3527 = vunpack.c.h.b16 %v237
    %v3528 = vunpack.c.l.b16 %v238
    %v3529 = vunpack.c.h.b16 %v238
    %v3530 = vunpack.c.l.b16 %v239
    %v3531 = vunpack.c.h.b16 %v239
    %v3532 = vunpack.c.l.b16 %v240
    %v3533 = vunpack.c.h.b16 %v240
    %v3534 = vunpack.c.l.b16 %v241
    %v3535 = vunpack.c.h.b16 %v241
    %v3536 = vunpack.c.l.b16 %v242
    %v3537 = vunpack.c.h.b16 %v242
    %v3538 = vunpack.c.l.b16 %v243
    %v3539 = vunpack.c.h.b16 %v243
    %v3540 = vunpack.c.l.b16 %v244
    %v3541 = vunpack.c.h.b16 %v244
    %v3542 = vunpack.c.l.b16 %v245
    %v3543 = vunpack.c.h.b16 %v245
    %v3544 = vunpack.c.l.b16 %v246
    %v3545 = vunpack.c.h.b16 %v246
    %v3546 = vunpack.c.l.b16 %v247
    %v3547 = vunpack.c.h.b16 %v247
    %v3548 = vunpack.c.l.b16 %v248
    %v3549 = vunpack.c.h.b16 %v248
    %v3550 = vunpack.c.l.b16 %v249
    %v3551 = vunpack.c.h.b16 %v249
    %v3552 = vunpack.c.l.b16 %v250
    %v3553 = vunpack.c.h.b16 %v250
    %v3554 = vunpack.c.l.b16 %v251
    %v3555 = vunpack.c.h.b16 %v251
    %v3556 = vunpack.c.l.b16 %v252
    %v3557 = vunpack.c.h.b16 %v252
    %v3558 = vunpack.c.l.b16 %v253
    %v3559 = vunpack.c.h.b16 %v253
    %v3560 = vunpack.c.l.b16 %v254
    %v3561 = vunpack.c.h.b16 %v254
    %v3562 = vunpack.c.l.b16 %v255
    %v3563 = vunpack.c.h.b16 %v255
    %v3564 = vunpack.c.l.b16 %v256
    %v3565 = vunpack.c.h.b16 %v256
    %v3566 = vunpack.c.l.b16 %v257
    %v3567 = vunpack.c.h.b16 %v257
    %v3568 = vunpack.c.l.b16 %v258
    %v3569 = vunpack.c.h.b16 %v258
    %v3570 = vunpack.c.l.b16 %v259
    %v3571 = vunpack.c.h.b16 %v259
    %v3572 = vunpack.c.l.b16 %v260
    %v3573 = vunpack.c.h.b16 %v260
    %v3574 = vunpack.c.l.b16 %v261
    %v3575 = vunpack.c.h.b16 %v261
    %v3576 = vunpack.c.l.b16 %v262
    %v3577 = vunpack.c.h.b16 %v262
    %v3578 = vunpack.c.l.b16 %v263
    %v3579 = vunpack.c.h.b16 %v263
    %v3580 = vunpack.c.l.b16 %v264
    %v3581 = vunpack.c.h.b16 %v264
    %v3582 = vunpack.c.l.b16 %v265
    %v3583 = vunpack.c.h.b16 %v265
    %v3584 = vunpack.c.l.b16 %v266
    %v3585 = vunpack.c.h.b16 %v266
    %v3586 = vunpack.c.l.b16 %v267
    %v3587 = vunpack.c.h.b16 %v267
    %v3588 = vunpack.c.l.b16 %v268
    %v3589 = vunpack.c.h.b16 %v268
    %v3590 = vunpack.c.l.b16 %v269
    %v3591 = vunpack.c.h.b16 %v269
    %v3592 = vunpack.c.l.b16 %v270
    %v3593 = vunpack.c.h.b16 %v270
    %v3594 = vunpack.c.l.b16 %v271
    %v3595 = vunpack.c.h.b16 %v271
    %v3596 = vunpack.c.l.b16 %v272
    %v3597 = vunpack.c.h.b16 %v272
    %v3598 = vunpack.c.l.b16 %v273
    %v3599 = vunpack.c.h.b16 %v273
    %v3600 = vunpack.c.l.b16 %v274
    %v3601 = vunpack.c.h.b16 %v274
    %v3602 = vunpack.c.l.b16 %v275
    %v3603 = vunpack.c.h.b16 %v275
    %v3604 = vunpack.c.l.b16 %v276
    %v3605 = vunpack.c.h.b16 %v276
    %v3606 = vunpack.c.l.b16 %v277
    %v3607 = vunpack.c.h.b16 %v277
    %v3608 = vunpack.c.l.b16 %v278
    %v3609 = vunpack.c.h.b16 %v278
    %v3610 = vunpack.c.l.b16 %v279
    %v3611 = vunpack.c.h.b16 %v279
    %v3612 = vunpack.c.l.b16 %v280
    %v3613 = vunpack.c.h.b16 %v280
    %v3614 = vunpack.c.l.b16 %v281
    %v3615 = vunpack.c.h.b16 %v281
    %v3616 = vunpack.c.l.b16 %v282
    %v3617 = vunpack.c.h.b16 %v282
    %v3618 = vunpack.c.l.b16 %v283
    %v3619 = vunpack.c.h.b16 %v283
    %v3620 = vunpack.c.l.b16 %v284
    %v3621 = vunpack.c.h.b16 %v284
    %v3622 = vunpack.c.l.b16 %v285
    %v3623 = vunpack.c.h.b16 %v285
    %v3624 = vunpack.c.l.b16 %v286
    %v3625 = vunpack.c.h.b16 %v286
    %v3626 = vunpack.c.l.b16 %v287
    %v3627 = vunpack.c.h.b16 %v287
    %v3628 = vunpack.c.l.b16 %v288
    %v3629 = vunpack.c.h.b16 %v288
    %v3630 = vunpack.c.l.b16 %v289
    %v3631 = vunpack.c.h.b16 %v289
    %v3632 = vunpack.c.l.b16 %v290
    %v3633 = vunpack.c.h.b16 %v290
    %v3634 = vunpack.c.l.b16 %v291
    %v3635 = vunpack.c.h.b16 %v291
    %v3636 = vunpack.c.l.b16 %v292
    %v3637 = vunpack.c.h.b16 %v292
    %v3638 = vunpack.c.l.b16 %v293
    %v3639 = vunpack.c.h.b16 %v293
    %v3640 = vunpack.c.l.b16 %v294
    %v3641 = vunpack.c.h.b16 %v294
    %v3642 = vunpack.c.l.b16 %v295
    %v3643 = vunpack.c.h.b16 %v295
    %v3644 = vunpack.c.l.b16 %v296
    %v3645 = vunpack.c.h.b16 %v296
    %v3646 = vunpack.c.l.b16 %v297
    %v3647 = vunpack.c.h.b16 %v297
    %v3648 = vunpack.c.l.b16 %v298
    %v3649 = vunpack.c.h.b16 %v298
    %v3650 = vunpack.c.l.b16 %v299
    %v3651 = vunpack.c.h.b16 %v299
    %v3652 = vunpack.c.l.b16 %v300
    %v3653 = vunpack.c.h.b16 %v300
    %v3654 = vunpack.c.l.b16 %v301
    %v3655 = vunpack.c.h.b16 %v301
    %v3656 = vunpack.c.l.b16 %v302
    %v3657 = vunpack.c.h.b16 %v302
    %v3658 = vunpack.c.l.b16 %v303
    %v3659 = vunpack.c.h.b16 %v303
    %v3660 = vunpack.c.l.b16 %v304
    %v3661 = vunpack.c.h.b16 %v304
    %v3662 = vunpack.c.l.b16 %v305
    %v3663 = vunpack.c.h.b16 %v305
    %v3664 = vunpack.c.l.b16 %v306
    %v3665 = vunpack.c.h.b16 %v306
    %v3666 = vunpack.c.l.b16 %v307
    %v3667 = vunpack.c.h.b16 %v307
    %v3668 = vunpack.c.l.b16 %v308
    %v3669 = vunpack.c.h.b16 %v308
    %v3670 = vunpack.c.l.b16 %v309
    %v3671 = vunpack.c.h.b16 %v309
    %v3672 = vunpack.c.l.b16 %v310
    %v3673 = vunpack.c.h.b16 %v310
    %v3674 = vunpack.c.l.b16 %v311
    %v3675 = vunpack.c.h.b16 %v311
    %v3676 = vunpack.c.l.b16 %v312
    %v3677 = vunpack.c.h.b16 %v312
    %v3678 = vunpack.c.l.b16 %v313
    %v3679 = vunpack.c.h.b16 %v313
    %v3680 = vunpack.c.l.b16 %v314
    %v3681 = vunpack.c.h.b16 %v314
    %v3682 = vunpack.c.l.b16 %v315
    %v3683 = vunpack.c.h.b16 %v315
    %v3684 = vunpack.c.l.b16 %v316
    %v3685 = vunpack.c.h.b16 %v316
    %v3686 = vunpack.c.l.b16 %v317
    %v3687 = vunpack.c.h.b16 %v317
    %v3688 = vunpack.c.l.b16 %v318
    %v3689 = vunpack.c.h.b16 %v318
    %v3690 = vunpack.c.l.b16 %v319
    %v3691 = vunpack.c.h.b16 %v319
    %v3692 = vunpack.c.l.b16 %v320
    %v3693 = vunpack.c.h.b16 %v320
    %v3694 = vunpack.c.l.b16 %v321
    %v3695 = vunpack.c.h.b16 %v321
    %v3696 = vunpack.c.l.b16 %v322
    %v3697 = vunpack.c.h.b16 %v322
    %v3698 = vunpack.c.l.b16 %v323
    %v3699 = vunpack.c.h.b16 %v323
    %v3700 = vunpack.c.l.b16 %v324
    %v3701 = vunpack.c.h.b16 %v324
    %v3702 = vunpack.c.l.b16 %v325
    %v3703 = vunpack.c.h.b16 %v325
    %v3704 = vunpack.c.l.b16 %v326
    %v3705 = vunpack.c.h.b16 %v326
    %v3706 = vunpack.c.l.b16 %v327
    %v3707 = vunpack.c.h.b16 %v327
    %v3708 = vunpack.c.l.b16 %v328
    %v3709 = vunpack.c.h.b16 %v328
    %v3710 = vunpack.c.l.b16 %v329
    %v3711 = vunpack.c.h.b16 %v329
    %v3712 = vunpack.c.l.b16 %v330
    %v3713 = vunpack.c.h.b16 %v330
    %v3714 = vunpack.c.l.b16 %v331
    %v3715 = vunpack.c.h.b16 %v331
    %v3716 = vunpack.c.l.b16 %v332
    %v3717 = vunpack.c.h.b16 %v332
    %v3718 = vunpack.c.l.b16 %v333
    %v3719 = vunpack.c.h.b16 %v333
    %v3720 = vunpack.c.l.b16 %v334
    %v3721 = vunpack.c.h.b16 %v334
    %v3722 = vunpack.c.l.b16 %v335
    %v3723 = vunpack.c.h.b16 %v335
    %v3724 = vunpack.c.l.b16 %v336
    %v3725 = vunpack.c.h.b16 %v336
    %v3726 = vunpack.c.l.b16 %v337
    %v3727 = vunpack.c.h.b16 %v337
    %v3728 = vunpack.c.l.b16 %v338
    %v3729 = vunpack.c.h.b16 %v338
    %v3730 = vunpack.c.l.b16 %v339
    %v3731 = vunpack.c.h.b16 %v339
    %v3732 = vunpack.c.l.b16 %v340
    %v3733 = vunpack.c.h.b16 %v340
    %v3734 = vunpack.c.l.b16 %v341
    %v3735 = vunpack.c.h.b16 %v341
    %v3736 = vunpack.c.l.b16 %v342
    %v3737 = vunpack.c.h.b16 %v342
    %v3738 = vunpack.c.l.b16 %v343
    %v3739 = vunpack.c.h.b16 %v343
    %v3740 = vunpack.c.l.b16 %v344
    %v3741 = vunpack.c.h.b16 %v344
    %v3742 = vunpack.c.l.b16 %v345
    %v3743 = vunpack.c.h.b16 %v345
    %v3744 = vunpack.c.l.b16 %v346
    %v3745 = vunpack.c.h.b16 %v346
    %v3746 = vunpack.c.l.b16 %v347
    %v3747 = vunpack.c.h.b16 %v347
    %v3748 = vunpack.c.l.b16 %v348
    %v3749 = vunpack.c.h.b16 %v348
    %v3750 = vunpack.c.l.b16 %v349
    %v3751 = vunpack.c.h.b16 %v349
    %v3752 = vunpack.c.l.b16 %v350
    %v3753 = vunpack.c.h.b16 %v350
    %v3754 = vunpack.c.l.b16 %v351
    %v3755 = vunpack.c.h.b16 %v351
    %v3756 = vunpack.c.l.b16 %v352
    %v3757 = vunpack.c.h.b16 %v352
    %v3758 = vunpack.c.l.b16 %v353
    %v3759 = vunpack.c.h.b16 %v353
    %v3760 = vunpack.c.l.b16 %v354
    %v3761 = vunpack.c.h.b16 %v354
    %v3762 = vunpack.c.l.b16 %v355
    %v3763 = vunpack.c.h.b16 %v355
    %v3764 = vunpack.c.l.b16 %v356
    %v3765 = vunpack.c.h.b16 %v356
    %v3766 = vunpack.c.l.b16 %v357
    %v3767 = vunpack.c.h.b16 %v357
    %v3768 = vunpack.c.l.b16 %v358
    %v3769 = vunpack.c.h.b16 %v358
    %v3770 = vunpack.c.l.b16 %v359
    %v3771 = vunpack.c.h.b16 %v359
    %v3772 = vunpack.c.l.b16 %v360
    %v3773 = vunpack.c.h.b16 %v360
    %v3774 = vunpack.c.l.b16 %v361
    %v3775 = vunpack.c.h.b16 %v361
    %v3776 = vunpack.c.l.b16 %v362
    %v3777 = vunpack.c.h.b16 %v362
    %v3778 = vunpack.c.l.b16 %v363
    %v3779 = vunpack.c.h.b16 %v363
    %v3780 = vunpack.c.l.b16 %v364
    %v3781 = vunpack.c.h.b16 %v364
    %v3782 = vunpack.c.l.b16 %v365
    %v3783 = vunpack.c.h.b16 %v365
    %v3784 = vunpack.c.l.b16 %v366
    %v3785 = vunpack.c.h.b16 %v366
    %v3786 = vunpack.c.l.b16 %v367
    %v3787 = vunpack.c.h.b16 %v367
    %v3788 = vunpack.c.l.b16 %v368
    %v3789 = vunpack.c.h.b16 %v368
    %v3790 = vunpack.c.l.b16 %v369
    %v3791 = vunpack.c.h.b16 %v369
    %v3792 = vunpack.c.l.b16 %v370
    %v3793 = vunpack.c.h.b16 %v370
    %v3794 = vunpack.c.l.b16 %v371
    %v3795 = vunpack.c.h.b16 %v371
    %v3796 = vunpack.c.l.b16 %v372
    %v3797 = vunpack.c.h.b16 %v372
    %v3798 = vunpack.c.l.b16 %v373
    %v3799 = vunpack.c.h.b16 %v373
    %v3800 = vunpack.c.l.b16 %v374
    %v3801 = vunpack.c.h.b16 %v374
    %v3802 = vunpack.c.l.b16 %v375
    %v3803 = vunpack.c.h.b16 %v375
    %v3804 = vunpack.c.l.b16 %v376
    %v3805 = vunpack.c.h.b16 %v376
    %v3806 = vunpack.c.l.b16 %v377
    %v3807 = vunpack.c.h.b16 %v377
    %v3808 = vunpack.c.l.b16 %v378
    %v3809 = vunpack.c.h.b16 %v378
    %v3810 = vunpack.c.l.b16 %v379
    %v3811 = vunpack.c.h.b16 %v379
    %v3812 = vunpack.c.l.b16 %v380
    %v3813 = vunpack.c.h.b16 %v380
    %v3814 = vunpack.c.l.b16 %v381
    %v3815 = vunpack.c.h.b16 %v381
    %v3816 = vunpack.c.l.b16 %v382
    %v3817 = vunpack.c.h.b16 %v382
    %v3818 = vunpack.c.l.b16 %v383
    %v3819 = vunpack.c.h.b16 %v383
    %v3820 = vunpack.c.l.b16 %v384
    %v3821 = vunpack.c.h.b16 %v384
    %v3822 = vunpack.c.l.b16 %v385
    %v3823 = vunpack.c.h.b16 %v385
    %v3824 = vunpack.c.l.b16 %v386
    %v3825 = vunpack.c.h.b16 %v386
    %v3826 = vunpack.c.l.b16 %v387
    %v3827 = vunpack.c.h.b16 %v387
    %v3828 = vunpack.c.l.b16 %v388
    %v3829 = vunpack.c.h.b16 %v388
    %v3830 = vunpack.c.l.b16 %v389
    %v3831 = vunpack.c.h.b16 %v389
    %v3832 = vunpack.c.l.b16 %v390
    %v3833 = vunpack.c.h.b16 %v390
    %v3834 = vunpack.c.l.b16 %v391
    %v3835 = vunpack.c.h.b16 %v391
    %v3836 = vunpack.c.l.b16 %v392
    %v3837 = vunpack.c.h.b16 %v392
    %v3838 = vunpack.c.l.b16 %v393
    %v3839 = vunpack.c.h.b16 %v393
    %v3840 = vunpack.c.l.b16 %v394
    %v3841 = vunpack.c.h.b16 %v394
    %v3842 = vunpack.c.l.b16 %v395
    %v3843 = vunpack.c.h.b16 %v395
    %v3844 = vunpack.c.l.b16 %v396
    %v3845 = vunpack.c.h.b16 %v396
    %v3846 = vunpack.c.l.b16 %v397
    %v3847 = vunpack.c.h.b16 %v397
    %v3848 = vunpack.c.l.b16 %v398
    %v3849 = vunpack.c.h.b16 %v398
    %v3850 = vunpack.c.l.b16 %v399
    %v3851 = vunpack.c.h.b16 %v399
    %v3852 = vunpack.c.l.b16 %v400
    %v3853 = vunpack.c.h.b16 %v400
    %v3854 = vunpack.c.l.b16 %v401
    %v3855 = vunpack.c.h.b16 %v401
    %v3856 = vunpack.c.l.b16 %v402
    %v3857 = vunpack.c.h.b16 %v402
    %v3858 = vunpack.c.l.b16 %v403
    %v3859 = vunpack.c.h.b16 %v403
    %v3860 = vunpack.c.l.b16 %v404
    %v3861 = vunpack.c.h.b16 %v404
    %v3862 = vunpack.c.l.b16 %v405
    %v3863 = vunpack.c.h.b16 %v405
    %v3864 = vunpack.c.l.b16 %v406
    %v3865 = vunpack.c.h.b16 %v406
    %v3866 = vunpack.c.l.b16 %v407
    %v3867 = vunpack.c.h.b16 %v407
    %v3868 = vunpack.c.l.b16 %v408
    %v3869 = vunpack.c.h.b16 %v408
    %v3870 = vunpack.c.l.b16 %v409
    %v3871 = vunpack.c.h.b16 %v409
    %v3872 = vunpack.c.l.b16 %v410
    %v3873 = vunpack.c.h.b16 %v410
    %v3874 = vunpack.c.l.b16 %v411
    %v3875 = vunpack.c.h.b16 %v411
    %v3876 = vunpack.c.l.b16 %v412
    %v3877 = vunpack.c.h.b16 %v412
    %v3878 = vunpack.c.l.b16 %v413
    %v3879 = vunpack.c.h.b16 %v413
    %v3880 = vunpack.c.l.b16 %v414
    %v3881 = vunpack.c.h.b16 %v414
    %v3882 = vunpack.c.l.b16 %v415
    %v3883 = vunpack.c.h.b16 %v415
    %v3884 = vunpack.c.l.b16 %v416
    %v3885 = vunpack.c.h.b16 %v416
    %v3886 = vunpack.c.l.b16 %v417
    %v3887 = vunpack.c.h.b16 %v417
    %v3888 = vunpack.c.l.b16 %v418
    %v3889 = vunpack.c.h.b16 %v418
    %v3890 = vunpack.c.l.b16 %v419
    %v3891 = vunpack.c.h.b16 %v419
    %v3892 = vunpack.c.l.b16 %v420
    %v3893 = vunpack.c.h.b16 %v420
    %v3894 = vunpack.c.l.b16 %v421
    %v3895 = vunpack.c.h.b16 %v421
    %v3896 = vunpack.c.l.b16 %v422
    %v3897 = vunpack.c.h.b16 %v422
    %v3898 = vunpack.c.l.b16 %v423
    %v3899 = vunpack.c.h.b16 %v423
    %v3900 = vunpack.c.l.b16 %v424
    %v3901 = vunpack.c.h.b16 %v424
    %v3902 = vunpack.c.l.b16 %v425
    %v3903 = vunpack.c.h.b16 %v425
    %v3904 = vunpack.c.l.b16 %v426
    %v3905 = vunpack.c.h.b16 %v426
    %v3906 = vunpack.c.l.b16 %v427
    %v3907 = vunpack.c.h.b16 %v427
    %v3908 = vunpack.c.l.b16 %v428
    %v3909 = vunpack.c.h.b16 %v428
    %v3910 = vunpack.c.l.b16 %v429
    %v3911 = vunpack.c.h.b16 %v429
    %v3912 = vunpack.c.l.b16 %v430
    %v3913 = vunpack.c.h.b16 %v430
    %v3914 = vunpack.c.l.b16 %v431
    %v3915 = vunpack.c.h.b16 %v431
    %v3916 = vunpack.c.l.b16 %v432
    %v3917 = vunpack.c.h.b16 %v432
    %v3918 = vunpack.c.l.b16 %v433
    %v3919 = vunpack.c.h.b16 %v433
    %v3920 = vunpack.c.l.b16 %v434
    %v3921 = vunpack.c.h.b16 %v434
    %v3922 = vunpack.c.l.b16 %v435
    %v3923 = vunpack.c.h.b16 %v435
    %v3924 = vunpack.c.l.b16 %v436
    %v3925 = vunpack.c.h.b16 %v436
    %v3926 = vunpack.c.l.b16 %v437
    %v3927 = vunpack.c.h.b16 %v437
    %v3928 = vunpack.c.l.b16 %v438
    %v3929 = vunpack.c.h.b16 %v438
    %v3930 = vunpack.c.l.b16 %v439
    %v3931 = vunpack.c.h.b16 %v439
    %v3932 = vunpack.c.l.b16 %v440
    %v3933 = vunpack.c.h.b16 %v440
    %v3934 = vunpack.c.l.b16 %v441
    %v3935 = vunpack.c.h.b16 %v441
    %v3936 = vunpack.c.l.b16 %v442
    %v3937 = vunpack.c.h.b16 %v442
    %v3938 = vunpack.c.l.b16 %v443
    %v3939 = vunpack.c.h.b16 %v443
    %v3940 = vunpack.c.l.b16 %v444
    %v3941 = vunpack.c.h.b16 %v444
    %v3942 = vunpack.c.l.b16 %v445
    %v3943 = vunpack.c.h.b16 %v445
    %v3944 = vunpack.c.l.b16 %v446
    %v3945 = vunpack.c.h.b16 %v446
    %v3946 = vunpack.c.l.b16 %v447
    %v3947 = vunpack.c.h.b16 %v447
    %v3948 = vunpack.c.l.b16 %v448
    %v3949 = vunpack.c.h.b16 %v448
    %v3950 = vunpack.c.l.b16 %v449
    %v3951 = vunpack.c.h.b16 %v449
    %v3952 = vunpack.c.l.b16 %v450
    %v3953 = vunpack.c.h.b16 %v450
    %v3954 = vunpack.c.l.b16 %v451
    %v3955 = vunpack.c.h.b16 %v451
    %v3956 = vunpack.c.l.b16 %v452
    %v3957 = vunpack.c.h.b16 %v452
    %v3958 = vunpack.c.l.b16 %v453
    %v3959 = vunpack.c.h.b16 %v453
    %v3960 = vunpack.c.l.b16 %v454
    %v3961 = vunpack.c.h.b16 %v454
    %v3962 = vunpack.c.l.b16 %v455
    %v3963 = vunpack.c.h.b16 %v455
    %v3964 = vunpack.c.l.b16 %v456
    %v3965 = vunpack.c.h.b16 %v456
    %v3966 = vunpack.c.l.b16 %v457
    %v3967 = vunpack.c.h.b16 %v457
    %v3968 = vunpack.c.l.b16 %v458
    %v3969 = vunpack.c.h.b16 %v458
    %v3970 = vunpack.c.l.b16 %v459
    %v3971 = vunpack.c.h.b16 %v459
    %v3972 = vunpack.c.l.b16 %v460
    %v3973 = vunpack.c.h.b16 %v460
    %v3974 = vunpack.c.l.b16 %v461
    %v3975 = vunpack.c.h.b16 %v461
    %v3976 = vunpack.c.l.b16 %v462
    %v3977 = vunpack.c.h.b16 %v462
    %v3978 = vunpack.c.l.b16 %v463
    %v3979 = vunpack.c.h.b16 %v463
    %v3980 = vunpack.c.l.b16 %v464
    %v3981 = vunpack.c.h.b16 %v464
    %v3982 = vunpack.c.l.b16 %v465
    %v3983 = vunpack.c.h.b16 %v465
    %v3984 = vunpack.c.l.b16 %v466
    %v3985 = vunpack.c.h.b16 %v466
    %v3986 = vunpack.c.l.b16 %v467
    %v3987 = vunpack.c.h.b16 %v467
    %v3988 = vunpack.c.l.b16 %v468
    %v3989 = vunpack.c.h.b16 %v468
    %v3990 = vunpack.c.l.b16 %v469
    %v3991 = vunpack.c.h.b16 %v469
    %v3992 = vunpack.c.l.b16 %v470
    %v3993 = vunpack.c.h.b16 %v470
    %v3994 = vunpack.c.l.b16 %v471
    %v3995 = vunpack.c.h.b16 %v471
    %v3996 = vunpack.c.l.b16 %v472
    %v3997 = vunpack.c.h.b16 %v472
    %v3998 = vunpack.c.l.b16 %v473
    %v3999 = vunpack.c.h.b16 %v473
    %v4000 = vunpack.c.l.b16 %v474
    %v4001 = vunpack.c.h.b16 %v474
    %v4002 = vunpack.c.l.b16 %v475
    %v4003 = vunpack.c.h.b16 %v475
    %v4004 = vunpack.c.l.b16 %v476
    %v4005 = vunpack.c.h.b16 %v476
    %v4006 = vunpack.c.l.b16 %v477
    %v4007 = vunpack.c.h.b16 %v477
    %v4008 = vunpack.c.l.b16 %v478
    %v4009 = vunpack.c.h.b16 %v478
    %v4010 = vunpack.c.l.b16 %v479
    %v4011 = vunpack.c.h.b16 %v479
    %v4012 = vunpack.c.l.b16 %v480
    %v4013 = vunpack.c.h.b16 %v480
    %v4014 = vunpack.c.l.b16 %v481
    %v4015 = vunpack.c.h.b16 %v481
    %v4016 = vunpack.c.l.b16 %v482
    %v4017 = vunpack.c.h.b16 %v482
    %v4018 = vunpack.c.l.b16 %v483
    %v4019 = vunpack.c.h.b16 %v483
    %v4020 = vunpack.c.l.b16 %v484
    %v4021 = vunpack.c.h.b16 %v484
    %v4022 = vunpack.c.l.b16 %v485
    %v4023 = vunpack.c.h.b16 %v485
    %v4024 = vunpack.c.l.b16 %v486
    %v4025 = vunpack.c.h.b16 %v486
    %v4026 = vunpack.c.l.b16 %v487
    %v4027 = vunpack.c.h.b16 %v487
    %v4028 = vunpack.c.l.b16 %v488
    %v4029 = vunpack.c.h.b16 %v488
    %v4030 = vunpack.c.l.b16 %v489
    %v4031 = vunpack.c.h.b16 %v489
    %v4032 = vunpack.c.l.b16 %v490
    %v4033 = vunpack.c.h.b16 %v490
    %v4034 = vunpack.c.l.b16 %v491
    %v4035 = vunpack.c.h.b16 %v491
    %v4036 = vunpack.c.l.b16 %v492
    %v4037 = vunpack.c.h.b16 %v492
    %v4038 = vunpack.c.l.b16 %v493
    %v4039 = vunpack.c.h.b16 %v493
    %v4040 = vunpack.c.l.b16 %v494
    %v4041 = vunpack.c.h.b16 %v494
    %v4042 = vunpack.c.l.b16 %v495
    %v4043 = vunpack.c.h.b16 %v495
    %v4044 = vunpack.c.l.b16 %v496
    %v4045 = vunpack.c.h.b16 %v496
    %v4046 = vunpack.c.l.b16 %v497
    %v4047 = vunpack.c.h.b16 %v497
    %v4048 = vunpack.c.l.b16 %v498
    %v4049 = vunpack.c.h.b16 %v498
    %v4050 = vunpack.c.l.b16 %v499
    %v4051 = vunpack.c.h.b16 %v499
    %v4052 = vunpack.c.l.b16 %v500
    %v4053 = vunpack.c.h.b16 %v500
    %v4054 = vunpack.c.l.b16 %v501
    %v4055 = vunpack.c.h.b16 %v501
    %v4056 = vunpack.c.l.b16 %v502
    %v4057 = vunpack.c.h.b16 %v502
    %v4058 = vunpack.c.l.b16 %v503
    %v4059 = vunpack.c.h.b16 %v503
    %v4060 = vunpack.c.l.b16 %v504
    %v4061 = vunpack.c.h.b16 %v504
    %v4062 = vunpack.c.l.b16 %v505
    %v4063 = vunpack.c.h.b16 %v505
    %v4064 = vunpack.c.l.b16 %v506
    %v4065 = vunpack.c.h.b16 %v506
    %v4066 = vunpack.c.l.b16 %v507
    %v4067 = vunpack.c.h.b16 %v507
    %v4068 = vunpack.c.l.b16 %v508
    %v4069 = vunpack.c.h.b16 %v508
    %v4070 = vunpack.c.l.b16 %v509
    %v4071 = vunpack.c.h.b16 %v509
    %v4072 = vunpack.c.l.b16 %v510
    %v4073 = vunpack.c.h.b16 %v510
    %v4074 = vunpack.c.l.b16 %v511
    %v4075 = vunpack.c.h.b16 %v511
    %v4076 = vunpack.c.l.b16 %v512
    %v4077 = vunpack.c.h.b16 %v512
    %v4078 = vunpack.c.l.b16 %v513
    %v4079 = vunpack.c.h.b16 %v513
    %v4080 = vunpack.c.l.b16 %v514
    %v4081 = vunpack.c.h.b16 %v514
    %v4082 = vunpack.c.l.b16 %v515
    %v4083 = vunpack.c.h.b16 %v515
    %v4084 = vunpack.c.l.b16 %v516
    %v4085 = vunpack.c.h.b16 %v516
    %v4086 = vunpack.c.l.b16 %v517
    %v4087 = vunpack.c.h.b16 %v517
    %v4088 = vunpack.c.l.b16 %v518
    %v4089 = vunpack.c.h.b16 %v518
    %v4090 = vunpack.c.l.b16 %v519
    %v4091 = vunpack.c.h.b16 %v519
    %v4092 = vunpack.c.l.b16 %v520
    %v4093 = vunpack.c.h.b16 %v520
    %v4094 = vunpack.c.l.b16 %v521
    %v4095 = vunpack.c.h.b16 %v521
    %v4096 = vunpack.c.l.b16 %v522
    %v4097 = vunpack.c.h.b16 %v522
    %v4098 = vunpack.c.l.b16 %v523
    %v4099 = vunpack.c.h.b16 %v523
    %v4100 = vunpack.c.l.b16 %v524
    %v4101 = vunpack.c.h.b16 %v524
    %v4102 = vunpack.c.l.b16 %v525
    %v4103 = vunpack.c.h.b16 %v525
    %v4104 = vunpack.c.l.b16 %v526
    %v4105 = vunpack.c.h.b16 %v526
    %v4106 = vunpack.c.l.b16 %v527
    %v4107 = vunpack.c.h.b16 %v527
    %v4108 = vunpack.c.l.b16 %v528
    %v4109 = vunpack.c.h.b16 %v528
    %v4110 = vunpack.c.l.b16 %v529
    %v4111 = vunpack.c.h.b16 %v529
    %v4112 = vunpack.c.l.b16 %v530
    %v4113 = vunpack.c.h.b16 %v530
    %v4114 = vunpack.c.l.b16 %v531
    %v4115 = vunpack.c.h.b16 %v531
    %v4116 = vunpack.c.l.b16 %v532
    %v4117 = vunpack.c.h.b16 %v532
    %v4118 = vunpack.c.l.b16 %v533
    %v4119 = vunpack.c.h.b16 %v533
    %v4120 = vunpack.c.l.b16 %v534
    %v4121 = vunpack.c.h.b16 %v534
    %v4122 = vunpack.c.l.b16 %v535
    %v4123 = vunpack.c.h.b16 %v535
    %v4124 = vunpack.c.l.b16 %v536
    %v4125 = vunpack.c.h.b16 %v536
    %v4126 = vunpack.c.l.b16 %v537
    %v4127 = vunpack.c.h.b16 %v537
    %v4128 = vunpack.c.l.b16 %v538
    %v4129 = vunpack.c.h.b16 %v538
    %v4130 = vunpack.c.l.b16 %v539
    %v4131 = vunpack.c.h.b16 %v539
    %v4132 = vunpack.c.l.b16 %v540
    %v4133 = vunpack.c.h.b16 %v540
    %v4134 = vunpack.c.l.b16 %v541
    %v4135 = vunpack.c.h.b16 %v541
    %v4136 = vunpack.c.l.b16 %v542
    %v4137 = vunpack.c.h.b16 %v542
    %v4138 = vunpack.c.l.b16 %v543
    %v4139 = vunpack.c.h.b16 %v543
    %v4140 = vunpack.c.l.b16 %v544
    %v4141 = vunpack.c.h.b16 %v544
    %v4142 = vunpack.c.l.b16 %v545
    %v4143 = vunpack.c.h.b16 %v545
    %v4144 = vunpack.c.l.b16 %v546
    %v4145 = vunpack.c.h.b16 %v546
    %v4146 = vunpack.c.l.b16 %v547
    %v4147 = vunpack.c.h.b16 %v547
    %v4148 = vunpack.c.l.b16 %v548
    %v4149 = vunpack.c.h.b16 %v548
    %v4150 = vunpack.c.l.b16 %v549
    %v4151 = vunpack.c.h.b16 %v549
    %v4152 = vunpack.c.l.b16 %v550
    %v4153 = vunpack.c.h.b16 %v550
    %v4154 = vunpack.c.l.b16 %v551
    %v4155 = vunpack.c.h.b16 %v551
    %v4156 = vunpack.c.l.b16 %v552
    %v4157 = vunpack.c.h.b16 %v552
    %v4158 = vunpack.c.l.b16 %v553
    %v4159 = vunpack.c.h.b16 %v553
    %v4160 = vunpack.c.l.b16 %v554
    %v4161 = vunpack.c.h.b16 %v554
    %v4162 = vunpack.c.l.b16 %v555
    %v4163 = vunpack.c.h.b16 %v555
    %v4164 = vunpack.c.l.b16 %v556
    %v4165 = vunpack.c.h.b16 %v556
    %v4166 = vunpack.c.l.b16 %v557
    %v4167 = vunpack.c.h.b16 %v557
    %v4168 = vunpack.c.l.b16 %v558
    %v4169 = vunpack.c.h.b16 %v558
    %v4170 = vunpack.c.l.b16 %v559
    %v4171 = vunpack.c.h.b16 %v559
    %v4172 = vunpack.c.l.b16 %v560
    %v4173 = vunpack.c.h.b16 %v560
    %v4174 = vunpack.c.l.b16 %v561
    %v4175 = vunpack.c.h.b16 %v561
    %v4176 = vunpack.c.l.b16 %v562
    %v4177 = vunpack.c.h.b16 %v562
    %v4178 = vunpack.c.l.b16 %v563
    %v4179 = vunpack.c.h.b16 %v563
    %v4180 = vunpack.c.l.b16 %v564
    %v4181 = vunpack.c.h.b16 %v564
    %v4182 = vunpack.c.l.b16 %v565
    %v4183 = vunpack.c.h.b16 %v565
    %v4184 = vunpack.c.l.b16 %v566
    %v4185 = vunpack.c.h.b16 %v566
    %v4186 = vunpack.c.l.b16 %v567
    %v4187 = vunpack.c.h.b16 %v567
    %v4188 = vunpack.c.l.b16 %v568
    %v4189 = vunpack.c.h.b16 %v568
    %v4190 = vunpack.c.l.b16 %v569
    %v4191 = vunpack.c.h.b16 %v569
    %v4192 = vunpack.c.l.b16 %v570
    %v4193 = vunpack.c.h.b16 %v570
    %v4194 = vunpack.c.l.b16 %v571
    %v4195 = vunpack.c.h.b16 %v571
    %v4196 = vunpack.c.l.b16 %v572
    %v4197 = vunpack.c.h.b16 %v572
    %v4198 = vunpack.c.l.b16 %v573
    %v4199 = vunpack.c.h.b16 %v573
    %v4200 = vunpack.c.l.b16 %v574
    %v4201 = vunpack.c.h.b16 %v574
    %v4202 = vunpack.c.l.b16 %v575
    %v4203 = vunpack.c.h.b16 %v575
    %v4204 = vunpack.c.l.b16 %v576
    %v4205 = vunpack.c.h.b16 %v576
    %v4206 = vunpack.c.l.b16 %v577
    %v4207 = vunpack.c.h.b16 %v577
    %v4208 = vunpack.c.l.b16 %v578
    %v4209 = vunpack.c.h.b16 %v578
    %v4210 = vunpack.c.l.b16 %v579
    %v4211 = vunpack.c.h.b16 %v579
    %v4212 = vunpack.c.l.b16 %v580
    %v4213 = vunpack.c.h.b16 %v580
    %v4214 = vunpack.c.l.b16 %v581
    %v4215 = vunpack.c.h.b16 %v581
    %v4216 = vunpack.c.l.b16 %v582
    %v4217 = vunpack.c.h.b16 %v582
    %v4218 = vunpack.c.l.b16 %v583
    %v4219 = vunpack.c.h.b16 %v583
    %v4220 = vunpack.c.l.b16 %v584
    %v4221 = vunpack.c.h.b16 %v584
    %v4222 = vunpack.c.l.b16 %v585
    %v4223 = vunpack.c.h.b16 %v585
    %v4224 = vunpack.c.l.b16 %v586
    %v4225 = vunpack.c.h.b16 %v586
    %v4226 = vunpack.c.l.b16 %v587
    %v4227 = vunpack.c.h.b16 %v587
    %v4228 = vunpack.c.l.b16 %v588
    %v4229 = vunpack.c.h.b16 %v588
    %v4230 = vunpack.c.l.b16 %v589
    %v4231 = vunpack.c.h.b16 %v589
    %v4232 = vunpack.c.l.b16 %v590
    %v4233 = vunpack.c.h.b16 %v590
    %v4234 = vunpack.c.l.b16 %v591
    %v4235 = vunpack.c.h.b16 %v591
    %v4236 = vunpack.c.l.b16 %v592
    %v4237 = vunpack.c.h.b16 %v592
    %v4238 = vunpack.c.l.b16 %v593
    %v4239 = vunpack.c.h.b16 %v593
    %v4240 = vunpack.c.l.b16 %v594
    %v4241 = vunpack.c.h.b16 %v594
    %v4242 = vunpack.c.l.b16 %v595
    %v4243 = vunpack.c.h.b16 %v595
    %v4244 = vunpack.c.l.b16 %v596
    %v4245 = vunpack.c.h.b16 %v596
    %v4246 = vunpack.c.l.b16 %v597
    %v4247 = vunpack.c.h.b16 %v597
    %v4248 = vunpack.c.l.b16 %v598
    %v4249 = vunpack.c.h.b16 %v598
    %v4250 = vunpack.c.l.b16 %v599
    %v4251 = vunpack.c.h.b16 %v599
    %v4252 = vunpack.c.l.b16 %v600
    %v4253 = vunpack.c.h.b16 %v600
    %v4254 = vunpack.c.l.b16 %v601
    %v4255 = vunpack.c.h.b16 %v601
    %v4256 = vunpack.c.l.b16 %v602
    %v4257 = vunpack.c.h.b16 %v602
    %v4258 = vunpack.c.l.b16 %v603
    %v4259 = vunpack.c.h.b16 %v603
    %v4260 = vunpack.c.l.b16 %v604
    %v4261 = vunpack.c.h.b16 %v604
    %v4262 = vunpack.c.l.b16 %v605
    %v4263 = vunpack.c.h.b16 %v605
    %v4264 = vunpack.c.l.b16 %v606
    %v4265 = vunpack.c.h.b16 %v606
    %v4266 = vunpack.c.l.b16 %v607
    %v4267 = vunpack.c.h.b16 %v607
    %v4268 = vunpack.c.l.b16 %v608
    %v4269 = vunpack.c.h.b16 %v608
    %v4270 = vunpack.c.l.b16 %v609
    %v4271 = vunpack.c.h.b16 %v609
    %v4272 = vunpack.c.l.b16 %v610
    %v4273 = vunpack.c.h.b16 %v610
    %v4274 = vunpack.c.l.b16 %v611
    %v4275 = vunpack.c.h.b16 %v611
    %v4276 = vunpack.c.l.b16 %v612
    %v4277 = vunpack.c.h.b16 %v612
    %v4278 = vunpack.c.l.b16 %v613
    %v4279 = vunpack.c.h.b16 %v613
    %v4280 = vunpack.c.l.b16 %v614
    %v4281 = vunpack.c.h.b16 %v614
    %v4282 = vunpack.c.l.b16 %v615
    %v4283 = vunpack.c.h.b16 %v615
    %v4284 = vunpack.c.l.b16 %v616
    %v4285 = vunpack.c.h.b16 %v616
    %v4286 = vunpack.c.l.b16 %v617
    %v4287 = vunpack.c.h.b16 %v617
    %v4288 = vunpack.c.l.b16 %v618
    %v4289 = vunpack.c.h.b16 %v618
    %v4290 = vunpack.c.l.b16 %v619
    %v4291 = vunpack.c.h.b16 %v619
    %v4292 = vunpack.c.l.b16 %v620
    %v4293 = vunpack.c.h.b16 %v620
    %v4294 = vunpack.c.l.b16 %v621
    %v4295 = vunpack.c.h.b16 %v621
    %v4296 = vunpack.c.l.b16 %v622
    %v4297 = vunpack.c.h.b16 %v622
    %v4298 = vunpack.c.l.b16 %v623
    %v4299 = vunpack.c.h.b16 %v623
    %v4300 = vunpack.c.l.b16 %v624
    %v4301 = vunpack.c.h.b16 %v624
    %v4302 = vunpack.c.l.b16 %v625
    %v4303 = vunpack.c.h.b16 %v625
    %v4304 = vunpack.c.l.b16 %v626
    %v4305 = vunpack.c.h.b16 %v626
    %v4306 = vunpack.c.l.b16 %v627
    %v4307 = vunpack.c.h.b16 %v627
    %v4308 = vunpack.c.l.b16 %v628
    %v4309 = vunpack.c.h.b16 %v628
    %v4310 = vunpack.c.l.b16 %v629
    %v4311 = vunpack.c.h.b16 %v629
    %v4312 = vunpack.c.l.b16 %v630
    %v4313 = vunpack.c.h.b16 %v630
    %v4314 = vunpack.c.l.b16 %v631
    %v4315 = vunpack.c.h.b16 %v631
    %v4316 = vunpack.c.l.b16 %v632
    %v4317 = vunpack.c.h.b16 %v632
    %v4318 = vunpack.c.l.b16 %v633
    %v4319 = vunpack.c.h.b16 %v633
    %v4320 = vunpack.c.l.b16 %v634
    %v4321 = vunpack.c.h.b16 %v634
    %v4322 = vunpack.c.l.b16 %v635
    %v4323 = vunpack.c.h.b16 %v635
    %v4324 = vunpack.c.l.b16 %v636
    %v4325 = vunpack.c.h.b16 %v636
    %v4326 = vunpack.c.l.b16 %v637
    %v4327 = vunpack.c.h.b16 %v637
    %v4328 = vunpack.c.l.b16 %v638
    %v4329 = vunpack.c.h.b16 %v638
    %v4330 = vunpack.c.l.b16 %v639
    %v4331 = vunpack.c.h.b16 %v639
    %v4332 = vunpack.c.l.b16 %v640
    %v4333 = vunpack.c.h.b16 %v640
    %v4334 = vunpack.c.l.b16 %v641
    %v4335 = vunpack.c.h.b16 %v641
    %v4336 = vunpack.c.l.b16 %v642
    %v4337 = vunpack.c.h.b16 %v642
    %v4338 = vunpack.c.l.b16 %v643
    %v4339 = vunpack.c.h.b16 %v643
    %v4340 = vunpack.c.l.b16 %v644
    %v4341 = vunpack.c.h.b16 %v644
    %v4342 = vunpack.c.l.b16 %v645
    %v4343 = vunpack.c.h.b16 %v645
    %v4344 = vunpack.c.l.b16 %v646
    %v4345 = vunpack.c.h.b16 %v646
    %v4346 = vunpack.c.l.b16 %v647
    %v4347 = vunpack.c.h.b16 %v647
    %v4348 = vunpack.c.l.b16 %v648
    %v4349 = vunpack.c.h.b16 %v648
    %v4350 = vunpack.c.l.b16 %v649
    %v4351 = vunpack.c.h.b16 %v649
    %v4352 = vunpack.c.l.b16 %v650
    %v4353 = vunpack.c.h.b16 %v650
    %v4354 = vunpack.c.l.b16 %v651
    %v4355 = vunpack.c.h.b16 %v651
    %v4356 = vunpack.c.l.b16 %v652
    %v4357 = vunpack.c.h.b16 %v652
    %v4358 = vunpack.c.l.b16 %v653
    %v4359 = vunpack.c.h.b16 %v653
    %v4360 = vunpack.c.l.b16 %v654
    %v4361 = vunpack.c.h.b16 %v654
    %v4362 = vunpack.c.l.b16 %v655
    %v4363 = vunpack.c.h.b16 %v655
    %v4364 = vunpack.c.l.b16 %v656
    %v4365 = vunpack.c.h.b16 %v656
    %v4366 = vunpack.c.l.b16 %v657
    %v4367 = vunpack.c.h.b16 %v657
    %v4368 = vunpack.c.l.b16 %v658
    %v4369 = vunpack.c.h.b16 %v658
    %v4370 = vunpack.c.l.b16 %v659
    %v4371 = vunpack.c.h.b16 %v659
    %v4372 = vunpack.c.l.b16 %v660
    %v4373 = vunpack.c.h.b16 %v660
    %v4374 = vunpack.c.l.b16 %v661
    %v4375 = vunpack.c.h.b16 %v661
    %v4376 = vunpack.c.l.b16 %v662
    %v4377 = vunpack.c.h.b16 %v662
    %v4378 = vunpack.c.l.b16 %v663
    %v4379 = vunpack.c.h.b16 %v663
    %v4380 = vunpack.c.l.b16 %v664
    %v4381 = vunpack.c.h.b16 %v664
    %v4382 = vunpack.c.l.b16 %v665
    %v4383 = vunpack.c.h.b16 %v665
    %v4384 = vunpack.c.l.b16 %v666
    %v4385 = vunpack.c.h.b16 %v666
    %v4386 = vunpack.c.l.b16 %v667
    %v4387 = vunpack.c.h.b16 %v667
    %v4388 = vunpack.c.l.b16 %v668
    %v4389 = vunpack.c.h.b16 %v668
    %v4390 = vunpack.c.l.b16 %v669
    %v4391 = vunpack.c.h.b16 %v669
    %v4392 = vunpack.c.l.b16 %v670
    %v4393 = vunpack.c.h.b16 %v670
    %v4394 = vunpack.c.l.b16 %v671
    %v4395 = vunpack.c.h.b16 %v671
    %v4396 = vunpack.c.l.b16 %v672
    %v4397 = vunpack.c.h.b16 %v672
    %v4398 = vunpack.c.l.b16 %v673
    %v4399 = vunpack.c.h.b16 %v673
    %v4400 = vunpack.c.l.b16 %v674
    %v4401 = vunpack.c.h.b16 %v674
    %v4402 = vunpack.c.l.b16 %v675
    %v4403 = vunpack.c.h.b16 %v675
    %v4404 = vunpack.c.l.b16 %v676
    %v4405 = vunpack.c.h.b16 %v676
    %v4406 = vunpack.c.l.b16 %v677
    %v4407 = vunpack.c.h.b16 %v677
    %v4408 = vunpack.c.l.b16 %v678
    %v4409 = vunpack.c.h.b16 %v678
    %v4410 = vunpack.c.l.b16 %v679
    %v4411 = vunpack.c.h.b16 %v679
    %v4412 = vunpack.c.l.b16 %v680
    %v4413 = vunpack.c.h.b16 %v680
    %v4414 = vunpack.c.l.b16 %v681
    %v4415 = vunpack.c.h.b16 %v681
    %v4416 = vunpack.c.l.b16 %v682
    %v4417 = vunpack.c.h.b16 %v682
    %v4418 = vunpack.c.l.b16 %v683
    %v4419 = vunpack.c.h.b16 %v683
    %v4420 = vunpack.c.l.b16 %v684
    %v4421 = vunpack.c.h.b16 %v684
    %v4422 = vunpack.c.l.b16 %v685
    %v4423 = vunpack.c.h.b16 %v685
    %v4424 = vunpack.c.l.b16 %v686
    %v4425 = vunpack.c.h.b16 %v686
    %v4426 = vunpack.c.l.b16 %v687
    %v4427 = vunpack.c.h.b16 %v687
    %v4428 = vunpack.c.l.b16 %v688
    %v4429 = vunpack.c.h.b16 %v688
    %v4430 = vunpack.c.l.b16 %v689
    %v4431 = vunpack.c.h.b16 %v689
    %v4432 = vunpack.c.l.b16 %v690
    %v4433 = vunpack.c.h.b16 %v690
    %v4434 = vunpack.c.l.b16 %v691
    %v4435 = vunpack.c.h.b16 %v691
    %v4436 = vunpack.c.l.b16 %v692
    %v4437 = vunpack.c.h.b16 %v692
    %v4438 = vunpack.c.l.b16 %v693
    %v4439 = vunpack.c.h.b16 %v693
    %v4440 = vunpack.c.l.b16 %v694
    %v4441 = vunpack.c.h.b16 %v694
    %v4442 = vunpack.c.l.b16 %v695
    %v4443 = vunpack.c.h.b16 %v695
    %v4444 = vunpack.c.l.b16 %v696
    %v4445 = vunpack.c.h.b16 %v696
    %v4446 = vunpack.c.l.b16 %v697
    %v4447 = vunpack.c.h.b16 %v697
    %v4448 = vunpack.c.l.b16 %v698
    %v4449 = vunpack.c.h.b16 %v698
    %v4450 = vunpack.c.l.b16 %v699
    %v4451 = vunpack.c.h.b16 %v699
    %v4452 = vunpack.c.l.b16 %v700
    %v4453 = vunpack.c.h.b16 %v700
    %v4454 = vunpack.c.l.b16 %v701
    %v4455 = vunpack.c.h.b16 %v701
    %v4456 = vunpack.c.l.b16 %v702
    %v4457 = vunpack.c.h.b16 %v702
    %v4458 = vunpack.c.l.b16 %v703
    %v4459 = vunpack.c.h.b16 %v703
    %v4460 = vunpack.c.l.b16 %v704
    %v4461 = vunpack.c.h.b16 %v704
    %v4462 = vunpack.c.l.b16 %v705
    %v4463 = vunpack.c.h.b16 %v705
    %v4464 = vunpack.c.l.b16 %v706
    %v4465 = vunpack.c.h.b16 %v706
    %v4466 = vunpack.c.l.b16 %v707
    %v4467 = vunpack.c.h.b16 %v707
    %v4468 = vunpack.c.l.b16 %v708
    %v4469 = vunpack.c.h.b16 %v708
    %v4470 = vunpack.c.l.b16 %v709
    %v4471 = vunpack.c.h.b16 %v709
    %v4472 = vunpack.c.l.b16 %v710
    %v4473 = vunpack.c.h.b16 %v710
    %v4474 = vunpack.c.l.b16 %v711
    %v4475 = vunpack.c.h.b16 %v711
    %v4476 = vunpack.c.l.b16 %v712
    %v4477 = vunpack.c.h.b16 %v712
    %v4478 = vunpack.c.l.b16 %v713
    %v4479 = vunpack.c.h.b16 %v713
    %v4480 = vunpack.c.l.b16 %v714
    %v4481 = vunpack.c.h.b16 %v714
    %v4482 = vunpack.c.l.b16 %v715
    %v4483 = vunpack.c.h.b16 %v715
    %v4484 = vunpack.c.l.b16 %v716
    %v4485 = vunpack.c.h.b16 %v716
    %v4486 = vunpack.c.l.b16 %v717
    %v4487 = vunpack.c.h.b16 %v717
    %v4488 = vunpack.c.l.b16 %v718
    %v4489 = vunpack.c.h.b16 %v718
    %v4490 = vunpack.c.l.b16 %v719
    %v4491 = vunpack.c.h.b16 %v719
    %v4492 = vunpack.c.l.b16 %v720
    %v4493 = vunpack.c.h.b16 %v720
    %v4494 = vunpack.c.l.b16 %v721
    %v4495 = vunpack.c.h.b16 %v721
    %v4496 = vunpack.c.l.b16 %v722
    %v4497 = vunpack.c.h.b16 %v722
    %v4498 = vunpack.c.l.b16 %v723
    %v4499 = vunpack.c.h.b16 %v723
    %v4500 = vunpack.c.l.b16 %v724
    %v4501 = vunpack.c.h.b16 %v724
    %v4502 = vunpack.c.l.b16 %v725
    %v4503 = vunpack.c.h.b16 %v725
    %v4504 = vunpack.c.l.b16 %v726
    %v4505 = vunpack.c.h.b16 %v726
    %v4506 = vunpack.c.l.b16 %v727
    %v4507 = vunpack.c.h.b16 %v727
    %v4508 = vunpack.c.l.b16 %v728
    %v4509 = vunpack.c.h.b16 %v728
    %v4510 = vunpack.c.l.b16 %v729
    %v4511 = vunpack.c.h.b16 %v729
    %v4512 = vunpack.c.l.b16 %v730
    %v4513 = vunpack.c.h.b16 %v730
    %v4514 = vunpack.c.l.b16 %v731
    %v4515 = vunpack.c.h.b16 %v731
    %v4516 = vunpack.c.l.b16 %v732
    %v4517 = vunpack.c.h.b16 %v732
    %v4518 = vunpack.c.l.b16 %v733
    %v4519 = vunpack.c.h.b16 %v733
    %v4520 = vunpack.c.l.b16 %v734
    %v4521 = vunpack.c.h.b16 %v734
    %v4522 = vunpack.c.l.b16 %v735
    %v4523 = vunpack.c.h.b16 %v735
    %v4524 = vunpack.c.l.b16 %v736
    %v4525 = vunpack.c.h.b16 %v736
    %v4526 = vunpack.c.l.b16 %v737
    %v4527 = vunpack.c.h.b16 %v737
    %v4528 = vunpack.c.l.b16 %v738
    %v4529 = vunpack.c.h.b16 %v738
    %v4530 = vunpack.c.l.b16 %v739
    %v4531 = vunpack.c.h.b16 %v739
    %v4532 = vunpack.c.l.b16 %v740
    %v4533 = vunpack.c.h.b16 %v740
    %v4534 = vunpack.c.l.b16 %v741
    %v4535 = vunpack.c.h.b16 %v741
    %v4536 = vunpack.c.l.b16 %v742
    %v4537 = vunpack.c.h.b16 %v742
    %v4538 = vunpack.c.l.b16 %v743
    %v4539 = vunpack.c.h.b16 %v743
    %v4540 = vunpack.c.l.b16 %v744
    %v4541 = vunpack.c.h.b16 %v744
    %v4542 = vunpack.c.l.b16 %v745
    %v4543 = vunpack.c.h.b16 %v745
    %v4544 = vunpack.c.l.b16 %v746
    %v4545 = vunpack.c.h.b16 %v746
    %v4546 = vunpack.c.l.b16 %v747
    %v4547 = vunpack.c.h.b16 %v747
    %v4548 = vunpack.c.l.b16 %v748
    %v4549 = vunpack.c.h.b16 %v748
    %v4550 = vunpack.c.l.b16 %v749
    %v4551 = vunpack.c.h.b16 %v749
    %v4552 = vunpack.c.l.b16 %v750
    %v4553 = vunpack.c.h.b16 %v750
    %v4554 = vunpack.c.l.b16 %v751
    %v4555 = vunpack.c.h.b16 %v751
    %v4556 = vunpack.c.l.b16 %v752
    %v4557 = vunpack.c.h.b16 %v752
    %v4558 = vunpack.c.l.b16 %v753
    %v4559 = vunpack.c.h.b16 %v753
    %v4560 = vunpack.c.l.b16 %v754
    %v4561 = vunpack.c.h.b16 %v754
    %v4562 = vunpack.c.l.b16 %v755
    %v4563 = vunpack.c.h.b16 %v755
    %v4564 = vunpack.c.l.b16 %v756
    %v4565 = vunpack.c.h.b16 %v756
    %v4566 = vunpack.c.l.b16 %v757
    %v4567 = vunpack.c.h.b16 %v757
    %v4568 = vunpack.c.l.b16 %v758
    %v4569 = vunpack.c.h.b16 %v758
    %v4570 = vunpack.c.l.b16 %v759
    %v4571 = vunpack.c.h.b16 %v759
    %v4572 = vunpack.c.l.b16 %v760
    %v4573 = vunpack.c.h.b16 %v760
    %v4574 = vunpack.c.l.b16 %v761
    %v4575 = vunpack.c.h.b16 %v761
    %v4576 = vunpack.c.l.b16 %v762
    %v4577 = vunpack.c.h.b16 %v762
    %v4578 = vunpack.c.l.b16 %v763
    %v4579 = vunpack.c.h.b16 %v763
    %v4580 = vunpack.c.l.b16 %v764
    %v4581 = vunpack.c.h.b16 %v764
    %v4582 = vunpack.c.l.b16 %v765
    %v4583 = vunpack.c.h.b16 %v765
    %v4584 = vunpack.c.l.b16 %v766
    %v4585 = vunpack.c.h.b16 %v766
    %v4586 = vunpack.c.l.b16 %v767
    %v4587 = vunpack.c.h.b16 %v767
    %v4588 = vunpack.c.l.b16 %v768
    %v4589 = vunpack.c.h.b16 %v768
    %v4590 = vunpack.c.l.b16 %v769
    %v4591 = vunpack.c.h.b16 %v769
    %v4592 = vunpack.c.l.b16 %v770
    %v4593 = vunpack.c.h.b16 %v770
    %v4594 = vunpack.c.l.b16 %v771
    %v4595 = vunpack.c.h.b16 %v771
    %v4596 = vunpack.c.l.b16 %v772
    %v4597 = vunpack.c.h.b16 %v772
    %v4598 = vunpack.c.l.b16 %v773
    %v4599 = vunpack.c.h.b16 %v773
    %v4600 = vunpack.c.l.b16 %v774
    %v4601 = vunpack.c.h.b16 %v774
    %v4602 = vunpack.c.l.b16 %v775
    %v4603 = vunpack.c.h.b16 %v775
    %v4604 = vunpack.c.l.b16 %v776
    %v4605 = vunpack.c.h.b16 %v776
    %v4606 = vunpack.c.l.b16 %v777
    %v4607 = vunpack.c.h.b16 %v777
    %v4608 = vunpack.c.l.b16 %v778
    %v4609 = vunpack.c.h.b16 %v778
    %v4610 = vunpack.c.l.b16 %v779
    %v4611 = vunpack.c.h.b16 %v779
    %v4612 = vunpack.c.l.b16 %v780
    %v4613 = vunpack.c.h.b16 %v780
    %v4614 = vunpack.c.l.b16 %v781
    %v4615 = vunpack.c.h.b16 %v781
    %v4616 = vunpack.c.l.b16 %v782
    %v4617 = vunpack.c.h.b16 %v782
    %v4618 = vunpack.c.l.b16 %v783
    %v4619 = vunpack.c.h.b16 %v783
    %v4620 = vunpack.c.l.b16 %v784
    %v4621 = vunpack.c.h.b16 %v784
    %v4622 = vunpack.c.l.b16 %v785
    %v4623 = vunpack.c.h.b16 %v785
    %v4624 = vunpack.c.l.b16 %v786
    %v4625 = vunpack.c.h.b16 %v786
    %v4626 = vunpack.c.l.b16 %v787
    %v4627 = vunpack.c.h.b16 %v787
    %v4628 = vunpack.c.l.b16 %v788
    %v4629 = vunpack.c.h.b16 %v788
    %v4630 = vunpack.c.l.b16 %v789
    %v4631 = vunpack.c.h.b16 %v789
    %v4632 = vunpack.c.l.b16 %v790
    %v4633 = vunpack.c.h.b16 %v790
    %v4634 = vunpack.c.l.b16 %v791
    %v4635 = vunpack.c.h.b16 %v791
    %v4636 = vunpack.c.l.b16 %v792
    %v4637 = vunpack.c.h.b16 %v792
    %v4638 = vunpack.c.l.b16 %v793
    %v4639 = vunpack.c.h.b16 %v793
    %v4640 = vunpack.c.l.b16 %v794
    %v4641 = vunpack.c.h.b16 %v794
    %v4642 = vunpack.c.l.b16 %v795
    %v4643 = vunpack.c.h.b16 %v795
    %v4644 = vunpack.c.l.b16 %v796
    %v4645 = vunpack.c.h.b16 %v796
    %v4646 = vunpack.c.l.b16 %v797
    %v4647 = vunpack.c.h.b16 %v797
    %v4648 = vunpack.c.l.b16 %v798
    %v4649 = vunpack.c.h.b16 %v798
    %v4650 = vunpack.c.l.b16 %v799
    %v4651 = vunpack.c.h.b16 %v799
    %v4652 = vunpack.c.l.b16 %v800
    %v4653 = vunpack.c.h.b16 %v800
    %v4654 = vunpack.c.l.b16 %v801
    %v4655 = vunpack.c.h.b16 %v801
    %v4656 = vunpack.c.l.b16 %v802
    %v4657 = vunpack.c.h.b16 %v802
    %v4658 = vunpack.c.l.b16 %v803
    %v4659 = vunpack.c.h.b16 %v803
    %v4660 = vunpack.c.l.b16 %v804
    %v4661 = vunpack.c.h.b16 %v804
    %v4662 = vunpack.c.l.b16 %v805
    %v4663 = vunpack.c.h.b16 %v805
    %v4664 = vunpack.c.l.b16 %v806
    %v4665 = vunpack.c.h.b16 %v806
    %v4666 = vunpack.c.l.b16 %v807
    %v4667 = vunpack.c.h.b16 %v807
    %v4668 = vunpack.c.l.b16 %v808
    %v4669 = vunpack.c.h.b16 %v808
    %v4670 = vunpack.c.l.b16 %v809
    %v4671 = vunpack.c.h.b16 %v809
    %v4672 = vunpack.c.l.b16 %v810
    %v4673 = vunpack.c.h.b16 %v810
    %v4674 = vunpack.c.l.b16 %v811
    %v4675 = vunpack.c.h.b16 %v811
    %v4676 = vunpack.c.l.b16 %v812
    %v4677 = vunpack.c.h.b16 %v812
    %v4678 = vunpack.c.l.b16 %v813
    %v4679 = vunpack.c.h.b16 %v813
    %v4680 = vunpack.c.l.b16 %v814
    %v4681 = vunpack.c.h.b16 %v814
    %v4682 = vunpack.c.l.b16 %v815
    %v4683 = vunpack.c.h.b16 %v815
    %v4684 = vunpack.c.l.b16 %v816
    %v4685 = vunpack.c.h.b16 %v816
    %v4686 = vunpack.c.l.b16 %v817
    %v4687 = vunpack.c.h.b16 %v817
    %v4688 = vunpack.c.l.b16 %v818
    %v4689 = vunpack.c.h.b16 %v818
    %v4690 = vunpack.c.l.b16 %v819
    %v4691 = vunpack.c.h.b16 %v819
    %v4692 = vunpack.c.l.b16 %v820
    %v4693 = vunpack.c.h.b16 %v820
    %v4694 = vunpack.c.l.b16 %v821
    %v4695 = vunpack.c.h.b16 %v821
    %v4696 = vunpack.c.l.b16 %v822
    %v4697 = vunpack.c.h.b16 %v822
    %v4698 = vunpack.c.l.b16 %v823
    %v4699 = vunpack.c.h.b16 %v823
    %v4700 = vunpack.c.l.b16 %v824
    %v4701 = vunpack.c.h.b16 %v824
    %v4702 = vunpack.c.l.b16 %v825
    %v4703 = vunpack.c.h.b16 %v825
    %v4704 = vunpack.c.l.b16 %v826
    %v4705 = vunpack.c.h.b16 %v826
    %v4706 = vunpack.c.l.b16 %v827
    %v4707 = vunpack.c.h.b16 %v827
    %v4708 = vunpack.c.l.b16 %v828
    %v4709 = vunpack.c.h.b16 %v828
    %v4710 = vunpack.c.l.b16 %v829
    %v4711 = vunpack.c.h.b16 %v829
    %v4712 = vunpack.c.l.b16 %v830
    %v4713 = vunpack.c.h.b16 %v830
    %v4714 = vunpack.c.l.b16 %v831
    %v4715 = vunpack.c.h.b16 %v831
    %v4716 = vunpack.c.l.b16 %v832
    %v4717 = vunpack.c.h.b16 %v832
    %v4718 = vunpack.c.l.b16 %v833
    %v4719 = vunpack.c.h.b16 %v833
    %v4720 = vunpack.c.l.b16 %v834
    %v4721 = vunpack.c.h.b16 %v834
    %v4722 = vunpack.c.l.b16 %v835
    %v4723 = vunpack.c.h.b16 %v835
    %v4724 = vunpack.c.l.b16 %v836
    %v4725 = vunpack.c.h.b16 %v836
    %v4726 = vunpack.c.l.b16 %v837
    %v4727 = vunpack.c.h.b16 %v837
    %v4728 = vunpack.c.l.b16 %v838
    %v4729 = vunpack.c.h.b16 %v838
    %v4730 = vunpack.c.l.b16 %v839
    %v4731 = vunpack.c.h.b16 %v839
    %v4732 = vunpack.c.l.b16 %v840
    %v4733 = vunpack.c.h.b16 %v840
    %v4734 = vunpack.c.l.b16 %v841
    %v4735 = vunpack.c.h.b16 %v841
    %v4736 = vunpack.c.l.b16 %v842
    %v4737 = vunpack.c.h.b16 %v842
    %v4738 = vunpack.c.l.b16 %v843
    %v4739 = vunpack.c.h.b16 %v843
    %v4740 = vunpack.c.l.b16 %v844
    %v4741 = vunpack.c.h.b16 %v844
    %v4742 = vunpack.c.l.b16 %v845
    %v4743 = vunpack.c.h.b16 %v845
    %v4744 = vunpack.c.l.b16 %v846
    %v4745 = vunpack.c.h.b16 %v846
    %v4746 = vunpack.c.l.b16 %v847
    %v4747 = vunpack.c.h.b16 %v847
    %v4748 = vunpack.c.l.b16 %v848
    %v4749 = vunpack.c.h.b16 %v848
    %v4750 = vunpack.c.l.b16 %v849
    %v4751 = vunpack.c.h.b16 %v849
    %v4752 = vunpack.c.l.b16 %v850
    %v4753 = vunpack.c.h.b16 %v850
    %v4754 = vunpack.c.l.b16 %v851
    %v4755 = vunpack.c.h.b16 %v851
    %v4756 = vunpack.c.l.b16 %v852
    %v4757 = vunpack.c.h.b16 %v852
    %v4758 = vunpack.c.l.b16 %v853
    %v4759 = vunpack.c.h.b16 %v853
    %v4760 = vunpack.c.l.b16 %v854
    %v4761 = vunpack.c.h.b16 %v854
    %v4762 = vunpack.c.l.b16 %v855
    %v4763 = vunpack.c.h.b16 %v855
    %v4764 = vunpack.c.l.b16 %v856
    %v4765 = vunpack.c.h.b16 %v856
    %v4766 = vunpack.c.l.b16 %v857
    %v4767 = vunpack.c.h.b16 %v857
    %v4768 = vunpack.c.l.b16 %v858
    %v4769 = vunpack.c.h.b16 %v858
    %v4770 = vunpack.c.l.b16 %v859
    %v4771 = vunpack.c.h.b16 %v859
    %v4772 = vunpack.c.l.b16 %v860
    %v4773 = vunpack.c.h.b16 %v860
    %v4774 = vunpack.c.l.b16 %v861
    %v4775 = vunpack.c.h.b16 %v861
    %v4776 = vunpack.c.l.b16 %v862
    %v4777 = vunpack.c.h.b16 %v862
    %v4778 = vunpack.c.l.b16 %v863
    %v4779 = vunpack.c.h.b16 %v863
    %v4780 = vunpack.c.l.b16 %v864
    %v4781 = vunpack.c.h.b16 %v864
    %v4782 = vunpack.c.l.b16 %v865
    %v4783 = vunpack.c.h.b16 %v865
    %v4784 = vunpack.c.l.b16 %v866
    %v4785 = vunpack.c.h.b16 %v866
    %v4786 = vunpack.c.l.b16 %v867
    %v4787 = vunpack.c.h.b16 %v867
    %v4788 = vunpack.c.l.b16 %v868
    %v4789 = vunpack.c.h.b16 %v868
    %v4790 = vunpack.c.l.b16 %v869
    %v4791 = vunpack.c.h.b16 %v869
    %v4792 = vunpack.c.l.b16 %v870
    %v4793 = vunpack.c.h.b16 %v870
    %v4794 = vunpack.c.l.b16 %v871
    %v4795 = vunpack.c.h.b16 %v871
    %v4796 = vunpack.c.l.b16 %v872
    %v4797 = vunpack.c.h.b16 %v872
    %v4798 = vunpack.c.l.b16 %v873
    %v4799 = vunpack.c.h.b16 %v873
    %v4800 = vunpack.c.l.b16 %v874
    %v4801 = vunpack.c.h.b16 %v874
    %v4802 = vunpack.c.l.b16 %v875
    %v4803 = vunpack.c.h.b16 %v875
    %v4804 = vunpack.c.l.b16 %v876
    %v4805 = vunpack.c.h.b16 %v876
    %v4806 = vunpack.c.l.b16 %v877
    %v4807 = vunpack.c.h.b16 %v877
    %v4808 = vunpack.c.l.b16 %v878
    %v4809 = vunpack.c.h.b16 %v878
    %v4810 = vunpack.c.l.b16 %v879
    %v4811 = vunpack.c.h.b16 %v879
    %v4812 = vunpack.c.l.b16 %v880
    %v4813 = vunpack.c.h.b16 %v880
    %v4814 = vunpack.c.l.b16 %v881
    %v4815 = vunpack.c.h.b16 %v881
    %v4816 = vunpack.c.l.b16 %v882
    %v4817 = vunpack.c.h.b16 %v882
    %v4818 = vunpack.c.l.b16 %v883
    %v4819 = vunpack.c.h.b16 %v883
    %v4820 = vunpack.c.l.b16 %v884
    %v4821 = vunpack.c.h.b16 %v884
    %v4822 = vunpack.c.l.b16 %v885
    %v4823 = vunpack.c.h.b16 %v885
    %v4824 = vunpack.c.l.b16 %v886
    %v4825 = vunpack.c.h.b16 %v886
    %v4826 = vunpack.c.l.b16 %v887
    %v4827 = vunpack.c.h.b16 %v887
    %v4828 = vunpack.c.l.b16 %v888
    %v4829 = vunpack.c.h.b16 %v888
    %v4830 = vunpack.c.l.b16 %v889
    %v4831 = vunpack.c.h.b16 %v889
    %v4832 = vunpack.c.l.b16 %v890
    %v4833 = vunpack.c.h.b16 %v890
    %v4834 = vunpack.c.l.b16 %v891
    %v4835 = vunpack.c.h.b16 %v891
    %v4836 = vunpack.c.l.b16 %v892
    %v4837 = vunpack.c.h.b16 %v892
    %v4838 = vunpack.c.l.b16 %v893
    %v4839 = vunpack.c.h.b16 %v893
    %v4840 = vunpack.c.l.b16 %v894
    %v4841 = vunpack.c.h.b16 %v894
    %v4842 = vunpack.c.l.b16 %v895
    %v4843 = vunpack.c.h.b16 %v895
    %v4844 = vunpack.c.l.b16 %v896
    %v4845 = vunpack.c.h.b16 %v896
    %v4846 = vunpack.c.l.b16 %v897
    %v4847 = vunpack.c.h.b16 %v897
    %v4848 = vunpack.c.l.b16 %v898
    %v4849 = vunpack.c.h.b16 %v898
    %v4850 = vunpack.c.l.b16 %v899
    %v4851 = vunpack.c.h.b16 %v899
    %v4852 = vunpack.c.l.b16 %v900
    %v4853 = vunpack.c.h.b16 %v900
    %v4854 = vunpack.c.l.b16 %v901
    %v4855 = vunpack.c.h.b16 %v901
    %v4856 = vunpack.c.l.b16 %v902
    %v4857 = vunpack.c.h.b16 %v902
    %v4858 = vunpack.c.l.b16 %v903
    %v4859 = vunpack.c.h.b16 %v903
    %v4860 = vunpack.c.l.b16 %v904
    %v4861 = vunpack.c.h.b16 %v904
    %v4862 = vunpack.c.l.b16 %v905
    %v4863 = vunpack.c.h.b16 %v905
    %v4864 = vunpack.c.l.b16 %v906
    %v4865 = vunpack.c.h.b16 %v906
    %v4866 = vunpack.c.l.b16 %v907
    %v4867 = vunpack.c.h.b16 %v907
    %v4868 = vunpack.c.l.b16 %v908
    %v4869 = vunpack.c.h.b16 %v908
    %v4870 = vunpack.c.l.b16 %v909
    %v4871 = vunpack.c.h.b16 %v909
    %v4872 = vunpack.c.l.b16 %v910
    %v4873 = vunpack.c.h.b16 %v910
    %v4874 = vunpack.c.l.b16 %v911
    %v4875 = vunpack.c.h.b16 %v911
    %v4876 = vunpack.c.l.b16 %v912
    %v4877 = vunpack.c.h.b16 %v912
    %v4878 = vunpack.c.l.b16 %v913
    %v4879 = vunpack.c.h.b16 %v913
    %v4880 = vunpack.c.l.b16 %v914
    %v4881 = vunpack.c.h.b16 %v914
    %v4882 = vunpack.c.l.b16 %v915
    %v4883 = vunpack.c.h.b16 %v915
    %v4884 = vunpack.c.l.b16 %v916
    %v4885 = vunpack.c.h.b16 %v916
    %v4886 = vunpack.c.l.b16 %v917
    %v4887 = vunpack.c.h.b16 %v917
    %v4888 = vunpack.c.l.b16 %v918
    %v4889 = vunpack.c.h.b16 %v918
    %v4890 = vunpack.c.l.b16 %v919
    %v4891 = vunpack.c.h.b16 %v919
    %v4892 = vunpack.c.l.b16 %v920
    %v4893 = vunpack.c.h.b16 %v920
    %v4894 = vunpack.c.l.b16 %v921
    %v4895 = vunpack.c.h.b16 %v921
    %v4896 = vunpack.c.l.b16 %v922
    %v4897 = vunpack.c.h.b16 %v922
    %v4898 = vunpack.c.l.b16 %v923
    %v4899 = vunpack.c.h.b16 %v923
    %v4900 = vunpack.c.l.b16 %v924
    %v4901 = vunpack.c.h.b16 %v924
    %v4902 = vunpack.c.l.b16 %v925
    %v4903 = vunpack.c.h.b16 %v925
    %v4904 = vunpack.c.l.b16 %v926
    %v4905 = vunpack.c.h.b16 %v926
    %v4906 = vunpack.c.l.b16 %v927
    %v4907 = vunpack.c.h.b16 %v927
    %v4908 = vunpack.c.l.b16 %v928
    %v4909 = vunpack.c.h.b16 %v928
    %v4910 = vunpack.c.l.b16 %v929
    %v4911 = vunpack.c.h.b16 %v929
    %v4912 = vunpack.c.l.b16 %v930
    %v4913 = vunpack.c.h.b16 %v930
    %v4914 = vunpack.c.l.b16 %v931
    %v4915 = vunpack.c.h.b16 %v931
    %v4916 = vunpack.c.l.b16 %v932
    %v4917 = vunpack.c.h.b16 %v932
    %v4918 = vunpack.c.l.b16 %v933
    %v4919 = vunpack.c.h.b16 %v933
    %v4920 = vunpack.c.l.b16 %v934
    %v4921 = vunpack.c.h.b16 %v934
    %v4922 = vunpack.c.l.b16 %v935
    %v4923 = vunpack.c.h.b16 %v935
    %v4924 = vunpack.c.l.b16 %v936
    %v4925 = vunpack.c.h.b16 %v936
    %v4926 = vunpack.c.l.b16 %v937
    %v4927 = vunpack.c.h.b16 %v937
    %v4928 = vunpack.c.l.b16 %v938
    %v4929 = vunpack.c.h.b16 %v938
    %v4930 = vunpack.c.l.b16 %v939
    %v4931 = vunpack.c.h.b16 %v939
    %v4932 = vunpack.c.l.b16 %v940
    %v4933 = vunpack.c.h.b16 %v940
    %v4934 = vunpack.c.l.b16 %v941
    %v4935 = vunpack.c.h.b16 %v941
    %v4936 = vunpack.c.l.b16 %v942
    %v4937 = vunpack.c.h.b16 %v942
    %v4938 = vunpack.c.l.b16 %v943
    %v4939 = vunpack.c.h.b16 %v943
    %v4940 = vunpack.c.l.b16 %v944
    %v4941 = vunpack.c.h.b16 %v944
    %v4942 = vunpack.c.l.b16 %v945
    %v4943 = vunpack.c.h.b16 %v945
    %v4944 = vunpack.c.l.b16 %v946
    %v4945 = vunpack.c.h.b16 %v946
    %v4946 = vunpack.c.l.b16 %v947
    %v4947 = vunpack.c.h.b16 %v947
    %v4948 = vunpack.c.l.b16 %v948
    %v4949 = vunpack.c.h.b16 %v948
    %v4950 = vunpack.c.l.b16 %v949
    %v4951 = vunpack.c.h.b16 %v949
    %v4952 = vunpack.c.l.b16 %v950
    %v4953 = vunpack.c.h.b16 %v950
    %v4954 = vunpack.c.l.b16 %v951
    %v4955 = vunpack.c.h.b16 %v951
    %v4956 = vunpack.c.l.b16 %v952
    %v4957 = vunpack.c.h.b16 %v952
    %v4958 = vunpack.c.l.b16 %v953
    %v4959 = vunpack.c.h.b16 %v953
    %v4960 = vunpack.c.l.b16 %v954
    %v4961 = vunpack.c.h.b16 %v954
    %v4962 = vunpack.c.l.b16 %v955
    %v4963 = vunpack.c.h.b16 %v955
    %v4964 = vunpack.c.l.b16 %v956
    %v4965 = vunpack.c.h.b16 %v956
    %v4966 = vunpack.c.l.b16 %v957
    %v4967 = vunpack.c.h.b16 %v957
    %v4968 = vunpack.c.l.b16 %v958
    %v4969 = vunpack.c.h.b16 %v958
    %v4970 = vunpack.c.l.b16 %v959
    %v4971 = vunpack.c.h.b16 %v959
    %v4972 = vunpack.c.l.b16 %v960
    %v4973 = vunpack.c.h.b16 %v960
    %v4974 = vunpack.c.l.b16 %v961
    %v4975 = vunpack.c.h.b16 %v961
    %v4976 = vunpack.c.l.b16 %v962
    %v4977 = vunpack.c.h.b16 %v962
    %v4978 = vunpack.c.l.b16 %v963
    %v4979 = vunpack.c.h.b16 %v963
    %v4980 = vunpack.c.l.b16 %v964
    %v4981 = vunpack.c.h.b16 %v964
    %v4982 = vunpack.c.l.b16 %v965
    %v4983 = vunpack.c.h.b16 %v965
    %v4984 = vunpack.c.l.b16 %v966
    %v4985 = vunpack.c.h.b16 %v966
    %v4986 = vunpack.c.l.b16 %v967
    %v4987 = vunpack.c.h.b16 %v967
    %v4988 = vunpack.c.l.b16 %v968
    %v4989 = vunpack.c.h.b16 %v968
    %v4990 = vunpack.c.l.b16 %v969
    %v4991 = vunpack.c.h.b16 %v969
    %v4992 = vunpack.c.l.b16 %v970
    %v4993 = vunpack.c.h.b16 %v970
    %v4994 = vunpack.c.l.b16 %v971
    %v4995 = vunpack.c.h.b16 %v971
    %v4996 = vunpack.c.l.b16 %v972
    %v4997 = vunpack.c.h.b16 %v972
    %v4998 = vunpack.c.l.b16 %v973
    %v4999 = vunpack.c.h.b16 %v973
    %v5000 = vunpack.c.l.b16 %v974
    %v5001 = vunpack.c.h.b16 %v974
    %v5002 = vunpack.c.l.b16 %v975
    %v5003 = vunpack.c.h.b16 %v975
    %v5004 = vunpack.c.l.b16 %v976
    %v5005 = vunpack.c.h.b16 %v976
    %v5006 = vunpack.c.l.b16 %v977
    %v5007 = vunpack.c.h.b16 %v977
    %v5008 = vunpack.c.l.b16 %v978
    %v5009 = vunpack.c.h.b16 %v978
    %v5010 = vunpack.c.l.b16 %v979
    %v5011 = vunpack.c.h.b16 %v979
    %v5012 = vunpack.c.l.b16 %v980
    %v5013 = vunpack.c.h.b16 %v980
    %v5014 = vunpack.c.l.b16 %v981
    %v5015 = vunpack.c.h.b16 %v981
    %v5016 = vunpack.c.l.b16 %v982
    %v5017 = vunpack.c.h.b16 %v982
    %v5018 = vunpack.c.l.b16 %v983
    %v5019 = vunpack.c.h.b16 %v983
    %v5020 = vunpack.c.l.b16 %v984
    %v5021 = vunpack.c.h.b16 %v984
    %v5022 = vunpack.c.l.b16 %v985
    %v5023 = vunpack.c.h.b16 %v985
    %v5024 = vunpack.c.l.b16 %v986
    %v5025 = vunpack.c.h.b16 %v986
    %v5026 = vunpack.c.l.b16 %v987
    %v5027 = vunpack.c.h.b16 %v987
    %v5028 = vunpack.c.l.b16 %v988
    %v5029 = vunpack.c.h.b16 %v988
    %v5030 = vunpack.c.l.b16 %v989
    %v5031 = vunpack.c.h.b16 %v989
    %v5032 = vunpack.c.l.b16 %v990
    %v5033 = vunpack.c.h.b16 %v990
    %v5034 = vunpack.c.l.b16 %v991
    %v5035 = vunpack.c.h.b16 %v991
    %v5036 = vunpack.c.l.b16 %v992
    %v5037 = vunpack.c.h.b16 %v992
    %v5038 = vunpack.c.l.b16 %v993
    %v5039 = vunpack.c.h.b16 %v993
    %v5040 = vunpack.c.l.b16 %v994
    %v5041 = vunpack.c.h.b16 %v994
    %v5042 = vunpack.c.l.b16 %v995
    %v5043 = vunpack.c.h.b16 %v995
    %v5044 = vunpack.c.l.b16 %v996
    %v5045 = vunpack.c.h.b16 %v996
    %v5046 = vunpack.c.l.b16 %v997
    %v5047 = vunpack.c.h.b16 %v997
    %v5048 = vunpack.c.l.b16 %v998
    %v5049 = vunpack.c.h.b16 %v998
    %v5050 = vunpack.c.l.b16 %v999
    %v5051 = vunpack.c.h.b16 %v999
    %v5052 = vunpack.c.l.b16 %v1000
    %v5053 = vunpack.c.h.b16 %v1000
    %v5054 = vunpack.c.l.b16 %v1001
    %v5055 = vunpack.c.h.b16 %v1001
    %v5056 = vunpack.c.l.b16 %v1002
    %v5057 = vunpack.c.h.b16 %v1002
    %v5058 = vunpack.c.l.b16 %v1003
    %v5059 = vunpack.c.h.b16 %v1003
    %v5060 = vunpack.c.l.b16 %v1004
    %v5061 = vunpack.c.h.b16 %v1004
    %v5062 = vunpack.c.l.b16 %v1005
    %v5063 = vunpack.c.h.b16 %v1005
    %v5064 = vunpack.c.l.b16 %v1006
    %v5065 = vunpack.c.h.b16 %v1006
    %v5066 = vunpack.c.l.b16 %v1007
    %v5067 = vunpack.c.h.b16 %v1007
    %v5068 = vunpack.c.l.b16 %v1008
    %v5069 = vunpack.c.h.b16 %v1008
    %v5070 = vunpack.c.l.b16 %v1009
    %v5071 = vunpack.c.h.b16 %v1009
    %v5072 = vunpack.c.l.b16 %v1010
    %v5073 = vunpack.c.h.b16 %v1010
    %v5074 = vunpack.c.l.b16 %v1011
    %v5075 = vunpack.c.h.b16 %v1011
    %v5076 = vunpack.c.l.b16 %v1012
    %v5077 = vunpack.c.h.b16 %v1012
    %v5078 = vunpack.c.l.b16 %v1013
    %v5079 = vunpack.c.h.b16 %v1013
    %v5080 = vunpack.c.l.b16 %v1014
    %v5081 = vunpack.c.h.b16 %v1014
    %v5082 = vunpack.c.l.b16 %v1015
    %v5083 = vunpack.c.h.b16 %v1015
    %v5084 = vunpack.c.l.b16 %v1016
    %v5085 = vunpack.c.h.b16 %v1016
    %v5086 = vunpack.c.l.b16 %v1017
    %v5087 = vunpack.c.h.b16 %v1017
    %v5088 = vunpack.c.l.b16 %v1018
    %v5089 = vunpack.c.h.b16 %v1018
    %v5090 = vunpack.c.l.b16 %v1019
    %v5091 = vunpack.c.h.b16 %v1019
    %v5092 = vunpack.c.l.b16 %v1020
    %v5093 = vunpack.c.h.b16 %v1020
    %v5094 = vunpack.c.l.b16 %v1021
    %v5095 = vunpack.c.h.b16 %v1021
    %v5096 = vunpack.c.l.b16 %v1022
    %v5097 = vunpack.c.h.b16 %v1022
    %v5098 = vunpack.c.l.b16 %v1023
    %v5099 = vunpack.c.h.b16 %v1023
    %v5100 = vunpack.c.l.b16 %v1024
    %v5101 = vunpack.c.h.b16 %v1024
    %v5102 = vunpack.c.l.b16 %v1025
    %v5103 = vunpack.c.h.b16 %v1025
    %v5104 = vunpack.c.l.b16 %v1026
    %v5105 = vunpack.c.h.b16 %v1026
    %v5106 = vunpack.c.l.b16 %v1027
    %v5107 = vunpack.c.h.b16 %v1027
    %v5108 = vunpack.c.l.b16 %v1028
    %v5109 = vunpack.c.h.b16 %v1028
    %v5110 = vunpack.c.l.b16 %v1029
    %v5111 = vunpack.c.h.b16 %v1029
    %v5112 = vunpack.c.l.b16 %v1030
    %v5113 = vunpack.c.h.b16 %v1030
    %v5114 = vunpack.c.l.b16 %v1031
    %v5115 = vunpack.c.h.b16 %v1031
    %v5116 = vunpack.c.l.b16 %v1032
    %v5117 = vunpack.c.h.b16 %v1032
    %v5118 = vunpack.c.l.b16 %v1033
    %v5119 = vunpack.c.h.b16 %v1033
    %v5120 = vunpack.c.l.b16 %v1034
    %v5121 = vunpack.c.h.b16 %v1034
    %v5122 = vunpack.c.l.b16 %v1035
    %v5123 = vunpack.c.h.b16 %v1035
    %v5124 = vunpack.c.l.b16 %v1036
    %v5125 = vunpack.c.h.b16 %v1036
    %v5126 = vunpack.c.l.b16 %v1037
    %v5127 = vunpack.c.h.b16 %v1037
    %v5128 = vunpack.c.l.b16 %v1038
    %v5129 = vunpack.c.h.b16 %v1038
    %v5130 = vunpack.c.l.b16 %v1039
    %v5131 = vunpack.c.h.b16 %v1039
    %v5132 = vunpack.c.l.b16 %v1040
    %v5133 = vunpack.c.h.b16 %v1040
    %v5134 = vunpack.c.l.b16 %v1041
    %v5135 = vunpack.c.h.b16 %v1041
    %v5136 = vunpack.c.l.b16 %v1042
    %v5137 = vunpack.c.h.b16 %v1042
    %v5138 = vunpack.c.l.b16 %v1043
    %v5139 = vunpack.c.h.b16 %v1043
    %v5140 = vunpack.c.l.b16 %v1044
    %v5141 = vunpack.c.h.b16 %v1044
    %v5142 = vunpack.c.l.b16 %v1045
    %v5143 = vunpack.c.h.b16 %v1045
    %v5144 = vunpack.c.l.b16 %v1046
    %v5145 = vunpack.c.h.b16 %v1046
    %v5146 = vunpack.c.l.b16 %v1047
    %v5147 = vunpack.c.h.b16 %v1047
    %v5148 = vunpack.c.l.b16 %v1048
    %v5149 = vunpack.c.h.b16 %v1048
    %v5150 = vunpack.c.l.b16 %v1049
    %v5151 = vunpack.c.h.b16 %v1049
    %v5152 = vunpack.c.l.b16 %v1050
    %v5153 = vunpack.c.h.b16 %v1050
    %v5154 = vunpack.c.l.b16 %v1051
    %v5155 = vunpack.c.h.b16 %v1051
    %v5156 = vunpack.c.l.b16 %v1052
    %v5157 = vunpack.c.h.b16 %v1052
    %v5158 = vunpack.c.l.b16 %v1053
    %v5159 = vunpack.c.h.b16 %v1053
    %v5160 = vunpack.c.l.b16 %v1054
    %v5161 = vunpack.c.h.b16 %v1054
    %v5162 = vunpack.c.l.b16 %v1055
    %v5163 = vunpack.c.h.b16 %v1055
    %v5164 = vunpack.c.l.b16 %v1056
    %v5165 = vunpack.c.h.b16 %v1056
    %v5166 = vunpack.c.l.b16 %v1057
    %v5167 = vunpack.c.h.b16 %v1057
    %v5168 = vunpack.c.l.b16 %v1058
    %v5169 = vunpack.c.h.b16 %v1058
    %v5170 = vunpack.c.l.b16 %v1059
    %v5171 = vunpack.c.h.b16 %v1059
    %v5172 = vunpack.c.l.b16 %v1060
    %v5173 = vunpack.c.h.b16 %v1060
    %v5174 = vunpack.c.l.b16 %v1061
    %v5175 = vunpack.c.h.b16 %v1061
    %v5176 = vunpack.c.l.b16 %v1062
    %v5177 = vunpack.c.h.b16 %v1062
    %v5178 = vunpack.c.l.b16 %v1063
    %v5179 = vunpack.c.h.b16 %v1063
    %v5180 = vunpack.c.l.b16 %v1064
    %v5181 = vunpack.c.h.b16 %v1064
    %v5182 = vunpack.c.l.b16 %v1065
    %v5183 = vunpack.c.h.b16 %v1065
    %v5184 = vunpack.c.l.b16 %v1066
    %v5185 = vunpack.c.h.b16 %v1066
    %v5186 = vunpack.c.l.b16 %v1067
    %v5187 = vunpack.c.h.b16 %v1067
    %v5188 = vunpack.c.l.b16 %v1068
    %v5189 = vunpack.c.h.b16 %v1068
    %v5190 = vunpack.c.l.b16 %v1069
    %v5191 = vunpack.c.h.b16 %v1069
    %v5192 = vunpack.c.l.b16 %v1070
    %v5193 = vunpack.c.h.b16 %v1070
    %v5194 = vunpack.c.l.b16 %v1071
    %v5195 = vunpack.c.h.b16 %v1071
    %v5196 = vunpack.c.l.b16 %v1072
    %v5197 = vunpack.c.h.b16 %v1072
    %v5198 = vunpack.c.l.b16 %v1073
    %v5199 = vunpack.c.h.b16 %v1073
    %v5200 = vunpack.c.l.b16 %v1074
    %v5201 = vunpack.c.h.b16 %v1074
    %v5202 = vunpack.c.l.b16 %v1075
    %v5203 = vunpack.c.h.b16 %v1075
    %v5204 = vunpack.c.l.b16 %v1076
    %v5205 = vunpack.c.h.b16 %v1076
    %v5206 = vunpack.c.l.b16 %v1077
    %v5207 = vunpack.c.h.b16 %v1077
    %v5208 = vunpack.c.l.b16 %v1078
    %v5209 = vunpack.c.h.b16 %v1078
    %v5210 = vunpack.c.l.b16 %v1079
    %v5211 = vunpack.c.h.b16 %v1079
    %v5212 = vunpack.c.l.b16 %v1080
    %v5213 = vunpack.c.h.b16 %v1080
    %v5214 = vunpack.c.l.b16 %v1081
    %v5215 = vunpack.c.h.b16 %v1081
    %v5216 = vunpack.c.l.b16 %v1082
    %v5217 = vunpack.c.h.b16 %v1082
    %v5218 = vunpack.c.l.b16 %v1083
    %v5219 = vunpack.c.h.b16 %v1083
    %v5220 = vunpack.c.l.b16 %v1084
    %v5221 = vunpack.c.h.b16 %v1084
    %v5222 = vunpack.c.l.b16 %v1085
    %v5223 = vunpack.c.h.b16 %v1085
    %v5224 = vunpack.c.l.b16 %v1086
    %v5225 = vunpack.c.h.b16 %v1086
    %v5226 = vunpack.c.l.b16 %v1087
    %v5227 = vunpack.c.h.b16 %v1087
    %v5228 = vunpack.c.l.b16 %v1088
    %v5229 = vunpack.c.h.b16 %v1088
    %v5230 = vunpack.c.l.b16 %v1089
    %v5231 = vunpack.c.h.b16 %v1089
    %v5232 = vunpack.c.l.b16 %v1090
    %v5233 = vunpack.c.h.b16 %v1090
    %v5234 = vunpack.c.l.b16 %v1091
    %v5235 = vunpack.c.h.b16 %v1091
    %v5236 = vunpack.c.l.b16 %v1092
    %v5237 = vunpack.c.h.b16 %v1092
    %v5238 = vunpack.c.l.b16 %v1093
    %v5239 = vunpack.c.h.b16 %v1093
    %v5240 = vunpack.c.l.b16 %v1094
    %v5241 = vunpack.c.h.b16 %v1094
    %v5242 = vunpack.c.l.b16 %v1095
    %v5243 = vunpack.c.h.b16 %v1095
    %v5244 = vunpack.c.l.b16 %v1096
    %v5245 = vunpack.c.h.b16 %v1096
    %v5246 = vunpack.c.l.b16 %v1097
    %v5247 = vunpack.c.h.b16 %v1097
    %v5248 = vunpack.c.l.b16 %v1098
    %v5249 = vunpack.c.h.b16 %v1098
    %v5250 = vunpack.c.l.b16 %v1099
    %v5251 = vunpack.c.h.b16 %v1099
    %v5252 = vunpack.c.l.b16 %v1100
    %v5253 = vunpack.c.h.b16 %v1100
    %v5254 = vunpack.c.l.b16 %v1101
    %v5255 = vunpack.c.h.b16 %v1101
    %v5256 = vunpack.c.l.b16 %v1102
    %v5257 = vunpack.c.h.b16 %v1102
    %v5258 = vunpack.c.l.b16 %v1103
    %v5259 = vunpack.c.h.b16 %v1103
    %v5260 = vunpack.c.l.b16 %v1104
    %v5261 = vunpack.c.h.b16 %v1104
    %v5262 = vunpack.c.l.b16 %v1105
    %v5263 = vunpack.c.h.b16 %v1105
    %v5264 = vunpack.c.l.b16 %v1106
    %v5265 = vunpack.c.h.b16 %v1106
    %v5266 = vunpack.c.l.b16 %v1107
    %v5267 = vunpack.c.h.b16 %v1107
    %v5268 = vunpack.c.l.b16 %v1108
    %v5269 = vunpack.c.h.b16 %v1108
    %v5270 = vunpack.c.l.b16 %v1109
    %v5271 = vunpack.c.h.b16 %v1109
    %v5272 = vunpack.c.l.b16 %v1110
    %v5273 = vunpack.c.h.b16 %v1110
    %v5274 = vunpack.c.l.b16 %v1111
    %v5275 = vunpack.c.h.b16 %v1111
    %v5276 = vunpack.c.l.b16 %v1112
    %v5277 = vunpack.c.h.b16 %v1112
    %v5278 = vunpack.c.l.b16 %v1113
    %v5279 = vunpack.c.h.b16 %v1113
    %v5280 = vunpack.c.l.b16 %v1114
    %v5281 = vunpack.c.h.b16 %v1114
    %v5282 = vunpack.c.l.b16 %v1115
    %v5283 = vunpack.c.h.b16 %v1115
    %v5284 = vunpack.c.l.b16 %v1116
    %v5285 = vunpack.c.h.b16 %v1116
    %v5286 = vunpack.c.l.b16 %v1117
    %v5287 = vunpack.c.h.b16 %v1117
    %v5288 = vunpack.c.l.b16 %v1118
    %v5289 = vunpack.c.h.b16 %v1118
    %v5290 = vunpack.c.l.b16 %v1119
    %v5291 = vunpack.c.h.b16 %v1119
    %v5292 = vunpack.c.l.b16 %v1120
    %v5293 = vunpack.c.h.b16 %v1120
    %v5294 = vunpack.c.l.b16 %v1121
    %v5295 = vunpack.c.h.b16 %v1121
    %v5296 = vunpack.c.l.b16 %v1122
    %v5297 = vunpack.c.h.b16 %v1122
    %v5298 = vunpack.c.l.b16 %v1123
    %v5299 = vunpack.c.h.b16 %v1123
    %v5300 = vunpack.c.l.b16 %v1124
    %v5301 = vunpack.c.h.b16 %v1124
    %v5302 = vunpack.c.l.b16 %v1125
    %v5303 = vunpack.c.h.b16 %v1125
    %v5304 = vunpack.c.l.b16 %v1126
    %v5305 = vunpack.c.h.b16 %v1126
    %v5306 = vunpack.c.l.b16 %v1127
    %v5307 = vunpack.c.h.b16 %v1127
    %v5308 = vunpack.c.l.b16 %v1128
    %v5309 = vunpack.c.h.b16 %v1128
    %v5310 = vunpack.c.l.b16 %v1129
    %v5311 = vunpack.c.h.b16 %v1129
    %v5312 = vunpack.c.l.b16 %v1130
    %v5313 = vunpack.c.h.b16 %v1130
    %v5314 = vunpack.c.l.b16 %v1131
    %v5315 = vunpack.c.h.b16 %v1131
    %v5316 = vunpack.c.l.b16 %v1132
    %v5317 = vunpack.c.h.b16 %v1132
    %v5318 = vunpack.c.l.b16 %v1133
    %v5319 = vunpack.c.h.b16 %v1133
    %v5320 = vunpack.c.l.b16 %v1134
    %v5321 = vunpack.c.h.b16 %v1134
    %v5322 = vunpack.c.l.b16 %v1135
    %v5323 = vunpack.c.h.b16 %v1135
    %v5324 = vunpack.c.l.b16 %v1136
    %v5325 = vunpack.c.h.b16 %v1136
    %v5326 = vunpack.c.l.b16 %v1137
    %v5327 = vunpack.c.h.b16 %v1137
    %v5328 = vunpack.c.l.b16 %v1138
    %v5329 = vunpack.c.h.b16 %v1138
    %v5330 = vunpack.c.l.b16 %v1139
    %v5331 = vunpack.c.h.b16 %v1139
    %v5332 = vunpack.c.l.b16 %v1140
    %v5333 = vunpack.c.h.b16 %v1140
    %v5334 = vunpack.c.l.b16 %v1141
    %v5335 = vunpack.c.h.b16 %v1141
    %v5336 = vunpack.c.l.b16 %v1142
    %v5337 = vunpack.c.h.b16 %v1142
    %v5338 = vunpack.c.l.b16 %v1143
    %v5339 = vunpack.c.h.b16 %v1143
    %v5340 = vunpack.c.l.b16 %v1144
    %v5341 = vunpack.c.h.b16 %v1144
    %v5342 = vunpack.c.l.b16 %v1145
    %v5343 = vunpack.c.h.b16 %v1145
    %v5344 = vunpack.c.l.b16 %v1146
    %v5345 = vunpack.c.h.b16 %v1146
    %v5346 = vunpack.c.l.b16 %v1147
    %v5347 = vunpack.c.h.b16 %v1147
    %v5348 = vunpack.c.l.b16 %v1148
    %v5349 = vunpack.c.h.b16 %v1148
    %v5350 = vunpack.c.l.b16 %v1149
    %v5351 = vunpack.c.h.b16 %v1149
    %v5352 = vunpack.c.l.b16 %v1150
    %v5353 = vunpack.c.h.b16 %v1150
    %v5354 = vunpack.c.l.b16 %v1151
    %v5355 = vunpack.c.h.b16 %v1151
    %v5356 = vunpack.c.l.b16 %v1152
    %v5357 = vunpack.c.h.b16 %v1152
    %v5358 = vunpack.c.l.b16 %v1153
    %v5359 = vunpack.c.h.b16 %v1153
    %v5360 = vunpack.c.l.b16 %v1154
    %v5361 = vunpack.c.h.b16 %v1154
    %v5362 = vunpack.c.l.b16 %v1155
    %v5363 = vunpack.c.h.b16 %v1155
    %v5364 = vunpack.c.l.b16 %v1156
    %v5365 = vunpack.c.h.b16 %v1156
    %v5366 = vunpack.c.l.b16 %v1157
    %v5367 = vunpack.c.h.b16 %v1157
    %v5368 = vunpack.c.l.b16 %v1158
    %v5369 = vunpack.c.h.b16 %v1158
    %v5370 = vunpack.c.l.b16 %v1159
    %v5371 = vunpack.c.h.b16 %v1159
    %v5372 = vunpack.c.l.b16 %v1160
    %v5373 = vunpack.c.h.b16 %v1160
    %v5374 = vunpack.c.l.b16 %v1161
    %v5375 = vunpack.c.h.b16 %v1161
    %v5376 = vunpack.c.l.b16 %v1162
    %v5377 = vunpack.c.h.b16 %v1162
    %v5378 = vunpack.c.l.b16 %v1163
    %v5379 = vunpack.c.h.b16 %v1163
    %v5380 = vunpack.c.l.b16 %v1164
    %v5381 = vunpack.c.h.b16 %v1164
    %v5382 = vunpack.c.l.b16 %v1165
    %v5383 = vunpack.c.h.b16 %v1165
    %v5384 = vunpack.c.l.b16 %v1166
    %v5385 = vunpack.c.h.b16 %v1166
    %v5386 = vunpack.c.l.b16 %v1167
    %v5387 = vunpack.c.h.b16 %v1167
    %v5388 = vunpack.c.l.b16 %v1168
    %v5389 = vunpack.c.h.b16 %v1168
    %v5390 = vunpack.c.l.b16 %v1169
    %v5391 = vunpack.c.h.b16 %v1169
    %v5392 = vunpack.c.l.b16 %v1170
    %v5393 = vunpack.c.h.b16 %v1170
    %v5394 = vunpack.c.l.b16 %v1171
    %v5395 = vunpack.c.h.b16 %v1171
    %v5396 = vunpack.c.l.b16 %v1172
    %v5397 = vunpack.c.h.b16 %v1172
    %v5398 = vunpack.c.l.b16 %v1173
    %v5399 = vunpack.c.h.b16 %v1173
    %v5400 = vunpack.c.l.b16 %v1174
    %v5401 = vunpack.c.h.b16 %v1174
    %v5402 = vunpack.c.l.b16 %v1175
    %v5403 = vunpack.c.h.b16 %v1175
    %v5404 = vunpack.c.l.b16 %v1176
    %v5405 = vunpack.c.h.b16 %v1176
    %v5406 = vunpack.c.l.b16 %v1177
    %v5407 = vunpack.c.h.b16 %v1177
    %v5408 = vunpack.c.l.b16 %v1178
    %v5409 = vunpack.c.h.b16 %v1178
    %v5410 = vunpack.c.l.b16 %v1179
    %v5411 = vunpack.c.h.b16 %v1179
    %v5412 = vunpack.c.l.b16 %v1180
    %v5413 = vunpack.c.h.b16 %v1180
    %v5414 = vunpack.c.l.b16 %v1181
    %v5415 = vunpack.c.h.b16 %v1181
    %v5416 = vunpack.c.l.b16 %v1182
    %v5417 = vunpack.c.h.b16 %v1182
    %v5418 = vunpack.c.l.b16 %v1183
    %v5419 = vunpack.c.h.b16 %v1183
    %v5420 = vunpack.c.l.b16 %v1184
    %v5421 = vunpack.c.h.b16 %v1184
    %v5422 = vunpack.c.l.b16 %v1185
    %v5423 = vunpack.c.h.b16 %v1185
    %v5424 = vunpack.c.l.b16 %v1186
    %v5425 = vunpack.c.h.b16 %v1186
    %v5426 = vunpack.c.l.b16 %v1187
    %v5427 = vunpack.c.h.b16 %v1187
    %v5428 = vunpack.c.l.b16 %v1188
    %v5429 = vunpack.c.h.b16 %v1188
    %v5430 = vunpack.c.l.b16 %v1189
    %v5431 = vunpack.c.h.b16 %v1189
    %v5432 = vunpack.c.l.b16 %v1190
    %v5433 = vunpack.c.h.b16 %v1190
    %v5434 = vunpack.c.l.b16 %v1191
    %v5435 = vunpack.c.h.b16 %v1191
    %v5436 = vunpack.c.l.b16 %v1192
    %v5437 = vunpack.c.h.b16 %v1192
    %v5438 = vunpack.c.l.b16 %v1193
    %v5439 = vunpack.c.h.b16 %v1193
    %v5440 = vunpack.c.l.b16 %v1194
    %v5441 = vunpack.c.h.b16 %v1194
    %v5442 = vunpack.c.l.b16 %v1195
    %v5443 = vunpack.c.h.b16 %v1195
    %v5444 = vunpack.c.l.b16 %v1196
    %v5445 = vunpack.c.h.b16 %v1196
    %v5446 = vunpack.c.l.b16 %v1197
    %v5447 = vunpack.c.h.b16 %v1197
    %v5448 = vunpack.c.l.b16 %v1198
    %v5449 = vunpack.c.h.b16 %v1198
    %v5450 = vunpack.c.l.b16 %v1199
    %v5451 = vunpack.c.h.b16 %v1199
    %v5452 = vunpack.c.l.b16 %v1200
    %v5453 = vunpack.c.h.b16 %v1200
    %v5454 = vunpack.c.l.b16 %v1201
    %v5455 = vunpack.c.h.b16 %v1201
    %v5456 = vunpack.c.l.b16 %v1202
    %v5457 = vunpack.c.h.b16 %v1202
    %v5458 = vunpack.c.l.b16 %v1203
    %v5459 = vunpack.c.h.b16 %v1203
    %v5460 = vunpack.c.l.b16 %v1204
    %v5461 = vunpack.c.h.b16 %v1204
    %v5462 = vunpack.c.l.b16 %v1205
    %v5463 = vunpack.c.h.b16 %v1205
    %v5464 = vunpack.c.l.b16 %v1206
    %v5465 = vunpack.c.h.b16 %v1206
    %v5466 = vunpack.c.l.b16 %v1207
    %v5467 = vunpack.c.h.b16 %v1207
    %v5468 = vunpack.c.l.b16 %v1208
    %v5469 = vunpack.c.h.b16 %v1208
    %v5470 = vunpack.c.l.b16 %v1209
    %v5471 = vunpack.c.h.b16 %v1209
    %v5472 = vunpack.c.l.b16 %v1210
    %v5473 = vunpack.c.h.b16 %v1210
    %v5474 = vunpack.c.l.b16 %v1211
    %v5475 = vunpack.c.h.b16 %v1211
    %v5476 = vunpack.c.l.b16 %v1212
    %v5477 = vunpack.c.h.b16 %v1212
    %v5478 = vunpack.c.l.b16 %v1213
    %v5479 = vunpack.c.h.b16 %v1213
    %v5480 = vunpack.c.l.b16 %v1214
    %v5481 = vunpack.c.h.b16 %v1214
    %v5482 = vunpack.c.l.b16 %v1215
    %v5483 = vunpack.c.h.b16 %v1215
    %v5484 = vunpack.c.l.b16 %v1216
    %v5485 = vunpack.c.h.b16 %v1216
    %v5486 = vunpack.c.l.b16 %v1217
    %v5487 = vunpack.c.h.b16 %v1217
    %v5488 = vunpack.c.l.b16 %v1218
    %v5489 = vunpack.c.h.b16 %v1218
    %v5490 = vunpack.c.l.b16 %v1219
    %v5491 = vunpack.c.h.b16 %v1219
    %v5492 = vunpack.c.l.b16 %v1220
    %v5493 = vunpack.c.h.b16 %v1220
    %v5494 = vunpack.c.l.b16 %v1221
    %v5495 = vunpack.c.h.b16 %v1221
    %v5496 = vunpack.c.l.b16 %v1222
    %v5497 = vunpack.c.h.b16 %v1222
    %v5498 = vunpack.c.l.b16 %v1223
    %v5499 = vunpack.c.h.b16 %v1223
    %v5500 = vunpack.c.l.b16 %v1224
    %v5501 = vunpack.c.h.b16 %v1224
    %v5502 = vunpack.c.l.b16 %v1225
    %v5503 = vunpack.c.h.b16 %v1225
    %v5504 = vunpack.c.l.b16 %v1226
    %v5505 = vunpack.c.h.b16 %v1226
    %v5506 = vunpack.c.l.b16 %v1227
    %v5507 = vunpack.c.h.b16 %v1227
    %v5508 = vunpack.c.l.b16 %v1228
    %v5509 = vunpack.c.h.b16 %v1228
    %v5510 = vunpack.c.l.b16 %v1229
    %v5511 = vunpack.c.h.b16 %v1229
    %v5512 = vunpack.c.l.b16 %v1230
    %v5513 = vunpack.c.h.b16 %v1230
    %v5514 = vunpack.c.l.b16 %v1231
    %v5515 = vunpack.c.h.b16 %v1231
    %v5516 = vunpack.c.l.b16 %v1232
    %v5517 = vunpack.c.h.b16 %v1232
    %v5518 = vunpack.c.l.b16 %v1233
    %v5519 = vunpack.c.h.b16 %v1233
    %v5520 = vunpack.c.l.b16 %v1234
    %v5521 = vunpack.c.h.b16 %v1234
    %v5522 = vunpack.c.l.b16 %v1235
    %v5523 = vunpack.c.h.b16 %v1235
    %v5524 = vunpack.c.l.b16 %v1236
    %v5525 = vunpack.c.h.b16 %v1236
    %v5526 = vunpack.c.l.b16 %v1237
    %v5527 = vunpack.c.h.b16 %v1237
    %v5528 = vunpack.c.l.b16 %v1238
    %v5529 = vunpack.c.h.b16 %v1238
    %v5530 = vunpack.c.l.b16 %v1239
    %v5531 = vunpack.c.h.b16 %v1239
    %v5532 = vunpack.c.l.b16 %v1240
    %v5533 = vunpack.c.h.b16 %v1240
    %v5534 = vunpack.c.l.b16 %v1241
    %v5535 = vunpack.c.h.b16 %v1241
    %v5536 = vunpack.c.l.b16 %v1242
    %v5537 = vunpack.c.h.b16 %v1242
    %v5538 = vunpack.c.l.b16 %v1243
    %v5539 = vunpack.c.h.b16 %v1243
    %v5540 = vunpack.c.l.b16 %v1244
    %v5541 = vunpack.c.h.b16 %v1244
    %v5542 = vunpack.c.l.b16 %v1245
    %v5543 = vunpack.c.h.b16 %v1245
    %v5544 = vunpack.c.l.b16 %v1246
    %v5545 = vunpack.c.h.b16 %v1246
    %v5546 = vunpack.c.l.b16 %v1247
    %v5547 = vunpack.c.h.b16 %v1247
    %v5548 = vunpack.c.l.b16 %v1248
    %v5549 = vunpack.c.h.b16 %v1248
    %v5550 = vunpack.c.l.b16 %v1249
    %v5551 = vunpack.c.h.b16 %v1249
    %v5552 = vunpack.c.l.b16 %v1250
    %v5553 = vunpack.c.h.b16 %v1250
    %v5554 = vunpack.c.l.b16 %v1251
    %v5555 = vunpack.c.h.b16 %v1251
    %v5556 = vunpack.c.l.b16 %v1252
    %v5557 = vunpack.c.h.b16 %v1252
    %v5558 = vunpack.c.l.b16 %v1253
    %v5559 = vunpack.c.h.b16 %v1253
    %v5560 = vunpack.c.l.b16 %v1254
    %v5561 = vunpack.c.h.b16 %v1254
    %v5562 = vunpack.c.l.b16 %v1255
    %v5563 = vunpack.c.h.b16 %v1255
    %v5564 = vunpack.c.l.b16 %v1256
    %v5565 = vunpack.c.h.b16 %v1256
    %v5566 = vunpack.c.l.b16 %v1257
    %v5567 = vunpack.c.h.b16 %v1257
    %v5568 = vunpack.c.l.b16 %v1258
    %v5569 = vunpack.c.h.b16 %v1258
    %v5570 = vunpack.c.l.b16 %v1259
    %v5571 = vunpack.c.h.b16 %v1259
    %v5572 = vunpack.c.l.b16 %v1260
    %v5573 = vunpack.c.h.b16 %v1260
    %v5574 = vunpack.c.l.b16 %v1261
    %v5575 = vunpack.c.h.b16 %v1261
    %v5576 = vunpack.c.l.b16 %v1262
    %v5577 = vunpack.c.h.b16 %v1262
    %v5578 = vunpack.c.l.b16 %v1263
    %v5579 = vunpack.c.h.b16 %v1263
    %v5580 = vunpack.c.l.b16 %v1264
    %v5581 = vunpack.c.h.b16 %v1264
    %v5582 = vunpack.c.l.b16 %v1265
    %v5583 = vunpack.c.h.b16 %v1265
    %v5584 = vunpack.c.l.b16 %v1266
    %v5585 = vunpack.c.h.b16 %v1266
    %v5586 = vunpack.c.l.b16 %v1267
    %v5587 = vunpack.c.h.b16 %v1267
    %v5588 = vunpack.c.l.b16 %v1268
    %v5589 = vunpack.c.h.b16 %v1268
    %v5590 = vunpack.c.l.b16 %v1269
    %v5591 = vunpack.c.h.b16 %v1269
    %v5592 = vunpack.c.l.b16 %v1270
    %v5593 = vunpack.c.h.b16 %v1270
    %v5594 = vunpack.c.l.b16 %v1271
    %v5595 = vunpack.c.h.b16 %v1271
    %v5596 = vunpack.c.l.b16 %v1272
    %v5597 = vunpack.c.h.b16 %v1272
    %v5598 = vunpack.c.l.b16 %v1273
    %v5599 = vunpack.c.h.b16 %v1273
    %v5600 = vunpack.c.l.b16 %v1274
    %v5601 = vunpack.c.h.b16 %v1274
    %v5602 = vunpack.c.l.b16 %v1275
    %v5603 = vunpack.c.h.b16 %v1275
    %v5604 = vunpack.c.l.b16 %v1276
    %v5605 = vunpack.c.h.b16 %v1276
    %v5606 = vunpack.c.l.b16 %v1277
    %v5607 = vunpack.c.h.b16 %v1277
    %v5608 = vunpack.c.l.b16 %v1278
    %v5609 = vunpack.c.h.b16 %v1278
    %v5610 = vunpack.c.l.b16 %v1279
    %v5611 = vunpack.c.h.b16 %v1279
    %v5612 = vunpack.c.l.b16 %v1280
    %v5613 = vunpack.c.h.b16 %v1280
    %v5614 = vunpack.c.l.b16 %v1281
    %v5615 = vunpack.c.h.b16 %v1281
    %v5616 = vunpack.c.l.b16 %v1282
    %v5617 = vunpack.c.h.b16 %v1282
    %v5618 = vunpack.c.l.b16 %v1283
    %v5619 = vunpack.c.h.b16 %v1283
    %v5620 = vunpack.c.l.b16 %v1284
    %v5621 = vunpack.c.h.b16 %v1284
    %v5622 = vunpack.c.l.b16 %v1285
    %v5623 = vunpack.c.h.b16 %v1285
    %v5624 = vunpack.c.l.b16 %v1286
    %v5625 = vunpack.c.h.b16 %v1286
    %v5626 = vunpack.c.l.b16 %v1287
    %v5627 = vunpack.c.h.b16 %v1287
    %v5628 = vunpack.c.l.b16 %v1288
    %v5629 = vunpack.c.h.b16 %v1288
    %v5630 = vunpack.c.l.b16 %v1289
    %v5631 = vunpack.c.h.b16 %v1289
    %v5632 = vunpack.c.l.b16 %v1290
    %v5633 = vunpack.c.h.b16 %v1290
    %v5634 = vunpack.c.l.b16 %v1291
    %v5635 = vunpack.c.h.b16 %v1291
    %v5636 = vunpack.c.l.b16 %v1292
    %v5637 = vunpack.c.h.b16 %v1292
    %v5638 = vunpack.c.l.b16 %v1293
    %v5639 = vunpack.c.h.b16 %v1293
    %v5640 = vunpack.c.l.b16 %v1294
    %v5641 = vunpack.c.h.b16 %v1294
    %v5642 = vunpack.c.l.b16 %v1295
    %v5643 = vunpack.c.h.b16 %v1295
    %v5644 = vunpack.c.l.b16 %v1296
    %v5645 = vunpack.c.h.b16 %v1296
    %v5646 = vunpack.c.l.b16 %v1297
    %v5647 = vunpack.c.h.b16 %v1297
    %v5648 = vunpack.c.l.b16 %v1298
    %v5649 = vunpack.c.h.b16 %v1298
    %v5650 = vunpack.c.l.b16 %v1299
    %v5651 = vunpack.c.h.b16 %v1299
    %v5652 = vunpack.c.l.b16 %v1300
    %v5653 = vunpack.c.h.b16 %v1300
    %v5654 = vunpack.c.l.b16 %v1301
    %v5655 = vunpack.c.h.b16 %v1301
    %v5656 = vunpack.c.l.b16 %v1302
    %v5657 = vunpack.c.h.b16 %v1302
    %v5658 = vunpack.c.l.b16 %v1303
    %v5659 = vunpack.c.h.b16 %v1303
    %v5660 = vunpack.c.l.b16 %v1304
    %v5661 = vunpack.c.h.b16 %v1304
    %v5662 = vunpack.c.l.b16 %v1305
    %v5663 = vunpack.c.h.b16 %v1305
    %v5664 = vunpack.c.l.b16 %v1306
    %v5665 = vunpack.c.h.b16 %v1306
    %v5666 = vunpack.c.l.b16 %v1307
    %v5667 = vunpack.c.h.b16 %v1307
    %v5668 = vunpack.c.l.b16 %v1308
    %v5669 = vunpack.c.h.b16 %v1308
    %v5670 = vunpack.c.l.b16 %v1309
    %v5671 = vunpack.c.h.b16 %v1309
    %v5672 = vunpack.c.l.b16 %v1310
    %v5673 = vunpack.c.h.b16 %v1310
    %v5674 = vunpack.c.l.b16 %v1311
    %v5675 = vunpack.c.h.b16 %v1311
    %v5676 = vunpack.c.l.b16 %v1312
    %v5677 = vunpack.c.h.b16 %v1312
    %v5678 = vunpack.c.l.b16 %v1313
    %v5679 = vunpack.c.h.b16 %v1313
    %v5680 = vunpack.c.l.b16 %v1314
    %v5681 = vunpack.c.h.b16 %v1314
    %v5682 = vunpack.c.l.b16 %v1315
    %v5683 = vunpack.c.h.b16 %v1315
    %v5684 = vunpack.c.l.b16 %v1316
    %v5685 = vunpack.c.h.b16 %v1316
    %v5686 = vunpack.c.l.b16 %v1317
    %v5687 = vunpack.c.h.b16 %v1317
    %v5688 = vunpack.c.l.b16 %v1318
    %v5689 = vunpack.c.h.b16 %v1318
    %v5690 = vunpack.c.l.b16 %v1319
    %v5691 = vunpack.c.h.b16 %v1319
    %v5692 = vunpack.c.l.b16 %v1320
    %v5693 = vunpack.c.h.b16 %v1320
    %v5694 = vunpack.c.l.b16 %v1321
    %v5695 = vunpack.c.h.b16 %v1321
    %v5696 = vunpack.c.l.b16 %v1322
    %v5697 = vunpack.c.h.b16 %v1322
    %v5698 = vunpack.c.l.b16 %v1323
    %v5699 = vunpack.c.h.b16 %v1323
    %v5700 = vunpack.c.l.b16 %v1324
    %v5701 = vunpack.c.h.b16 %v1324
    %v5702 = vunpack.c.l.b16 %v1325
    %v5703 = vunpack.c.h.b16 %v1325
    %v5704 = vunpack.c.l.b16 %v1326
    %v5705 = vunpack.c.h.b16 %v1326
    %v5706 = vunpack.c.l.b16 %v1327
    %v5707 = vunpack.c.h.b16 %v1327
    %v5708 = vunpack.c.l.b16 %v1328
    %v5709 = vunpack.c.h.b16 %v1328
    %v5710 = vunpack.c.l.b16 %v1329
    %v5711 = vunpack.c.h.b16 %v1329
    %v5712 = vunpack.c.l.b16 %v1330
    %v5713 = vunpack.c.h.b16 %v1330
    %v5714 = vunpack.c.l.b16 %v1331
    %v5715 = vunpack.c.h.b16 %v1331
    %v5716 = vunpack.c.l.b16 %v1332
    %v5717 = vunpack.c.h.b16 %v1332
    %v5718 = vunpack.c.l.b16 %v1333
    %v5719 = vunpack.c.h.b16 %v1333
    %v5720 = vunpack.c.l.b16 %v1334
    %v5721 = vunpack.c.h.b16 %v1334
    %v5722 = vunpack.c.l.b16 %v1335
    %v5723 = vunpack.c.h.b16 %v1335
    %v5724 = vunpack.c.l.b16 %v1336
    %v5725 = vunpack.c.h.b16 %v1336
    %v5726 = vunpack.c.l.b16 %v1337
    %v5727 = vunpack.c.h.b16 %v1337
    %v5728 = vunpack.c.l.b16 %v1338
    %v5729 = vunpack.c.h.b16 %v1338
    %v5730 = vunpack.c.l.b16 %v1339
    %v5731 = vunpack.c.h.b16 %v1339
    %v5732 = vunpack.c.l.b16 %v1340
    %v5733 = vunpack.c.h.b16 %v1340
    %v5734 = vunpack.c.l.b16 %v1341
    %v5735 = vunpack.c.h.b16 %v1341
    %v5736 = vunpack.c.l.b16 %v1342
    %v5737 = vunpack.c.h.b16 %v1342
    %v5738 = vunpack.c.l.b16 %v1343
    %v5739 = vunpack.c.h.b16 %v1343
    %v5740 = vunpack.c.l.b16 %v1344
    %v5741 = vunpack.c.h.b16 %v1344
    %v5742 = vunpack.c.l.b16 %v1345
    %v5743 = vunpack.c.h.b16 %v1345
    %v5744 = vunpack.c.l.b16 %v1346
    %v5745 = vunpack.c.h.b16 %v1346
    %v5746 = vunpack.c.l.b16 %v1347
    %v5747 = vunpack.c.h.b16 %v1347
    %v5748 = vunpack.c.l.b16 %v1348
    %v5749 = vunpack.c.h.b16 %v1348
    %v5750 = vunpack.c.l.b16 %v1349
    %v5751 = vunpack.c.h.b16 %v1349
    %v5752 = vunpack.c.l.b16 %v1350
    %v5753 = vunpack.c.h.b16 %v1350
    %v5754 = vunpack.c.l.b16 %v1351
    %v5755 = vunpack.c.h.b16 %v1351
    %v5756 = vunpack.c.l.b16 %v1352
    %v5757 = vunpack.c.h.b16 %v1352
    %v5758 = vunpack.c.l.b16 %v1353
    %v5759 = vunpack.c.h.b16 %v1353
    %v5760 = vunpack.c.l.b16 %v1354
    %v5761 = vunpack.c.h.b16 %v1354
    %v5762 = vunpack.c.l.b16 %v1355
    %v5763 = vunpack.c.h.b16 %v1355
    %v5764 = vunpack.c.l.b16 %v1356
    %v5765 = vunpack.c.h.b16 %v1356
    %v5766 = vunpack.c.l.b16 %v1357
    %v5767 = vunpack.c.h.b16 %v1357
    %v5768 = vunpack.c.l.b16 %v1358
    %v5769 = vunpack.c.h.b16 %v1358
    %v5770 = vunpack.c.l.b16 %v1359
    %v5771 = vunpack.c.h.b16 %v1359
    %v5772 = vunpack.c.l.b16 %v1360
    %v5773 = vunpack.c.h.b16 %v1360
    %v5774 = vunpack.c.l.b16 %v1361
    %v5775 = vunpack.c.h.b16 %v1361
    %v5776 = vunpack.c.l.b16 %v1362
    %v5777 = vunpack.c.h.b16 %v1362
    %v5778 = vunpack.c.l.b16 %v1363
    %v5779 = vunpack.c.h.b16 %v1363
    %v5780 = vunpack.c.l.b16 %v1364
    %v5781 = vunpack.c.h.b16 %v1364
    %v5782 = vunpack.c.l.b16 %v1365
    %v5783 = vunpack.c.h.b16 %v1365
    %v5784 = vunpack.c.l.b16 %v1366
    %v5785 = vunpack.c.h.b16 %v1366
    %v5786 = vunpack.c.l.b16 %v1367
    %v5787 = vunpack.c.h.b16 %v1367
    %v5788 = vunpack.c.l.b16 %v1368
    %v5789 = vunpack.c.h.b16 %v1368
    %v5790 = vunpack.c.l.b16 %v1369
    %v5791 = vunpack.c.h.b16 %v1369
    %v5792 = vunpack.c.l.b16 %v1370
    %v5793 = vunpack.c.h.b16 %v1370
    %v5794 = vunpack.c.l.b16 %v1371
    %v5795 = vunpack.c.h.b16 %v1371
    %v5796 = vunpack.c.l.b16 %v1372
    %v5797 = vunpack.c.h.b16 %v1372
    %v5798 = vunpack.c.l.b16 %v1373
    %v5799 = vunpack.c.h.b16 %v1373
    %v5800 = vunpack.c.l.b16 %v1374
    %v5801 = vunpack.c.h.b16 %v1374
    %v5802 = vunpack.c.l.b16 %v1375
    %v5803 = vunpack.c.h.b16 %v1375
    %v5804 = vunpack.c.l.b16 %v1376
    %v5805 = vunpack.c.h.b16 %v1376
    %v5806 = vunpack.c.l.b16 %v1377
    %v5807 = vunpack.c.h.b16 %v1377
    %v5808 = vunpack.c.l.b16 %v1378
    %v5809 = vunpack.c.h.b16 %v1378
    %v5810 = vunpack.c.l.b16 %v1379
    %v5811 = vunpack.c.h.b16 %v1379
    %v5812 = vunpack.c.l.b16 %v1380
    %v5813 = vunpack.c.h.b16 %v1380
    %v5814 = vunpack.c.l.b16 %v1381
    %v5815 = vunpack.c.h.b16 %v1381
    %v5816 = vunpack.c.l.b16 %v1382
    %v5817 = vunpack.c.h.b16 %v1382
    %v5818 = vunpack.c.l.b16 %v1383
    %v5819 = vunpack.c.h.b16 %v1383
    %v5820 = vunpack.c.l.b16 %v1384
    %v5821 = vunpack.c.h.b16 %v1384
    %v5822 = vunpack.c.l.b16 %v1385
    %v5823 = vunpack.c.h.b16 %v1385
    %v5824 = vunpack.c.l.b16 %v1386
    %v5825 = vunpack.c.h.b16 %v1386
    %v5826 = vunpack.c.l.b16 %v1387
    %v5827 = vunpack.c.h.b16 %v1387
    %v5828 = vunpack.c.l.b16 %v1388
    %v5829 = vunpack.c.h.b16 %v1388
    %v5830 = vunpack.c.l.b16 %v1389
    %v5831 = vunpack.c.h.b16 %v1389
    %v5832 = vunpack.c.l.b16 %v1390
    %v5833 = vunpack.c.h.b16 %v1390
    %v5834 = vunpack.c.l.b16 %v1391
    %v5835 = vunpack.c.h.b16 %v1391
    %v5836 = vunpack.c.l.b16 %v1392
    %v5837 = vunpack.c.h.b16 %v1392
    %v5838 = vunpack.c.l.b16 %v1393
    %v5839 = vunpack.c.h.b16 %v1393
    %v5840 = vunpack.c.l.b16 %v1394
    %v5841 = vunpack.c.h.b16 %v1394
    %v5842 = vunpack.c.l.b16 %v1395
    %v5843 = vunpack.c.h.b16 %v1395
    %v5844 = vunpack.c.l.b16 %v1396
    %v5845 = vunpack.c.h.b16 %v1396
    %v5846 = vunpack.c.l.b16 %v1397
    %v5847 = vunpack.c.h.b16 %v1397
    %v5848 = vunpack.c.l.b16 %v1398
    %v5849 = vunpack.c.h.b16 %v1398
    %v5850 = vunpack.c.l.b16 %v1399
    %v5851 = vunpack.c.h.b16 %v1399
    %v5852 = vunpack.c.l.b16 %v1400
    %v5853 = vunpack.c.h.b16 %v1400
    %v5854 = vunpack.c.l.b16 %v1401
    %v5855 = vunpack.c.h.b16 %v1401
    %v5856 = vunpack.c.l.b16 %v1402
    %v5857 = vunpack.c.h.b16 %v1402
    %v5858 = vunpack.c.l.b16 %v1403
    %v5859 = vunpack.c.h.b16 %v1403
    %v5860 = vunpack.c.l.b16 %v1404
    %v5861 = vunpack.c.h.b16 %v1404
    %v5862 = vunpack.c.l.b16 %v1405
    %v5863 = vunpack.c.h.b16 %v1405
    %v5864 = vunpack.c.l.b16 %v1406
    %v5865 = vunpack.c.h.b16 %v1406
    %v5866 = vunpack.c.l.b16 %v1407
    %v5867 = vunpack.c.h.b16 %v1407
    %v5868 = vunpack.c.l.b16 %v1408
    %v5869 = vunpack.c.h.b16 %v1408
    %v5870 = vunpack.c.l.b16 %v1409
    %v5871 = vunpack.c.h.b16 %v1409
    %v5872 = vunpack.c.l.b16 %v1410
    %v5873 = vunpack.c.h.b16 %v1410
    %v5874 = vunpack.c.l.b16 %v1411
    %v5875 = vunpack.c.h.b16 %v1411
    %v5876 = vunpack.c.l.b16 %v1412
    %v5877 = vunpack.c.h.b16 %v1412
    %v5878 = vunpack.c.l.b16 %v1413
    %v5879 = vunpack.c.h.b16 %v1413
    %v5880 = vunpack.c.l.b16 %v1414
    %v5881 = vunpack.c.h.b16 %v1414
    %v5882 = vunpack.c.l.b16 %v1415
    %v5883 = vunpack.c.h.b16 %v1415
    %v5884 = vunpack.c.l.b16 %v1416
    %v5885 = vunpack.c.h.b16 %v1416
    %v5886 = vunpack.c.l.b16 %v1417
    %v5887 = vunpack.c.h.b16 %v1417
    %v5888 = vunpack.c.l.b16 %v1418
    %v5889 = vunpack.c.h.b16 %v1418
    %v5890 = vunpack.c.l.b16 %v1419
    %v5891 = vunpack.c.h.b16 %v1419
    %v5892 = vunpack.c.l.b16 %v1420
    %v5893 = vunpack.c.h.b16 %v1420
    %v5894 = vunpack.c.l.b16 %v1421
    %v5895 = vunpack.c.h.b16 %v1421
    %v5896 = vunpack.c.l.b16 %v1422
    %v5897 = vunpack.c.h.b16 %v1422
    %v5898 = vunpack.c.l.b16 %v1423
    %v5899 = vunpack.c.h.b16 %v1423
    %v5900 = vunpack.c.l.b16 %v1424
    %v5901 = vunpack.c.h.b16 %v1424
    %v5902 = vunpack.c.l.b16 %v1425
    %v5903 = vunpack.c.h.b16 %v1425
    %v5904 = vunpack.c.l.b16 %v1426
    %v5905 = vunpack.c.h.b16 %v1426
    %v5906 = vunpack.c.l.b16 %v1427
    %v5907 = vunpack.c.h.b16 %v1427
    %v5908 = vunpack.c.l.b16 %v1428
    %v5909 = vunpack.c.h.b16 %v1428
    %v5910 = vunpack.c.l.b16 %v1429
    %v5911 = vunpack.c.h.b16 %v1429
    %v5912 = vunpack.c.l.b16 %v1430
    %v5913 = vunpack.c.h.b16 %v1430
    %v5914 = vunpack.c.l.b16 %v1431
    %v5915 = vunpack.c.h.b16 %v1431
    %v5916 = vunpack.c.l.b16 %v1432
    %v5917 = vunpack.c.h.b16 %v1432
    %v5918 = vunpack.c.l.b16 %v1433
    %v5919 = vunpack.c.h.b16 %v1433
    %v5920 = vunpack.c.l.b16 %v1434
    %v5921 = vunpack.c.h.b16 %v1434
    %v5922 = vunpack.c.l.b16 %v1435
    %v5923 = vunpack.c.h.b16 %v1435
    %v5924 = vunpack.c.l.b16 %v1436
    %v5925 = vunpack.c.h.b16 %v1436
    %v5926 = vunpack.c.l.b16 %v1437
    %v5927 = vunpack.c.h.b16 %v1437
    %v5928 = vunpack.c.l.b16 %v1438
    %v5929 = vunpack.c.h.b16 %v1438
    %v5930 = vunpack.c.l.b16 %v1439
    %v5931 = vunpack.c.h.b16 %v1439
    %v5932 = vunpack.c.l.b16 %v1440
    %v5933 = vunpack.c.h.b16 %v1440
    %v5934 = vunpack.c.l.b16 %v1441
    %v5935 = vunpack.c.h.b16 %v1441
    %v5936 = vunpack.c.l.b16 %v1442
    %v5937 = vunpack.c.h.b16 %v1442
    %v5938 = vunpack.c.l.b16 %v1443
    %v5939 = vunpack.c.h.b16 %v1443
    %v5940 = vunpack.c.l.b16 %v1444
    %v5941 = vunpack.c.h.b16 %v1444
    %v5942 = vunpack.c.l.b16 %v1445
    %v5943 = vunpack.c.h.b16 %v1445
    %v5944 = vunpack.c.l.b16 %v1446
    %v5945 = vunpack.c.h.b16 %v1446
    %v5946 = vunpack.c.l.b16 %v1447
    %v5947 = vunpack.c.h.b16 %v1447
    %v5948 = vunpack.c.l.b16 %v1448
    %v5949 = vunpack.c.h.b16 %v1448
    %v5950 = vunpack.c.l.b16 %v1449
    %v5951 = vunpack.c.h.b16 %v1449
    %v5952 = vunpack.c.l.b16 %v1450
    %v5953 = vunpack.c.h.b16 %v1450
    %v5954 = vunpack.c.l.b16 %v1451
    %v5955 = vunpack.c.h.b16 %v1451
    %v5956 = vunpack.c.l.b16 %v1452
    %v5957 = vunpack.c.h.b16 %v1452
    %v5958 = vunpack.c.l.b16 %v1453
    %v5959 = vunpack.c.h.b16 %v1453
    %v5960 = vunpack.c.l.b16 %v1454
    %v5961 = vunpack.c.h.b16 %v1454
    %v5962 = vunpack.c.l.b16 %v1455
    %v5963 = vunpack.c.h.b16 %v1455
    %v5964 = vunpack.c.l.b16 %v1456
    %v5965 = vunpack.c.h.b16 %v1456
    %v5966 = vunpack.c.l.b16 %v1457
    %v5967 = vunpack.c.h.b16 %v1457
    %v5968 = vunpack.c.l.b16 %v1458
    %v5969 = vunpack.c.h.b16 %v1458
    %v5970 = vunpack.c.l.b16 %v1459
    %v5971 = vunpack.c.h.b16 %v1459
    %v5972 = vunpack.c.l.b16 %v1460
    %v5973 = vunpack.c.h.b16 %v1460
    %v5974 = vunpack.c.l.b16 %v1461
    %v5975 = vunpack.c.h.b16 %v1461
    %v5976 = vunpack.c.l.b16 %v1462
    %v5977 = vunpack.c.h.b16 %v1462
    %v5978 = vunpack.c.l.b16 %v1463
    %v5979 = vunpack.c.h.b16 %v1463
    %v5980 = vunpack.c.l.b16 %v1464
    %v5981 = vunpack.c.h.b16 %v1464
    %v5982 = vunpack.c.l.b16 %v1465
    %v5983 = vunpack.c.h.b16 %v1465
    %v5984 = vunpack.c.l.b16 %v1466
    %v5985 = vunpack.c.h.b16 %v1466
    %v5986 = vunpack.c.l.b16 %v1467
    %v5987 = vunpack.c.h.b16 %v1467
    %v5988 = vunpack.c.l.b16 %v1468
    %v5989 = vunpack.c.h.b16 %v1468
    %v5990 = vunpack.c.l.b16 %v1469
    %v5991 = vunpack.c.h.b16 %v1469
    %v5992 = vunpack.c.l.b16 %v1470
    %v5993 = vunpack.c.h.b16 %v1470
    %v5994 = vunpack.c.l.b16 %v1471
    %v5995 = vunpack.c.h.b16 %v1471
    %v5996 = vunpack.c.l.b16 %v1472
    %v5997 = vunpack.c.h.b16 %v1472
    %v5998 = vunpack.c.l.b16 %v1473
    %v5999 = vunpack.c.h.b16 %v1473
    %v6000 = vunpack.c.l.b16 %v1474
    %v6001 = vunpack.c.h.b16 %v1474
    %v6002 = vunpack.c.l.b16 %v1475
    %v6003 = vunpack.c.h.b16 %v1475
    %v6004 = vunpack.c.l.b16 %v1476
    %v6005 = vunpack.c.h.b16 %v1476
    %v6006 = vunpack.c.l.b16 %v1477
    %v6007 = vunpack.c.h.b16 %v1477
    %v6008 = vunpack.c.l.b16 %v1478
    %v6009 = vunpack.c.h.b16 %v1478
    %v6010 = vunpack.c.l.b16 %v1479
    %v6011 = vunpack.c.h.b16 %v1479
    %v6012 = vunpack.c.l.b16 %v1480
    %v6013 = vunpack.c.h.b16 %v1480
    %v6014 = vunpack.c.l.b16 %v1481
    %v6015 = vunpack.c.h.b16 %v1481
    %v6016 = vunpack.c.l.b16 %v1482
    %v6017 = vunpack.c.h.b16 %v1482
    %v6018 = vunpack.c.l.b16 %v1483
    %v6019 = vunpack.c.h.b16 %v1483
    %v6020 = vunpack.c.l.b16 %v1484
    %v6021 = vunpack.c.h.b16 %v1484
    %v6022 = vunpack.c.l.b16 %v1485
    %v6023 = vunpack.c.h.b16 %v1485
    %v6024 = vunpack.c.l.b16 %v1486
    %v6025 = vunpack.c.h.b16 %v1486
    %v6026 = vunpack.c.l.b16 %v1487
    %v6027 = vunpack.c.h.b16 %v1487
    %v6028 = vunpack.c.l.b16 %v1488
    %v6029 = vunpack.c.h.b16 %v1488
    %v6030 = vunpack.c.l.b16 %v1489
    %v6031 = vunpack.c.h.b16 %v1489
    %v6032 = vunpack.c.l.b16 %v1490
    %v6033 = vunpack.c.h.b16 %v1490
    %v6034 = vunpack.c.l.b16 %v1491
    %v6035 = vunpack.c.h.b16 %v1491
    %v6036 = vunpack.c.l.b16 %v1492
    %v6037 = vunpack.c.h.b16 %v1492
    %v6038 = vunpack.c.l.b16 %v1493
    %v6039 = vunpack.c.h.b16 %v1493
    %v6040 = vunpack.c.l.b16 %v1494
    %v6041 = vunpack.c.h.b16 %v1494
    %v6042 = vunpack.c.l.b16 %v1495
    %v6043 = vunpack.c.h.b16 %v1495
    %v6044 = vunpack.c.l.b16 %v1496
    %v6045 = vunpack.c.h.b16 %v1496
    %v6046 = vunpack.c.l.b16 %v1497
    %v6047 = vunpack.c.h.b16 %v1497
    %v6048 = vunpack.c.l.b16 %v1498
    %v6049 = vunpack.c.h.b16 %v1498
    %v6050 = vunpack.c.l.b16 %v1499
    %v6051 = vunpack.c.h.b16 %v1499
    %v6052 = vunpack.c.l.b16 %v1500
    %v6053 = vunpack.c.h.b16 %v1500
    %v6054 = vunpack.c.l.b16 %v1501
    %v6055 = vunpack.c.h.b16 %v1501
    %v6056 = vunpack.c.l.b16 %v1502
    %v6057 = vunpack.c.h.b16 %v1502
    %v6058 = vunpack.c.l.b16 %v1503
    %v6059 = vunpack.c.h.b16 %v1503
    %v6060 = vunpack.c.l.b16 %v1504
    %v6061 = vunpack.c.h.b16 %v1504
    %v6062 = vunpack.c.l.b16 %v1505
    %v6063 = vunpack.c.h.b16 %v1505
    %v6064 = vunpack.c.l.b16 %v1506
    %v6065 = vunpack.c.h.b16 %v1506
    %v6066 = vunpack.c.l.b16 %v1507
    %v6067 = vunpack.c.h.b16 %v1507
    %v6068 = vunpack.c.l.b16 %v1508
    %v6069 = vunpack.c.h.b16 %v1508
    %v6070 = vunpack.c.l.b16 %v1509
    %v6071 = vunpack.c.h.b16 %v1509
    %v6072 = vunpack.c.l.b16 %v1510
    %v6073 = vunpack.c.h.b16 %v1510
    %v6074 = vunpack.c.l.b16 %v1511
    %v6075 = vunpack.c.h.b16 %v1511
    %v6076 = vunpack.c.l.b16 %v1512
    %v6077 = vunpack.c.h.b16 %v1512
    %v6078 = vunpack.c.l.b16 %v1513
    %v6079 = vunpack.c.h.b16 %v1513
    %v6080 = vunpack.c.l.b16 %v1514
    %v6081 = vunpack.c.h.b16 %v1514
    %v6082 = vunpack.c.l.b16 %v1515
    %v6083 = vunpack.c.h.b16 %v1515
    %v6084 = vunpack.c.l.b16 %v1516
    %v6085 = vunpack.c.h.b16 %v1516
    %v6086 = vunpack.c.l.b16 %v1517
    %v6087 = vunpack.c.h.b16 %v1517
    %v6088 = vunpack.c.l.b16 %v1518
    %v6089 = vunpack.c.h.b16 %v1518
    %v6090 = vunpack.c.l.b16 %v1519
    %v6091 = vunpack.c.h.b16 %v1519
    %v6092 = vunpack.c.l.b16 %v1520
    %v6093 = vunpack.c.h.b16 %v1520
    %v6094 = vunpack.c.l.b16 %v1521
    %v6095 = vunpack.c.h.b16 %v1521
    %v6096 = vunpack.c.l.b16 %v1522
    %v6097 = vunpack.c.h.b16 %v1522
    %v6098 = vunpack.c.l.b16 %v1523
    %v6099 = vunpack.c.h.b16 %v1523
    %v6100 = vunpack.c.l.b16 %v1524
    %v6101 = vunpack.c.h.b16 %v1524
    %v6102 = vunpack.c.l.b16 %v1525
    %v6103 = vunpack.c.h.b16 %v1525
    %v6104 = vunpack.c.l.b16 %v1526
    %v6105 = vunpack.c.h.b16 %v1526
    %v6106 = vunpack.c.l.b16 %v1527
    %v6107 = vunpack.c.h.b16 %v1527
    %v6108 = vunpack.c.l.b16 %v1528
    %v6109 = vunpack.c.h.b16 %v1528
    %v6110 = vunpack.c.l.b16 %v1529
    %v6111 = vunpack.c.h.b16 %v1529
    %v6112 = vunpack.c.l.b16 %v1530
    %v6113 = vunpack.c.h.b16 %v1530
    %v6114 = vunpack.c.l.b16 %v1531
    %v6115 = vunpack.c.h.b16 %v1531
    %v6116 = vunpack.c.l.b16 %v1532
    %v6117 = vunpack.c.h.b16 %v1532
    %v6118 = vunpack.c.l.b16 %v1533
    %v6119 = vunpack.c.h.b16 %v1533
    %v6120 = vunpack.c.l.b16 %v1534
    %v6121 = vunpack.c.h.b16 %v1534
    %v6122 = vunpack.c.l.b16 %v1535
    %v6123 = vunpack.c.h.b16 %v1535
    %v6124 = vunpack.c.l.b16 %v1536
    %v6125 = vunpack.c.h.b16 %v1536
    %v6126 = vunpack.c.l.b16 %v1537
    %v6127 = vunpack.c.h.b16 %v1537
    %v6128 = vunpack.c.l.b16 %v1538
    %v6129 = vunpack.c.h.b16 %v1538
    %v6130 = vunpack.c.l.b16 %v1539
    %v6131 = vunpack.c.h.b16 %v1539
    %v6132 = vunpack.c.l.b16 %v1540
    %v6133 = vunpack.c.h.b16 %v1540
    %v6134 = vunpack.c.l.b16 %v1541
    %v6135 = vunpack.c.h.b16 %v1541
    %v6136 = vunpack.c.l.b16 %v1542
    %v6137 = vunpack.c.h.b16 %v1542
    %v6138 = vunpack.c.l.b16 %v1543
    %v6139 = vunpack.c.h.b16 %v1543
    %v6140 = vunpack.c.l.b16 %v1544
    %v6141 = vunpack.c.h.b16 %v1544
    %v6142 = vunpack.c.l.b16 %v1545
    %v6143 = vunpack.c.h.b16 %v1545
    %v6144 = vunpack.c.l.b16 %v1546
    %v6145 = vunpack.c.h.b16 %v1546
    %v6146 = vunpack.c.l.b16 %v1547
    %v6147 = vunpack.c.h.b16 %v1547
    %v6148 = vunpack.c.l.b16 %v1548
    %v6149 = vunpack.c.h.b16 %v1548
    %v6150 = vunpack.c.l.b16 %v1549
    %v6151 = vunpack.c.h.b16 %v1549
    %v6152 = vunpack.c.l.b16 %v1550
    %v6153 = vunpack.c.h.b16 %v1550
    %v6154 = vunpack.c.l.b16 %v1551
    %v6155 = vunpack.c.h.b16 %v1551
    %v6156 = vunpack.c.l.b16 %v1552
    %v6157 = vunpack.c.h.b16 %v1552
    %v6158 = vunpack.c.l.b16 %v1553
    %v6159 = vunpack.c.h.b16 %v1553
    %v6160 = vunpack.c.l.b16 %v1554
    %v6161 = vunpack.c.h.b16 %v1554
    %v6162 = vunpack.c.l.b16 %v1555
    %v6163 = vunpack.c.h.b16 %v1555
    %v6164 = vunpack.c.l.b16 %v1556
    %v6165 = vunpack.c.h.b16 %v1556
    %v6166 = vunpack.c.l.b16 %v1557
    %v6167 = vunpack.c.h.b16 %v1557
    %v6168 = vunpack.c.l.b16 %v1558
    %v6169 = vunpack.c.h.b16 %v1558
    %v6170 = vunpack.c.l.b16 %v1559
    %v6171 = vunpack.c.h.b16 %v1559
    %v6172 = vunpack.c.l.b16 %v1560
    %v6173 = vunpack.c.h.b16 %v1560
    %v6174 = vunpack.c.l.b16 %v1561
    %v6175 = vunpack.c.h.b16 %v1561
    %v6176 = vunpack.c.l.b16 %v1562
    %v6177 = vunpack.c.h.b16 %v1562
    %v6178 = vunpack.c.l.b16 %v1563
    %v6179 = vunpack.c.h.b16 %v1563
    %v6180 = vunpack.c.l.b16 %v1564
    %v6181 = vunpack.c.h.b16 %v1564
    %v6182 = vunpack.c.l.b16 %v1565
    %v6183 = vunpack.c.h.b16 %v1565
    %v6184 = vunpack.c.l.b16 %v1566
    %v6185 = vunpack.c.h.b16 %v1566
    %v6186 = vunpack.c.l.b16 %v1567
    %v6187 = vunpack.c.h.b16 %v1567
    %v6188 = vunpack.c.l.b16 %v1568
    %v6189 = vunpack.c.h.b16 %v1568
    %v6190 = vunpack.c.l.b16 %v1569
    %v6191 = vunpack.c.h.b16 %v1569
    %v6192 = vunpack.c.l.b16 %v1570
    %v6193 = vunpack.c.h.b16 %v1570
    %v6194 = vunpack.c.l.b16 %v1571
    %v6195 = vunpack.c.h.b16 %v1571
    %v6196 = vunpack.c.l.b16 %v1572
    %v6197 = vunpack.c.h.b16 %v1572
    %v6198 = vunpack.c.l.b16 %v1573
    %v6199 = vunpack.c.h.b16 %v1573
    %v6200 = vunpack.c.l.b16 %v1574
    %v6201 = vunpack.c.h.b16 %v1574
    %v6202 = vunpack.c.l.b16 %v1575
    %v6203 = vunpack.c.h.b16 %v1575
    %v6204 = vunpack.c.l.b16 %v1576
    %v6205 = vunpack.c.h.b16 %v1576
    %v6206 = vunpack.c.l.b16 %v1577
    %v6207 = vunpack.c.h.b16 %v1577
    %v6208 = vunpack.c.l.b16 %v1578
    %v6209 = vunpack.c.h.b16 %v1578
    %v6210 = vunpack.c.l.b16 %v1579
    %v6211 = vunpack.c.h.b16 %v1579
    %v6212 = vunpack.c.l.b16 %v1580
    %v6213 = vunpack.c.h.b16 %v1580
    %v6214 = vunpack.c.l.b16 %v1581
    %v6215 = vunpack.c.h.b16 %v1581
    %v6216 = vunpack.c.l.b16 %v1582
    %v6217 = vunpack.c.h.b16 %v1582
    %v6218 = vunpack.c.l.b16 %v1583
    %v6219 = vunpack.c.h.b16 %v1583
    %v6220 = vunpack.c.l.b16 %v1584
    %v6221 = vunpack.c.h.b16 %v1584
    %v6222 = vunpack.c.l.b16 %v1585
    %v6223 = vunpack.c.h.b16 %v1585
    %v6224 = vunpack.c.l.b16 %v1586
    %v6225 = vunpack.c.h.b16 %v1586
    %v6226 = vunpack.c.l.b16 %v1587
    %v6227 = vunpack.c.h.b16 %v1587
    %v6228 = vunpack.c.l.b16 %v1588
    %v6229 = vunpack.c.h.b16 %v1588
    %v6230 = vunpack.c.l.b16 %v1589
    %v6231 = vunpack.c.h.b16 %v1589
    %v6232 = vunpack.c.l.b16 %v1590
    %v6233 = vunpack.c.h.b16 %v1590
    %v6234 = vunpack.c.l.b16 %v1591
    %v6235 = vunpack.c.h.b16 %v1591
    %v6236 = vunpack.c.l.b16 %v1592
    %v6237 = vunpack.c.h.b16 %v1592
    %v6238 = vunpack.c.l.b16 %v1593
    %v6239 = vunpack.c.h.b16 %v1593
    %v6240 = vunpack.c.l.b16 %v1594
    %v6241 = vunpack.c.h.b16 %v1594
    %v6242 = vunpack.c.l.b16 %v1595
    %v6243 = vunpack.c.h.b16 %v1595
    %v6244 = vunpack.c.l.b16 %v1596
    %v6245 = vunpack.c.h.b16 %v1596
    %v6246 = vunpack.c.l.b16 %v1597
    %v6247 = vunpack.c.h.b16 %v1597
    %v6248 = vunpack.c.l.b16 %v1598
    %v6249 = vunpack.c.h.b16 %v1598
    %v6250 = vunpack.c.l.b16 %v1599
    %v6251 = vunpack.c.h.b16 %v1599
    %v6252 = vunpack.c.l.b16 %v1600
    %v6253 = vunpack.c.h.b16 %v1600
    %v6254 = vunpack.c.l.b16 %v1601
    %v6255 = vunpack.c.h.b16 %v1601
    %v6256 = vunpack.c.l.b16 %v1602
    %v6257 = vunpack.c.h.b16 %v1602
    %v6258 = vunpack.c.l.b16 %v1603
    %v6259 = vunpack.c.h.b16 %v1603
    %v6260 = vunpack.c.l.b16 %v1604
    %v6261 = vunpack.c.h.b16 %v1604
    %v6262 = vunpack.c.l.b16 %v1605
    %v6263 = vunpack.c.h.b16 %v1605
    %v6264 = vunpack.c.l.b16 %v1606
    %v6265 = vunpack.c.h.b16 %v1606
    %v6266 = vunpack.c.l.b16 %v1607
    %v6267 = vunpack.c.h.b16 %v1607
    %v6268 = vunpack.c.l.b16 %v1608
    %v6269 = vunpack.c.h.b16 %v1608
    %v6270 = vunpack.c.l.b16 %v1609
    %v6271 = vunpack.c.h.b16 %v1609
    %v6272 = vunpack.c.l.b16 %v1610
    %v6273 = vunpack.c.h.b16 %v1610
    %v6274 = vunpack.c.l.b16 %v1611
    %v6275 = vunpack.c.h.b16 %v1611
    %v6276 = vunpack.c.l.b16 %v1612
    %v6277 = vunpack.c.h.b16 %v1612
    %v6278 = vunpack.c.l.b16 %v1613
    %v6279 = vunpack.c.h.b16 %v1613
    %v6280 = vunpack.c.l.b16 %v1614
    %v6281 = vunpack.c.h.b16 %v1614
    %v6282 = vunpack.c.l.b16 %v1615
    %v6283 = vunpack.c.h.b16 %v1615
    %v6284 = vunpack.c.l.b16 %v1616
    %v6285 = vunpack.c.h.b16 %v1616
    %v6286 = vunpack.c.l.b16 %v1617
    %v6287 = vunpack.c.h.b16 %v1617
    %v6288 = vunpack.c.l.b16 %v1618
    %v6289 = vunpack.c.h.b16 %v1618
    %v6290 = vunpack.c.l.b16 %v1619
    %v6291 = vunpack.c.h.b16 %v1619
    %v6292 = vunpack.c.l.b16 %v1620
    %v6293 = vunpack.c.h.b16 %v1620
    %v6294 = vunpack.c.l.b16 %v1621
    %v6295 = vunpack.c.h.b16 %v1621
    %v6296 = vunpack.c.l.b16 %v1622
    %v6297 = vunpack.c.h.b16 %v1622
    %v6298 = vunpack.c.l.b16 %v1623
    %v6299 = vunpack.c.h.b16 %v1623
    %v6300 = vunpack.c.l.b16 %v1624
    %v6301 = vunpack.c.h.b16 %v1624
    %v6302 = vunpack.c.l.b16 %v1625
    %v6303 = vunpack.c.h.b16 %v1625
    %v6304 = vunpack.c.l.b16 %v1626
    %v6305 = vunpack.c.h.b16 %v1626
    %v6306 = vunpack.c.l.b16 %v1627
    %v6307 = vunpack.c.h.b16 %v1627
    %v6308 = vunpack.c.l.b16 %v1628
    %v6309 = vunpack.c.h.b16 %v1628
    %v6310 = vunpack.c.l.b16 %v1629
    %v6311 = vunpack.c.h.b16 %v1629
    %v6312 = vunpack.c.l.b16 %v1630
    %v6313 = vunpack.c.h.b16 %v1630
    %v6314 = vunpack.c.l.b16 %v1631
    %v6315 = vunpack.c.h.b16 %v1631
    %v6316 = vunpack.c.l.b16 %v1632
    %v6317 = vunpack.c.h.b16 %v1632
    %v6318 = vunpack.c.l.b16 %v1633
    %v6319 = vunpack.c.h.b16 %v1633
    %v6320 = vunpack.c.l.b16 %v1634
    %v6321 = vunpack.c.h.b16 %v1634
    %v6322 = vunpack.c.l.b16 %v1635
    %v6323 = vunpack.c.h.b16 %v1635
    %v6324 = vunpack.c.l.b16 %v1636
    %v6325 = vunpack.c.h.b16 %v1636
    %v6326 = vunpack.c.l.b16 %v1637
    %v6327 = vunpack.c.h.b16 %v1637
    %v6328 = vunpack.c.l.b16 %v1638
    %v6329 = vunpack.c.h.b16 %v1638
    %v6330 = vunpack.c.l.b16 %v1639
    %v6331 = vunpack.c.h.b16 %v1639
    %v6332 = vunpack.c.l.b16 %v1640
    %v6333 = vunpack.c.h.b16 %v1640
    %v6334 = vunpack.c.l.b16 %v1641
    %v6335 = vunpack.c.h.b16 %v1641
    %v6336 = vunpack.c.l.b16 %v1642
    %v6337 = vunpack.c.h.b16 %v1642
    %v6338 = vunpack.c.l.b16 %v1643
    %v6339 = vunpack.c.h.b16 %v1643
    %v6340 = vunpack.c.l.b16 %v1644
    %v6341 = vunpack.c.h.b16 %v1644
    %v6342 = vunpack.c.l.b16 %v1645
    %v6343 = vunpack.c.h.b16 %v1645
    %v6344 = vunpack.c.l.b16 %v1646
    %v6345 = vunpack.c.h.b16 %v1646
    %v6346 = vunpack.c.l.b16 %v1647
    %v6347 = vunpack.c.h.b16 %v1647
    %v6348 = vunpack.c.l.b16 %v1648
    %v6349 = vunpack.c.h.b16 %v1648
    %v6350 = vunpack.c.l.b16 %v1649
    %v6351 = vunpack.c.h.b16 %v1649
    %v6352 = vunpack.c.l.b16 %v1650
    %v6353 = vunpack.c.h.b16 %v1650
    %v6354 = vunpack.c.l.b16 %v1651
    %v6355 = vunpack.c.h.b16 %v1651
    %v6356 = vunpack.c.l.b16 %v1652
    %v6357 = vunpack.c.h.b16 %v1652
    %v6358 = vunpack.c.l.b16 %v1653
    %v6359 = vunpack.c.h.b16 %v1653
    %v6360 = vunpack.c.l.b16 %v1654
    %v6361 = vunpack.c.h.b16 %v1654
    %v6362 = vunpack.c.l.b16 %v1655
    %v6363 = vunpack.c.h.b16 %v1655
    %v6364 = vunpack.c.l.b16 %v1656
    %v6365 = vunpack.c.h.b16 %v1656
    %v6366 = vunpack.c.l.b16 %v1657
    %v6367 = vunpack.c.h.b16 %v1657
    %v6368 = vunpack.c.l.b16 %v1658
    %v6369 = vunpack.c.h.b16 %v1658
    %v6370 = vunpack.c.l.b16 %v1659
    %v6371 = vunpack.c.h.b16 %v1659
    %v6372 = vunpack.c.l.b16 %v1660
    %v6373 = vunpack.c.h.b16 %v1660
    %v6374 = vunpack.c.l.b16 %v1661
    %v6375 = vunpack.c.h.b16 %v1661
    %v6376 = vunpack.c.l.b16 %v1662
    %v6377 = vunpack.c.h.b16 %v1662
    %v6378 = vunpack.c.l.b16 %v1663
    %v6379 = vunpack.c.h.b16 %v1663
    %v6380 = vunpack.c.l.b16 %v1664
    %v6381 = vunpack.c.h.b16 %v1664
    %v6382 = vunpack.c.l.b16 %v1665
    %v6383 = vunpack.c.h.b16 %v1665
    %v6384 = vunpack.c.l.b16 %v1666
    %v6385 = vunpack.c.h.b16 %v1666
    %v6386 = vunpack.c.l.b16 %v1667
    %v6387 = vunpack.c.h.b16 %v1667
    %v6388 = vunpack.c.l.b16 %v1668
    %v6389 = vunpack.c.h.b16 %v1668
    %v6390 = vunpack.c.l.b16 %v1669
    %v6391 = vunpack.c.h.b16 %v1669
    %v6392 = vunpack.c.l.b16 %v1670
    %v6393 = vunpack.c.h.b16 %v1670
    %v6394 = vunpack.c.l.b16 %v1671
    %v6395 = vunpack.c.h.b16 %v1671
    %v6396 = vunpack.c.l.b16 %v1672
    %v6397 = vunpack.c.h.b16 %v1672
    %v6398 = vunpack.c.l.b16 %v1673
    %v6399 = vunpack.c.h.b16 %v1673
    %v6400 = vunpack.c.l.b16 %v1674
    %v6401 = vunpack.c.h.b16 %v1674
    %v6402 = vunpack.c.l.b16 %v1675
    %v6403 = vunpack.c.h.b16 %v1675
    %v6404 = vunpack.c.l.b16 %v1676
    %v6405 = vunpack.c.h.b16 %v1676
    %v6406 = vunpack.c.l.b16 %v1677
    %v6407 = vunpack.c.h.b16 %v1677
    %v6408 = vunpack.c.l.b16 %v1678
    %v6409 = vunpack.c.h.b16 %v1678
    %v6410 = vunpack.c.l.b16 %v1679
    %v6411 = vunpack.c.h.b16 %v1679
    %v6412 = vunpack.c.l.b16 %v1680
    %v6413 = vunpack.c.h.b16 %v1680
    %v6414 = vunpack.c.l.b16 %v1681
    %v6415 = vunpack.c.h.b16 %v1681
    %v6416 = vpack.c.b16 %v3352, %v3344
    %v6417 = vpack.c.b16 %v3353, %v3345
    %v6418 = vpack.c.b16 %v3354, %v3346
    %v6419 = vpack.c.b16 %v3355, %v3347
    %v6420 = vpack.c.b16 %v3356, %v3348
    %v6421 = vpack.c.b16 %v3357, %v3349
    %v6422 = vpack.c.b16 %v3358, %v3350
    %v6423 = vpack.c.b16 %v3359, %v3351
    %v6424 = vpack.c.b16 %v3368, %v3360
    %v6425 = vpack.c.b16 %v3369, %v3361
    %v6426 = vpack.c.b16 %v3370, %v3362
    %v6427 = vpack.c.b16 %v3371, %v3363
    %v6428 = vpack.c.b16 %v3372, %v3364
    %v6429 = vpack.c.b16 %v3373, %v3365
    %v6430 = vpack.c.b16 %v3374, %v3366
    %v6431 = vpack.c.b16 %v3375, %v3367
    %v6432 = vpack.c.b16 %v3384, %v3376
    %v6433 = vpack.c.b16 %v3385, %v3377
    %v6434 = vpack.c.b16 %v3386, %v3378
    %v6435 = vpack.c.b16 %v3387, %v3379
    %v6436 = vpack.c.b16 %v3388, %v3380
    %v6437 = vpack.c.b16 %v3389, %v3381
    %v6438 = vpack.c.b16 %v3390, %v3382
    %v6439 = vpack.c.b16 %v3391, %v3383
    %v6440 = vpack.c.b16 %v3400, %v3392
    %v6441 = vpack.c.b16 %v3401, %v3393
    %v6442 = vpack.c.b16 %v3402, %v3394
    %v6443 = vpack.c.b16 %v3403, %v3395
    %v6444 = vpack.c.b16 %v3404, %v3396
    %v6445 = vpack.c.b16 %v3405, %v3397
    %v6446 = vpack.c.b16 %v3406, %v3398
    %v6447 = vpack.c.b16 %v3407, %v3399
    %v6448 = vpack.c.b16 %v3416, %v3408
    %v6449 = vpack.c.b16 %v3417, %v3409
    %v6450 = vpack.c.b16 %v3418, %v3410
    %v6451 = vpack.c.b16 %v3419, %v3411
    %v6452 = vpack.c.b16 %v3420, %v3412
    %v6453 = vpack.c.b16 %v3421, %v3413
    %v6454 = vpack.c.b16 %v3422, %v3414
    %v6455 = vpack.c.b16 %v3423, %v3415
    %v6456 = vpack.c.b16 %v3432, %v3424
    %v6457 = vpack.c.b16 %v3433, %v3425
    %v6458 = vpack.c.b16 %v3434, %v3426
    %v6459 = vpack.c.b16 %v3435, %v3427
    %v6460 = vpack.c.b16 %v3436, %v3428
    %v6461 = vpack.c.b16 %v3437, %v3429
    %v6462 = vpack.c.b16 %v3438, %v3430
    %v6463 = vpack.c.b16 %v3439, %v3431
    %v6464 = vpack.c.b16 %v3448, %v3440
    %v6465 = vpack.c.b16 %v3449, %v3441
    %v6466 = vpack.c.b16 %v3450, %v3442
    %v6467 = vpack.c.b16 %v3451, %v3443
    %v6468 = vpack.c.b16 %v3452, %v3444
    %v6469 = vpack.c.b16 %v3453, %v3445
    %v6470 = vpack.c.b16 %v3454, %v3446
    %v6471 = vpack.c.b16 %v3455, %v3447
    %v6472 = vpack.c.b16 %v3464, %v3456
    %v6473 = vpack.c.b16 %v3465, %v3457
    %v6474 = vpack.c.b16 %v3466, %v3458
    %v6475 = vpack.c.b16 %v3467, %v3459
    %v6476 = vpack.c.b16 %v3468, %v3460
    %v6477 = vpack.c.b16 %v3469, %v3461
    %v6478 = vpack.c.b16 %v3470, %v3462
    %v6479 = vpack.c.b16 %v3471, %v3463
    %v6480 = vpack.c.b16 %v3480, %v3472
    %v6481 = vpack.c.b16 %v3481, %v3473
    %v6482 = vpack.c.b16 %v3482, %v3474
    %v6483 = vpack.c.b16 %v3483, %v3475
    %v6484 = vpack.c.b16 %v3484, %v3476
    %v6485 = vpack.c.b16 %v3485, %v3477
    %v6486 = vpack.c.b16 %v3486, %v3478
    %v6487 = vpack.c.b16 %v3487, %v3479
    %v6488 = vpack.c.b16 %v3496, %v3488
    %v6489 = vpack.c.b16 %v3497, %v3489
    %v6490 = vpack.c.b16 %v3498, %v3490
    %v6491 = vpack.c.b16 %v3499, %v3491
    %v6492 = vpack.c.b16 %v3500, %v3492
    %v6493 = vpack.c.b16 %v3501, %v3493
    %v6494 = vpack.c.b16 %v3502, %v3494
    %v6495 = vpack.c.b16 %v3503, %v3495
    %v6496 = vpack.c.b16 %v3512, %v3504
    %v6497 = vpack.c.b16 %v3513, %v3505
    %v6498 = vpack.c.b16 %v3514, %v3506
    %v6499 = vpack.c.b16 %v3515, %v3507
    %v6500 = vpack.c.b16 %v3516, %v3508
    %v6501 = vpack.c.b16 %v3517, %v3509
    %v6502 = vpack.c.b16 %v3518, %v3510
    %v6503 = vpack.c.b16 %v3519, %v3511
    %v6504 = vpack.c.b16 %v3528, %v3520
    %v6505 = vpack.c.b16 %v3529, %v3521
    %v6506 = vpack.c.b16 %v3530, %v3522
    %v6507 = vpack.c.b16 %v3531, %v3523
    %v6508 = vpack.c.b16 %v3532, %v3524
    %v6509 = vpack.c.b16 %v3533, %v3525
    %v6510 = vpack.c.b16 %v3534, %v3526
    %v6511 = vpack.c.b16 %v3535, %v3527
    %v6512 = vpack.c.b16 %v3544, %v3536
    %v6513 = vpack.c.b16 %v3545, %v3537
    %v6514 = vpack.c.b16 %v3546, %v3538
    %v6515 = vpack.c.b16 %v3547, %v3539
    %v6516 = vpack.c.b16 %v3548, %v3540
    %v6517 = vpack.c.b16 %v3549, %v3541
    %v6518 = vpack.c.b16 %v3550, %v3542
    %v6519 = vpack.c.b16 %v3551, %v3543
    %v6520 = vpack.c.b16 %v3560, %v3552
    %v6521 = vpack.c.b16 %v3561, %v3553
    %v6522 = vpack.c.b16 %v3562, %v3554
    %v6523 = vpack.c.b16 %v3563, %v3555
    %v6524 = vpack.c.b16 %v3564, %v3556
    %v6525 = vpack.c.b16 %v3565, %v3557
    %v6526 = vpack.c.b16 %v3566, %v3558
    %v6527 = vpack.c.b16 %v3567, %v3559
    %v6528 = vpack.c.b16 %v3576, %v3568
    %v6529 = vpack.c.b16 %v3577, %v3569
    %v6530 = vpack.c.b16 %v3578, %v3570
    %v6531 = vpack.c.b16 %v3579, %v3571
    %v6532 = vpack.c.b16 %v3580, %v3572
    %v6533 = vpack.c.b16 %v3581, %v3573
    %v6534 = vpack.c.b16 %v3582, %v3574
    %v6535 = vpack.c.b16 %v3583, %v3575
    %v6536 = vpack.c.b16 %v3592, %v3584
    %v6537 = vpack.c.b16 %v3593, %v3585
    %v6538 = vpack.c.b16 %v3594, %v3586
    %v6539 = vpack.c.b16 %v3595, %v3587
    %v6540 = vpack.c.b16 %v3596, %v3588
    %v6541 = vpack.c.b16 %v3597, %v3589
    %v6542 = vpack.c.b16 %v3598, %v3590
    %v6543 = vpack.c.b16 %v3599, %v3591
    %v6544 = vpack.c.b16 %v3608, %v3600
    %v6545 = vpack.c.b16 %v3609, %v3601
    %v6546 = vpack.c.b16 %v3610, %v3602
    %v6547 = vpack.c.b16 %v3611, %v3603
    %v6548 = vpack.c.b16 %v3612, %v3604
    %v6549 = vpack.c.b16 %v3613, %v3605
    %v6550 = vpack.c.b16 %v3614, %v3606
    %v6551 = vpack.c.b16 %v3615, %v3607
    %v6552 = vpack.c.b16 %v3624, %v3616
    %v6553 = vpack.c.b16 %v3625, %v3617
    %v6554 = vpack.c.b16 %v3626, %v3618
    %v6555 = vpack.c.b16 %v3627, %v3619
    %v6556 = vpack.c.b16 %v3628, %v3620
    %v6557 = vpack.c.b16 %v3629, %v3621
    %v6558 = vpack.c.b16 %v3630, %v3622
    %v6559 = vpack.c.b16 %v3631, %v3623
    %v6560 = vpack.c.b16 %v3640, %v3632
    %v6561 = vpack.c.b16 %v3641, %v3633
    %v6562 = vpack.c.b16 %v3642, %v3634
    %v6563 = vpack.c.b16 %v3643, %v3635
    %v6564 = vpack.c.b16 %v3644, %v3636
    %v6565 = vpack.c.b16 %v3645, %v3637
    %v6566 = vpack.c.b16 %v3646, %v3638
    %v6567 = vpack.c.b16 %v3647, %v3639
    %v6568 = vpack.c.b16 %v3656, %v3648
    %v6569 = vpack.c.b16 %v3657, %v3649
    %v6570 = vpack.c.b16 %v3658, %v3650
    %v6571 = vpack.c.b16 %v3659, %v3651
    %v6572 = vpack.c.b16 %v3660, %v3652
    %v6573 = vpack.c.b16 %v3661, %v3653
    %v6574 = vpack.c.b16 %v3662, %v3654
    %v6575 = vpack.c.b16 %v3663, %v3655
    %v6576 = vpack.c.b16 %v3672, %v3664
    %v6577 = vpack.c.b16 %v3673, %v3665
    %v6578 = vpack.c.b16 %v3674, %v3666
    %v6579 = vpack.c.b16 %v3675, %v3667
    %v6580 = vpack.c.b16 %v3676, %v3668
    %v6581 = vpack.c.b16 %v3677, %v3669
    %v6582 = vpack.c.b16 %v3678, %v3670
    %v6583 = vpack.c.b16 %v3679, %v3671
    %v6584 = vpack.c.b16 %v3688, %v3680
    %v6585 = vpack.c.b16 %v3689, %v3681
    %v6586 = vpack.c.b16 %v3690, %v3682
    %v6587 = vpack.c.b16 %v3691, %v3683
    %v6588 = vpack.c.b16 %v3692, %v3684
    %v6589 = vpack.c.b16 %v3693, %v3685
    %v6590 = vpack.c.b16 %v3694, %v3686
    %v6591 = vpack.c.b16 %v3695, %v3687
    %v6592 = vpack.c.b16 %v3704, %v3696
    %v6593 = vpack.c.b16 %v3705, %v3697
    %v6594 = vpack.c.b16 %v3706, %v3698
    %v6595 = vpack.c.b16 %v3707, %v3699
    %v6596 = vpack.c.b16 %v3708, %v3700
    %v6597 = vpack.c.b16 %v3709, %v3701
    %v6598 = vpack.c.b16 %v3710, %v3702
    %v6599 = vpack.c.b16 %v3711, %v3703
    %v6600 = vpack.c.b16 %v3720, %v3712
    %v6601 = vpack.c.b16 %v3721, %v3713
    %v6602 = vpack.c.b16 %v3722, %v3714
    %v6603 = vpack.c.b16 %v3723, %v3715
    %v6604 = vpack.c.b16 %v3724, %v3716
    %v6605 = vpack.c.b16 %v3725, %v3717
    %v6606 = vpack.c.b16 %v3726, %v3718
    %v6607 = vpack.c.b16 %v3727, %v3719
    %v6608 = vpack.c.b16 %v3736, %v3728
    %v6609 = vpack.c.b16 %v3737, %v3729
    %v6610 = vpack.c.b16 %v3738, %v3730
    %v6611 = vpack.c.b16 %v3739, %v3731
    %v6612 = vpack.c.b16 %v3740, %v3732
    %v6613 = vpack.c.b16 %v3741, %v3733
    %v6614 = vpack.c.b16 %v3742, %v3734
    %v6615 = vpack.c.b16 %v3743, %v3735
    %v6616 = vpack.c.b16 %v3752, %v3744
    %v6617 = vpack.c.b16 %v3753, %v3745
    %v6618 = vpack.c.b16 %v3754, %v3746
    %v6619 = vpack.c.b16 %v3755, %v3747
    %v6620 = vpack.c.b16 %v3756, %v3748
    %v6621 = vpack.c.b16 %v3757, %v3749
    %v6622 = vpack.c.b16 %v3758, %v3750
    %v6623 = vpack.c.b16 %v3759, %v3751
    %v6624 = vpack.c.b16 %v3768, %v3760
    %v6625 = vpack.c.b16 %v3769, %v3761
    %v6626 = vpack.c.b16 %v3770, %v3762
    %v6627 = vpack.c.b16 %v3771, %v3763
    %v6628 = vpack.c.b16 %v3772, %v3764
    %v6629 = vpack.c.b16 %v3773, %v3765
    %v6630 = vpack.c.b16 %v3774, %v3766
    %v6631 = vpack.c.b16 %v3775, %v3767
    %v6632 = vpack.c.b16 %v3784, %v3776
    %v6633 = vpack.c.b16 %v3785, %v3777
    %v6634 = vpack.c.b16 %v3786, %v3778
    %v6635 = vpack.c.b16 %v3787, %v3779
    %v6636 = vpack.c.b16 %v3788, %v3780
    %v6637 = vpack.c.b16 %v3789, %v3781
    %v6638 = vpack.c.b16 %v3790, %v3782
    %v6639 = vpack.c.b16 %v3791, %v3783
    %v6640 = vpack.c.b16 %v3800, %v3792
    %v6641 = vpack.c.b16 %v3801, %v3793
    %v6642 = vpack.c.b16 %v3802, %v3794
    %v6643 = vpack.c.b16 %v3803, %v3795
    %v6644 = vpack.c.b16 %v3804, %v3796
    %v6645 = vpack.c.b16 %v3805, %v3797
    %v6646 = vpack.c.b16 %v3806, %v3798
    %v6647 = vpack.c.b16 %v3807, %v3799
    %v6648 = vpack.c.b16 %v3816, %v3808
    %v6649 = vpack.c.b16 %v3817, %v3809
    %v6650 = vpack.c.b16 %v3818, %v3810
    %v6651 = vpack.c.b16 %v3819, %v3811
    %v6652 = vpack.c.b16 %v3820, %v3812
    %v6653 = vpack.c.b16 %v3821, %v3813
    %v6654 = vpack.c.b16 %v3822, %v3814
    %v6655 = vpack.c.b16 %v3823, %v3815
    %v6656 = vpack.c.b16 %v3832, %v3824
    %v6657 = vpack.c.b16 %v3833, %v3825
    %v6658 = vpack.c.b16 %v3834, %v3826
    %v6659 = vpack.c.b16 %v3835, %v3827
    %v6660 = vpack.c.b16 %v3836, %v3828
    %v6661 = vpack.c.b16 %v3837, %v3829
    %v6662 = vpack.c.b16 %v3838, %v3830
    %v6663 = vpack.c.b16 %v3839, %v3831
    %v6664 = vpack.c.b16 %v3848, %v3840
    %v6665 = vpack.c.b16 %v3849, %v3841
    %v6666 = vpack.c.b16 %v3850, %v3842
    %v6667 = vpack.c.b16 %v3851, %v3843
    %v6668 = vpack.c.b16 %v3852, %v3844
    %v6669 = vpack.c.b16 %v3853, %v3845
    %v6670 = vpack.c.b16 %v3854, %v3846
    %v6671 = vpack.c.b16 %v3855, %v3847
    %v6672 = vpack.c.b16 %v3864, %v3856
    %v6673 = vpack.c.b16 %v3865, %v3857
    %v6674 = vpack.c.b16 %v3866, %v3858
    %v6675 = vpack.c.b16 %v3867, %v3859
    %v6676 = vpack.c.b16 %v3868, %v3860
    %v6677 = vpack.c.b16 %v3869, %v3861
    %v6678 = vpack.c.b16 %v3870, %v3862
    %v6679 = vpack.c.b16 %v3871, %v3863
    %v6680 = vpack.c.b16 %v3880, %v3872
    %v6681 = vpack.c.b16 %v3881, %v3873
    %v6682 = vpack.c.b16 %v3882, %v3874
    %v6683 = vpack.c.b16 %v3883, %v3875
    %v6684 = vpack.c.b16 %v3884, %v3876
    %v6685 = vpack.c.b16 %v3885, %v3877
    %v6686 = vpack.c.b16 %v3886, %v3878
    %v6687 = vpack.c.b16 %v3887, %v3879
    %v6688 = vpack.c.b16 %v3896, %v3888
    %v6689 = vpack.c.b16 %v3897, %v3889
    %v6690 = vpack.c.b16 %v3898, %v3890
    %v6691 = vpack.c.b16 %v3899, %v3891
    %v6692 = vpack.c.b16 %v3900, %v3892
    %v6693 = vpack.c.b16 %v3901, %v3893
    %v6694 = vpack.c.b16 %v3902, %v3894
    %v6695 = vpack.c.b16 %v3903, %v3895
    %v6696 = vpack.c.b16 %v3912, %v3904
    %v6697 = vpack.c.b16 %v3913, %v3905
    %v6698 = vpack.c.b16 %v3914, %v3906
    %v6699 = vpack.c.b16 %v3915, %v3907
    %v6700 = vpack.c.b16 %v3916, %v3908
    %v6701 = vpack.c.b16 %v3917, %v3909
    %v6702 = vpack.c.b16 %v3918, %v3910
    %v6703 = vpack.c.b16 %v3919, %v3911
    %v6704 = vpack.c.b16 %v3928, %v3920
    %v6705 = vpack.c.b16 %v3929, %v3921
    %v6706 = vpack.c.b16 %v3930, %v3922
    %v6707 = vpack.c.b16 %v3931, %v3923
    %v6708 = vpack.c.b16 %v3932, %v3924
    %v6709 = vpack.c.b16 %v3933, %v3925
    %v6710 = vpack.c.b16 %v3934, %v3926
    %v6711 = vpack.c.b16 %v3935, %v3927
    %v6712 = vpack.c.b16 %v3944, %v3936
    %v6713 = vpack.c.b16 %v3945, %v3937
    %v6714 = vpack.c.b16 %v3946, %v3938
    %v6715 = vpack.c.b16 %v3947, %v3939
    %v6716 = vpack.c.b16 %v3948, %v3940
    %v6717 = vpack.c.b16 %v3949, %v3941
    %v6718 = vpack.c.b16 %v3950, %v3942
    %v6719 = vpack.c.b16 %v3951, %v3943
    %v6720 = vpack.c.b16 %v3960, %v3952
    %v6721 = vpack.c.b16 %v3961, %v3953
    %v6722 = vpack.c.b16 %v3962, %v3954
    %v6723 = vpack.c.b16 %v3963, %v3955
    %v6724 = vpack.c.b16 %v3964, %v3956
    %v6725 = vpack.c.b16 %v3965, %v3957
    %v6726 = vpack.c.b16 %v3966, %v3958
    %v6727 = vpack.c.b16 %v3967, %v3959
    %v6728 = vpack.c.b16 %v3976, %v3968
    %v6729 = vpack.c.b16 %v3977, %v3969
    %v6730 = vpack.c.b16 %v3978, %v3970
    %v6731 = vpack.c.b16 %v3979, %v3971
    %v6732 = vpack.c.b16 %v3980, %v3972
    %v6733 = vpack.c.b16 %v3981, %v3973
    %v6734 = vpack.c.b16 %v3982, %v3974
    %v6735 = vpack.c.b16 %v3983, %v3975
    %v6736 = vpack.c.b16 %v3992, %v3984
    %v6737 = vpack.c.b16 %v3993, %v3985
    %v6738 = vpack.c.b16 %v3994, %v3986
    %v6739 = vpack.c.b16 %v3995, %v3987
    %v6740 = vpack.c.b16 %v3996, %v3988
    %v6741 = vpack.c.b16 %v3997, %v3989
    %v6742 = vpack.c.b16 %v3998, %v3990
    %v6743 = vpack.c.b16 %v3999, %v3991
    %v6744 = vpack.c.b16 %v4008, %v4000
    %v6745 = vpack.c.b16 %v4009, %v4001
    %v6746 = vpack.c.b16 %v4010, %v4002
    %v6747 = vpack.c.b16 %v4011, %v4003
    %v6748 = vpack.c.b16 %v4012, %v4004
    %v6749 = vpack.c.b16 %v4013, %v4005
    %v6750 = vpack.c.b16 %v4014, %v4006
    %v6751 = vpack.c.b16 %v4015, %v4007
    %v6752 = vpack.c.b16 %v4024, %v4016
    %v6753 = vpack.c.b16 %v4025, %v4017
    %v6754 = vpack.c.b16 %v4026, %v4018
    %v6755 = vpack.c.b16 %v4027, %v4019
    %v6756 = vpack.c.b16 %v4028, %v4020
    %v6757 = vpack.c.b16 %v4029, %v4021
    %v6758 = vpack.c.b16 %v4030, %v4022
    %v6759 = vpack.c.b16 %v4031, %v4023
    %v6760 = vpack.c.b16 %v4040, %v4032
    %v6761 = vpack.c.b16 %v4041, %v4033
    %v6762 = vpack.c.b16 %v4042, %v4034
    %v6763 = vpack.c.b16 %v4043, %v4035
    %v6764 = vpack.c.b16 %v4044, %v4036
    %v6765 = vpack.c.b16 %v4045, %v4037
    %v6766 = vpack.c.b16 %v4046, %v4038
    %v6767 = vpack.c.b16 %v4047, %v4039
    %v6768 = vpack.c.b16 %v4056, %v4048
    %v6769 = vpack.c.b16 %v4057, %v4049
    %v6770 = vpack.c.b16 %v4058, %v4050
    %v6771 = vpack.c.b16 %v4059, %v4051
    %v6772 = vpack.c.b16 %v4060, %v4052
    %v6773 = vpack.c.b16 %v4061, %v4053
    %v6774 = vpack.c.b16 %v4062, %v4054
    %v6775 = vpack.c.b16 %v4063, %v4055
    %v6776 = vpack.c.b16 %v4072, %v4064
    %v6777 = vpack.c.b16 %v4073, %v4065
    %v6778 = vpack.c.b16 %v4074, %v4066
    %v6779 = vpack.c.b16 %v4075, %v4067
    %v6780 = vpack.c.b16 %v4076, %v4068
    %v6781 = vpack.c.b16 %v4077, %v4069
    %v6782 = vpack.c.b16 %v4078, %v4070
    %v6783 = vpack.c.b16 %v4079, %v4071
    %v6784 = vpack.c.b16 %v4088, %v4080
    %v6785 = vpack.c.b16 %v4089, %v4081
    %v6786 = vpack.c.b16 %v4090, %v4082
    %v6787 = vpack.c.b16 %v4091, %v4083
    %v6788 = vpack.c.b16 %v4092, %v4084
    %v6789 = vpack.c.b16 %v4093, %v4085
    %v6790 = vpack.c.b16 %v4094, %v4086
    %v6791 = vpack.c.b16 %v4095, %v4087
    %v6792 = vpack.c.b16 %v4104, %v4096
    %v6793 = vpack.c.b16 %v4105, %v4097
    %v6794 = vpack.c.b16 %v4106, %v4098
    %v6795 = vpack.c.b16 %v4107, %v4099
    %v6796 = vpack.c.b16 %v4108, %v4100
    %v6797 = vpack.c.b16 %v4109, %v4101
    %v6798 = vpack.c.b16 %v4110, %v4102
    %v6799 = vpack.c.b16 %v4111, %v4103
    %v6800 = vpack.c.b16 %v4120, %v4112
    %v6801 = vpack.c.b16 %v4121, %v4113
    %v6802 = vpack.c.b16 %v4122, %v4114
    %v6803 = vpack.c.b16 %v4123, %v4115
    %v6804 = vpack.c.b16 %v4124, %v4116
    %v6805 = vpack.c.b16 %v4125, %v4117
    %v6806 = vpack.c.b16 %v4126, %v4118
    %v6807 = vpack.c.b16 %v4127, %v4119
    %v6808 = vpack.c.b16 %v4136, %v4128
    %v6809 = vpack.c.b16 %v4137, %v4129
    %v6810 = vpack.c.b16 %v4138, %v4130
    %v6811 = vpack.c.b16 %v4139, %v4131
    %v6812 = vpack.c.b16 %v4140, %v4132
    %v6813 = vpack.c.b16 %v4141, %v4133
    %v6814 = vpack.c.b16 %v4142, %v4134
    %v6815 = vpack.c.b16 %v4143, %v4135
    %v6816 = vpack.c.b16 %v4152, %v4144
    %v6817 = vpack.c.b16 %v4153, %v4145
    %v6818 = vpack.c.b16 %v4154, %v4146
    %v6819 = vpack.c.b16 %v4155, %v4147
    %v6820 = vpack.c.b16 %v4156, %v4148
    %v6821 = vpack.c.b16 %v4157, %v4149
    %v6822 = vpack.c.b16 %v4158, %v4150
    %v6823 = vpack.c.b16 %v4159, %v4151
    %v6824 = vpack.c.b16 %v4168, %v4160
    %v6825 = vpack.c.b16 %v4169, %v4161
    %v6826 = vpack.c.b16 %v4170, %v4162
    %v6827 = vpack.c.b16 %v4171, %v4163
    %v6828 = vpack.c.b16 %v4172, %v4164
    %v6829 = vpack.c.b16 %v4173, %v4165
    %v6830 = vpack.c.b16 %v4174, %v4166
    %v6831 = vpack.c.b16 %v4175, %v4167
    %v6832 = vpack.c.b16 %v4184, %v4176
    %v6833 = vpack.c.b16 %v4185, %v4177
    %v6834 = vpack.c.b16 %v4186, %v4178
    %v6835 = vpack.c.b16 %v4187, %v4179
    %v6836 = vpack.c.b16 %v4188, %v4180
    %v6837 = vpack.c.b16 %v4189, %v4181
    %v6838 = vpack.c.b16 %v4190, %v4182
    %v6839 = vpack.c.b16 %v4191, %v4183
    %v6840 = vpack.c.b16 %v4200, %v4192
    %v6841 = vpack.c.b16 %v4201, %v4193
    %v6842 = vpack.c.b16 %v4202, %v4194
    %v6843 = vpack.c.b16 %v4203, %v4195
    %v6844 = vpack.c.b16 %v4204, %v4196
    %v6845 = vpack.c.b16 %v4205, %v4197
    %v6846 = vpack.c.b16 %v4206, %v4198
    %v6847 = vpack.c.b16 %v4207, %v4199
    %v6848 = vpack.c.b16 %v4216, %v4208
    %v6849 = vpack.c.b16 %v4217, %v4209
    %v6850 = vpack.c.b16 %v4218, %v4210
    %v6851 = vpack.c.b16 %v4219, %v4211
    %v6852 = vpack.c.b16 %v4220, %v4212
    %v6853 = vpack.c.b16 %v4221, %v4213
    %v6854 = vpack.c.b16 %v4222, %v4214
    %v6855 = vpack.c.b16 %v4223, %v4215
    %v6856 = vpack.c.b16 %v4232, %v4224
    %v6857 = vpack.c.b16 %v4233, %v4225
    %v6858 = vpack.c.b16 %v4234, %v4226
    %v6859 = vpack.c.b16 %v4235, %v4227
    %v6860 = vpack.c.b16 %v4236, %v4228
    %v6861 = vpack.c.b16 %v4237, %v4229
    %v6862 = vpack.c.b16 %v4238, %v4230
    %v6863 = vpack.c.b16 %v4239, %v4231
    %v6864 = vpack.c.b16 %v4248, %v4240
    %v6865 = vpack.c.b16 %v4249, %v4241
    %v6866 = vpack.c.b16 %v4250, %v4242
    %v6867 = vpack.c.b16 %v4251, %v4243
    %v6868 = vpack.c.b16 %v4252, %v4244
    %v6869 = vpack.c.b16 %v4253, %v4245
    %v6870 = vpack.c.b16 %v4254, %v4246
    %v6871 = vpack.c.b16 %v4255, %v4247
    %v6872 = vpack.c.b16 %v4264, %v4256
    %v6873 = vpack.c.b16 %v4265, %v4257
    %v6874 = vpack.c.b16 %v4266, %v4258
    %v6875 = vpack.c.b16 %v4267, %v4259
    %v6876 = vpack.c.b16 %v4268, %v4260
    %v6877 = vpack.c.b16 %v4269, %v4261
    %v6878 = vpack.c.b16 %v4270, %v4262
    %v6879 = vpack.c.b16 %v4271, %v4263
    %v6880 = vpack.c.b16 %v4280, %v4272
    %v6881 = vpack.c.b16 %v4281, %v4273
    %v6882 = vpack.c.b16 %v4282, %v4274
    %v6883 = vpack.c.b16 %v4283, %v4275
    %v6884 = vpack.c.b16 %v4284, %v4276
    %v6885 = vpack.c.b16 %v4285, %v4277
    %v6886 = vpack.c.b16 %v4286, %v4278
    %v6887 = vpack.c.b16 %v4287, %v4279
    %v6888 = vpack.c.b16 %v4296, %v4288
    %v6889 = vpack.c.b16 %v4297, %v4289
    %v6890 = vpack.c.b16 %v4298, %v4290
    %v6891 = vpack.c.b16 %v4299, %v4291
    %v6892 = vpack.c.b16 %v4300, %v4292
    %v6893 = vpack.c.b16 %v4301, %v4293
    %v6894 = vpack.c.b16 %v4302, %v4294
    %v6895 = vpack.c.b16 %v4303, %v4295
    %v6896 = vpack.c.b16 %v4312, %v4304
    %v6897 = vpack.c.b16 %v4313, %v4305
    %v6898 = vpack.c.b16 %v4314, %v4306
    %v6899 = vpack.c.b16 %v4315, %v4307
    %v6900 = vpack.c.b16 %v4316, %v4308
    %v6901 = vpack.c.b16 %v4317, %v4309
    %v6902 = vpack.c.b16 %v4318, %v4310
    %v6903 = vpack.c.b16 %v4319, %v4311
    %v6904 = vpack.c.b16 %v4328, %v4320
    %v6905 = vpack.c.b16 %v4329, %v4321
    %v6906 = vpack.c.b16 %v4330, %v4322
    %v6907 = vpack.c.b16 %v4331, %v4323
    %v6908 = vpack.c.b16 %v4332, %v4324
    %v6909 = vpack.c.b16 %v4333, %v4325
    %v6910 = vpack.c.b16 %v4334, %v4326
    %v6911 = vpack.c.b16 %v4335, %v4327
    %v6912 = vpack.c.b16 %v4344, %v4336
    %v6913 = vpack.c.b16 %v4345, %v4337
    %v6914 = vpack.c.b16 %v4346, %v4338
    %v6915 = vpack.c.b16 %v4347, %v4339
    %v6916 = vpack.c.b16 %v4348, %v4340
    %v6917 = vpack.c.b16 %v4349, %v4341
    %v6918 = vpack.c.b16 %v4350, %v4342
    %v6919 = vpack.c.b16 %v4351, %v4343
    %v6920 = vpack.c.b16 %v4360, %v4352
    %v6921 = vpack.c.b16 %v4361, %v4353
    %v6922 = vpack.c.b16 %v4362, %v4354
    %v6923 = vpack.c.b16 %v4363, %v4355
    %v6924 = vpack.c.b16 %v4364, %v4356
    %v6925 = vpack.c.b16 %v4365, %v4357
    %v6926 = vpack.c.b16 %v4366, %v4358
    %v6927 = vpack.c.b16 %v4367, %v4359
    %v6928 = vpack.c.b16 %v4376, %v4368
    %v6929 = vpack.c.b16 %v4377, %v4369
    %v6930 = vpack.c.b16 %v4378, %v4370
    %v6931 = vpack.c.b16 %v4379, %v4371
    %v6932 = vpack.c.b16 %v4380, %v4372
    %v6933 = vpack.c.b16 %v4381, %v4373
    %v6934 = vpack.c.b16 %v4382, %v4374
    %v6935 = vpack.c.b16 %v4383, %v4375
    %v6936 = vpack.c.b16 %v4392, %v4384
    %v6937 = vpack.c.b16 %v4393, %v4385
    %v6938 = vpack.c.b16 %v4394, %v4386
    %v6939 = vpack.c.b16 %v4395, %v4387
    %v6940 = vpack.c.b16 %v4396, %v4388
    %v6941 = vpack.c.b16 %v4397, %v4389
    %v6942 = vpack.c.b16 %v4398, %v4390
    %v6943 = vpack.c.b16 %v4399, %v4391
    %v6944 = vpack.c.b16 %v4408, %v4400
    %v6945 = vpack.c.b16 %v4409, %v4401
    %v6946 = vpack.c.b16 %v4410, %v4402
    %v6947 = vpack.c.b16 %v4411, %v4403
    %v6948 = vpack.c.b16 %v4412, %v4404
    %v6949 = vpack.c.b16 %v4413, %v4405
    %v6950 = vpack.c.b16 %v4414, %v4406
    %v6951 = vpack.c.b16 %v4415, %v4407
    %v6952 = vpack.c.b16 %v4424, %v4416
    %v6953 = vpack.c.b16 %v4425, %v4417
    %v6954 = vpack.c.b16 %v4426, %v4418
    %v6955 = vpack.c.b16 %v4427, %v4419
    %v6956 = vpack.c.b16 %v4428, %v4420
    %v6957 = vpack.c.b16 %v4429, %v4421
    %v6958 = vpack.c.b16 %v4430, %v4422
    %v6959 = vpack.c.b16 %v4431, %v4423
    %v6960 = vpack.c.b16 %v4440, %v4432
    %v6961 = vpack.c.b16 %v4441, %v4433
    %v6962 = vpack.c.b16 %v4442, %v4434
    %v6963 = vpack.c.b16 %v4443, %v4435
    %v6964 = vpack.c.b16 %v4444, %v4436
    %v6965 = vpack.c.b16 %v4445, %v4437
    %v6966 = vpack.c.b16 %v4446, %v4438
    %v6967 = vpack.c.b16 %v4447, %v4439
    %v6968 = vpack.c.b16 %v4456, %v4448
    %v6969 = vpack.c.b16 %v4457, %v4449
    %v6970 = vpack.c.b16 %v4458, %v4450
    %v6971 = vpack.c.b16 %v4459, %v4451
    %v6972 = vpack.c.b16 %v4460, %v4452
    %v6973 = vpack.c.b16 %v4461, %v4453
    %v6974 = vpack.c.b16 %v4462, %v4454
    %v6975 = vpack.c.b16 %v4463, %v4455
    %v6976 = vpack.c.b16 %v4472, %v4464
    %v6977 = vpack.c.b16 %v4473, %v4465
    %v6978 = vpack.c.b16 %v4474, %v4466
    %v6979 = vpack.c.b16 %v4475, %v4467
    %v6980 = vpack.c.b16 %v4476, %v4468
    %v6981 = vpack.c.b16 %v4477, %v4469
    %v6982 = vpack.c.b16 %v4478, %v4470
    %v6983 = vpack.c.b16 %v4479, %v4471
    %v6984 = vpack.c.b16 %v4488, %v4480
    %v6985 = vpack.c.b16 %v4489, %v4481
    %v6986 = vpack.c.b16 %v4490, %v4482
    %v6987 = vpack.c.b16 %v4491, %v4483
    %v6988 = vpack.c.b16 %v4492, %v4484
    %v6989 = vpack.c.b16 %v4493, %v4485
    %v6990 = vpack.c.b16 %v4494, %v4486
    %v6991 = vpack.c.b16 %v4495, %v4487
    %v6992 = vpack.c.b16 %v4504, %v4496
    %v6993 = vpack.c.b16 %v4505, %v4497
    %v6994 = vpack.c.b16 %v4506, %v4498
    %v6995 = vpack.c.b16 %v4507, %v4499
    %v6996 = vpack.c.b16 %v4508, %v4500
    %v6997 = vpack.c.b16 %v4509, %v4501
    %v6998 = vpack.c.b16 %v4510, %v4502
    %v6999 = vpack.c.b16 %v4511, %v4503
    %v7000 = vpack.c.b16 %v4520, %v4512
    %v7001 = vpack.c.b16 %v4521, %v4513
    %v7002 = vpack.c.b16 %v4522, %v4514
    %v7003 = vpack.c.b16 %v4523, %v4515
    %v7004 = vpack.c.b16 %v4524, %v4516
    %v7005 = vpack.c.b16 %v4525, %v4517
    %v7006 = vpack.c.b16 %v4526, %v4518
    %v7007 = vpack.c.b16 %v4527, %v4519
    %v7008 = vpack.c.b16 %v4536, %v4528
    %v7009 = vpack.c.b16 %v4537, %v4529
    %v7010 = vpack.c.b16 %v4538, %v4530
    %v7011 = vpack.c.b16 %v4539, %v4531
    %v7012 = vpack.c.b16 %v4540, %v4532
    %v7013 = vpack.c.b16 %v4541, %v4533
    %v7014 = vpack.c.b16 %v4542, %v4534
    %v7015 = vpack.c.b16 %v4543, %v4535
    %v7016 = vpack.c.b16 %v4552, %v4544
    %v7017 = vpack.c.b16 %v4553, %v4545
    %v7018 = vpack.c.b16 %v4554, %v4546
    %v7019 = vpack.c.b16 %v4555, %v4547
    %v7020 = vpack.c.b16 %v4556, %v4548
    %v7021 = vpack.c.b16 %v4557, %v4549
    %v7022 = vpack.c.b16 %v4558, %v4550
    %v7023 = vpack.c.b16 %v4559, %v4551
    %v7024 = vpack.c.b16 %v4568, %v4560
    %v7025 = vpack.c.b16 %v4569, %v4561
    %v7026 = vpack.c.b16 %v4570, %v4562
    %v7027 = vpack.c.b16 %v4571, %v4563
    %v7028 = vpack.c.b16 %v4572, %v4564
    %v7029 = vpack.c.b16 %v4573, %v4565
    %v7030 = vpack.c.b16 %v4574, %v4566
    %v7031 = vpack.c.b16 %v4575, %v4567
    %v7032 = vpack.c.b16 %v4584, %v4576
    %v7033 = vpack.c.b16 %v4585, %v4577
    %v7034 = vpack.c.b16 %v4586, %v4578
    %v7035 = vpack.c.b16 %v4587, %v4579
    %v7036 = vpack.c.b16 %v4588, %v4580
    %v7037 = vpack.c.b16 %v4589, %v4581
    %v7038 = vpack.c.b16 %v4590, %v4582
    %v7039 = vpack.c.b16 %v4591, %v4583
    %v7040 = vpack.c.b16 %v4600, %v4592
    %v7041 = vpack.c.b16 %v4601, %v4593
    %v7042 = vpack.c.b16 %v4602, %v4594
    %v7043 = vpack.c.b16 %v4603, %v4595
    %v7044 = vpack.c.b16 %v4604, %v4596
    %v7045 = vpack.c.b16 %v4605, %v4597
    %v7046 = vpack.c.b16 %v4606, %v4598
    %v7047 = vpack.c.b16 %v4607, %v4599
    %v7048 = vpack.c.b16 %v4616, %v4608
    %v7049 = vpack.c.b16 %v4617, %v4609
    %v7050 = vpack.c.b16 %v4618, %v4610
    %v7051 = vpack.c.b16 %v4619, %v4611
    %v7052 = vpack.c.b16 %v4620, %v4612
    %v7053 = vpack.c.b16 %v4621, %v4613
    %v7054 = vpack.c.b16 %v4622, %v4614
    %v7055 = vpack.c.b16 %v4623, %v4615
    %v7056 = vpack.c.b16 %v4632, %v4624
    %v7057 = vpack.c.b16 %v4633, %v4625
    %v7058 = vpack.c.b16 %v4634, %v4626
    %v7059 = vpack.c.b16 %v4635, %v4627
    %v7060 = vpack.c.b16 %v4636, %v4628
    %v7061 = vpack.c.b16 %v4637, %v4629
    %v7062 = vpack.c.b16 %v4638, %v4630
    %v7063 = vpack.c.b16 %v4639, %v4631
    %v7064 = vpack.c.b16 %v4648, %v4640
    %v7065 = vpack.c.b16 %v4649, %v4641
    %v7066 = vpack.c.b16 %v4650, %v4642
    %v7067 = vpack.c.b16 %v4651, %v4643
    %v7068 = vpack.c.b16 %v4652, %v4644
    %v7069 = vpack.c.b16 %v4653, %v4645
    %v7070 = vpack.c.b16 %v4654, %v4646
    %v7071 = vpack.c.b16 %v4655, %v4647
    %v7072 = vpack.c.b16 %v4664, %v4656
    %v7073 = vpack.c.b16 %v4665, %v4657
    %v7074 = vpack.c.b16 %v4666, %v4658
    %v7075 = vpack.c.b16 %v4667, %v4659
    %v7076 = vpack.c.b16 %v4668, %v4660
    %v7077 = vpack.c.b16 %v4669, %v4661
    %v7078 = vpack.c.b16 %v4670, %v4662
    %v7079 = vpack.c.b16 %v4671, %v4663
    %v7080 = vpack.c.b16 %v4680, %v4672
    %v7081 = vpack.c.b16 %v4681, %v4673
    %v7082 = vpack.c.b16 %v4682, %v4674
    %v7083 = vpack.c.b16 %v4683, %v4675
    %v7084 = vpack.c.b16 %v4684, %v4676
    %v7085 = vpack.c.b16 %v4685, %v4677
    %v7086 = vpack.c.b16 %v4686, %v4678
    %v7087 = vpack.c.b16 %v4687, %v4679
    %v7088 = vpack.c.b16 %v4696, %v4688
    %v7089 = vpack.c.b16 %v4697, %v4689
    %v7090 = vpack.c.b16 %v4698, %v4690
    %v7091 = vpack.c.b16 %v4699, %v4691
    %v7092 = vpack.c.b16 %v4700, %v4692
    %v7093 = vpack.c.b16 %v4701, %v4693
    %v7094 = vpack.c.b16 %v4702, %v4694
    %v7095 = vpack.c.b16 %v4703, %v4695
    %v7096 = vpack.c.b16 %v4712, %v4704
    %v7097 = vpack.c.b16 %v4713, %v4705
    %v7098 = vpack.c.b16 %v4714, %v4706
    %v7099 = vpack.c.b16 %v4715, %v4707
    %v7100 = vpack.c.b16 %v4716, %v4708
    %v7101 = vpack.c.b16 %v4717, %v4709
    %v7102 = vpack.c.b16 %v4718, %v4710
    %v7103 = vpack.c.b16 %v4719, %v4711
    %v7104 = vpack.c.b16 %v4728, %v4720
    %v7105 = vpack.c.b16 %v4729, %v4721
    %v7106 = vpack.c.b16 %v4730, %v4722
    %v7107 = vpack.c.b16 %v4731, %v4723
    %v7108 = vpack.c.b16 %v4732, %v4724
    %v7109 = vpack.c.b16 %v4733, %v4725
    %v7110 = vpack.c.b16 %v4734, %v4726
    %v7111 = vpack.c.b16 %v4735, %v4727
    %v7112 = vpack.c.b16 %v4744, %v4736
    %v7113 = vpack.c.b16 %v4745, %v4737
    %v7114 = vpack.c.b16 %v4746, %v4738
    %v7115 = vpack.c.b16 %v4747, %v4739
    %v7116 = vpack.c.b16 %v4748, %v4740
    %v7117 = vpack.c.b16 %v4749, %v4741
    %v7118 = vpack.c.b16 %v4750, %v4742
    %v7119 = vpack.c.b16 %v4751, %v4743
    %v7120 = vpack.c.b16 %v4760, %v4752
    %v7121 = vpack.c.b16 %v4761, %v4753
    %v7122 = vpack.c.b16 %v4762, %v4754
    %v7123 = vpack.c.b16 %v4763, %v4755
    %v7124 = vpack.c.b16 %v4764, %v4756
    %v7125 = vpack.c.b16 %v4765, %v4757
    %v7126 = vpack.c.b16 %v4766, %v4758
    %v7127 = vpack.c.b16 %v4767, %v4759
    %v7128 = vpack.c.b16 %v4776, %v4768
    %v7129 = vpack.c.b16 %v4777, %v4769
    %v7130 = vpack.c.b16 %v4778, %v4770
    %v7131 = vpack.c.b16 %v4779, %v4771
    %v7132 = vpack.c.b16 %v4780, %v4772
    %v7133 = vpack.c.b16 %v4781, %v4773
    %v7134 = vpack.c.b16 %v4782, %v4774
    %v7135 = vpack.c.b16 %v4783, %v4775
    %v7136 = vpack.c.b16 %v4792, %v4784
    %v7137 = vpack.c.b16 %v4793, %v4785
    %v7138 = vpack.c.b16 %v4794, %v4786
    %v7139 = vpack.c.b16 %v4795, %v4787
    %v7140 = vpack.c.b16 %v4796, %v4788
    %v7141 = vpack.c.b16 %v4797, %v4789
    %v7142 = vpack.c.b16 %v4798, %v4790
    %v7143 = vpack.c.b16 %v4799, %v4791
    %v7144 = vpack.c.b16 %v4808, %v4800
    %v7145 = vpack.c.b16 %v4809, %v4801
    %v7146 = vpack.c.b16 %v4810, %v4802
    %v7147 = vpack.c.b16 %v4811, %v4803
    %v7148 = vpack.c.b16 %v4812, %v4804
    %v7149 = vpack.c.b16 %v4813, %v4805
    %v7150 = vpack.c.b16 %v4814, %v4806
    %v7151 = vpack.c.b16 %v4815, %v4807
    %v7152 = vpack.c.b16 %v4824, %v4816
    %v7153 = vpack.c.b16 %v4825, %v4817
    %v7154 = vpack.c.b16 %v4826, %v4818
    %v7155 = vpack.c.b16 %v4827, %v4819
    %v7156 = vpack.c.b16 %v4828, %v4820
    %v7157 = vpack.c.b16 %v4829, %v4821
    %v7158 = vpack.c.b16 %v4830, %v4822
    %v7159 = vpack.c.b16 %v4831, %v4823
    %v7160 = vpack.c.b16 %v4840, %v4832
    %v7161 = vpack.c.b16 %v4841, %v4833
    %v7162 = vpack.c.b16 %v4842, %v4834
    %v7163 = vpack.c.b16 %v4843, %v4835
    %v7164 = vpack.c.b16 %v4844, %v4836
    %v7165 = vpack.c.b16 %v4845, %v4837
    %v7166 = vpack.c.b16 %v4846, %v4838
    %v7167 = vpack.c.b16 %v4847, %v4839
    %v7168 = vpack.c.b16 %v4856, %v4848
    %v7169 = vpack.c.b16 %v4857, %v4849
    %v7170 = vpack.c.b16 %v4858, %v4850
    %v7171 = vpack.c.b16 %v4859, %v4851
    %v7172 = vpack.c.b16 %v4860, %v4852
    %v7173 = vpack.c.b16 %v4861, %v4853
    %v7174 = vpack.c.b16 %v4862, %v4854
    %v7175 = vpack.c.b16 %v4863, %v4855
    %v7176 = vpack.c.b16 %v4872, %v4864
    %v7177 = vpack.c.b16 %v4873, %v4865
    %v7178 = vpack.c.b16 %v4874, %v4866
    %v7179 = vpack.c.b16 %v4875, %v4867
    %v7180 = vpack.c.b16 %v4876, %v4868
    %v7181 = vpack.c.b16 %v4877, %v4869
    %v7182 = vpack.c.b16 %v4878, %v4870
    %v7183 = vpack.c.b16 %v4879, %v4871
    %v7184 = vpack.c.b16 %v4888, %v4880
    %v7185 = vpack.c.b16 %v4889, %v4881
    %v7186 = vpack.c.b16 %v4890, %v4882
    %v7187 = vpack.c.b16 %v4891, %v4883
    %v7188 = vpack.c.b16 %v4892, %v4884
    %v7189 = vpack.c.b16 %v4893, %v4885
    %v7190 = vpack.c.b16 %v4894, %v4886
    %v7191 = vpack.c.b16 %v4895, %v4887
    %v7192 = vpack.c.b16 %v4904, %v4896
    %v7193 = vpack.c.b16 %v4905, %v4897
    %v7194 = vpack.c.b16 %v4906, %v4898
    %v7195 = vpack.c.b16 %v4907, %v4899
    %v7196 = vpack.c.b16 %v4908, %v4900
    %v7197 = vpack.c.b16 %v4909, %v4901
    %v7198 = vpack.c.b16 %v4910, %v4902
    %v7199 = vpack.c.b16 %v4911, %v4903
    %v7200 = vpack.c.b16 %v4920, %v4912
    %v7201 = vpack.c.b16 %v4921, %v4913
    %v7202 = vpack.c.b16 %v4922, %v4914
    %v7203 = vpack.c.b16 %v4923, %v4915
    %v7204 = vpack.c.b16 %v4924, %v4916
    %v7205 = vpack.c.b16 %v4925, %v4917
    %v7206 = vpack.c.b16 %v4926, %v4918
    %v7207 = vpack.c.b16 %v4927, %v4919
    %v7208 = vpack.c.b16 %v4936, %v4928
    %v7209 = vpack.c.b16 %v4937, %v4929
    %v7210 = vpack.c.b16 %v4938, %v4930
    %v7211 = vpack.c.b16 %v4939, %v4931
    %v7212 = vpack.c.b16 %v4940, %v4932
    %v7213 = vpack.c.b16 %v4941, %v4933
    %v7214 = vpack.c.b16 %v4942, %v4934
    %v7215 = vpack.c.b16 %v4943, %v4935
    %v7216 = vpack.c.b16 %v4952, %v4944
    %v7217 = vpack.c.b16 %v4953, %v4945
    %v7218 = vpack.c.b16 %v4954, %v4946
    %v7219 = vpack.c.b16 %v4955, %v4947
    %v7220 = vpack.c.b16 %v4956, %v4948
    %v7221 = vpack.c.b16 %v4957, %v4949
    %v7222 = vpack.c.b16 %v4958, %v4950
    %v7223 = vpack.c.b16 %v4959, %v4951
    %v7224 = vpack.c.b16 %v4968, %v4960
    %v7225 = vpack.c.b16 %v4969, %v4961
    %v7226 = vpack.c.b16 %v4970, %v4962
    %v7227 = vpack.c.b16 %v4971, %v4963
    %v7228 = vpack.c.b16 %v4972, %v4964
    %v7229 = vpack.c.b16 %v4973, %v4965
    %v7230 = vpack.c.b16 %v4974, %v4966
    %v7231 = vpack.c.b16 %v4975, %v4967
    %v7232 = vpack.c.b16 %v4984, %v4976
    %v7233 = vpack.c.b16 %v4985, %v4977
    %v7234 = vpack.c.b16 %v4986, %v4978
    %v7235 = vpack.c.b16 %v4987, %v4979
    %v7236 = vpack.c.b16 %v4988, %v4980
    %v7237 = vpack.c.b16 %v4989, %v4981
    %v7238 = vpack.c.b16 %v4990, %v4982
    %v7239 = vpack.c.b16 %v4991, %v4983
    %v7240 = vpack.c.b16 %v5000, %v4992
    %v7241 = vpack.c.b16 %v5001, %v4993
    %v7242 = vpack.c.b16 %v5002, %v4994
    %v7243 = vpack.c.b16 %v5003, %v4995
    %v7244 = vpack.c.b16 %v5004, %v4996
    %v7245 = vpack.c.b16 %v5005, %v4997
    %v7246 = vpack.c.b16 %v5006, %v4998
    %v7247 = vpack.c.b16 %v5007, %v4999
    %v7248 = vpack.c.b16 %v5016, %v5008
    %v7249 = vpack.c.b16 %v5017, %v5009
    %v7250 = vpack.c.b16 %v5018, %v5010
    %v7251 = vpack.c.b16 %v5019, %v5011
    %v7252 = vpack.c.b16 %v5020, %v5012
    %v7253 = vpack.c.b16 %v5021, %v5013
    %v7254 = vpack.c.b16 %v5022, %v5014
    %v7255 = vpack.c.b16 %v5023, %v5015
    %v7256 = vpack.c.b16 %v5032, %v5024
    %v7257 = vpack.c.b16 %v5033, %v5025
    %v7258 = vpack.c.b16 %v5034, %v5026
    %v7259 = vpack.c.b16 %v5035, %v5027
    %v7260 = vpack.c.b16 %v5036, %v5028
    %v7261 = vpack.c.b16 %v5037, %v5029
    %v7262 = vpack.c.b16 %v5038, %v5030
    %v7263 = vpack.c.b16 %v5039, %v5031
    %v7264 = vpack.c.b16 %v5048, %v5040
    %v7265 = vpack.c.b16 %v5049, %v5041
    %v7266 = vpack.c.b16 %v5050, %v5042
    %v7267 = vpack.c.b16 %v5051, %v5043
    %v7268 = vpack.c.b16 %v5052, %v5044
    %v7269 = vpack.c.b16 %v5053, %v5045
    %v7270 = vpack.c.b16 %v5054, %v5046
    %v7271 = vpack.c.b16 %v5055, %v5047
    %v7272 = vpack.c.b16 %v5064, %v5056
    %v7273 = vpack.c.b16 %v5065, %v5057
    %v7274 = vpack.c.b16 %v5066, %v5058
    %v7275 = vpack.c.b16 %v5067, %v5059
    %v7276 = vpack.c.b16 %v5068, %v5060
    %v7277 = vpack.c.b16 %v5069, %v5061
    %v7278 = vpack.c.b16 %v5070, %v5062
    %v7279 = vpack.c.b16 %v5071, %v5063
    %v7280 = vpack.c.b16 %v5080, %v5072
    %v7281 = vpack.c.b16 %v5081, %v5073
    %v7282 = vpack.c.b16 %v5082, %v5074
    %v7283 = vpack.c.b16 %v5083, %v5075
    %v7284 = vpack.c.b16 %v5084, %v5076
    %v7285 = vpack.c.b16 %v5085, %v5077
    %v7286 = vpack.c.b16 %v5086, %v5078
    %v7287 = vpack.c.b16 %v5087, %v5079
    %v7288 = vpack.c.b16 %v5096, %v5088
    %v7289 = vpack.c.b16 %v5097, %v5089
    %v7290 = vpack.c.b16 %v5098, %v5090
    %v7291 = vpack.c.b16 %v5099, %v5091
    %v7292 = vpack.c.b16 %v5100, %v5092
    %v7293 = vpack.c.b16 %v5101, %v5093
    %v7294 = vpack.c.b16 %v5102, %v5094
    %v7295 = vpack.c.b16 %v5103, %v5095
    %v7296 = vpack.c.b16 %v5112, %v5104
    %v7297 = vpack.c.b16 %v5113, %v5105
    %v7298 = vpack.c.b16 %v5114, %v5106
    %v7299 = vpack.c.b16 %v5115, %v5107
    %v7300 = vpack.c.b16 %v5116, %v5108
    %v7301 = vpack.c.b16 %v5117, %v5109
    %v7302 = vpack.c.b16 %v5118, %v5110
    %v7303 = vpack.c.b16 %v5119, %v5111
    %v7304 = vpack.c.b16 %v5128, %v5120
    %v7305 = vpack.c.b16 %v5129, %v5121
    %v7306 = vpack.c.b16 %v5130, %v5122
    %v7307 = vpack.c.b16 %v5131, %v5123
    %v7308 = vpack.c.b16 %v5132, %v5124
    %v7309 = vpack.c.b16 %v5133, %v5125
    %v7310 = vpack.c.b16 %v5134, %v5126
    %v7311 = vpack.c.b16 %v5135, %v5127
    %v7312 = vpack.c.b16 %v5144, %v5136
    %v7313 = vpack.c.b16 %v5145, %v5137
    %v7314 = vpack.c.b16 %v5146, %v5138
    %v7315 = vpack.c.b16 %v5147, %v5139
    %v7316 = vpack.c.b16 %v5148, %v5140
    %v7317 = vpack.c.b16 %v5149, %v5141
    %v7318 = vpack.c.b16 %v5150, %v5142
    %v7319 = vpack.c.b16 %v5151, %v5143
    %v7320 = vpack.c.b16 %v5160, %v5152
    %v7321 = vpack.c.b16 %v5161, %v5153
    %v7322 = vpack.c.b16 %v5162, %v5154
    %v7323 = vpack.c.b16 %v5163, %v5155
    %v7324 = vpack.c.b16 %v5164, %v5156
    %v7325 = vpack.c.b16 %v5165, %v5157
    %v7326 = vpack.c.b16 %v5166, %v5158
    %v7327 = vpack.c.b16 %v5167, %v5159
    %v7328 = vpack.c.b16 %v5176, %v5168
    %v7329 = vpack.c.b16 %v5177, %v5169
    %v7330 = vpack.c.b16 %v5178, %v5170
    %v7331 = vpack.c.b16 %v5179, %v5171
    %v7332 = vpack.c.b16 %v5180, %v5172
    %v7333 = vpack.c.b16 %v5181, %v5173
    %v7334 = vpack.c.b16 %v5182, %v5174
    %v7335 = vpack.c.b16 %v5183, %v5175
    %v7336 = vpack.c.b16 %v5192, %v5184
    %v7337 = vpack.c.b16 %v5193, %v5185
    %v7338 = vpack.c.b16 %v5194, %v5186
    %v7339 = vpack.c.b16 %v5195, %v5187
    %v7340 = vpack.c.b16 %v5196, %v5188
    %v7341 = vpack.c.b16 %v5197, %v5189
    %v7342 = vpack.c.b16 %v5198, %v5190
    %v7343 = vpack.c.b16 %v5199, %v5191
    %v7344 = vpack.c.b16 %v5208, %v5200
    %v7345 = vpack.c.b16 %v5209, %v5201
    %v7346 = vpack.c.b16 %v5210, %v5202
    %v7347 = vpack.c.b16 %v5211, %v5203
    %v7348 = vpack.c.b16 %v5212, %v5204
    %v7349 = vpack.c.b16 %v5213, %v5205
    %v7350 = vpack.c.b16 %v5214, %v5206
    %v7351 = vpack.c.b16 %v5215, %v5207
    %v7352 = vpack.c.b16 %v5224, %v5216
    %v7353 = vpack.c.b16 %v5225, %v5217
    %v7354 = vpack.c.b16 %v5226, %v5218
    %v7355 = vpack.c.b16 %v5227, %v5219
    %v7356 = vpack.c.b16 %v5228, %v5220
    %v7357 = vpack.c.b16 %v5229, %v5221
    %v7358 = vpack.c.b16 %v5230, %v5222
    %v7359 = vpack.c.b16 %v5231, %v5223
    %v7360 = vpack.c.b16 %v5240, %v5232
    %v7361 = vpack.c.b16 %v5241, %v5233
    %v7362 = vpack.c.b16 %v5242, %v5234
    %v7363 = vpack.c.b16 %v5243, %v5235
    %v7364 = vpack.c.b16 %v5244, %v5236
    %v7365 = vpack.c.b16 %v5245, %v5237
    %v7366 = vpack.c.b16 %v5246, %v5238
    %v7367 = vpack.c.b16 %v5247, %v5239
    %v7368 = vpack.c.b16 %v5256, %v5248
    %v7369 = vpack.c.b16 %v5257, %v5249
    %v7370 = vpack.c.b16 %v5258, %v5250
    %v7371 = vpack.c.b16 %v5259, %v5251
    %v7372 = vpack.c.b16 %v5260, %v5252
    %v7373 = vpack.c.b16 %v5261, %v5253
    %v7374 = vpack.c.b16 %v5262, %v5254
    %v7375 = vpack.c.b16 %v5263, %v5255
    %v7376 = vpack.c.b16 %v5272, %v5264
    %v7377 = vpack.c.b16 %v5273, %v5265
    %v7378 = vpack.c.b16 %v5274, %v5266
    %v7379 = vpack.c.b16 %v5275, %v5267
    %v7380 = vpack.c.b16 %v5276, %v5268
    %v7381 = vpack.c.b16 %v5277, %v5269
    %v7382 = vpack.c.b16 %v5278, %v5270
    %v7383 = vpack.c.b16 %v5279, %v5271
    %v7384 = vpack.c.b16 %v5288, %v5280
    %v7385 = vpack.c.b16 %v5289, %v5281
    %v7386 = vpack.c.b16 %v5290, %v5282
    %v7387 = vpack.c.b16 %v5291, %v5283
    %v7388 = vpack.c.b16 %v5292, %v5284
    %v7389 = vpack.c.b16 %v5293, %v5285
    %v7390 = vpack.c.b16 %v5294, %v5286
    %v7391 = vpack.c.b16 %v5295, %v5287
    %v7392 = vpack.c.b16 %v5304, %v5296
    %v7393 = vpack.c.b16 %v5305, %v5297
    %v7394 = vpack.c.b16 %v5306, %v5298
    %v7395 = vpack.c.b16 %v5307, %v5299
    %v7396 = vpack.c.b16 %v5308, %v5300
    %v7397 = vpack.c.b16 %v5309, %v5301
    %v7398 = vpack.c.b16 %v5310, %v5302
    %v7399 = vpack.c.b16 %v5311, %v5303
    %v7400 = vpack.c.b16 %v5320, %v5312
    %v7401 = vpack.c.b16 %v5321, %v5313
    %v7402 = vpack.c.b16 %v5322, %v5314
    %v7403 = vpack.c.b16 %v5323, %v5315
    %v7404 = vpack.c.b16 %v5324, %v5316
    %v7405 = vpack.c.b16 %v5325, %v5317
    %v7406 = vpack.c.b16 %v5326, %v5318
    %v7407 = vpack.c.b16 %v5327, %v5319
    %v7408 = vpack.c.b16 %v5336, %v5328
    %v7409 = vpack.c.b16 %v5337, %v5329
    %v7410 = vpack.c.b16 %v5338, %v5330
    %v7411 = vpack.c.b16 %v5339, %v5331
    %v7412 = vpack.c.b16 %v5340, %v5332
    %v7413 = vpack.c.b16 %v5341, %v5333
    %v7414 = vpack.c.b16 %v5342, %v5334
    %v7415 = vpack.c.b16 %v5343, %v5335
    %v7416 = vpack.c.b16 %v5352, %v5344
    %v7417 = vpack.c.b16 %v5353, %v5345
    %v7418 = vpack.c.b16 %v5354, %v5346
    %v7419 = vpack.c.b16 %v5355, %v5347
    %v7420 = vpack.c.b16 %v5356, %v5348
    %v7421 = vpack.c.b16 %v5357, %v5349
    %v7422 = vpack.c.b16 %v5358, %v5350
    %v7423 = vpack.c.b16 %v5359, %v5351
    %v7424 = vpack.c.b16 %v5368, %v5360
    %v7425 = vpack.c.b16 %v5369, %v5361
    %v7426 = vpack.c.b16 %v5370, %v5362
    %v7427 = vpack.c.b16 %v5371, %v5363
    %v7428 = vpack.c.b16 %v5372, %v5364
    %v7429 = vpack.c.b16 %v5373, %v5365
    %v7430 = vpack.c.b16 %v5374, %v5366
    %v7431 = vpack.c.b16 %v5375, %v5367
    %v7432 = vpack.c.b16 %v5384, %v5376
    %v7433 = vpack.c.b16 %v5385, %v5377
    %v7434 = vpack.c.b16 %v5386, %v5378
    %v7435 = vpack.c.b16 %v5387, %v5379
    %v7436 = vpack.c.b16 %v5388, %v5380
    %v7437 = vpack.c.b16 %v5389, %v5381
    %v7438 = vpack.c.b16 %v5390, %v5382
    %v7439 = vpack.c.b16 %v5391, %v5383
    %v7440 = vpack.c.b16 %v5400, %v5392
    %v7441 = vpack.c.b16 %v5401, %v5393
    %v7442 = vpack.c.b16 %v5402, %v5394
    %v7443 = vpack.c.b16 %v5403, %v5395
    %v7444 = vpack.c.b16 %v5404, %v5396
    %v7445 = vpack.c.b16 %v5405, %v5397
    %v7446 = vpack.c.b16 %v5406, %v5398
    %v7447 = vpack.c.b16 %v5407, %v5399
    %v7448 = vpack.c.b16 %v5416, %v5408
    %v7449 = vpack.c.b16 %v5417, %v5409
    %v7450 = vpack.c.b16 %v5418, %v5410
    %v7451 = vpack.c.b16 %v5419, %v5411
    %v7452 = vpack.c.b16 %v5420, %v5412
    %v7453 = vpack.c.b16 %v5421, %v5413
    %v7454 = vpack.c.b16 %v5422, %v5414
    %v7455 = vpack.c.b16 %v5423, %v5415
    %v7456 = vpack.c.b16 %v5432, %v5424
    %v7457 = vpack.c.b16 %v5433, %v5425
    %v7458 = vpack.c.b16 %v5434, %v5426
    %v7459 = vpack.c.b16 %v5435, %v5427
    %v7460 = vpack.c.b16 %v5436, %v5428
    %v7461 = vpack.c.b16 %v5437, %v5429
    %v7462 = vpack.c.b16 %v5438, %v5430
    %v7463 = vpack.c.b16 %v5439, %v5431
    %v7464 = vpack.c.b16 %v5448, %v5440
    %v7465 = vpack.c.b16 %v5449, %v5441
    %v7466 = vpack.c.b16 %v5450, %v5442
    %v7467 = vpack.c.b16 %v5451, %v5443
    %v7468 = vpack.c.b16 %v5452, %v5444
    %v7469 = vpack.c.b16 %v5453, %v5445
    %v7470 = vpack.c.b16 %v5454, %v5446
    %v7471 = vpack.c.b16 %v5455, %v5447
    %v7472 = vpack.c.b16 %v5464, %v5456
    %v7473 = vpack.c.b16 %v5465, %v5457
    %v7474 = vpack.c.b16 %v5466, %v5458
    %v7475 = vpack.c.b16 %v5467, %v5459
    %v7476 = vpack.c.b16 %v5468, %v5460
    %v7477 = vpack.c.b16 %v5469, %v5461
    %v7478 = vpack.c.b16 %v5470, %v5462
    %v7479 = vpack.c.b16 %v5471, %v5463
    %v7480 = vpack.c.b16 %v5480, %v5472
    %v7481 = vpack.c.b16 %v5481, %v5473
    %v7482 = vpack.c.b16 %v5482, %v5474
    %v7483 = vpack.c.b16 %v5483, %v5475
    %v7484 = vpack.c.b16 %v5484, %v5476
    %v7485 = vpack.c.b16 %v5485, %v5477
    %v7486 = vpack.c.b16 %v5486, %v5478
    %v7487 = vpack.c.b16 %v5487, %v5479
    %v7488 = vpack.c.b16 %v5496, %v5488
    %v7489 = vpack.c.b16 %v5497, %v5489
    %v7490 = vpack.c.b16 %v5498, %v5490
    %v7491 = vpack.c.b16 %v5499, %v5491
    %v7492 = vpack.c.b16 %v5500, %v5492
    %v7493 = vpack.c.b16 %v5501, %v5493
    %v7494 = vpack.c.b16 %v5502, %v5494
    %v7495 = vpack.c.b16 %v5503, %v5495
    %v7496 = vpack.c.b16 %v5512, %v5504
    %v7497 = vpack.c.b16 %v5513, %v5505
    %v7498 = vpack.c.b16 %v5514, %v5506
    %v7499 = vpack.c.b16 %v5515, %v5507
    %v7500 = vpack.c.b16 %v5516, %v5508
    %v7501 = vpack.c.b16 %v5517, %v5509
    %v7502 = vpack.c.b16 %v5518, %v5510
    %v7503 = vpack.c.b16 %v5519, %v5511
    %v7504 = vpack.c.b16 %v5528, %v5520
    %v7505 = vpack.c.b16 %v5529, %v5521
    %v7506 = vpack.c.b16 %v5530, %v5522
    %v7507 = vpack.c.b16 %v5531, %v5523
    %v7508 = vpack.c.b16 %v5532, %v5524
    %v7509 = vpack.c.b16 %v5533, %v5525
    %v7510 = vpack.c.b16 %v5534, %v5526
    %v7511 = vpack.c.b16 %v5535, %v5527
    %v7512 = vpack.c.b16 %v5544, %v5536
    %v7513 = vpack.c.b16 %v5545, %v5537
    %v7514 = vpack.c.b16 %v5546, %v5538
    %v7515 = vpack.c.b16 %v5547, %v5539
    %v7516 = vpack.c.b16 %v5548, %v5540
    %v7517 = vpack.c.b16 %v5549, %v5541
    %v7518 = vpack.c.b16 %v5550, %v5542
    %v7519 = vpack.c.b16 %v5551, %v5543
    %v7520 = vpack.c.b16 %v5560, %v5552
    %v7521 = vpack.c.b16 %v5561, %v5553
    %v7522 = vpack.c.b16 %v5562, %v5554
    %v7523 = vpack.c.b16 %v5563, %v5555
    %v7524 = vpack.c.b16 %v5564, %v5556
    %v7525 = vpack.c.b16 %v5565, %v5557
    %v7526 = vpack.c.b16 %v5566, %v5558
    %v7527 = vpack.c.b16 %v5567, %v5559
    %v7528 = vpack.c.b16 %v5576, %v5568
    %v7529 = vpack.c.b16 %v5577, %v5569
    %v7530 = vpack.c.b16 %v5578, %v5570
    %v7531 = vpack.c.b16 %v5579, %v5571
    %v7532 = vpack.c.b16 %v5580, %v5572
    %v7533 = vpack.c.b16 %v5581, %v5573
    %v7534 = vpack.c.b16 %v5582, %v5574
    %v7535 = vpack.c.b16 %v5583, %v5575
    %v7536 = vpack.c.b16 %v5592, %v5584
    %v7537 = vpack.c.b16 %v5593, %v5585
    %v7538 = vpack.c.b16 %v5594, %v5586
    %v7539 = vpack.c.b16 %v5595, %v5587
    %v7540 = vpack.c.b16 %v5596, %v5588
    %v7541 = vpack.c.b16 %v5597, %v5589
    %v7542 = vpack.c.b16 %v5598, %v5590
    %v7543 = vpack.c.b16 %v5599, %v5591
    %v7544 = vpack.c.b16 %v5608, %v5600
    %v7545 = vpack.c.b16 %v5609, %v5601
    %v7546 = vpack.c.b16 %v5610, %v5602
    %v7547 = vpack.c.b16 %v5611, %v5603
    %v7548 = vpack.c.b16 %v5612, %v5604
    %v7549 = vpack.c.b16 %v5613, %v5605
    %v7550 = vpack.c.b16 %v5614, %v5606
    %v7551 = vpack.c.b16 %v5615, %v5607
    %v7552 = vpack.c.b16 %v5624, %v5616
    %v7553 = vpack.c.b16 %v5625, %v5617
    %v7554 = vpack.c.b16 %v5626, %v5618
    %v7555 = vpack.c.b16 %v5627, %v5619
    %v7556 = vpack.c.b16 %v5628, %v5620
    %v7557 = vpack.c.b16 %v5629, %v5621
    %v7558 = vpack.c.b16 %v5630, %v5622
    %v7559 = vpack.c.b16 %v5631, %v5623
    %v7560 = vpack.c.b16 %v5640, %v5632
    %v7561 = vpack.c.b16 %v5641, %v5633
    %v7562 = vpack.c.b16 %v5642, %v5634
    %v7563 = vpack.c.b16 %v5643, %v5635
    %v7564 = vpack.c.b16 %v5644, %v5636
    %v7565 = vpack.c.b16 %v5645, %v5637
    %v7566 = vpack.c.b16 %v5646, %v5638
    %v7567 = vpack.c.b16 %v5647, %v5639
    %v7568 = vpack.c.b16 %v5656, %v5648
    %v7569 = vpack.c.b16 %v5657, %v5649
    %v7570 = vpack.c.b16 %v5658, %v5650
    %v7571 = vpack.c.b16 %v5659, %v5651
    %v7572 = vpack.c.b16 %v5660, %v5652
    %v7573 = vpack.c.b16 %v5661, %v5653
    %v7574 = vpack.c.b16 %v5662, %v5654
    %v7575 = vpack.c.b16 %v5663, %v5655
    %v7576 = vpack.c.b16 %v5672, %v5664
    %v7577 = vpack.c.b16 %v5673, %v5665
    %v7578 = vpack.c.b16 %v5674, %v5666
    %v7579 = vpack.c.b16 %v5675, %v5667
    %v7580 = vpack.c.b16 %v5676, %v5668
    %v7581 = vpack.c.b16 %v5677, %v5669
    %v7582 = vpack.c.b16 %v5678, %v5670
    %v7583 = vpack.c.b16 %v5679, %v5671
    %v7584 = vpack.c.b16 %v5688, %v5680
    %v7585 = vpack.c.b16 %v5689, %v5681
    %v7586 = vpack.c.b16 %v5690, %v5682
    %v7587 = vpack.c.b16 %v5691, %v5683
    %v7588 = vpack.c.b16 %v5692, %v5684
    %v7589 = vpack.c.b16 %v5693, %v5685
    %v7590 = vpack.c.b16 %v5694, %v5686
    %v7591 = vpack.c.b16 %v5695, %v5687
    %v7592 = vpack.c.b16 %v5704, %v5696
    %v7593 = vpack.c.b16 %v5705, %v5697
    %v7594 = vpack.c.b16 %v5706, %v5698
    %v7595 = vpack.c.b16 %v5707, %v5699
    %v7596 = vpack.c.b16 %v5708, %v5700
    %v7597 = vpack.c.b16 %v5709, %v5701
    %v7598 = vpack.c.b16 %v5710, %v5702
    %v7599 = vpack.c.b16 %v5711, %v5703
    %v7600 = vpack.c.b16 %v5720, %v5712
    %v7601 = vpack.c.b16 %v5721, %v5713
    %v7602 = vpack.c.b16 %v5722, %v5714
    %v7603 = vpack.c.b16 %v5723, %v5715
    %v7604 = vpack.c.b16 %v5724, %v5716
    %v7605 = vpack.c.b16 %v5725, %v5717
    %v7606 = vpack.c.b16 %v5726, %v5718
    %v7607 = vpack.c.b16 %v5727, %v5719
    %v7608 = vpack.c.b16 %v5736, %v5728
    %v7609 = vpack.c.b16 %v5737, %v5729
    %v7610 = vpack.c.b16 %v5738, %v5730
    %v7611 = vpack.c.b16 %v5739, %v5731
    %v7612 = vpack.c.b16 %v5740, %v5732
    %v7613 = vpack.c.b16 %v5741, %v5733
    %v7614 = vpack.c.b16 %v5742, %v5734
    %v7615 = vpack.c.b16 %v5743, %v5735
    %v7616 = vpack.c.b16 %v5752, %v5744
    %v7617 = vpack.c.b16 %v5753, %v5745
    %v7618 = vpack.c.b16 %v5754, %v5746
    %v7619 = vpack.c.b16 %v5755, %v5747
    %v7620 = vpack.c.b16 %v5756, %v5748
    %v7621 = vpack.c.b16 %v5757, %v5749
    %v7622 = vpack.c.b16 %v5758, %v5750
    %v7623 = vpack.c.b16 %v5759, %v5751
    %v7624 = vpack.c.b16 %v5768, %v5760
    %v7625 = vpack.c.b16 %v5769, %v5761
    %v7626 = vpack.c.b16 %v5770, %v5762
    %v7627 = vpack.c.b16 %v5771, %v5763
    %v7628 = vpack.c.b16 %v5772, %v5764
    %v7629 = vpack.c.b16 %v5773, %v5765
    %v7630 = vpack.c.b16 %v5774, %v5766
    %v7631 = vpack.c.b16 %v5775, %v5767
    %v7632 = vpack.c.b16 %v5784, %v5776
    %v7633 = vpack.c.b16 %v5785, %v5777
    %v7634 = vpack.c.b16 %v5786, %v5778
    %v7635 = vpack.c.b16 %v5787, %v5779
    %v7636 = vpack.c.b16 %v5788, %v5780
    %v7637 = vpack.c.b16 %v5789, %v5781
    %v7638 = vpack.c.b16 %v5790, %v5782
    %v7639 = vpack.c.b16 %v5791, %v5783
    %v7640 = vpack.c.b16 %v5800, %v5792
    %v7641 = vpack.c.b16 %v5801, %v5793
    %v7642 = vpack.c.b16 %v5802, %v5794
    %v7643 = vpack.c.b16 %v5803, %v5795
    %v7644 = vpack.c.b16 %v5804, %v5796
    %v7645 = vpack.c.b16 %v5805, %v5797
    %v7646 = vpack.c.b16 %v5806, %v5798
    %v7647 = vpack.c.b16 %v5807, %v5799
    %v7648 = vpack.c.b16 %v5816, %v5808
    %v7649 = vpack.c.b16 %v5817, %v5809
    %v7650 = vpack.c.b16 %v5818, %v5810
    %v7651 = vpack.c.b16 %v5819, %v5811
    %v7652 = vpack.c.b16 %v5820, %v5812
    %v7653 = vpack.c.b16 %v5821, %v5813
    %v7654 = vpack.c.b16 %v5822, %v5814
    %v7655 = vpack.c.b16 %v5823, %v5815
    %v7656 = vpack.c.b16 %v5832, %v5824
    %v7657 = vpack.c.b16 %v5833, %v5825
    %v7658 = vpack.c.b16 %v5834, %v5826
    %v7659 = vpack.c.b16 %v5835, %v5827
    %v7660 = vpack.c.b16 %v5836, %v5828
    %v7661 = vpack.c.b16 %v5837, %v5829
    %v7662 = vpack.c.b16 %v5838, %v5830
    %v7663 = vpack.c.b16 %v5839, %v5831
    %v7664 = vpack.c.b16 %v5848, %v5840
    %v7665 = vpack.c.b16 %v5849, %v5841
    %v7666 = vpack.c.b16 %v5850, %v5842
    %v7667 = vpack.c.b16 %v5851, %v5843
    %v7668 = vpack.c.b16 %v5852, %v5844
    %v7669 = vpack.c.b16 %v5853, %v5845
    %v7670 = vpack.c.b16 %v5854, %v5846
    %v7671 = vpack.c.b16 %v5855, %v5847
    %v7672 = vpack.c.b16 %v5864, %v5856
    %v7673 = vpack.c.b16 %v5865, %v5857
    %v7674 = vpack.c.b16 %v5866, %v5858
    %v7675 = vpack.c.b16 %v5867, %v5859
    %v7676 = vpack.c.b16 %v5868, %v5860
    %v7677 = vpack.c.b16 %v5869, %v5861
    %v7678 = vpack.c.b16 %v5870, %v5862
    %v7679 = vpack.c.b16 %v5871, %v5863
    %v7680 = vpack.c.b16 %v5880, %v5872
    %v7681 = vpack.c.b16 %v5881, %v5873
    %v7682 = vpack.c.b16 %v5882, %v5874
    %v7683 = vpack.c.b16 %v5883, %v5875
    %v7684 = vpack.c.b16 %v5884, %v5876
    %v7685 = vpack.c.b16 %v5885, %v5877
    %v7686 = vpack.c.b16 %v5886, %v5878
    %v7687 = vpack.c.b16 %v5887, %v5879
    %v7688 = vpack.c.b16 %v5896, %v5888
    %v7689 = vpack.c.b16 %v5897, %v5889
    %v7690 = vpack.c.b16 %v5898, %v5890
    %v7691 = vpack.c.b16 %v5899, %v5891
    %v7692 = vpack.c.b16 %v5900, %v5892
    %v7693 = vpack.c.b16 %v5901, %v5893
    %v7694 = vpack.c.b16 %v5902, %v5894
    %v7695 = vpack.c.b16 %v5903, %v5895
    %v7696 = vpack.c.b16 %v5912, %v5904
    %v7697 = vpack.c.b16 %v5913, %v5905
    %v7698 = vpack.c.b16 %v5914, %v5906
    %v7699 = vpack.c.b16 %v5915, %v5907
    %v7700 = vpack.c.b16 %v5916, %v5908
    %v7701 = vpack.c.b16 %v5917, %v5909
    %v7702 = vpack.c.b16 %v5918, %v5910
    %v7703 = vpack.c.b16 %v5919, %v5911
    %v7704 = vpack.c.b16 %v5928, %v5920
    %v7705 = vpack.c.b16 %v5929, %v5921
    %v7706 = vpack.c.b16 %v5930, %v5922
    %v7707 = vpack.c.b16 %v5931, %v5923
    %v7708 = vpack.c.b16 %v5932, %v5924
    %v7709 = vpack.c.b16 %v5933, %v5925
    %v7710 = vpack.c.b16 %v5934, %v5926
    %v7711 = vpack.c.b16 %v5935, %v5927
    %v7712 = vpack.c.b16 %v5944, %v5936
    %v7713 = vpack.c.b16 %v5945, %v5937
    %v7714 = vpack.c.b16 %v5946, %v5938
    %v7715 = vpack.c.b16 %v5947, %v5939
    %v7716 = vpack.c.b16 %v5948, %v5940
    %v7717 = vpack.c.b16 %v5949, %v5941
    %v7718 = vpack.c.b16 %v5950, %v5942
    %v7719 = vpack.c.b16 %v5951, %v5943
    %v7720 = vpack.c.b16 %v5960, %v5952
    %v7721 = vpack.c.b16 %v5961, %v5953
    %v7722 = vpack.c.b16 %v5962, %v5954
    %v7723 = vpack.c.b16 %v5963, %v5955
    %v7724 = vpack.c.b16 %v5964, %v5956
    %v7725 = vpack.c.b16 %v5965, %v5957
    %v7726 = vpack.c.b16 %v5966, %v5958
    %v7727 = vpack.c.b16 %v5967, %v5959
    %v7728 = vpack.c.b16 %v5976, %v5968
    %v7729 = vpack.c.b16 %v5977, %v5969
    %v7730 = vpack.c.b16 %v5978, %v5970
    %v7731 = vpack.c.b16 %v5979, %v5971
    %v7732 = vpack.c.b16 %v5980, %v5972
    %v7733 = vpack.c.b16 %v5981, %v5973
    %v7734 = vpack.c.b16 %v5982, %v5974
    %v7735 = vpack.c.b16 %v5983, %v5975
    %v7736 = vpack.c.b16 %v5992, %v5984
    %v7737 = vpack.c.b16 %v5993, %v5985
    %v7738 = vpack.c.b16 %v5994, %v5986
    %v7739 = vpack.c.b16 %v5995, %v5987
    %v7740 = vpack.c.b16 %v5996, %v5988
    %v7741 = vpack.c.b16 %v5997, %v5989
    %v7742 = vpack.c.b16 %v5998, %v5990
    %v7743 = vpack.c.b16 %v5999, %v5991
    %v7744 = vpack.c.b16 %v6008, %v6000
    %v7745 = vpack.c.b16 %v6009, %v6001
    %v7746 = vpack.c.b16 %v6010, %v6002
    %v7747 = vpack.c.b16 %v6011, %v6003
    %v7748 = vpack.c.b16 %v6012, %v6004
    %v7749 = vpack.c.b16 %v6013, %v6005
    %v7750 = vpack.c.b16 %v6014, %v6006
    %v7751 = vpack.c.b16 %v6015, %v6007
    %v7752 = vpack.c.b16 %v6024, %v6016
    %v7753 = vpack.c.b16 %v6025, %v6017
    %v7754 = vpack.c.b16 %v6026, %v6018
    %v7755 = vpack.c.b16 %v6027, %v6019
    %v7756 = vpack.c.b16 %v6028, %v6020
    %v7757 = vpack.c.b16 %v6029, %v6021
    %v7758 = vpack.c.b16 %v6030, %v6022
    %v7759 = vpack.c.b16 %v6031, %v6023
    %v7760 = vpack.c.b16 %v6040, %v6032
    %v7761 = vpack.c.b16 %v6041, %v6033
    %v7762 = vpack.c.b16 %v6042, %v6034
    %v7763 = vpack.c.b16 %v6043, %v6035
    %v7764 = vpack.c.b16 %v6044, %v6036
    %v7765 = vpack.c.b16 %v6045, %v6037
    %v7766 = vpack.c.b16 %v6046, %v6038
    %v7767 = vpack.c.b16 %v6047, %v6039
    %v7768 = vpack.c.b16 %v6056, %v6048
    %v7769 = vpack.c.b16 %v6057, %v6049
    %v7770 = vpack.c.b16 %v6058, %v6050
    %v7771 = vpack.c.b16 %v6059, %v6051
    %v7772 = vpack.c.b16 %v6060, %v6052
    %v7773 = vpack.c.b16 %v6061, %v6053
    %v7774 = vpack.c.b16 %v6062, %v6054
    %v7775 = vpack.c.b16 %v6063, %v6055
    %v7776 = vpack.c.b16 %v6072, %v6064
    %v7777 = vpack.c.b16 %v6073, %v6065
    %v7778 = vpack.c.b16 %v6074, %v6066
    %v7779 = vpack.c.b16 %v6075, %v6067
    %v7780 = vpack.c.b16 %v6076, %v6068
    %v7781 = vpack.c.b16 %v6077, %v6069
    %v7782 = vpack.c.b16 %v6078, %v6070
    %v7783 = vpack.c.b16 %v6079, %v6071
    %v7784 = vpack.c.b16 %v6088, %v6080
    %v7785 = vpack.c.b16 %v6089, %v6081
    %v7786 = vpack.c.b16 %v6090, %v6082
    %v7787 = vpack.c.b16 %v6091, %v6083
    %v7788 = vpack.c.b16 %v6092, %v6084
    %v7789 = vpack.c.b16 %v6093, %v6085
    %v7790 = vpack.c.b16 %v6094, %v6086
    %v7791 = vpack.c.b16 %v6095, %v6087
    %v7792 = vpack.c.b16 %v6104, %v6096
    %v7793 = vpack.c.b16 %v6105, %v6097
    %v7794 = vpack.c.b16 %v6106, %v6098
    %v7795 = vpack.c.b16 %v6107, %v6099
    %v7796 = vpack.c.b16 %v6108, %v6100
    %v7797 = vpack.c.b16 %v6109, %v6101
    %v7798 = vpack.c.b16 %v6110, %v6102
    %v7799 = vpack.c.b16 %v6111, %v6103
    %v7800 = vpack.c.b16 %v6120, %v6112
    %v7801 = vpack.c.b16 %v6121, %v6113
    %v7802 = vpack.c.b16 %v6122, %v6114
    %v7803 = vpack.c.b16 %v6123, %v6115
    %v7804 = vpack.c.b16 %v6124, %v6116
    %v7805 = vpack.c.b16 %v6125, %v6117
    %v7806 = vpack.c.b16 %v6126, %v6118
    %v7807 = vpack.c.b16 %v6127, %v6119
    %v7808 = vpack.c.b16 %v6136, %v6128
    %v7809 = vpack.c.b16 %v6137, %v6129
    %v7810 = vpack.c.b16 %v6138, %v6130
    %v7811 = vpack.c.b16 %v6139, %v6131
    %v7812 = vpack.c.b16 %v6140, %v6132
    %v7813 = vpack.c.b16 %v6141, %v6133
    %v7814 = vpack.c.b16 %v6142, %v6134
    %v7815 = vpack.c.b16 %v6143, %v6135
    %v7816 = vpack.c.b16 %v6152, %v6144
    %v7817 = vpack.c.b16 %v6153, %v6145
    %v7818 = vpack.c.b16 %v6154, %v6146
    %v7819 = vpack.c.b16 %v6155, %v6147
    %v7820 = vpack.c.b16 %v6156, %v6148
    %v7821 = vpack.c.b16 %v6157, %v6149
    %v7822 = vpack.c.b16 %v6158, %v6150
    %v7823 = vpack.c.b16 %v6159, %v6151
    %v7824 = vpack.c.b16 %v6168, %v6160
    %v7825 = vpack.c.b16 %v6169, %v6161
    %v7826 = vpack.c.b16 %v6170, %v6162
    %v7827 = vpack.c.b16 %v6171, %v6163
    %v7828 = vpack.c.b16 %v6172, %v6164
    %v7829 = vpack.c.b16 %v6173, %v6165
    %v7830 = vpack.c.b16 %v6174, %v6166
    %v7831 = vpack.c.b16 %v6175, %v6167
    %v7832 = vpack.c.b16 %v6184, %v6176
    %v7833 = vpack.c.b16 %v6185, %v6177
    %v7834 = vpack.c.b16 %v6186, %v6178
    %v7835 = vpack.c.b16 %v6187, %v6179
    %v7836 = vpack.c.b16 %v6188, %v6180
    %v7837 = vpack.c.b16 %v6189, %v6181
    %v7838 = vpack.c.b16 %v6190, %v6182
    %v7839 = vpack.c.b16 %v6191, %v6183
    %v7840 = vpack.c.b16 %v6200, %v6192
    %v7841 = vpack.c.b16 %v6201, %v6193
    %v7842 = vpack.c.b16 %v6202, %v6194
    %v7843 = vpack.c.b16 %v6203, %v6195
    %v7844 = vpack.c.b16 %v6204, %v6196
    %v7845 = vpack.c.b16 %v6205, %v6197
    %v7846 = vpack.c.b16 %v6206, %v6198
    %v7847 = vpack.c.b16 %v6207, %v6199
    %v7848 = vpack.c.b16 %v6216, %v6208
    %v7849 = vpack.c.b16 %v6217, %v6209
    %v7850 = vpack.c.b16 %v6218, %v6210
    %v7851 = vpack.c.b16 %v6219, %v6211
    %v7852 = vpack.c.b16 %v6220, %v6212
    %v7853 = vpack.c.b16 %v6221, %v6213
    %v7854 = vpack.c.b16 %v6222, %v6214
    %v7855 = vpack.c.b16 %v6223, %v6215
    %v7856 = vpack.c.b16 %v6232, %v6224
    %v7857 = vpack.c.b16 %v6233, %v6225
    %v7858 = vpack.c.b16 %v6234, %v6226
    %v7859 = vpack.c.b16 %v6235, %v6227
    %v7860 = vpack.c.b16 %v6236, %v6228
    %v7861 = vpack.c.b16 %v6237, %v6229
    %v7862 = vpack.c.b16 %v6238, %v6230
    %v7863 = vpack.c.b16 %v6239, %v6231
    %v7864 = vpack.c.b16 %v6248, %v6240
    %v7865 = vpack.c.b16 %v6249, %v6241
    %v7866 = vpack.c.b16 %v6250, %v6242
    %v7867 = vpack.c.b16 %v6251, %v6243
    %v7868 = vpack.c.b16 %v6252, %v6244
    %v7869 = vpack.c.b16 %v6253, %v6245
    %v7870 = vpack.c.b16 %v6254, %v6246
    %v7871 = vpack.c.b16 %v6255, %v6247
    %v7872 = vpack.c.b16 %v6264, %v6256
    %v7873 = vpack.c.b16 %v6265, %v6257
    %v7874 = vpack.c.b16 %v6266, %v6258
    %v7875 = vpack.c.b16 %v6267, %v6259
    %v7876 = vpack.c.b16 %v6268, %v6260
    %v7877 = vpack.c.b16 %v6269, %v6261
    %v7878 = vpack.c.b16 %v6270, %v6262
    %v7879 = vpack.c.b16 %v6271, %v6263
    %v7880 = vpack.c.b16 %v6280, %v6272
    %v7881 = vpack.c.b16 %v6281, %v6273
    %v7882 = vpack.c.b16 %v6282, %v6274
    %v7883 = vpack.c.b16 %v6283, %v6275
    %v7884 = vpack.c.b16 %v6284, %v6276
    %v7885 = vpack.c.b16 %v6285, %v6277
    %v7886 = vpack.c.b16 %v6286, %v6278
    %v7887 = vpack.c.b16 %v6287, %v6279
    %v7888 = vpack.c.b16 %v6296, %v6288
    %v7889 = vpack.c.b16 %v6297, %v6289
    %v7890 = vpack.c.b16 %v6298, %v6290
    %v7891 = vpack.c.b16 %v6299, %v6291
    %v7892 = vpack.c.b16 %v6300, %v6292
    %v7893 = vpack.c.b16 %v6301, %v6293
    %v7894 = vpack.c.b16 %v6302, %v6294
    %v7895 = vpack.c.b16 %v6303, %v6295
    %v7896 = vpack.c.b16 %v6312, %v6304
    %v7897 = vpack.c.b16 %v6313, %v6305
    %v7898 = vpack.c.b16 %v6314, %v6306
    %v7899 = vpack.c.b16 %v6315, %v6307
    %v7900 = vpack.c.b16 %v6316, %v6308
    %v7901 = vpack.c.b16 %v6317, %v6309
    %v7902 = vpack.c.b16 %v6318, %v6310
    %v7903 = vpack.c.b16 %v6319, %v6311
    %v7904 = vpack.c.b16 %v6328, %v6320
    %v7905 = vpack.c.b16 %v6329, %v6321
    %v7906 = vpack.c.b16 %v6330, %v6322
    %v7907 = vpack.c.b16 %v6331, %v6323
    %v7908 = vpack.c.b16 %v6332, %v6324
    %v7909 = vpack.c.b16 %v6333, %v6325
    %v7910 = vpack.c.b16 %v6334, %v6326
    %v7911 = vpack.c.b16 %v6335, %v6327
    %v7912 = vpack.c.b16 %v6344, %v6336
    %v7913 = vpack.c.b16 %v6345, %v6337
    %v7914 = vpack.c.b16 %v6346, %v6338
    %v7915 = vpack.c.b16 %v6347, %v6339
    %v7916 = vpack.c.b16 %v6348, %v6340
    %v7917 = vpack.c.b16 %v6349, %v6341
    %v7918 = vpack.c.b16 %v6350, %v6342
    %v7919 = vpack.c.b16 %v6351, %v6343
    %v7920 = vpack.c.b16 %v6360, %v6352
    %v7921 = vpack.c.b16 %v6361, %v6353
    %v7922 = vpack.c.b16 %v6362, %v6354
    %v7923 = vpack.c.b16 %v6363, %v6355
    %v7924 = vpack.c.b16 %v6364, %v6356
    %v7925 = vpack.c.b16 %v6365, %v6357
    %v7926 = vpack.c.b16 %v6366, %v6358
    %v7927 = vpack.c.b16 %v6367, %v6359
    %v7928 = vpack.c.b16 %v6376, %v6368
    %v7929 = vpack.c.b16 %v6377, %v6369
    %v7930 = vpack.c.b16 %v6378, %v6370
    %v7931 = vpack.c.b16 %v6379, %v6371
    %v7932 = vpack.c.b16 %v6380, %v6372
    %v7933 = vpack.c.b16 %v6381, %v6373
    %v7934 = vpack.c.b16 %v6382, %v6374
    %v7935 = vpack.c.b16 %v6383, %v6375
    %v7936 = vpack.c.b16 %v6392, %v6384
    %v7937 = vpack.c.b16 %v6393, %v6385
    %v7938 = vpack.c.b16 %v6394, %v6386
    %v7939 = vpack.c.b16 %v6395, %v6387
    %v7940 = vpack.c.b16 %v6396, %v6388
    %v7941 = vpack.c.b16 %v6397, %v6389
    %v7942 = vpack.c.b16 %v6398, %v6390
    %v7943 = vpack.c.b16 %v6399, %v6391
    %v7944 = vpack.c.b16 %v6408, %v6400
    %v7945 = vpack.c.b16 %v6409, %v6401
    %v7946 = vpack.c.b16 %v6410, %v6402
    %v7947 = vpack.c.b16 %v6411, %v6403
    %v7948 = vpack.c.b16 %v6412, %v6404
    %v7949 = vpack.c.b16 %v6413, %v6405
    %v7950 = vpack.c.b16 %v6414, %v6406
    %v7951 = vpack.c.b16 %v6415, %v6407
    %9488 = vmatprep.subr.bf16.mxu0 %v6473
    %9489 = vmatpush1.bf16.msra.mxu0 %v6472
    %9490 = vmatprep.subr.bf16.mxu0 %v6465
    %9491 = vmatpush1.bf16.msra.mxu0 %v6464
    %9492 = vmatprep.subr.bf16.mxu0 %v6457
    %9493 = vmatpush1.bf16.msra.mxu0 %v6456
    %9494 = vmatprep.subr.bf16.mxu0 %v6449
    %9495 = vmatpush1.bf16.msra.mxu0 %v6448
    %9496 = vmatprep.subr.bf16.mxu0 %v6441
    %9497 = vmatpush1.bf16.msra.mxu0 %v6440
    %9498 = vmatprep.subr.bf16.mxu0 %v6433
    %9499 = vmatpush1.bf16.msra.mxu0 %v6432
    %9500 = vmatprep.subr.bf16.mxu0 %v6425
    %9501 = vmatpush1.bf16.msra.mxu0 %v6424
    %9502 = vmatprep.subr.bf16.mxu0 %v6417
    %9503 = vmatpush1.bf16.msra.mxu0 %v6416
    %9504 = vmatprep.subr.bf16.mxu0 %v6537
    %9505 = vmatpush2.bf16.msra.mxu0 %v6536
    %9506 = vmatprep.subr.bf16.mxu0 %v6529
    %9507 = vmatpush2.bf16.msra.mxu0 %v6528
    %9508 = vmatprep.subr.bf16.mxu0 %v6521
    %9509 = vmatpush2.bf16.msra.mxu0 %v6520
    %9510 = vmatprep.subr.bf16.mxu0 %v6513
    %9511 = vmatpush2.bf16.msra.mxu0 %v6512
    %9512 = vmatprep.subr.bf16.mxu0 %v6505
    %9513 = vmatpush2.bf16.msra.mxu0 %v6504
    %9514 = vmatprep.subr.bf16.mxu0 %v6497
    %9515 = vmatpush2.bf16.msra.mxu0 %v6496
    %9516 = vmatprep.subr.bf16.mxu0 %v6489
    %9517 = vmatpush2.bf16.msra.mxu0 %v6488
    %9518 = vmatprep.subr.bf16.mxu0 %v6481
    %9519 = vmatpush2.bf16.msra.mxu0 %v6480
    %9520 = vmatprep.mubr.bf16.mxu0 %v1761
    %9521 = vmatmul.mubr.bf16.gmra.mxu0 %v1760
    %v9522 = vpop.f32.mrf.mxu0
    %v9523 = vadd.f32 %v1687, %v9522
    %v9524 = vpop.f32.mrf.mxu0
    %v9525 = vadd.f32 %v1691, %v9524
    %v9526 = vpop.f32.mrf.mxu0
    %v9527 = vpop.f32.mrf.mxu0
    %9528 = vdwg.mxu0
    %9529 = vmatprep.subr.bf16.mxu0 %v6601
    %9530 = vmatpush1.bf16.msra.mxu0 %v6600
    %9531 = vmatprep.subr.bf16.mxu0 %v6593
    %9532 = vmatpush1.bf16.msra.mxu0 %v6592
    %9533 = vmatprep.subr.bf16.mxu0 %v6585
    %9534 = vmatpush1.bf16.msra.mxu0 %v6584
    %9535 = vmatprep.subr.bf16.mxu0 %v6577
    %9536 = vmatpush1.bf16.msra.mxu0 %v6576
    %9537 = vmatprep.subr.bf16.mxu0 %v6569
    %9538 = vmatpush1.bf16.msra.mxu0 %v6568
    %9539 = vmatprep.subr.bf16.mxu0 %v6561
    %9540 = vmatpush1.bf16.msra.mxu0 %v6560
    %9541 = vmatprep.subr.bf16.mxu0 %v6553
    %9542 = vmatpush1.bf16.msra.mxu0 %v6552
    %9543 = vmatprep.subr.bf16.mxu0 %v6545
    %9544 = vmatpush1.bf16.msra.mxu0 %v6544
    %9545 = vmatprep.subr.bf16.mxu0 %v6665
    %9546 = vmatpush2.bf16.msra.mxu0 %v6664
    %9547 = vmatprep.subr.bf16.mxu0 %v6657
    %9548 = vmatpush2.bf16.msra.mxu0 %v6656
    %9549 = vmatprep.subr.bf16.mxu0 %v6649
    %9550 = vmatpush2.bf16.msra.mxu0 %v6648
    %9551 = vmatprep.subr.bf16.mxu0 %v6641
    %9552 = vmatpush2.bf16.msra.mxu0 %v6640
    %9553 = vmatprep.subr.bf16.mxu0 %v6633
    %9554 = vmatpush2.bf16.msra.mxu0 %v6632
    %9555 = vmatprep.subr.bf16.mxu0 %v6625
    %9556 = vmatpush2.bf16.msra.mxu0 %v6624
    %9557 = vmatprep.subr.bf16.mxu0 %v6617
    %9558 = vmatpush2.bf16.msra.mxu0 %v6616
    %9559 = vmatprep.subr.bf16.mxu0 %v6609
    %9560 = vmatpush2.bf16.msra.mxu0 %v6608
    %9561 = vmatprep.mubr.bf16.mxu0 %v1763
    %9562 = vmatmul.mubr.bf16.gmra.mxu0 %v1762
    %v9563 = vpop.f32.mrf.mxu0
    %v9564 = vadd.f32 %v9523, %v9563
    %v9565 = vpop.f32.mrf.mxu0
    %v9566 = vadd.f32 %v9525, %v9565
    %v9567 = vpop.f32.mrf.mxu0
    %v9568 = vpop.f32.mrf.mxu0
    %9569 = vdwg.mxu0
    %9570 = vmatprep.subr.bf16.mxu0 %v6729
    %9571 = vmatpush1.bf16.msra.mxu0 %v6728
    %9572 = vmatprep.subr.bf16.mxu0 %v6721
    %9573 = vmatpush1.bf16.msra.mxu0 %v6720
    %9574 = vmatprep.subr.bf16.mxu0 %v6713
    %9575 = vmatpush1.bf16.msra.mxu0 %v6712
    %9576 = vmatprep.subr.bf16.mxu0 %v6705
    %9577 = vmatpush1.bf16.msra.mxu0 %v6704
    %9578 = vmatprep.subr.bf16.mxu0 %v6697
    %9579 = vmatpush1.bf16.msra.mxu0 %v6696
    %9580 = vmatprep.subr.bf16.mxu0 %v6689
    %9581 = vmatpush1.bf16.msra.mxu0 %v6688
    %9582 = vmatprep.subr.bf16.mxu0 %v6681
    %9583 = vmatpush1.bf16.msra.mxu0 %v6680
    %9584 = vmatprep.subr.bf16.mxu0 %v6673
    %9585 = vmatpush1.bf16.msra.mxu0 %v6672
    %9586 = vmatprep.subr.bf16.mxu0 %v6793
    %9587 = vmatpush2.bf16.msra.mxu0 %v6792
    %9588 = vmatprep.subr.bf16.mxu0 %v6785
    %9589 = vmatpush2.bf16.msra.mxu0 %v6784
    %9590 = vmatprep.subr.bf16.mxu0 %v6777
    %9591 = vmatpush2.bf16.msra.mxu0 %v6776
    %9592 = vmatprep.subr.bf16.mxu0 %v6769
    %9593 = vmatpush2.bf16.msra.mxu0 %v6768
    %9594 = vmatprep.subr.bf16.mxu0 %v6761
    %9595 = vmatpush2.bf16.msra.mxu0 %v6760
    %9596 = vmatprep.subr.bf16.mxu0 %v6753
    %9597 = vmatpush2.bf16.msra.mxu0 %v6752
    %9598 = vmatprep.subr.bf16.mxu0 %v6745
    %9599 = vmatpush2.bf16.msra.mxu0 %v6744
    %9600 = vmatprep.subr.bf16.mxu0 %v6737
    %9601 = vmatpush2.bf16.msra.mxu0 %v6736
    %9602 = vmatprep.mubr.bf16.mxu0 %v1765
    %9603 = vmatmul.mubr.bf16.gmra.mxu0 %v1764
    %v9604 = vpop.f32.mrf.mxu0
    %v9605 = vadd.f32 %v9564, %v9604
    %v9606 = vpop.f32.mrf.mxu0
    %v9607 = vadd.f32 %v9566, %v9606
    %v9608 = vpop.f32.mrf.mxu0
    %v9609 = vpop.f32.mrf.mxu0
    %9610 = vdwg.mxu0
    %9611 = vmatprep.subr.bf16.mxu0 %v6857
    %9612 = vmatpush1.bf16.msra.mxu0 %v6856
    %9613 = vmatprep.subr.bf16.mxu0 %v6849
    %9614 = vmatpush1.bf16.msra.mxu0 %v6848
    %9615 = vmatprep.subr.bf16.mxu0 %v6841
    %9616 = vmatpush1.bf16.msra.mxu0 %v6840
    %9617 = vmatprep.subr.bf16.mxu0 %v6833
    %9618 = vmatpush1.bf16.msra.mxu0 %v6832
    %9619 = vmatprep.subr.bf16.mxu0 %v6825
    %9620 = vmatpush1.bf16.msra.mxu0 %v6824
    %9621 = vmatprep.subr.bf16.mxu0 %v6817
    %9622 = vmatpush1.bf16.msra.mxu0 %v6816
    %9623 = vmatprep.subr.bf16.mxu0 %v6809
    %9624 = vmatpush1.bf16.msra.mxu0 %v6808
    %9625 = vmatprep.subr.bf16.mxu0 %v6801
    %9626 = vmatpush1.bf16.msra.mxu0 %v6800
    %9627 = vmatprep.subr.bf16.mxu0 %v6921
    %9628 = vmatpush2.bf16.msra.mxu0 %v6920
    %9629 = vmatprep.subr.bf16.mxu0 %v6913
    %9630 = vmatpush2.bf16.msra.mxu0 %v6912
    %9631 = vmatprep.subr.bf16.mxu0 %v6905
    %9632 = vmatpush2.bf16.msra.mxu0 %v6904
    %9633 = vmatprep.subr.bf16.mxu0 %v6897
    %9634 = vmatpush2.bf16.msra.mxu0 %v6896
    %9635 = vmatprep.subr.bf16.mxu0 %v6889
    %9636 = vmatpush2.bf16.msra.mxu0 %v6888
    %9637 = vmatprep.subr.bf16.mxu0 %v6881
    %9638 = vmatpush2.bf16.msra.mxu0 %v6880
    %9639 = vmatprep.subr.bf16.mxu0 %v6873
    %9640 = vmatpush2.bf16.msra.mxu0 %v6872
    %9641 = vmatprep.subr.bf16.mxu0 %v6865
    %9642 = vmatpush2.bf16.msra.mxu0 %v6864
    %9643 = vmatprep.mubr.bf16.mxu0 %v1767
    %9644 = vmatmul.mubr.bf16.gmra.mxu0 %v1766
    %v9645 = vpop.f32.mrf.mxu0
    %v9646 = vadd.f32 %v9605, %v9645
    %v9647 = vpop.f32.mrf.mxu0
    %v9648 = vadd.f32 %v9607, %v9647
    %v9649 = vpop.f32.mrf.mxu0
    %v9650 = vpop.f32.mrf.mxu0
    %9651 = vdwg.mxu0
    %9652 = vmatprep.subr.bf16.mxu0 %v6985
    %9653 = vmatpush1.bf16.msra.mxu0 %v6984
    %9654 = vmatprep.subr.bf16.mxu0 %v6977
    %9655 = vmatpush1.bf16.msra.mxu0 %v6976
    %9656 = vmatprep.subr.bf16.mxu0 %v6969
    %9657 = vmatpush1.bf16.msra.mxu0 %v6968
    %9658 = vmatprep.subr.bf16.mxu0 %v6961
    %9659 = vmatpush1.bf16.msra.mxu0 %v6960
    %9660 = vmatprep.subr.bf16.mxu0 %v6953
    %9661 = vmatpush1.bf16.msra.mxu0 %v6952
    %9662 = vmatprep.subr.bf16.mxu0 %v6945
    %9663 = vmatpush1.bf16.msra.mxu0 %v6944
    %9664 = vmatprep.subr.bf16.mxu0 %v6937
    %9665 = vmatpush1.bf16.msra.mxu0 %v6936
    %9666 = vmatprep.subr.bf16.mxu0 %v6929
    %9667 = vmatpush1.bf16.msra.mxu0 %v6928
    %9668 = vmatprep.subr.bf16.mxu0 %v7049
    %9669 = vmatpush2.bf16.msra.mxu0 %v7048
    %9670 = vmatprep.subr.bf16.mxu0 %v7041
    %9671 = vmatpush2.bf16.msra.mxu0 %v7040
    %9672 = vmatprep.subr.bf16.mxu0 %v7033
    %9673 = vmatpush2.bf16.msra.mxu0 %v7032
    %9674 = vmatprep.subr.bf16.mxu0 %v7025
    %9675 = vmatpush2.bf16.msra.mxu0 %v7024
    %9676 = vmatprep.subr.bf16.mxu0 %v7017
    %9677 = vmatpush2.bf16.msra.mxu0 %v7016
    %9678 = vmatprep.subr.bf16.mxu0 %v7009
    %9679 = vmatpush2.bf16.msra.mxu0 %v7008
    %9680 = vmatprep.subr.bf16.mxu0 %v7001
    %9681 = vmatpush2.bf16.msra.mxu0 %v7000
    %9682 = vmatprep.subr.bf16.mxu0 %v6993
    %9683 = vmatpush2.bf16.msra.mxu0 %v6992
    %9684 = vmatprep.mubr.bf16.mxu0 %v1769
    %9685 = vmatmul.mubr.bf16.gmra.mxu0 %v1768
    %v9686 = vpop.f32.mrf.mxu0
    %v9687 = vadd.f32 %v9646, %v9686
    %v9688 = vpop.f32.mrf.mxu0
    %v9689 = vadd.f32 %v9648, %v9688
    %v9690 = vpop.f32.mrf.mxu0
    %v9691 = vpop.f32.mrf.mxu0
    %9692 = vdwg.mxu0
    %9693 = vmatprep.subr.bf16.mxu0 %v7113
    %9694 = vmatpush1.bf16.msra.mxu0 %v7112
    %9695 = vmatprep.subr.bf16.mxu0 %v7105
    %9696 = vmatpush1.bf16.msra.mxu0 %v7104
    %9697 = vmatprep.subr.bf16.mxu0 %v7097
    %9698 = vmatpush1.bf16.msra.mxu0 %v7096
    %9699 = vmatprep.subr.bf16.mxu0 %v7089
    %9700 = vmatpush1.bf16.msra.mxu0 %v7088
    %9701 = vmatprep.subr.bf16.mxu0 %v7081
    %9702 = vmatpush1.bf16.msra.mxu0 %v7080
    %9703 = vmatprep.subr.bf16.mxu0 %v7073
    %9704 = vmatpush1.bf16.msra.mxu0 %v7072
    %9705 = vmatprep.subr.bf16.mxu0 %v7065
    %9706 = vmatpush1.bf16.msra.mxu0 %v7064
    %9707 = vmatprep.subr.bf16.mxu0 %v7057
    %9708 = vmatpush1.bf16.msra.mxu0 %v7056
    %9709 = vmatprep.subr.bf16.mxu0 %v7177
    %9710 = vmatpush2.bf16.msra.mxu0 %v7176
    %9711 = vmatprep.subr.bf16.mxu0 %v7169
    %9712 = vmatpush2.bf16.msra.mxu0 %v7168
    %9713 = vmatprep.subr.bf16.mxu0 %v7161
    %9714 = vmatpush2.bf16.msra.mxu0 %v7160
    %9715 = vmatprep.subr.bf16.mxu0 %v7153
    %9716 = vmatpush2.bf16.msra.mxu0 %v7152
    %9717 = vmatprep.subr.bf16.mxu0 %v7145
    %9718 = vmatpush2.bf16.msra.mxu0 %v7144
    %9719 = vmatprep.subr.bf16.mxu0 %v7137
    %9720 = vmatpush2.bf16.msra.mxu0 %v7136
    %9721 = vmatprep.subr.bf16.mxu0 %v7129
    %9722 = vmatpush2.bf16.msra.mxu0 %v7128
    %9723 = vmatprep.subr.bf16.mxu0 %v7121
    %9724 = vmatpush2.bf16.msra.mxu0 %v7120
    %9725 = vmatprep.mubr.bf16.mxu0 %v1771
    %9726 = vmatmul.mubr.bf16.gmra.mxu0 %v1770
    %v9727 = vpop.f32.mrf.mxu0
    %v9728 = vadd.f32 %v9687, %v9727
    %v9729 = vpop.f32.mrf.mxu0
    %v9730 = vadd.f32 %v9689, %v9729
    %v9731 = vpop.f32.mrf.mxu0
    %v9732 = vpop.f32.mrf.mxu0
    %9733 = vdwg.mxu0
    %9734 = vmatprep.subr.bf16.mxu0 %v7241
    %9735 = vmatpush1.bf16.msra.mxu0 %v7240
    %9736 = vmatprep.subr.bf16.mxu0 %v7233
    %9737 = vmatpush1.bf16.msra.mxu0 %v7232
    %9738 = vmatprep.subr.bf16.mxu0 %v7225
    %9739 = vmatpush1.bf16.msra.mxu0 %v7224
    %9740 = vmatprep.subr.bf16.mxu0 %v7217
    %9741 = vmatpush1.bf16.msra.mxu0 %v7216
    %9742 = vmatprep.subr.bf16.mxu0 %v7209
    %9743 = vmatpush1.bf16.msra.mxu0 %v7208
    %9744 = vmatprep.subr.bf16.mxu0 %v7201
    %9745 = vmatpush1.bf16.msra.mxu0 %v7200
    %9746 = vmatprep.subr.bf16.mxu0 %v7193
    %9747 = vmatpush1.bf16.msra.mxu0 %v7192
    %9748 = vmatprep.subr.bf16.mxu0 %v7185
    %9749 = vmatpush1.bf16.msra.mxu0 %v7184
    %9750 = vmatprep.subr.bf16.mxu0 %v7305
    %9751 = vmatpush2.bf16.msra.mxu0 %v7304
    %9752 = vmatprep.subr.bf16.mxu0 %v7297
    %9753 = vmatpush2.bf16.msra.mxu0 %v7296
    %9754 = vmatprep.subr.bf16.mxu0 %v7289
    %9755 = vmatpush2.bf16.msra.mxu0 %v7288
    %9756 = vmatprep.subr.bf16.mxu0 %v7281
    %9757 = vmatpush2.bf16.msra.mxu0 %v7280
    %9758 = vmatprep.subr.bf16.mxu0 %v7273
    %9759 = vmatpush2.bf16.msra.mxu0 %v7272
    %9760 = vmatprep.subr.bf16.mxu0 %v7265
    %9761 = vmatpush2.bf16.msra.mxu0 %v7264
    %9762 = vmatprep.subr.bf16.mxu0 %v7257
    %9763 = vmatpush2.bf16.msra.mxu0 %v7256
    %9764 = vmatprep.subr.bf16.mxu0 %v7249
    %9765 = vmatpush2.bf16.msra.mxu0 %v7248
    %9766 = vmatprep.mubr.bf16.mxu0 %v1773
    %9767 = vmatmul.mubr.bf16.gmra.mxu0 %v1772
    %v9768 = vpop.f32.mrf.mxu0
    %v9769 = vadd.f32 %v9728, %v9768
    %v9770 = vpop.f32.mrf.mxu0
    %v9771 = vadd.f32 %v9730, %v9770
    %v9772 = vpop.f32.mrf.mxu0
    %v9773 = vpop.f32.mrf.mxu0
    %9774 = vdwg.mxu0
    %9775 = vmatprep.subr.bf16.mxu0 %v7369
    %9776 = vmatpush1.bf16.msra.mxu0 %v7368
    %9777 = vmatprep.subr.bf16.mxu0 %v7361
    %9778 = vmatpush1.bf16.msra.mxu0 %v7360
    %9779 = vmatprep.subr.bf16.mxu0 %v7353
    %9780 = vmatpush1.bf16.msra.mxu0 %v7352
    %9781 = vmatprep.subr.bf16.mxu0 %v7345
    %9782 = vmatpush1.bf16.msra.mxu0 %v7344
    %9783 = vmatprep.subr.bf16.mxu0 %v7337
    %9784 = vmatpush1.bf16.msra.mxu0 %v7336
    %9785 = vmatprep.subr.bf16.mxu0 %v7329
    %9786 = vmatpush1.bf16.msra.mxu0 %v7328
    %9787 = vmatprep.subr.bf16.mxu0 %v7321
    %9788 = vmatpush1.bf16.msra.mxu0 %v7320
    %9789 = vmatprep.subr.bf16.mxu0 %v7313
    %9790 = vmatpush1.bf16.msra.mxu0 %v7312
    %9791 = vmatprep.subr.bf16.mxu0 %v7433
    %9792 = vmatpush2.bf16.msra.mxu0 %v7432
    %9793 = vmatprep.subr.bf16.mxu0 %v7425
    %9794 = vmatpush2.bf16.msra.mxu0 %v7424
    %9795 = vmatprep.subr.bf16.mxu0 %v7417
    %9796 = vmatpush2.bf16.msra.mxu0 %v7416
    %9797 = vmatprep.subr.bf16.mxu0 %v7409
    %9798 = vmatpush2.bf16.msra.mxu0 %v7408
    %9799 = vmatprep.subr.bf16.mxu0 %v7401
    %9800 = vmatpush2.bf16.msra.mxu0 %v7400
    %9801 = vmatprep.subr.bf16.mxu0 %v7393
    %9802 = vmatpush2.bf16.msra.mxu0 %v7392
    %9803 = vmatprep.subr.bf16.mxu0 %v7385
    %9804 = vmatpush2.bf16.msra.mxu0 %v7384
    %9805 = vmatprep.subr.bf16.mxu0 %v7377
    %9806 = vmatpush2.bf16.msra.mxu0 %v7376
    %9807 = vmatprep.mubr.bf16.mxu0 %v1775
    %9808 = vmatmul.mubr.bf16.gmra.mxu0 %v1774
    %v9809 = vpop.f32.mrf.mxu0
    %v9810 = vadd.f32 %v9769, %v9809
    %v9811 = vpop.f32.mrf.mxu0
    %v9812 = vadd.f32 %v9771, %v9811
    %v9813 = vpop.f32.mrf.mxu0
    %v9814 = vpop.f32.mrf.mxu0
    %9815 = vdwg.mxu0
    %9816 = vmatprep.subr.bf16.mxu0 %v7497
    %9817 = vmatpush1.bf16.msra.mxu0 %v7496
    %9818 = vmatprep.subr.bf16.mxu0 %v7489
    %9819 = vmatpush1.bf16.msra.mxu0 %v7488
    %9820 = vmatprep.subr.bf16.mxu0 %v7481
    %9821 = vmatpush1.bf16.msra.mxu0 %v7480
    %9822 = vmatprep.subr.bf16.mxu0 %v7473
    %9823 = vmatpush1.bf16.msra.mxu0 %v7472
    %9824 = vmatprep.subr.bf16.mxu0 %v7465
    %9825 = vmatpush1.bf16.msra.mxu0 %v7464
    %9826 = vmatprep.subr.bf16.mxu0 %v7457
    %9827 = vmatpush1.bf16.msra.mxu0 %v7456
    %9828 = vmatprep.subr.bf16.mxu0 %v7449
    %9829 = vmatpush1.bf16.msra.mxu0 %v7448
    %9830 = vmatprep.subr.bf16.mxu0 %v7441
    %9831 = vmatpush1.bf16.msra.mxu0 %v7440
    %9832 = vmatprep.subr.bf16.mxu0 %v7561
    %9833 = vmatpush2.bf16.msra.mxu0 %v7560
    %9834 = vmatprep.subr.bf16.mxu0 %v7553
    %9835 = vmatpush2.bf16.msra.mxu0 %v7552
    %9836 = vmatprep.subr.bf16.mxu0 %v7545
    %9837 = vmatpush2.bf16.msra.mxu0 %v7544
    %9838 = vmatprep.subr.bf16.mxu0 %v7537
    %9839 = vmatpush2.bf16.msra.mxu0 %v7536
    %9840 = vmatprep.subr.bf16.mxu0 %v7529
    %9841 = vmatpush2.bf16.msra.mxu0 %v7528
    %9842 = vmatprep.subr.bf16.mxu0 %v7521
    %9843 = vmatpush2.bf16.msra.mxu0 %v7520
    %9844 = vmatprep.subr.bf16.mxu0 %v7513
    %9845 = vmatpush2.bf16.msra.mxu0 %v7512
    %9846 = vmatprep.subr.bf16.mxu0 %v7505
    %9847 = vmatpush2.bf16.msra.mxu0 %v7504
    %9848 = vmatprep.mubr.bf16.mxu0 %v1777
    %9849 = vmatmul.mubr.bf16.gmra.mxu0 %v1776
    %v9850 = vpop.f32.mrf.mxu0
    %v9851 = vadd.f32 %v9810, %v9850
    %v9852 = vpop.f32.mrf.mxu0
    %v9853 = vadd.f32 %v9812, %v9852
    %v9854 = vpop.f32.mrf.mxu0
    %v9855 = vpop.f32.mrf.mxu0
    %9856 = vdwg.mxu0
    %9857 = vmatprep.subr.bf16.mxu0 %v7625
    %9858 = vmatpush1.bf16.msra.mxu0 %v7624
    %9859 = vmatprep.subr.bf16.mxu0 %v7617
    %9860 = vmatpush1.bf16.msra.mxu0 %v7616
    %9861 = vmatprep.subr.bf16.mxu0 %v7609
    %9862 = vmatpush1.bf16.msra.mxu0 %v7608
    %9863 = vmatprep.subr.bf16.mxu0 %v7601
    %9864 = vmatpush1.bf16.msra.mxu0 %v7600
    %9865 = vmatprep.subr.bf16.mxu0 %v7593
    %9866 = vmatpush1.bf16.msra.mxu0 %v7592
    %9867 = vmatprep.subr.bf16.mxu0 %v7585
    %9868 = vmatpush1.bf16.msra.mxu0 %v7584
    %9869 = vmatprep.subr.bf16.mxu0 %v7577
    %9870 = vmatpush1.bf16.msra.mxu0 %v7576
    %9871 = vmatprep.subr.bf16.mxu0 %v7569
    %9872 = vmatpush1.bf16.msra.mxu0 %v7568
    %9873 = vmatprep.subr.bf16.mxu0 %v7689
    %9874 = vmatpush2.bf16.msra.mxu0 %v7688
    %9875 = vmatprep.subr.bf16.mxu0 %v7681
    %9876 = vmatpush2.bf16.msra.mxu0 %v7680
    %9877 = vmatprep.subr.bf16.mxu0 %v7673
    %9878 = vmatpush2.bf16.msra.mxu0 %v7672
    %9879 = vmatprep.subr.bf16.mxu0 %v7665
    %9880 = vmatpush2.bf16.msra.mxu0 %v7664
    %9881 = vmatprep.subr.bf16.mxu0 %v7657
    %9882 = vmatpush2.bf16.msra.mxu0 %v7656
    %9883 = vmatprep.subr.bf16.mxu0 %v7649
    %9884 = vmatpush2.bf16.msra.mxu0 %v7648
    %9885 = vmatprep.subr.bf16.mxu0 %v7641
    %9886 = vmatpush2.bf16.msra.mxu0 %v7640
    %9887 = vmatprep.subr.bf16.mxu0 %v7633
    %9888 = vmatpush2.bf16.msra.mxu0 %v7632
    %9889 = vmatprep.mubr.bf16.mxu0 %v1779
    %9890 = vmatmul.mubr.bf16.gmra.mxu0 %v1778
    %v9891 = vpop.f32.mrf.mxu0
    %v9892 = vadd.f32 %v9851, %v9891
    %v9893 = vpop.f32.mrf.mxu0
    %v9894 = vadd.f32 %v9853, %v9893
    %v9895 = vpop.f32.mrf.mxu0
    %v9896 = vpop.f32.mrf.mxu0
    %9897 = vdwg.mxu0
    %9898 = vmatprep.subr.bf16.mxu0 %v7753
    %9899 = vmatpush1.bf16.msra.mxu0 %v7752
    %9900 = vmatprep.subr.bf16.mxu0 %v7745
    %9901 = vmatpush1.bf16.msra.mxu0 %v7744
    %9902 = vmatprep.subr.bf16.mxu0 %v7737
    %9903 = vmatpush1.bf16.msra.mxu0 %v7736
    %9904 = vmatprep.subr.bf16.mxu0 %v7729
    %9905 = vmatpush1.bf16.msra.mxu0 %v7728
    %9906 = vmatprep.subr.bf16.mxu0 %v7721
    %9907 = vmatpush1.bf16.msra.mxu0 %v7720
    %9908 = vmatprep.subr.bf16.mxu0 %v7713
    %9909 = vmatpush1.bf16.msra.mxu0 %v7712
    %9910 = vmatprep.subr.bf16.mxu0 %v7705
    %9911 = vmatpush1.bf16.msra.mxu0 %v7704
    %9912 = vmatprep.subr.bf16.mxu0 %v7697
    %9913 = vmatpush1.bf16.msra.mxu0 %v7696
    %9914 = vmatprep.subr.bf16.mxu0 %v7817
    %9915 = vmatpush2.bf16.msra.mxu0 %v7816
    %9916 = vmatprep.subr.bf16.mxu0 %v7809
    %9917 = vmatpush2.bf16.msra.mxu0 %v7808
    %9918 = vmatprep.subr.bf16.mxu0 %v7801
    %9919 = vmatpush2.bf16.msra.mxu0 %v7800
    %9920 = vmatprep.subr.bf16.mxu0 %v7793
    %9921 = vmatpush2.bf16.msra.mxu0 %v7792
    %9922 = vmatprep.subr.bf16.mxu0 %v7785
    %9923 = vmatpush2.bf16.msra.mxu0 %v7784
    %9924 = vmatprep.subr.bf16.mxu0 %v7777
    %9925 = vmatpush2.bf16.msra.mxu0 %v7776
    %9926 = vmatprep.subr.bf16.mxu0 %v7769
    %9927 = vmatpush2.bf16.msra.mxu0 %v7768
    %9928 = vmatprep.subr.bf16.mxu0 %v7761
    %9929 = vmatpush2.bf16.msra.mxu0 %v7760
    %9930 = vmatprep.mubr.bf16.mxu0 %v1781
    %9931 = vmatmul.mubr.bf16.gmra.mxu0 %v1780
    %v9932 = vpop.f32.mrf.mxu0
    %v9933 = vadd.f32 %v9892, %v9932
    %v9934 = vpop.f32.mrf.mxu0
    %v9935 = vadd.f32 %v9894, %v9934
    %v9936 = vpop.f32.mrf.mxu0
    %v9937 = vpop.f32.mrf.mxu0
    %9938 = vdwg.mxu0
    %9939 = vmatprep.subr.bf16.mxu0 %v7881
    %9940 = vmatpush1.bf16.msra.mxu0 %v7880
    %9941 = vmatprep.subr.bf16.mxu0 %v7873
    %9942 = vmatpush1.bf16.msra.mxu0 %v7872
    %9943 = vmatprep.subr.bf16.mxu0 %v7865
    %9944 = vmatpush1.bf16.msra.mxu0 %v7864
    %9945 = vmatprep.subr.bf16.mxu0 %v7857
    %9946 = vmatpush1.bf16.msra.mxu0 %v7856
    %9947 = vmatprep.subr.bf16.mxu0 %v7849
    %9948 = vmatpush1.bf16.msra.mxu0 %v7848
    %9949 = vmatprep.subr.bf16.mxu0 %v7841
    %9950 = vmatpush1.bf16.msra.mxu0 %v7840
    %9951 = vmatprep.subr.bf16.mxu0 %v7833
    %9952 = vmatpush1.bf16.msra.mxu0 %v7832
    %9953 = vmatprep.subr.bf16.mxu0 %v7825
    %9954 = vmatpush1.bf16.msra.mxu0 %v7824
    %9955 = vmatprep.subr.bf16.mxu0 %v7945
    %9956 = vmatpush2.bf16.msra.mxu0 %v7944
    %9957 = vmatprep.subr.bf16.mxu0 %v7937
    %9958 = vmatpush2.bf16.msra.mxu0 %v7936
    %9959 = vmatprep.subr.bf16.mxu0 %v7929
    %9960 = vmatpush2.bf16.msra.mxu0 %v7928
    %9961 = vmatprep.subr.bf16.mxu0 %v7921
    %9962 = vmatpush2.bf16.msra.mxu0 %v7920
    %9963 = vmatprep.subr.bf16.mxu0 %v7913
    %9964 = vmatpush2.bf16.msra.mxu0 %v7912
    %9965 = vmatprep.subr.bf16.mxu0 %v7905
    %9966 = vmatpush2.bf16.msra.mxu0 %v7904
    %9967 = vmatprep.subr.bf16.mxu0 %v7897
    %9968 = vmatpush2.bf16.msra.mxu0 %v7896
    %9969 = vmatprep.subr.bf16.mxu0 %v7889
    %9970 = vmatpush2.bf16.msra.mxu0 %v7888
    %9971 = vmatprep.mubr.bf16.mxu0 %v1783
    %9972 = vmatmul.mubr.bf16.gmra.mxu0 %v1782
    %v9973 = vpop.f32.mrf.mxu0
    %v9974 = vadd.f32 %v9933, %v9973
    %v9975 = vpop.f32.mrf.mxu0
    %v9976 = vadd.f32 %v9935, %v9975
    %v9977 = vpop.f32.mrf.mxu0
    %v9978 = vpop.f32.mrf.mxu0
    %9979 = vdwg.mxu0
    %9980 = vmatprep.subr.bf16.mxu0 %v6475
    %9981 = vmatpush1.bf16.msra.mxu0 %v6474
    %9982 = vmatprep.subr.bf16.mxu0 %v6467
    %9983 = vmatpush1.bf16.msra.mxu0 %v6466
    %9984 = vmatprep.subr.bf16.mxu0 %v6459
    %9985 = vmatpush1.bf16.msra.mxu0 %v6458
    %9986 = vmatprep.subr.bf16.mxu0 %v6451
    %9987 = vmatpush1.bf16.msra.mxu0 %v6450
    %9988 = vmatprep.subr.bf16.mxu0 %v6443
    %9989 = vmatpush1.bf16.msra.mxu0 %v6442
    %9990 = vmatprep.subr.bf16.mxu0 %v6435
    %9991 = vmatpush1.bf16.msra.mxu0 %v6434
    %9992 = vmatprep.subr.bf16.mxu0 %v6427
    %9993 = vmatpush1.bf16.msra.mxu0 %v6426
    %9994 = vmatprep.subr.bf16.mxu0 %v6419
    %9995 = vmatpush1.bf16.msra.mxu0 %v6418
    %9996 = vmatprep.subr.bf16.mxu0 %v6539
    %9997 = vmatpush2.bf16.msra.mxu0 %v6538
    %9998 = vmatprep.subr.bf16.mxu0 %v6531
    %9999 = vmatpush2.bf16.msra.mxu0 %v6530
    %10000 = vmatprep.subr.bf16.mxu0 %v6523
    %10001 = vmatpush2.bf16.msra.mxu0 %v6522
    %10002 = vmatprep.subr.bf16.mxu0 %v6515
    %10003 = vmatpush2.bf16.msra.mxu0 %v6514
    %10004 = vmatprep.subr.bf16.mxu0 %v6507
    %10005 = vmatpush2.bf16.msra.mxu0 %v6506
    %10006 = vmatprep.subr.bf16.mxu0 %v6499
    %10007 = vmatpush2.bf16.msra.mxu0 %v6498
    %10008 = vmatprep.subr.bf16.mxu0 %v6491
    %10009 = vmatpush2.bf16.msra.mxu0 %v6490
    %10010 = vmatprep.subr.bf16.mxu0 %v6483
    %10011 = vmatpush2.bf16.msra.mxu0 %v6482
    %10012 = vmatprep.mubr.bf16.mxu0 %v1761
    %10013 = vmatmul.mubr.bf16.gmra.mxu0 %v1760
    %v10014 = vpop.f32.mrf.mxu0
    %v10015 = vadd.f32 %v1695, %v10014
    %v10016 = vpop.f32.mrf.mxu0
    %v10017 = vadd.f32 %v1699, %v10016
    %v10018 = vpop.f32.mrf.mxu0
    %v10019 = vpop.f32.mrf.mxu0
    %10020 = vdwg.mxu0
    %10021 = vmatprep.subr.bf16.mxu0 %v6603
    %10022 = vmatpush1.bf16.msra.mxu0 %v6602
    %10023 = vmatprep.subr.bf16.mxu0 %v6595
    %10024 = vmatpush1.bf16.msra.mxu0 %v6594
    %10025 = vmatprep.subr.bf16.mxu0 %v6587
    %10026 = vmatpush1.bf16.msra.mxu0 %v6586
    %10027 = vmatprep.subr.bf16.mxu0 %v6579
    %10028 = vmatpush1.bf16.msra.mxu0 %v6578
    %10029 = vmatprep.subr.bf16.mxu0 %v6571
    %10030 = vmatpush1.bf16.msra.mxu0 %v6570
    %10031 = vmatprep.subr.bf16.mxu0 %v6563
    %10032 = vmatpush1.bf16.msra.mxu0 %v6562
    %10033 = vmatprep.subr.bf16.mxu0 %v6555
    %10034 = vmatpush1.bf16.msra.mxu0 %v6554
    %10035 = vmatprep.subr.bf16.mxu0 %v6547
    %10036 = vmatpush1.bf16.msra.mxu0 %v6546
    %10037 = vmatprep.subr.bf16.mxu0 %v6667
    %10038 = vmatpush2.bf16.msra.mxu0 %v6666
    %10039 = vmatprep.subr.bf16.mxu0 %v6659
    %10040 = vmatpush2.bf16.msra.mxu0 %v6658
    %10041 = vmatprep.subr.bf16.mxu0 %v6651
    %10042 = vmatpush2.bf16.msra.mxu0 %v6650
    %10043 = vmatprep.subr.bf16.mxu0 %v6643
    %10044 = vmatpush2.bf16.msra.mxu0 %v6642
    %10045 = vmatprep.subr.bf16.mxu0 %v6635
    %10046 = vmatpush2.bf16.msra.mxu0 %v6634
    %10047 = vmatprep.subr.bf16.mxu0 %v6627
    %10048 = vmatpush2.bf16.msra.mxu0 %v6626
    %10049 = vmatprep.subr.bf16.mxu0 %v6619
    %10050 = vmatpush2.bf16.msra.mxu0 %v6618
    %10051 = vmatprep.subr.bf16.mxu0 %v6611
    %10052 = vmatpush2.bf16.msra.mxu0 %v6610
    %10053 = vmatprep.mubr.bf16.mxu0 %v1763
    %10054 = vmatmul.mubr.bf16.gmra.mxu0 %v1762
    %v10055 = vpop.f32.mrf.mxu0
    %v10056 = vadd.f32 %v10015, %v10055
    %v10057 = vpop.f32.mrf.mxu0
    %v10058 = vadd.f32 %v10017, %v10057
    %v10059 = vpop.f32.mrf.mxu0
    %v10060 = vpop.f32.mrf.mxu0
    %10061 = vdwg.mxu0
    %10062 = vmatprep.subr.bf16.mxu0 %v6731
    %10063 = vmatpush1.bf16.msra.mxu0 %v6730
    %10064 = vmatprep.subr.bf16.mxu0 %v6723
    %10065 = vmatpush1.bf16.msra.mxu0 %v6722
    %10066 = vmatprep.subr.bf16.mxu0 %v6715
    %10067 = vmatpush1.bf16.msra.mxu0 %v6714
    %10068 = vmatprep.subr.bf16.mxu0 %v6707
    %10069 = vmatpush1.bf16.msra.mxu0 %v6706
    %10070 = vmatprep.subr.bf16.mxu0 %v6699
    %10071 = vmatpush1.bf16.msra.mxu0 %v6698
    %10072 = vmatprep.subr.bf16.mxu0 %v6691
    %10073 = vmatpush1.bf16.msra.mxu0 %v6690
    %10074 = vmatprep.subr.bf16.mxu0 %v6683
    %10075 = vmatpush1.bf16.msra.mxu0 %v6682
    %10076 = vmatprep.subr.bf16.mxu0 %v6675
    %10077 = vmatpush1.bf16.msra.mxu0 %v6674
    %10078 = vmatprep.subr.bf16.mxu0 %v6795
    %10079 = vmatpush2.bf16.msra.mxu0 %v6794
    %10080 = vmatprep.subr.bf16.mxu0 %v6787
    %10081 = vmatpush2.bf16.msra.mxu0 %v6786
    %10082 = vmatprep.subr.bf16.mxu0 %v6779
    %10083 = vmatpush2.bf16.msra.mxu0 %v6778
    %10084 = vmatprep.subr.bf16.mxu0 %v6771
    %10085 = vmatpush2.bf16.msra.mxu0 %v6770
    %10086 = vmatprep.subr.bf16.mxu0 %v6763
    %10087 = vmatpush2.bf16.msra.mxu0 %v6762
    %10088 = vmatprep.subr.bf16.mxu0 %v6755
    %10089 = vmatpush2.bf16.msra.mxu0 %v6754
    %10090 = vmatprep.subr.bf16.mxu0 %v6747
    %10091 = vmatpush2.bf16.msra.mxu0 %v6746
    %10092 = vmatprep.subr.bf16.mxu0 %v6739
    %10093 = vmatpush2.bf16.msra.mxu0 %v6738
    %10094 = vmatprep.mubr.bf16.mxu0 %v1765
    %10095 = vmatmul.mubr.bf16.gmra.mxu0 %v1764
    %v10096 = vpop.f32.mrf.mxu0
    %v10097 = vadd.f32 %v10056, %v10096
    %v10098 = vpop.f32.mrf.mxu0
    %v10099 = vadd.f32 %v10058, %v10098
    %v10100 = vpop.f32.mrf.mxu0
    %v10101 = vpop.f32.mrf.mxu0
    %10102 = vdwg.mxu0
    %10103 = vmatprep.subr.bf16.mxu0 %v6859
    %10104 = vmatpush1.bf16.msra.mxu0 %v6858
    %10105 = vmatprep.subr.bf16.mxu0 %v6851
    %10106 = vmatpush1.bf16.msra.mxu0 %v6850
    %10107 = vmatprep.subr.bf16.mxu0 %v6843
    %10108 = vmatpush1.bf16.msra.mxu0 %v6842
    %10109 = vmatprep.subr.bf16.mxu0 %v6835
    %10110 = vmatpush1.bf16.msra.mxu0 %v6834
    %10111 = vmatprep.subr.bf16.mxu0 %v6827
    %10112 = vmatpush1.bf16.msra.mxu0 %v6826
    %10113 = vmatprep.subr.bf16.mxu0 %v6819
    %10114 = vmatpush1.bf16.msra.mxu0 %v6818
    %10115 = vmatprep.subr.bf16.mxu0 %v6811
    %10116 = vmatpush1.bf16.msra.mxu0 %v6810
    %10117 = vmatprep.subr.bf16.mxu0 %v6803
    %10118 = vmatpush1.bf16.msra.mxu0 %v6802
    %10119 = vmatprep.subr.bf16.mxu0 %v6923
    %10120 = vmatpush2.bf16.msra.mxu0 %v6922
    %10121 = vmatprep.subr.bf16.mxu0 %v6915
    %10122 = vmatpush2.bf16.msra.mxu0 %v6914
    %10123 = vmatprep.subr.bf16.mxu0 %v6907
    %10124 = vmatpush2.bf16.msra.mxu0 %v6906
    %10125 = vmatprep.subr.bf16.mxu0 %v6899
    %10126 = vmatpush2.bf16.msra.mxu0 %v6898
    %10127 = vmatprep.subr.bf16.mxu0 %v6891
    %10128 = vmatpush2.bf16.msra.mxu0 %v6890
    %10129 = vmatprep.subr.bf16.mxu0 %v6883
    %10130 = vmatpush2.bf16.msra.mxu0 %v6882
    %10131 = vmatprep.subr.bf16.mxu0 %v6875
    %10132 = vmatpush2.bf16.msra.mxu0 %v6874
    %10133 = vmatprep.subr.bf16.mxu0 %v6867
    %10134 = vmatpush2.bf16.msra.mxu0 %v6866
    %10135 = vmatprep.mubr.bf16.mxu0 %v1767
    %10136 = vmatmul.mubr.bf16.gmra.mxu0 %v1766
    %v10137 = vpop.f32.mrf.mxu0
    %v10138 = vadd.f32 %v10097, %v10137
    %v10139 = vpop.f32.mrf.mxu0
    %v10140 = vadd.f32 %v10099, %v10139
    %v10141 = vpop.f32.mrf.mxu0
    %v10142 = vpop.f32.mrf.mxu0
    %10143 = vdwg.mxu0
    %10144 = vmatprep.subr.bf16.mxu0 %v6987
    %10145 = vmatpush1.bf16.msra.mxu0 %v6986
    %10146 = vmatprep.subr.bf16.mxu0 %v6979
    %10147 = vmatpush1.bf16.msra.mxu0 %v6978
    %10148 = vmatprep.subr.bf16.mxu0 %v6971
    %10149 = vmatpush1.bf16.msra.mxu0 %v6970
    %10150 = vmatprep.subr.bf16.mxu0 %v6963
    %10151 = vmatpush1.bf16.msra.mxu0 %v6962
    %10152 = vmatprep.subr.bf16.mxu0 %v6955
    %10153 = vmatpush1.bf16.msra.mxu0 %v6954
    %10154 = vmatprep.subr.bf16.mxu0 %v6947
    %10155 = vmatpush1.bf16.msra.mxu0 %v6946
    %10156 = vmatprep.subr.bf16.mxu0 %v6939
    %10157 = vmatpush1.bf16.msra.mxu0 %v6938
    %10158 = vmatprep.subr.bf16.mxu0 %v6931
    %10159 = vmatpush1.bf16.msra.mxu0 %v6930
    %10160 = vmatprep.subr.bf16.mxu0 %v7051
    %10161 = vmatpush2.bf16.msra.mxu0 %v7050
    %10162 = vmatprep.subr.bf16.mxu0 %v7043
    %10163 = vmatpush2.bf16.msra.mxu0 %v7042
    %10164 = vmatprep.subr.bf16.mxu0 %v7035
    %10165 = vmatpush2.bf16.msra.mxu0 %v7034
    %10166 = vmatprep.subr.bf16.mxu0 %v7027
    %10167 = vmatpush2.bf16.msra.mxu0 %v7026
    %10168 = vmatprep.subr.bf16.mxu0 %v7019
    %10169 = vmatpush2.bf16.msra.mxu0 %v7018
    %10170 = vmatprep.subr.bf16.mxu0 %v7011
    %10171 = vmatpush2.bf16.msra.mxu0 %v7010
    %10172 = vmatprep.subr.bf16.mxu0 %v7003
    %10173 = vmatpush2.bf16.msra.mxu0 %v7002
    %10174 = vmatprep.subr.bf16.mxu0 %v6995
    %10175 = vmatpush2.bf16.msra.mxu0 %v6994
    %10176 = vmatprep.mubr.bf16.mxu0 %v1769
    %10177 = vmatmul.mubr.bf16.gmra.mxu0 %v1768
    %v10178 = vpop.f32.mrf.mxu0
    %v10179 = vadd.f32 %v10138, %v10178
    %v10180 = vpop.f32.mrf.mxu0
    %v10181 = vadd.f32 %v10140, %v10180
    %v10182 = vpop.f32.mrf.mxu0
    %v10183 = vpop.f32.mrf.mxu0
    %10184 = vdwg.mxu0
    %10185 = vmatprep.subr.bf16.mxu0 %v7115
    %10186 = vmatpush1.bf16.msra.mxu0 %v7114
    %10187 = vmatprep.subr.bf16.mxu0 %v7107
    %10188 = vmatpush1.bf16.msra.mxu0 %v7106
    %10189 = vmatprep.subr.bf16.mxu0 %v7099
    %10190 = vmatpush1.bf16.msra.mxu0 %v7098
    %10191 = vmatprep.subr.bf16.mxu0 %v7091
    %10192 = vmatpush1.bf16.msra.mxu0 %v7090
    %10193 = vmatprep.subr.bf16.mxu0 %v7083
    %10194 = vmatpush1.bf16.msra.mxu0 %v7082
    %10195 = vmatprep.subr.bf16.mxu0 %v7075
    %10196 = vmatpush1.bf16.msra.mxu0 %v7074
    %10197 = vmatprep.subr.bf16.mxu0 %v7067
    %10198 = vmatpush1.bf16.msra.mxu0 %v7066
    %10199 = vmatprep.subr.bf16.mxu0 %v7059
    %10200 = vmatpush1.bf16.msra.mxu0 %v7058
    %10201 = vmatprep.subr.bf16.mxu0 %v7179
    %10202 = vmatpush2.bf16.msra.mxu0 %v7178
    %10203 = vmatprep.subr.bf16.mxu0 %v7171
    %10204 = vmatpush2.bf16.msra.mxu0 %v7170
    %10205 = vmatprep.subr.bf16.mxu0 %v7163
    %10206 = vmatpush2.bf16.msra.mxu0 %v7162
    %10207 = vmatprep.subr.bf16.mxu0 %v7155
    %10208 = vmatpush2.bf16.msra.mxu0 %v7154
    %10209 = vmatprep.subr.bf16.mxu0 %v7147
    %10210 = vmatpush2.bf16.msra.mxu0 %v7146
    %10211 = vmatprep.subr.bf16.mxu0 %v7139
    %10212 = vmatpush2.bf16.msra.mxu0 %v7138
    %10213 = vmatprep.subr.bf16.mxu0 %v7131
    %10214 = vmatpush2.bf16.msra.mxu0 %v7130
    %10215 = vmatprep.subr.bf16.mxu0 %v7123
    %10216 = vmatpush2.bf16.msra.mxu0 %v7122
    %10217 = vmatprep.mubr.bf16.mxu0 %v1771
    %10218 = vmatmul.mubr.bf16.gmra.mxu0 %v1770
    %v10219 = vpop.f32.mrf.mxu0
    %v10220 = vadd.f32 %v10179, %v10219
    %v10221 = vpop.f32.mrf.mxu0
    %v10222 = vadd.f32 %v10181, %v10221
    %v10223 = vpop.f32.mrf.mxu0
    %v10224 = vpop.f32.mrf.mxu0
    %10225 = vdwg.mxu0
    %10226 = vmatprep.subr.bf16.mxu0 %v7243
    %10227 = vmatpush1.bf16.msra.mxu0 %v7242
    %10228 = vmatprep.subr.bf16.mxu0 %v7235
    %10229 = vmatpush1.bf16.msra.mxu0 %v7234
    %10230 = vmatprep.subr.bf16.mxu0 %v7227
    %10231 = vmatpush1.bf16.msra.mxu0 %v7226
    %10232 = vmatprep.subr.bf16.mxu0 %v7219
    %10233 = vmatpush1.bf16.msra.mxu0 %v7218
    %10234 = vmatprep.subr.bf16.mxu0 %v7211
    %10235 = vmatpush1.bf16.msra.mxu0 %v7210
    %10236 = vmatprep.subr.bf16.mxu0 %v7203
    %10237 = vmatpush1.bf16.msra.mxu0 %v7202
    %10238 = vmatprep.subr.bf16.mxu0 %v7195
    %10239 = vmatpush1.bf16.msra.mxu0 %v7194
    %10240 = vmatprep.subr.bf16.mxu0 %v7187
    %10241 = vmatpush1.bf16.msra.mxu0 %v7186
    %10242 = vmatprep.subr.bf16.mxu0 %v7307
    %10243 = vmatpush2.bf16.msra.mxu0 %v7306
    %10244 = vmatprep.subr.bf16.mxu0 %v7299
    %10245 = vmatpush2.bf16.msra.mxu0 %v7298
    %10246 = vmatprep.subr.bf16.mxu0 %v7291
    %10247 = vmatpush2.bf16.msra.mxu0 %v7290
    %10248 = vmatprep.subr.bf16.mxu0 %v7283
    %10249 = vmatpush2.bf16.msra.mxu0 %v7282
    %10250 = vmatprep.subr.bf16.mxu0 %v7275
    %10251 = vmatpush2.bf16.msra.mxu0 %v7274
    %10252 = vmatprep.subr.bf16.mxu0 %v7267
    %10253 = vmatpush2.bf16.msra.mxu0 %v7266
    %10254 = vmatprep.subr.bf16.mxu0 %v7259
    %10255 = vmatpush2.bf16.msra.mxu0 %v7258
    %10256 = vmatprep.subr.bf16.mxu0 %v7251
    %10257 = vmatpush2.bf16.msra.mxu0 %v7250
    %10258 = vmatprep.mubr.bf16.mxu0 %v1773
    %10259 = vmatmul.mubr.bf16.gmra.mxu0 %v1772
    %v10260 = vpop.f32.mrf.mxu0
    %v10261 = vadd.f32 %v10220, %v10260
    %v10262 = vpop.f32.mrf.mxu0
    %v10263 = vadd.f32 %v10222, %v10262
    %v10264 = vpop.f32.mrf.mxu0
    %v10265 = vpop.f32.mrf.mxu0
    %10266 = vdwg.mxu0
    %10267 = vmatprep.subr.bf16.mxu0 %v7371
    %10268 = vmatpush1.bf16.msra.mxu0 %v7370
    %10269 = vmatprep.subr.bf16.mxu0 %v7363
    %10270 = vmatpush1.bf16.msra.mxu0 %v7362
    %10271 = vmatprep.subr.bf16.mxu0 %v7355
    %10272 = vmatpush1.bf16.msra.mxu0 %v7354
    %10273 = vmatprep.subr.bf16.mxu0 %v7347
    %10274 = vmatpush1.bf16.msra.mxu0 %v7346
    %10275 = vmatprep.subr.bf16.mxu0 %v7339
    %10276 = vmatpush1.bf16.msra.mxu0 %v7338
    %10277 = vmatprep.subr.bf16.mxu0 %v7331
    %10278 = vmatpush1.bf16.msra.mxu0 %v7330
    %10279 = vmatprep.subr.bf16.mxu0 %v7323
    %10280 = vmatpush1.bf16.msra.mxu0 %v7322
    %10281 = vmatprep.subr.bf16.mxu0 %v7315
    %10282 = vmatpush1.bf16.msra.mxu0 %v7314
    %10283 = vmatprep.subr.bf16.mxu0 %v7435
    %10284 = vmatpush2.bf16.msra.mxu0 %v7434
    %10285 = vmatprep.subr.bf16.mxu0 %v7427
    %10286 = vmatpush2.bf16.msra.mxu0 %v7426
    %10287 = vmatprep.subr.bf16.mxu0 %v7419
    %10288 = vmatpush2.bf16.msra.mxu0 %v7418
    %10289 = vmatprep.subr.bf16.mxu0 %v7411
    %10290 = vmatpush2.bf16.msra.mxu0 %v7410
    %10291 = vmatprep.subr.bf16.mxu0 %v7403
    %10292 = vmatpush2.bf16.msra.mxu0 %v7402
    %10293 = vmatprep.subr.bf16.mxu0 %v7395
    %10294 = vmatpush2.bf16.msra.mxu0 %v7394
    %10295 = vmatprep.subr.bf16.mxu0 %v7387
    %10296 = vmatpush2.bf16.msra.mxu0 %v7386
    %10297 = vmatprep.subr.bf16.mxu0 %v7379
    %10298 = vmatpush2.bf16.msra.mxu0 %v7378
    %10299 = vmatprep.mubr.bf16.mxu0 %v1775
    %10300 = vmatmul.mubr.bf16.gmra.mxu0 %v1774
    %v10301 = vpop.f32.mrf.mxu0
    %v10302 = vadd.f32 %v10261, %v10301
    %v10303 = vpop.f32.mrf.mxu0
    %v10304 = vadd.f32 %v10263, %v10303
    %v10305 = vpop.f32.mrf.mxu0
    %v10306 = vpop.f32.mrf.mxu0
    %10307 = vdwg.mxu0
    %10308 = vmatprep.subr.bf16.mxu0 %v7499
    %10309 = vmatpush1.bf16.msra.mxu0 %v7498
    %10310 = vmatprep.subr.bf16.mxu0 %v7491
    %10311 = vmatpush1.bf16.msra.mxu0 %v7490
    %10312 = vmatprep.subr.bf16.mxu0 %v7483
    %10313 = vmatpush1.bf16.msra.mxu0 %v7482
    %10314 = vmatprep.subr.bf16.mxu0 %v7475
    %10315 = vmatpush1.bf16.msra.mxu0 %v7474
    %10316 = vmatprep.subr.bf16.mxu0 %v7467
    %10317 = vmatpush1.bf16.msra.mxu0 %v7466
    %10318 = vmatprep.subr.bf16.mxu0 %v7459
    %10319 = vmatpush1.bf16.msra.mxu0 %v7458
    %10320 = vmatprep.subr.bf16.mxu0 %v7451
    %10321 = vmatpush1.bf16.msra.mxu0 %v7450
    %10322 = vmatprep.subr.bf16.mxu0 %v7443
    %10323 = vmatpush1.bf16.msra.mxu0 %v7442
    %10324 = vmatprep.subr.bf16.mxu0 %v7563
    %10325 = vmatpush2.bf16.msra.mxu0 %v7562
    %10326 = vmatprep.subr.bf16.mxu0 %v7555
    %10327 = vmatpush2.bf16.msra.mxu0 %v7554
    %10328 = vmatprep.subr.bf16.mxu0 %v7547
    %10329 = vmatpush2.bf16.msra.mxu0 %v7546
    %10330 = vmatprep.subr.bf16.mxu0 %v7539
    %10331 = vmatpush2.bf16.msra.mxu0 %v7538
    %10332 = vmatprep.subr.bf16.mxu0 %v7531
    %10333 = vmatpush2.bf16.msra.mxu0 %v7530
    %10334 = vmatprep.subr.bf16.mxu0 %v7523
    %10335 = vmatpush2.bf16.msra.mxu0 %v7522
    %10336 = vmatprep.subr.bf16.mxu0 %v7515
    %10337 = vmatpush2.bf16.msra.mxu0 %v7514
    %10338 = vmatprep.subr.bf16.mxu0 %v7507
    %10339 = vmatpush2.bf16.msra.mxu0 %v7506
    %10340 = vmatprep.mubr.bf16.mxu0 %v1777
    %10341 = vmatmul.mubr.bf16.gmra.mxu0 %v1776
    %v10342 = vpop.f32.mrf.mxu0
    %v10343 = vadd.f32 %v10302, %v10342
    %v10344 = vpop.f32.mrf.mxu0
    %v10345 = vadd.f32 %v10304, %v10344
    %v10346 = vpop.f32.mrf.mxu0
    %v10347 = vpop.f32.mrf.mxu0
    %10348 = vdwg.mxu0
    %10349 = vmatprep.subr.bf16.mxu0 %v7627
    %10350 = vmatpush1.bf16.msra.mxu0 %v7626
    %10351 = vmatprep.subr.bf16.mxu0 %v7619
    %10352 = vmatpush1.bf16.msra.mxu0 %v7618
    %10353 = vmatprep.subr.bf16.mxu0 %v7611
    %10354 = vmatpush1.bf16.msra.mxu0 %v7610
    %10355 = vmatprep.subr.bf16.mxu0 %v7603
    %10356 = vmatpush1.bf16.msra.mxu0 %v7602
    %10357 = vmatprep.subr.bf16.mxu0 %v7595
    %10358 = vmatpush1.bf16.msra.mxu0 %v7594
    %10359 = vmatprep.subr.bf16.mxu0 %v7587
    %10360 = vmatpush1.bf16.msra.mxu0 %v7586
    %10361 = vmatprep.subr.bf16.mxu0 %v7579
    %10362 = vmatpush1.bf16.msra.mxu0 %v7578
    %10363 = vmatprep.subr.bf16.mxu0 %v7571
    %10364 = vmatpush1.bf16.msra.mxu0 %v7570
    %10365 = vmatprep.subr.bf16.mxu0 %v7691
    %10366 = vmatpush2.bf16.msra.mxu0 %v7690
    %10367 = vmatprep.subr.bf16.mxu0 %v7683
    %10368 = vmatpush2.bf16.msra.mxu0 %v7682
    %10369 = vmatprep.subr.bf16.mxu0 %v7675
    %10370 = vmatpush2.bf16.msra.mxu0 %v7674
    %10371 = vmatprep.subr.bf16.mxu0 %v7667
    %10372 = vmatpush2.bf16.msra.mxu0 %v7666
    %10373 = vmatprep.subr.bf16.mxu0 %v7659
    %10374 = vmatpush2.bf16.msra.mxu0 %v7658
    %10375 = vmatprep.subr.bf16.mxu0 %v7651
    %10376 = vmatpush2.bf16.msra.mxu0 %v7650
    %10377 = vmatprep.subr.bf16.mxu0 %v7643
    %10378 = vmatpush2.bf16.msra.mxu0 %v7642
    %10379 = vmatprep.subr.bf16.mxu0 %v7635
    %10380 = vmatpush2.bf16.msra.mxu0 %v7634
    %10381 = vmatprep.mubr.bf16.mxu0 %v1779
    %10382 = vmatmul.mubr.bf16.gmra.mxu0 %v1778
    %v10383 = vpop.f32.mrf.mxu0
    %v10384 = vadd.f32 %v10343, %v10383
    %v10385 = vpop.f32.mrf.mxu0
    %v10386 = vadd.f32 %v10345, %v10385
    %v10387 = vpop.f32.mrf.mxu0
    %v10388 = vpop.f32.mrf.mxu0
    %10389 = vdwg.mxu0
    %10390 = vmatprep.subr.bf16.mxu0 %v7755
    %10391 = vmatpush1.bf16.msra.mxu0 %v7754
    %10392 = vmatprep.subr.bf16.mxu0 %v7747
    %10393 = vmatpush1.bf16.msra.mxu0 %v7746
    %10394 = vmatprep.subr.bf16.mxu0 %v7739
    %10395 = vmatpush1.bf16.msra.mxu0 %v7738
    %10396 = vmatprep.subr.bf16.mxu0 %v7731
    %10397 = vmatpush1.bf16.msra.mxu0 %v7730
    %10398 = vmatprep.subr.bf16.mxu0 %v7723
    %10399 = vmatpush1.bf16.msra.mxu0 %v7722
    %10400 = vmatprep.subr.bf16.mxu0 %v7715
    %10401 = vmatpush1.bf16.msra.mxu0 %v7714
    %10402 = vmatprep.subr.bf16.mxu0 %v7707
    %10403 = vmatpush1.bf16.msra.mxu0 %v7706
    %10404 = vmatprep.subr.bf16.mxu0 %v7699
    %10405 = vmatpush1.bf16.msra.mxu0 %v7698
    %10406 = vmatprep.subr.bf16.mxu0 %v7819
    %10407 = vmatpush2.bf16.msra.mxu0 %v7818
    %10408 = vmatprep.subr.bf16.mxu0 %v7811
    %10409 = vmatpush2.bf16.msra.mxu0 %v7810
    %10410 = vmatprep.subr.bf16.mxu0 %v7803
    %10411 = vmatpush2.bf16.msra.mxu0 %v7802
    %10412 = vmatprep.subr.bf16.mxu0 %v7795
    %10413 = vmatpush2.bf16.msra.mxu0 %v7794
    %10414 = vmatprep.subr.bf16.mxu0 %v7787
    %10415 = vmatpush2.bf16.msra.mxu0 %v7786
    %10416 = vmatprep.subr.bf16.mxu0 %v7779
    %10417 = vmatpush2.bf16.msra.mxu0 %v7778
    %10418 = vmatprep.subr.bf16.mxu0 %v7771
    %10419 = vmatpush2.bf16.msra.mxu0 %v7770
    %10420 = vmatprep.subr.bf16.mxu0 %v7763
    %10421 = vmatpush2.bf16.msra.mxu0 %v7762
    %10422 = vmatprep.mubr.bf16.mxu0 %v1781
    %10423 = vmatmul.mubr.bf16.gmra.mxu0 %v1780
    %v10424 = vpop.f32.mrf.mxu0
    %v10425 = vadd.f32 %v10384, %v10424
    %v10426 = vpop.f32.mrf.mxu0
    %v10427 = vadd.f32 %v10386, %v10426
    %v10428 = vpop.f32.mrf.mxu0
    %v10429 = vpop.f32.mrf.mxu0
    %10430 = vdwg.mxu0
    %10431 = vmatprep.subr.bf16.mxu0 %v7883
    %10432 = vmatpush1.bf16.msra.mxu0 %v7882
    %10433 = vmatprep.subr.bf16.mxu0 %v7875
    %10434 = vmatpush1.bf16.msra.mxu0 %v7874
    %10435 = vmatprep.subr.bf16.mxu0 %v7867
    %10436 = vmatpush1.bf16.msra.mxu0 %v7866
    %10437 = vmatprep.subr.bf16.mxu0 %v7859
    %10438 = vmatpush1.bf16.msra.mxu0 %v7858
    %10439 = vmatprep.subr.bf16.mxu0 %v7851
    %10440 = vmatpush1.bf16.msra.mxu0 %v7850
    %10441 = vmatprep.subr.bf16.mxu0 %v7843
    %10442 = vmatpush1.bf16.msra.mxu0 %v7842
    %10443 = vmatprep.subr.bf16.mxu0 %v7835
    %10444 = vmatpush1.bf16.msra.mxu0 %v7834
    %10445 = vmatprep.subr.bf16.mxu0 %v7827
    %10446 = vmatpush1.bf16.msra.mxu0 %v7826
    %10447 = vmatprep.subr.bf16.mxu0 %v7947
    %10448 = vmatpush2.bf16.msra.mxu0 %v7946
    %10449 = vmatprep.subr.bf16.mxu0 %v7939
    %10450 = vmatpush2.bf16.msra.mxu0 %v7938
    %10451 = vmatprep.subr.bf16.mxu0 %v7931
    %10452 = vmatpush2.bf16.msra.mxu0 %v7930
    %10453 = vmatprep.subr.bf16.mxu0 %v7923
    %10454 = vmatpush2.bf16.msra.mxu0 %v7922
    %10455 = vmatprep.subr.bf16.mxu0 %v7915
    %10456 = vmatpush2.bf16.msra.mxu0 %v7914
    %10457 = vmatprep.subr.bf16.mxu0 %v7907
    %10458 = vmatpush2.bf16.msra.mxu0 %v7906
    %10459 = vmatprep.subr.bf16.mxu0 %v7899
    %10460 = vmatpush2.bf16.msra.mxu0 %v7898
    %10461 = vmatprep.subr.bf16.mxu0 %v7891
    %10462 = vmatpush2.bf16.msra.mxu0 %v7890
    %10463 = vmatprep.mubr.bf16.mxu0 %v1783
    %10464 = vmatmul.mubr.bf16.gmra.mxu0 %v1782
    %v10465 = vpop.f32.mrf.mxu0
    %v10466 = vadd.f32 %v10425, %v10465
    %v10467 = vpop.f32.mrf.mxu0
    %v10468 = vadd.f32 %v10427, %v10467
    %v10469 = vpop.f32.mrf.mxu0
    %v10470 = vpop.f32.mrf.mxu0
    %10471 = vdwg.mxu0
    %10472 = vmatprep.subr.bf16.mxu0 %v6477
    %10473 = vmatpush1.bf16.msra.mxu0 %v6476
    %10474 = vmatprep.subr.bf16.mxu0 %v6469
    %10475 = vmatpush1.bf16.msra.mxu0 %v6468
    %10476 = vmatprep.subr.bf16.mxu0 %v6461
    %10477 = vmatpush1.bf16.msra.mxu0 %v6460
    %10478 = vmatprep.subr.bf16.mxu0 %v6453
    %10479 = vmatpush1.bf16.msra.mxu0 %v6452
    %10480 = vmatprep.subr.bf16.mxu0 %v6445
    %10481 = vmatpush1.bf16.msra.mxu0 %v6444
    %10482 = vmatprep.subr.bf16.mxu0 %v6437
    %10483 = vmatpush1.bf16.msra.mxu0 %v6436
    %10484 = vmatprep.subr.bf16.mxu0 %v6429
    %10485 = vmatpush1.bf16.msra.mxu0 %v6428
    %10486 = vmatprep.subr.bf16.mxu0 %v6421
    %10487 = vmatpush1.bf16.msra.mxu0 %v6420
    %10488 = vmatprep.subr.bf16.mxu0 %v6541
    %10489 = vmatpush2.bf16.msra.mxu0 %v6540
    %10490 = vmatprep.subr.bf16.mxu0 %v6533
    %10491 = vmatpush2.bf16.msra.mxu0 %v6532
    %10492 = vmatprep.subr.bf16.mxu0 %v6525
    %10493 = vmatpush2.bf16.msra.mxu0 %v6524
    %10494 = vmatprep.subr.bf16.mxu0 %v6517
    %10495 = vmatpush2.bf16.msra.mxu0 %v6516
    %10496 = vmatprep.subr.bf16.mxu0 %v6509
    %10497 = vmatpush2.bf16.msra.mxu0 %v6508
    %10498 = vmatprep.subr.bf16.mxu0 %v6501
    %10499 = vmatpush2.bf16.msra.mxu0 %v6500
    %10500 = vmatprep.subr.bf16.mxu0 %v6493
    %10501 = vmatpush2.bf16.msra.mxu0 %v6492
    %10502 = vmatprep.subr.bf16.mxu0 %v6485
    %10503 = vmatpush2.bf16.msra.mxu0 %v6484
    %10504 = vmatprep.mubr.bf16.mxu0 %v1761
    %10505 = vmatmul.mubr.bf16.gmra.mxu0 %v1760
    %v10506 = vpop.f32.mrf.mxu0
    %v10507 = vadd.f32 %v1703, %v10506
    %v10508 = vpop.f32.mrf.mxu0
    %v10509 = vadd.f32 %v1707, %v10508
    %v10510 = vpop.f32.mrf.mxu0
    %v10511 = vpop.f32.mrf.mxu0
    %10512 = vdwg.mxu0
    %10513 = vmatprep.subr.bf16.mxu0 %v6605
    %10514 = vmatpush1.bf16.msra.mxu0 %v6604
    %10515 = vmatprep.subr.bf16.mxu0 %v6597
    %10516 = vmatpush1.bf16.msra.mxu0 %v6596
    %10517 = vmatprep.subr.bf16.mxu0 %v6589
    %10518 = vmatpush1.bf16.msra.mxu0 %v6588
    %10519 = vmatprep.subr.bf16.mxu0 %v6581
    %10520 = vmatpush1.bf16.msra.mxu0 %v6580
    %10521 = vmatprep.subr.bf16.mxu0 %v6573
    %10522 = vmatpush1.bf16.msra.mxu0 %v6572
    %10523 = vmatprep.subr.bf16.mxu0 %v6565
    %10524 = vmatpush1.bf16.msra.mxu0 %v6564
    %10525 = vmatprep.subr.bf16.mxu0 %v6557
    %10526 = vmatpush1.bf16.msra.mxu0 %v6556
    %10527 = vmatprep.subr.bf16.mxu0 %v6549
    %10528 = vmatpush1.bf16.msra.mxu0 %v6548
    %10529 = vmatprep.subr.bf16.mxu0 %v6669
    %10530 = vmatpush2.bf16.msra.mxu0 %v6668
    %10531 = vmatprep.subr.bf16.mxu0 %v6661
    %10532 = vmatpush2.bf16.msra.mxu0 %v6660
    %10533 = vmatprep.subr.bf16.mxu0 %v6653
    %10534 = vmatpush2.bf16.msra.mxu0 %v6652
    %10535 = vmatprep.subr.bf16.mxu0 %v6645
    %10536 = vmatpush2.bf16.msra.mxu0 %v6644
    %10537 = vmatprep.subr.bf16.mxu0 %v6637
    %10538 = vmatpush2.bf16.msra.mxu0 %v6636
    %10539 = vmatprep.subr.bf16.mxu0 %v6629
    %10540 = vmatpush2.bf16.msra.mxu0 %v6628
    %10541 = vmatprep.subr.bf16.mxu0 %v6621
    %10542 = vmatpush2.bf16.msra.mxu0 %v6620
    %10543 = vmatprep.subr.bf16.mxu0 %v6613
    %10544 = vmatpush2.bf16.msra.mxu0 %v6612
    %10545 = vmatprep.mubr.bf16.mxu0 %v1763
    %10546 = vmatmul.mubr.bf16.gmra.mxu0 %v1762
    %v10547 = vpop.f32.mrf.mxu0
    %v10548 = vadd.f32 %v10507, %v10547
    %v10549 = vpop.f32.mrf.mxu0
    %v10550 = vadd.f32 %v10509, %v10549
    %v10551 = vpop.f32.mrf.mxu0
    %v10552 = vpop.f32.mrf.mxu0
    %10553 = vdwg.mxu0
    %10554 = vmatprep.subr.bf16.mxu0 %v6733
    %10555 = vmatpush1.bf16.msra.mxu0 %v6732
    %10556 = vmatprep.subr.bf16.mxu0 %v6725
    %10557 = vmatpush1.bf16.msra.mxu0 %v6724
    %10558 = vmatprep.subr.bf16.mxu0 %v6717
    %10559 = vmatpush1.bf16.msra.mxu0 %v6716
    %10560 = vmatprep.subr.bf16.mxu0 %v6709
    %10561 = vmatpush1.bf16.msra.mxu0 %v6708
    %10562 = vmatprep.subr.bf16.mxu0 %v6701
    %10563 = vmatpush1.bf16.msra.mxu0 %v6700
    %10564 = vmatprep.subr.bf16.mxu0 %v6693
    %10565 = vmatpush1.bf16.msra.mxu0 %v6692
    %10566 = vmatprep.subr.bf16.mxu0 %v6685
    %10567 = vmatpush1.bf16.msra.mxu0 %v6684
    %10568 = vmatprep.subr.bf16.mxu0 %v6677
    %10569 = vmatpush1.bf16.msra.mxu0 %v6676
    %10570 = vmatprep.subr.bf16.mxu0 %v6797
    %10571 = vmatpush2.bf16.msra.mxu0 %v6796
    %10572 = vmatprep.subr.bf16.mxu0 %v6789
    %10573 = vmatpush2.bf16.msra.mxu0 %v6788
    %10574 = vmatprep.subr.bf16.mxu0 %v6781
    %10575 = vmatpush2.bf16.msra.mxu0 %v6780
    %10576 = vmatprep.subr.bf16.mxu0 %v6773
    %10577 = vmatpush2.bf16.msra.mxu0 %v6772
    %10578 = vmatprep.subr.bf16.mxu0 %v6765
    %10579 = vmatpush2.bf16.msra.mxu0 %v6764
    %10580 = vmatprep.subr.bf16.mxu0 %v6757
    %10581 = vmatpush2.bf16.msra.mxu0 %v6756
    %10582 = vmatprep.subr.bf16.mxu0 %v6749
    %10583 = vmatpush2.bf16.msra.mxu0 %v6748
    %10584 = vmatprep.subr.bf16.mxu0 %v6741
    %10585 = vmatpush2.bf16.msra.mxu0 %v6740
    %10586 = vmatprep.mubr.bf16.mxu0 %v1765
    %10587 = vmatmul.mubr.bf16.gmra.mxu0 %v1764
    %v10588 = vpop.f32.mrf.mxu0
    %v10589 = vadd.f32 %v10548, %v10588
    %v10590 = vpop.f32.mrf.mxu0
    %v10591 = vadd.f32 %v10550, %v10590
    %v10592 = vpop.f32.mrf.mxu0
    %v10593 = vpop.f32.mrf.mxu0
    %10594 = vdwg.mxu0
    %10595 = vmatprep.subr.bf16.mxu0 %v6861
    %10596 = vmatpush1.bf16.msra.mxu0 %v6860
    %10597 = vmatprep.subr.bf16.mxu0 %v6853
    %10598 = vmatpush1.bf16.msra.mxu0 %v6852
    %10599 = vmatprep.subr.bf16.mxu0 %v6845
    %10600 = vmatpush1.bf16.msra.mxu0 %v6844
    %10601 = vmatprep.subr.bf16.mxu0 %v6837
    %10602 = vmatpush1.bf16.msra.mxu0 %v6836
    %10603 = vmatprep.subr.bf16.mxu0 %v6829
    %10604 = vmatpush1.bf16.msra.mxu0 %v6828
    %10605 = vmatprep.subr.bf16.mxu0 %v6821
    %10606 = vmatpush1.bf16.msra.mxu0 %v6820
    %10607 = vmatprep.subr.bf16.mxu0 %v6813
    %10608 = vmatpush1.bf16.msra.mxu0 %v6812
    %10609 = vmatprep.subr.bf16.mxu0 %v6805
    %10610 = vmatpush1.bf16.msra.mxu0 %v6804
    %10611 = vmatprep.subr.bf16.mxu0 %v6925
    %10612 = vmatpush2.bf16.msra.mxu0 %v6924
    %10613 = vmatprep.subr.bf16.mxu0 %v6917
    %10614 = vmatpush2.bf16.msra.mxu0 %v6916
    %10615 = vmatprep.subr.bf16.mxu0 %v6909
    %10616 = vmatpush2.bf16.msra.mxu0 %v6908
    %10617 = vmatprep.subr.bf16.mxu0 %v6901
    %10618 = vmatpush2.bf16.msra.mxu0 %v6900
    %10619 = vmatprep.subr.bf16.mxu0 %v6893
    %10620 = vmatpush2.bf16.msra.mxu0 %v6892
    %10621 = vmatprep.subr.bf16.mxu0 %v6885
    %10622 = vmatpush2.bf16.msra.mxu0 %v6884
    %10623 = vmatprep.subr.bf16.mxu0 %v6877
    %10624 = vmatpush2.bf16.msra.mxu0 %v6876
    %10625 = vmatprep.subr.bf16.mxu0 %v6869
    %10626 = vmatpush2.bf16.msra.mxu0 %v6868
    %10627 = vmatprep.mubr.bf16.mxu0 %v1767
    %10628 = vmatmul.mubr.bf16.gmra.mxu0 %v1766
    %v10629 = vpop.f32.mrf.mxu0
    %v10630 = vadd.f32 %v10589, %v10629
    %v10631 = vpop.f32.mrf.mxu0
    %v10632 = vadd.f32 %v10591, %v10631
    %v10633 = vpop.f32.mrf.mxu0
    %v10634 = vpop.f32.mrf.mxu0
    %10635 = vdwg.mxu0
    %10636 = vmatprep.subr.bf16.mxu0 %v6989
    %10637 = vmatpush1.bf16.msra.mxu0 %v6988
    %10638 = vmatprep.subr.bf16.mxu0 %v6981
    %10639 = vmatpush1.bf16.msra.mxu0 %v6980
    %10640 = vmatprep.subr.bf16.mxu0 %v6973
    %10641 = vmatpush1.bf16.msra.mxu0 %v6972
    %10642 = vmatprep.subr.bf16.mxu0 %v6965
    %10643 = vmatpush1.bf16.msra.mxu0 %v6964
    %10644 = vmatprep.subr.bf16.mxu0 %v6957
    %10645 = vmatpush1.bf16.msra.mxu0 %v6956
    %10646 = vmatprep.subr.bf16.mxu0 %v6949
    %10647 = vmatpush1.bf16.msra.mxu0 %v6948
    %10648 = vmatprep.subr.bf16.mxu0 %v6941
    %10649 = vmatpush1.bf16.msra.mxu0 %v6940
    %10650 = vmatprep.subr.bf16.mxu0 %v6933
    %10651 = vmatpush1.bf16.msra.mxu0 %v6932
    %10652 = vmatprep.subr.bf16.mxu0 %v7053
    %10653 = vmatpush2.bf16.msra.mxu0 %v7052
    %10654 = vmatprep.subr.bf16.mxu0 %v7045
    %10655 = vmatpush2.bf16.msra.mxu0 %v7044
    %10656 = vmatprep.subr.bf16.mxu0 %v7037
    %10657 = vmatpush2.bf16.msra.mxu0 %v7036
    %10658 = vmatprep.subr.bf16.mxu0 %v7029
    %10659 = vmatpush2.bf16.msra.mxu0 %v7028
    %10660 = vmatprep.subr.bf16.mxu0 %v7021
    %10661 = vmatpush2.bf16.msra.mxu0 %v7020
    %10662 = vmatprep.subr.bf16.mxu0 %v7013
    %10663 = vmatpush2.bf16.msra.mxu0 %v7012
    %10664 = vmatprep.subr.bf16.mxu0 %v7005
    %10665 = vmatpush2.bf16.msra.mxu0 %v7004
    %10666 = vmatprep.subr.bf16.mxu0 %v6997
    %10667 = vmatpush2.bf16.msra.mxu0 %v6996
    %10668 = vmatprep.mubr.bf16.mxu0 %v1769
    %10669 = vmatmul.mubr.bf16.gmra.mxu0 %v1768
    %v10670 = vpop.f32.mrf.mxu0
    %v10671 = vadd.f32 %v10630, %v10670
    %v10672 = vpop.f32.mrf.mxu0
    %v10673 = vadd.f32 %v10632, %v10672
    %v10674 = vpop.f32.mrf.mxu0
    %v10675 = vpop.f32.mrf.mxu0
    %10676 = vdwg.mxu0
    %10677 = vmatprep.subr.bf16.mxu0 %v7117
    %10678 = vmatpush1.bf16.msra.mxu0 %v7116
    %10679 = vmatprep.subr.bf16.mxu0 %v7109
    %10680 = vmatpush1.bf16.msra.mxu0 %v7108
    %10681 = vmatprep.subr.bf16.mxu0 %v7101
    %10682 = vmatpush1.bf16.msra.mxu0 %v7100
    %10683 = vmatprep.subr.bf16.mxu0 %v7093
    %10684 = vmatpush1.bf16.msra.mxu0 %v7092
    %10685 = vmatprep.subr.bf16.mxu0 %v7085
    %10686 = vmatpush1.bf16.msra.mxu0 %v7084
    %10687 = vmatprep.subr.bf16.mxu0 %v7077
    %10688 = vmatpush1.bf16.msra.mxu0 %v7076
    %10689 = vmatprep.subr.bf16.mxu0 %v7069
    %10690 = vmatpush1.bf16.msra.mxu0 %v7068
    %10691 = vmatprep.subr.bf16.mxu0 %v7061
    %10692 = vmatpush1.bf16.msra.mxu0 %v7060
    %10693 = vmatprep.subr.bf16.mxu0 %v7181
    %10694 = vmatpush2.bf16.msra.mxu0 %v7180
    %10695 = vmatprep.subr.bf16.mxu0 %v7173
    %10696 = vmatpush2.bf16.msra.mxu0 %v7172
    %10697 = vmatprep.subr.bf16.mxu0 %v7165
    %10698 = vmatpush2.bf16.msra.mxu0 %v7164
    %10699 = vmatprep.subr.bf16.mxu0 %v7157
    %10700 = vmatpush2.bf16.msra.mxu0 %v7156
    %10701 = vmatprep.subr.bf16.mxu0 %v7149
    %10702 = vmatpush2.bf16.msra.mxu0 %v7148
    %10703 = vmatprep.subr.bf16.mxu0 %v7141
    %10704 = vmatpush2.bf16.msra.mxu0 %v7140
    %10705 = vmatprep.subr.bf16.mxu0 %v7133
    %10706 = vmatpush2.bf16.msra.mxu0 %v7132
    %10707 = vmatprep.subr.bf16.mxu0 %v7125
    %10708 = vmatpush2.bf16.msra.mxu0 %v7124
    %10709 = vmatprep.mubr.bf16.mxu0 %v1771
    %10710 = vmatmul.mubr.bf16.gmra.mxu0 %v1770
    %v10711 = vpop.f32.mrf.mxu0
    %v10712 = vadd.f32 %v10671, %v10711
    %v10713 = vpop.f32.mrf.mxu0
    %v10714 = vadd.f32 %v10673, %v10713
    %v10715 = vpop.f32.mrf.mxu0
    %v10716 = vpop.f32.mrf.mxu0
    %10717 = vdwg.mxu0
    %10718 = vmatprep.subr.bf16.mxu0 %v7245
    %10719 = vmatpush1.bf16.msra.mxu0 %v7244
    %10720 = vmatprep.subr.bf16.mxu0 %v7237
    %10721 = vmatpush1.bf16.msra.mxu0 %v7236
    %10722 = vmatprep.subr.bf16.mxu0 %v7229
    %10723 = vmatpush1.bf16.msra.mxu0 %v7228
    %10724 = vmatprep.subr.bf16.mxu0 %v7221
    %10725 = vmatpush1.bf16.msra.mxu0 %v7220
    %10726 = vmatprep.subr.bf16.mxu0 %v7213
    %10727 = vmatpush1.bf16.msra.mxu0 %v7212
    %10728 = vmatprep.subr.bf16.mxu0 %v7205
    %10729 = vmatpush1.bf16.msra.mxu0 %v7204
    %10730 = vmatprep.subr.bf16.mxu0 %v7197
    %10731 = vmatpush1.bf16.msra.mxu0 %v7196
    %10732 = vmatprep.subr.bf16.mxu0 %v7189
    %10733 = vmatpush1.bf16.msra.mxu0 %v7188
    %10734 = vmatprep.subr.bf16.mxu0 %v7309
    %10735 = vmatpush2.bf16.msra.mxu0 %v7308
    %10736 = vmatprep.subr.bf16.mxu0 %v7301
    %10737 = vmatpush2.bf16.msra.mxu0 %v7300
    %10738 = vmatprep.subr.bf16.mxu0 %v7293
    %10739 = vmatpush2.bf16.msra.mxu0 %v7292
    %10740 = vmatprep.subr.bf16.mxu0 %v7285
    %10741 = vmatpush2.bf16.msra.mxu0 %v7284
    %10742 = vmatprep.subr.bf16.mxu0 %v7277
    %10743 = vmatpush2.bf16.msra.mxu0 %v7276
    %10744 = vmatprep.subr.bf16.mxu0 %v7269
    %10745 = vmatpush2.bf16.msra.mxu0 %v7268
    %10746 = vmatprep.subr.bf16.mxu0 %v7261
    %10747 = vmatpush2.bf16.msra.mxu0 %v7260
    %10748 = vmatprep.subr.bf16.mxu0 %v7253
    %10749 = vmatpush2.bf16.msra.mxu0 %v7252
    %10750 = vmatprep.mubr.bf16.mxu0 %v1773
    %10751 = vmatmul.mubr.bf16.gmra.mxu0 %v1772
    %v10752 = vpop.f32.mrf.mxu0
    %v10753 = vadd.f32 %v10712, %v10752
    %v10754 = vpop.f32.mrf.mxu0
    %v10755 = vadd.f32 %v10714, %v10754
    %v10756 = vpop.f32.mrf.mxu0
    %v10757 = vpop.f32.mrf.mxu0
    %10758 = vdwg.mxu0
    %10759 = vmatprep.subr.bf16.mxu0 %v7373
    %10760 = vmatpush1.bf16.msra.mxu0 %v7372
    %10761 = vmatprep.subr.bf16.mxu0 %v7365
    %10762 = vmatpush1.bf16.msra.mxu0 %v7364
    %10763 = vmatprep.subr.bf16.mxu0 %v7357
    %10764 = vmatpush1.bf16.msra.mxu0 %v7356
    %10765 = vmatprep.subr.bf16.mxu0 %v7349
    %10766 = vmatpush1.bf16.msra.mxu0 %v7348
    %10767 = vmatprep.subr.bf16.mxu0 %v7341
    %10768 = vmatpush1.bf16.msra.mxu0 %v7340
    %10769 = vmatprep.subr.bf16.mxu0 %v7333
    %10770 = vmatpush1.bf16.msra.mxu0 %v7332
    %10771 = vmatprep.subr.bf16.mxu0 %v7325
    %10772 = vmatpush1.bf16.msra.mxu0 %v7324
    %10773 = vmatprep.subr.bf16.mxu0 %v7317
    %10774 = vmatpush1.bf16.msra.mxu0 %v7316
    %10775 = vmatprep.subr.bf16.mxu0 %v7437
    %10776 = vmatpush2.bf16.msra.mxu0 %v7436
    %10777 = vmatprep.subr.bf16.mxu0 %v7429
    %10778 = vmatpush2.bf16.msra.mxu0 %v7428
    %10779 = vmatprep.subr.bf16.mxu0 %v7421
    %10780 = vmatpush2.bf16.msra.mxu0 %v7420
    %10781 = vmatprep.subr.bf16.mxu0 %v7413
    %10782 = vmatpush2.bf16.msra.mxu0 %v7412
    %10783 = vmatprep.subr.bf16.mxu0 %v7405
    %10784 = vmatpush2.bf16.msra.mxu0 %v7404
    %10785 = vmatprep.subr.bf16.mxu0 %v7397
    %10786 = vmatpush2.bf16.msra.mxu0 %v7396
    %10787 = vmatprep.subr.bf16.mxu0 %v7389
    %10788 = vmatpush2.bf16.msra.mxu0 %v7388
    %10789 = vmatprep.subr.bf16.mxu0 %v7381
    %10790 = vmatpush2.bf16.msra.mxu0 %v7380
    %10791 = vmatprep.mubr.bf16.mxu0 %v1775
    %10792 = vmatmul.mubr.bf16.gmra.mxu0 %v1774
    %v10793 = vpop.f32.mrf.mxu0
    %v10794 = vadd.f32 %v10753, %v10793
    %v10795 = vpop.f32.mrf.mxu0
    %v10796 = vadd.f32 %v10755, %v10795
    %v10797 = vpop.f32.mrf.mxu0
    %v10798 = vpop.f32.mrf.mxu0
    %10799 = vdwg.mxu0
    %10800 = vmatprep.subr.bf16.mxu0 %v7501
    %10801 = vmatpush1.bf16.msra.mxu0 %v7500
    %10802 = vmatprep.subr.bf16.mxu0 %v7493
    %10803 = vmatpush1.bf16.msra.mxu0 %v7492
    %10804 = vmatprep.subr.bf16.mxu0 %v7485
    %10805 = vmatpush1.bf16.msra.mxu0 %v7484
    %10806 = vmatprep.subr.bf16.mxu0 %v7477
    %10807 = vmatpush1.bf16.msra.mxu0 %v7476
    %10808 = vmatprep.subr.bf16.mxu0 %v7469
    %10809 = vmatpush1.bf16.msra.mxu0 %v7468
    %10810 = vmatprep.subr.bf16.mxu0 %v7461
    %10811 = vmatpush1.bf16.msra.mxu0 %v7460
    %10812 = vmatprep.subr.bf16.mxu0 %v7453
    %10813 = vmatpush1.bf16.msra.mxu0 %v7452
    %10814 = vmatprep.subr.bf16.mxu0 %v7445
    %10815 = vmatpush1.bf16.msra.mxu0 %v7444
    %10816 = vmatprep.subr.bf16.mxu0 %v7565
    %10817 = vmatpush2.bf16.msra.mxu0 %v7564
    %10818 = vmatprep.subr.bf16.mxu0 %v7557
    %10819 = vmatpush2.bf16.msra.mxu0 %v7556
    %10820 = vmatprep.subr.bf16.mxu0 %v7549
    %10821 = vmatpush2.bf16.msra.mxu0 %v7548
    %10822 = vmatprep.subr.bf16.mxu0 %v7541
    %10823 = vmatpush2.bf16.msra.mxu0 %v7540
    %10824 = vmatprep.subr.bf16.mxu0 %v7533
    %10825 = vmatpush2.bf16.msra.mxu0 %v7532
    %10826 = vmatprep.subr.bf16.mxu0 %v7525
    %10827 = vmatpush2.bf16.msra.mxu0 %v7524
    %10828 = vmatprep.subr.bf16.mxu0 %v7517
    %10829 = vmatpush2.bf16.msra.mxu0 %v7516
    %10830 = vmatprep.subr.bf16.mxu0 %v7509
    %10831 = vmatpush2.bf16.msra.mxu0 %v7508
    %10832 = vmatprep.mubr.bf16.mxu0 %v1777
    %10833 = vmatmul.mubr.bf16.gmra.mxu0 %v1776
    %v10834 = vpop.f32.mrf.mxu0
    %v10835 = vadd.f32 %v10794, %v10834
    %v10836 = vpop.f32.mrf.mxu0
    %v10837 = vadd.f32 %v10796, %v10836
    %v10838 = vpop.f32.mrf.mxu0
    %v10839 = vpop.f32.mrf.mxu0
    %10840 = vdwg.mxu0
    %10841 = vmatprep.subr.bf16.mxu0 %v7629
    %10842 = vmatpush1.bf16.msra.mxu0 %v7628
    %10843 = vmatprep.subr.bf16.mxu0 %v7621
    %10844 = vmatpush1.bf16.msra.mxu0 %v7620
    %10845 = vmatprep.subr.bf16.mxu0 %v7613
    %10846 = vmatpush1.bf16.msra.mxu0 %v7612
    %10847 = vmatprep.subr.bf16.mxu0 %v7605
    %10848 = vmatpush1.bf16.msra.mxu0 %v7604
    %10849 = vmatprep.subr.bf16.mxu0 %v7597
    %10850 = vmatpush1.bf16.msra.mxu0 %v7596
    %10851 = vmatprep.subr.bf16.mxu0 %v7589
    %10852 = vmatpush1.bf16.msra.mxu0 %v7588
    %10853 = vmatprep.subr.bf16.mxu0 %v7581
    %10854 = vmatpush1.bf16.msra.mxu0 %v7580
    %10855 = vmatprep.subr.bf16.mxu0 %v7573
    %10856 = vmatpush1.bf16.msra.mxu0 %v7572
    %10857 = vmatprep.subr.bf16.mxu0 %v7693
    %10858 = vmatpush2.bf16.msra.mxu0 %v7692
    %10859 = vmatprep.subr.bf16.mxu0 %v7685
    %10860 = vmatpush2.bf16.msra.mxu0 %v7684
    %10861 = vmatprep.subr.bf16.mxu0 %v7677
    %10862 = vmatpush2.bf16.msra.mxu0 %v7676
    %10863 = vmatprep.subr.bf16.mxu0 %v7669
    %10864 = vmatpush2.bf16.msra.mxu0 %v7668
    %10865 = vmatprep.subr.bf16.mxu0 %v7661
    %10866 = vmatpush2.bf16.msra.mxu0 %v7660
    %10867 = vmatprep.subr.bf16.mxu0 %v7653
    %10868 = vmatpush2.bf16.msra.mxu0 %v7652
    %10869 = vmatprep.subr.bf16.mxu0 %v7645
    %10870 = vmatpush2.bf16.msra.mxu0 %v7644
    %10871 = vmatprep.subr.bf16.mxu0 %v7637
    %10872 = vmatpush2.bf16.msra.mxu0 %v7636
    %10873 = vmatprep.mubr.bf16.mxu0 %v1779
    %10874 = vmatmul.mubr.bf16.gmra.mxu0 %v1778
    %v10875 = vpop.f32.mrf.mxu0
    %v10876 = vadd.f32 %v10835, %v10875
    %v10877 = vpop.f32.mrf.mxu0
    %v10878 = vadd.f32 %v10837, %v10877
    %v10879 = vpop.f32.mrf.mxu0
    %v10880 = vpop.f32.mrf.mxu0
    %10881 = vdwg.mxu0
    %10882 = vmatprep.subr.bf16.mxu0 %v7757
    %10883 = vmatpush1.bf16.msra.mxu0 %v7756
    %10884 = vmatprep.subr.bf16.mxu0 %v7749
    %10885 = vmatpush1.bf16.msra.mxu0 %v7748
    %10886 = vmatprep.subr.bf16.mxu0 %v7741
    %10887 = vmatpush1.bf16.msra.mxu0 %v7740
    %10888 = vmatprep.subr.bf16.mxu0 %v7733
    %10889 = vmatpush1.bf16.msra.mxu0 %v7732
    %10890 = vmatprep.subr.bf16.mxu0 %v7725
    %10891 = vmatpush1.bf16.msra.mxu0 %v7724
    %10892 = vmatprep.subr.bf16.mxu0 %v7717
    %10893 = vmatpush1.bf16.msra.mxu0 %v7716
    %10894 = vmatprep.subr.bf16.mxu0 %v7709
    %10895 = vmatpush1.bf16.msra.mxu0 %v7708
    %10896 = vmatprep.subr.bf16.mxu0 %v7701
    %10897 = vmatpush1.bf16.msra.mxu0 %v7700
    %10898 = vmatprep.subr.bf16.mxu0 %v7821
    %10899 = vmatpush2.bf16.msra.mxu0 %v7820
    %10900 = vmatprep.subr.bf16.mxu0 %v7813
    %10901 = vmatpush2.bf16.msra.mxu0 %v7812
    %10902 = vmatprep.subr.bf16.mxu0 %v7805
    %10903 = vmatpush2.bf16.msra.mxu0 %v7804
    %10904 = vmatprep.subr.bf16.mxu0 %v7797
    %10905 = vmatpush2.bf16.msra.mxu0 %v7796
    %10906 = vmatprep.subr.bf16.mxu0 %v7789
    %10907 = vmatpush2.bf16.msra.mxu0 %v7788
    %10908 = vmatprep.subr.bf16.mxu0 %v7781
    %10909 = vmatpush2.bf16.msra.mxu0 %v7780
    %10910 = vmatprep.subr.bf16.mxu0 %v7773
    %10911 = vmatpush2.bf16.msra.mxu0 %v7772
    %10912 = vmatprep.subr.bf16.mxu0 %v7765
    %10913 = vmatpush2.bf16.msra.mxu0 %v7764
    %10914 = vmatprep.mubr.bf16.mxu0 %v1781
    %10915 = vmatmul.mubr.bf16.gmra.mxu0 %v1780
    %v10916 = vpop.f32.mrf.mxu0
    %v10917 = vadd.f32 %v10876, %v10916
    %v10918 = vpop.f32.mrf.mxu0
    %v10919 = vadd.f32 %v10878, %v10918
    %v10920 = vpop.f32.mrf.mxu0
    %v10921 = vpop.f32.mrf.mxu0
    %10922 = vdwg.mxu0
    %10923 = vmatprep.subr.bf16.mxu0 %v7885
    %10924 = vmatpush1.bf16.msra.mxu0 %v7884
    %10925 = vmatprep.subr.bf16.mxu0 %v7877
    %10926 = vmatpush1.bf16.msra.mxu0 %v7876
    %10927 = vmatprep.subr.bf16.mxu0 %v7869
    %10928 = vmatpush1.bf16.msra.mxu0 %v7868
    %10929 = vmatprep.subr.bf16.mxu0 %v7861
    %10930 = vmatpush1.bf16.msra.mxu0 %v7860
    %10931 = vmatprep.subr.bf16.mxu0 %v7853
    %10932 = vmatpush1.bf16.msra.mxu0 %v7852
    %10933 = vmatprep.subr.bf16.mxu0 %v7845
    %10934 = vmatpush1.bf16.msra.mxu0 %v7844
    %10935 = vmatprep.subr.bf16.mxu0 %v7837
    %10936 = vmatpush1.bf16.msra.mxu0 %v7836
    %10937 = vmatprep.subr.bf16.mxu0 %v7829
    %10938 = vmatpush1.bf16.msra.mxu0 %v7828
    %10939 = vmatprep.subr.bf16.mxu0 %v7949
    %10940 = vmatpush2.bf16.msra.mxu0 %v7948
    %10941 = vmatprep.subr.bf16.mxu0 %v7941
    %10942 = vmatpush2.bf16.msra.mxu0 %v7940
    %10943 = vmatprep.subr.bf16.mxu0 %v7933
    %10944 = vmatpush2.bf16.msra.mxu0 %v7932
    %10945 = vmatprep.subr.bf16.mxu0 %v7925
    %10946 = vmatpush2.bf16.msra.mxu0 %v7924
    %10947 = vmatprep.subr.bf16.mxu0 %v7917
    %10948 = vmatpush2.bf16.msra.mxu0 %v7916
    %10949 = vmatprep.subr.bf16.mxu0 %v7909
    %10950 = vmatpush2.bf16.msra.mxu0 %v7908
    %10951 = vmatprep.subr.bf16.mxu0 %v7901
    %10952 = vmatpush2.bf16.msra.mxu0 %v7900
    %10953 = vmatprep.subr.bf16.mxu0 %v7893
    %10954 = vmatpush2.bf16.msra.mxu0 %v7892
    %10955 = vmatprep.mubr.bf16.mxu0 %v1783
    %10956 = vmatmul.mubr.bf16.gmra.mxu0 %v1782
    %v10957 = vpop.f32.mrf.mxu0
    %v10958 = vadd.f32 %v10917, %v10957
    %v10959 = vpop.f32.mrf.mxu0
    %v10960 = vadd.f32 %v10919, %v10959
    %v10961 = vpop.f32.mrf.mxu0
    %v10962 = vpop.f32.mrf.mxu0
    %10963 = vdwg.mxu0
    %10964 = vmatprep.subr.bf16.mxu0 %v6479
    %10965 = vmatpush1.bf16.msra.mxu0 %v6478
    %10966 = vmatprep.subr.bf16.mxu0 %v6471
    %10967 = vmatpush1.bf16.msra.mxu0 %v6470
    %10968 = vmatprep.subr.bf16.mxu0 %v6463
    %10969 = vmatpush1.bf16.msra.mxu0 %v6462
    %10970 = vmatprep.subr.bf16.mxu0 %v6455
    %10971 = vmatpush1.bf16.msra.mxu0 %v6454
    %10972 = vmatprep.subr.bf16.mxu0 %v6447
    %10973 = vmatpush1.bf16.msra.mxu0 %v6446
    %10974 = vmatprep.subr.bf16.mxu0 %v6439
    %10975 = vmatpush1.bf16.msra.mxu0 %v6438
    %10976 = vmatprep.subr.bf16.mxu0 %v6431
    %10977 = vmatpush1.bf16.msra.mxu0 %v6430
    %10978 = vmatprep.subr.bf16.mxu0 %v6423
    %10979 = vmatpush1.bf16.msra.mxu0 %v6422
    %10980 = vmatprep.subr.bf16.mxu0 %v6543
    %10981 = vmatpush2.bf16.msra.mxu0 %v6542
    %10982 = vmatprep.subr.bf16.mxu0 %v6535
    %10983 = vmatpush2.bf16.msra.mxu0 %v6534
    %10984 = vmatprep.subr.bf16.mxu0 %v6527
    %10985 = vmatpush2.bf16.msra.mxu0 %v6526
    %10986 = vmatprep.subr.bf16.mxu0 %v6519
    %10987 = vmatpush2.bf16.msra.mxu0 %v6518
    %10988 = vmatprep.subr.bf16.mxu0 %v6511
    %10989 = vmatpush2.bf16.msra.mxu0 %v6510
    %10990 = vmatprep.subr.bf16.mxu0 %v6503
    %10991 = vmatpush2.bf16.msra.mxu0 %v6502
    %10992 = vmatprep.subr.bf16.mxu0 %v6495
    %10993 = vmatpush2.bf16.msra.mxu0 %v6494
    %10994 = vmatprep.subr.bf16.mxu0 %v6487
    %10995 = vmatpush2.bf16.msra.mxu0 %v6486
    %10996 = vmatprep.mubr.bf16.mxu0 %v1761
    %10997 = vmatmul.mubr.bf16.gmra.mxu0 %v1760
    %v10998 = vpop.f32.mrf.mxu0
    %v10999 = vadd.f32 %v1711, %v10998
    %v11000 = vpop.f32.mrf.mxu0
    %v11001 = vadd.f32 %v1715, %v11000
    %v11002 = vpop.f32.mrf.mxu0
    %v11003 = vpop.f32.mrf.mxu0
    %11004 = vdwg.mxu0
    %11005 = vmatprep.subr.bf16.mxu0 %v6607
    %11006 = vmatpush1.bf16.msra.mxu0 %v6606
    %11007 = vmatprep.subr.bf16.mxu0 %v6599
    %11008 = vmatpush1.bf16.msra.mxu0 %v6598
    %11009 = vmatprep.subr.bf16.mxu0 %v6591
    %11010 = vmatpush1.bf16.msra.mxu0 %v6590
    %11011 = vmatprep.subr.bf16.mxu0 %v6583
    %11012 = vmatpush1.bf16.msra.mxu0 %v6582
    %11013 = vmatprep.subr.bf16.mxu0 %v6575
    %11014 = vmatpush1.bf16.msra.mxu0 %v6574
    %11015 = vmatprep.subr.bf16.mxu0 %v6567
    %11016 = vmatpush1.bf16.msra.mxu0 %v6566
    %11017 = vmatprep.subr.bf16.mxu0 %v6559
    %11018 = vmatpush1.bf16.msra.mxu0 %v6558
    %11019 = vmatprep.subr.bf16.mxu0 %v6551
    %11020 = vmatpush1.bf16.msra.mxu0 %v6550
    %11021 = vmatprep.subr.bf16.mxu0 %v6671
    %11022 = vmatpush2.bf16.msra.mxu0 %v6670
    %11023 = vmatprep.subr.bf16.mxu0 %v6663
    %11024 = vmatpush2.bf16.msra.mxu0 %v6662
    %11025 = vmatprep.subr.bf16.mxu0 %v6655
    %11026 = vmatpush2.bf16.msra.mxu0 %v6654
    %11027 = vmatprep.subr.bf16.mxu0 %v6647
    %11028 = vmatpush2.bf16.msra.mxu0 %v6646
    %11029 = vmatprep.subr.bf16.mxu0 %v6639
    %11030 = vmatpush2.bf16.msra.mxu0 %v6638
    %11031 = vmatprep.subr.bf16.mxu0 %v6631
    %11032 = vmatpush2.bf16.msra.mxu0 %v6630
    %11033 = vmatprep.subr.bf16.mxu0 %v6623
    %11034 = vmatpush2.bf16.msra.mxu0 %v6622
    %11035 = vmatprep.subr.bf16.mxu0 %v6615
    %11036 = vmatpush2.bf16.msra.mxu0 %v6614
    %11037 = vmatprep.mubr.bf16.mxu0 %v1763
    %11038 = vmatmul.mubr.bf16.gmra.mxu0 %v1762
    %v11039 = vpop.f32.mrf.mxu0
    %v11040 = vadd.f32 %v10999, %v11039
    %v11041 = vpop.f32.mrf.mxu0
    %v11042 = vadd.f32 %v11001, %v11041
    %v11043 = vpop.f32.mrf.mxu0
    %v11044 = vpop.f32.mrf.mxu0
    %11045 = vdwg.mxu0
    %11046 = vmatprep.subr.bf16.mxu0 %v6735
    %11047 = vmatpush1.bf16.msra.mxu0 %v6734
    %11048 = vmatprep.subr.bf16.mxu0 %v6727
    %11049 = vmatpush1.bf16.msra.mxu0 %v6726
    %11050 = vmatprep.subr.bf16.mxu0 %v6719
    %11051 = vmatpush1.bf16.msra.mxu0 %v6718
    %11052 = vmatprep.subr.bf16.mxu0 %v6711
    %11053 = vmatpush1.bf16.msra.mxu0 %v6710
    %11054 = vmatprep.subr.bf16.mxu0 %v6703
    %11055 = vmatpush1.bf16.msra.mxu0 %v6702
    %11056 = vmatprep.subr.bf16.mxu0 %v6695
    %11057 = vmatpush1.bf16.msra.mxu0 %v6694
    %11058 = vmatprep.subr.bf16.mxu0 %v6687
    %11059 = vmatpush1.bf16.msra.mxu0 %v6686
    %11060 = vmatprep.subr.bf16.mxu0 %v6679
    %11061 = vmatpush1.bf16.msra.mxu0 %v6678
    %11062 = vmatprep.subr.bf16.mxu0 %v6799
    %11063 = vmatpush2.bf16.msra.mxu0 %v6798
    %11064 = vmatprep.subr.bf16.mxu0 %v6791
    %11065 = vmatpush2.bf16.msra.mxu0 %v6790
    %11066 = vmatprep.subr.bf16.mxu0 %v6783
    %11067 = vmatpush2.bf16.msra.mxu0 %v6782
    %11068 = vmatprep.subr.bf16.mxu0 %v6775
    %11069 = vmatpush2.bf16.msra.mxu0 %v6774
    %11070 = vmatprep.subr.bf16.mxu0 %v6767
    %11071 = vmatpush2.bf16.msra.mxu0 %v6766
    %11072 = vmatprep.subr.bf16.mxu0 %v6759
    %11073 = vmatpush2.bf16.msra.mxu0 %v6758
    %11074 = vmatprep.subr.bf16.mxu0 %v6751
    %11075 = vmatpush2.bf16.msra.mxu0 %v6750
    %11076 = vmatprep.subr.bf16.mxu0 %v6743
    %11077 = vmatpush2.bf16.msra.mxu0 %v6742
    %11078 = vmatprep.mubr.bf16.mxu0 %v1765
    %11079 = vmatmul.mubr.bf16.gmra.mxu0 %v1764
    %v11080 = vpop.f32.mrf.mxu0
    %v11081 = vadd.f32 %v11040, %v11080
    %v11082 = vpop.f32.mrf.mxu0
    %v11083 = vadd.f32 %v11042, %v11082
    %v11084 = vpop.f32.mrf.mxu0
    %v11085 = vpop.f32.mrf.mxu0
    %11086 = vdwg.mxu0
    %11087 = vmatprep.subr.bf16.mxu0 %v6863
    %11088 = vmatpush1.bf16.msra.mxu0 %v6862
    %11089 = vmatprep.subr.bf16.mxu0 %v6855
    %11090 = vmatpush1.bf16.msra.mxu0 %v6854
    %11091 = vmatprep.subr.bf16.mxu0 %v6847
    %11092 = vmatpush1.bf16.msra.mxu0 %v6846
    %11093 = vmatprep.subr.bf16.mxu0 %v6839
    %11094 = vmatpush1.bf16.msra.mxu0 %v6838
    %11095 = vmatprep.subr.bf16.mxu0 %v6831
    %11096 = vmatpush1.bf16.msra.mxu0 %v6830
    %11097 = vmatprep.subr.bf16.mxu0 %v6823
    %11098 = vmatpush1.bf16.msra.mxu0 %v6822
    %11099 = vmatprep.subr.bf16.mxu0 %v6815
    %11100 = vmatpush1.bf16.msra.mxu0 %v6814
    %11101 = vmatprep.subr.bf16.mxu0 %v6807
    %11102 = vmatpush1.bf16.msra.mxu0 %v6806
    %11103 = vmatprep.subr.bf16.mxu0 %v6927
    %11104 = vmatpush2.bf16.msra.mxu0 %v6926
    %11105 = vmatprep.subr.bf16.mxu0 %v6919
    %11106 = vmatpush2.bf16.msra.mxu0 %v6918
    %11107 = vmatprep.subr.bf16.mxu0 %v6911
    %11108 = vmatpush2.bf16.msra.mxu0 %v6910
    %11109 = vmatprep.subr.bf16.mxu0 %v6903
    %11110 = vmatpush2.bf16.msra.mxu0 %v6902
    %11111 = vmatprep.subr.bf16.mxu0 %v6895
    %11112 = vmatpush2.bf16.msra.mxu0 %v6894
    %11113 = vmatprep.subr.bf16.mxu0 %v6887
    %11114 = vmatpush2.bf16.msra.mxu0 %v6886
    %11115 = vmatprep.subr.bf16.mxu0 %v6879
    %11116 = vmatpush2.bf16.msra.mxu0 %v6878
    %11117 = vmatprep.subr.bf16.mxu0 %v6871
    %11118 = vmatpush2.bf16.msra.mxu0 %v6870
    %11119 = vmatprep.mubr.bf16.mxu0 %v1767
    %11120 = vmatmul.mubr.bf16.gmra.mxu0 %v1766
    %v11121 = vpop.f32.mrf.mxu0
    %v11122 = vadd.f32 %v11081, %v11121
    %v11123 = vpop.f32.mrf.mxu0
    %v11124 = vadd.f32 %v11083, %v11123
    %v11125 = vpop.f32.mrf.mxu0
    %v11126 = vpop.f32.mrf.mxu0
    %11127 = vdwg.mxu0
    %11128 = vmatprep.subr.bf16.mxu0 %v6991
    %11129 = vmatpush1.bf16.msra.mxu0 %v6990
    %11130 = vmatprep.subr.bf16.mxu0 %v6983
    %11131 = vmatpush1.bf16.msra.mxu0 %v6982
    %11132 = vmatprep.subr.bf16.mxu0 %v6975
    %11133 = vmatpush1.bf16.msra.mxu0 %v6974
    %11134 = vmatprep.subr.bf16.mxu0 %v6967
    %11135 = vmatpush1.bf16.msra.mxu0 %v6966
    %11136 = vmatprep.subr.bf16.mxu0 %v6959
    %11137 = vmatpush1.bf16.msra.mxu0 %v6958
    %11138 = vmatprep.subr.bf16.mxu0 %v6951
    %11139 = vmatpush1.bf16.msra.mxu0 %v6950
    %11140 = vmatprep.subr.bf16.mxu0 %v6943
    %11141 = vmatpush1.bf16.msra.mxu0 %v6942
    %11142 = vmatprep.subr.bf16.mxu0 %v6935
    %11143 = vmatpush1.bf16.msra.mxu0 %v6934
    %11144 = vmatprep.subr.bf16.mxu0 %v7055
    %11145 = vmatpush2.bf16.msra.mxu0 %v7054
    %11146 = vmatprep.subr.bf16.mxu0 %v7047
    %11147 = vmatpush2.bf16.msra.mxu0 %v7046
    %11148 = vmatprep.subr.bf16.mxu0 %v7039
    %11149 = vmatpush2.bf16.msra.mxu0 %v7038
    %11150 = vmatprep.subr.bf16.mxu0 %v7031
    %11151 = vmatpush2.bf16.msra.mxu0 %v7030
    %11152 = vmatprep.subr.bf16.mxu0 %v7023
    %11153 = vmatpush2.bf16.msra.mxu0 %v7022
    %11154 = vmatprep.subr.bf16.mxu0 %v7015
    %11155 = vmatpush2.bf16.msra.mxu0 %v7014
    %11156 = vmatprep.subr.bf16.mxu0 %v7007
    %11157 = vmatpush2.bf16.msra.mxu0 %v7006
    %11158 = vmatprep.subr.bf16.mxu0 %v6999
    %11159 = vmatpush2.bf16.msra.mxu0 %v6998
    %11160 = vmatprep.mubr.bf16.mxu0 %v1769
    %11161 = vmatmul.mubr.bf16.gmra.mxu0 %v1768
    %v11162 = vpop.f32.mrf.mxu0
    %v11163 = vadd.f32 %v11122, %v11162
    %v11164 = vpop.f32.mrf.mxu0
    %v11165 = vadd.f32 %v11124, %v11164
    %v11166 = vpop.f32.mrf.mxu0
    %v11167 = vpop.f32.mrf.mxu0
    %11168 = vdwg.mxu0
    %11169 = vmatprep.subr.bf16.mxu0 %v7119
    %11170 = vmatpush1.bf16.msra.mxu0 %v7118
    %11171 = vmatprep.subr.bf16.mxu0 %v7111
    %11172 = vmatpush1.bf16.msra.mxu0 %v7110
    %11173 = vmatprep.subr.bf16.mxu0 %v7103
    %11174 = vmatpush1.bf16.msra.mxu0 %v7102
    %11175 = vmatprep.subr.bf16.mxu0 %v7095
    %11176 = vmatpush1.bf16.msra.mxu0 %v7094
    %11177 = vmatprep.subr.bf16.mxu0 %v7087
    %11178 = vmatpush1.bf16.msra.mxu0 %v7086
    %11179 = vmatprep.subr.bf16.mxu0 %v7079
    %11180 = vmatpush1.bf16.msra.mxu0 %v7078
    %11181 = vmatprep.subr.bf16.mxu0 %v7071
    %11182 = vmatpush1.bf16.msra.mxu0 %v7070
    %11183 = vmatprep.subr.bf16.mxu0 %v7063
    %11184 = vmatpush1.bf16.msra.mxu0 %v7062
    %11185 = vmatprep.subr.bf16.mxu0 %v7183
    %11186 = vmatpush2.bf16.msra.mxu0 %v7182
    %11187 = vmatprep.subr.bf16.mxu0 %v7175
    %11188 = vmatpush2.bf16.msra.mxu0 %v7174
    %11189 = vmatprep.subr.bf16.mxu0 %v7167
    %11190 = vmatpush2.bf16.msra.mxu0 %v7166
    %11191 = vmatprep.subr.bf16.mxu0 %v7159
    %11192 = vmatpush2.bf16.msra.mxu0 %v7158
    %11193 = vmatprep.subr.bf16.mxu0 %v7151
    %11194 = vmatpush2.bf16.msra.mxu0 %v7150
    %11195 = vmatprep.subr.bf16.mxu0 %v7143
    %11196 = vmatpush2.bf16.msra.mxu0 %v7142
    %11197 = vmatprep.subr.bf16.mxu0 %v7135
    %11198 = vmatpush2.bf16.msra.mxu0 %v7134
    %11199 = vmatprep.subr.bf16.mxu0 %v7127
    %11200 = vmatpush2.bf16.msra.mxu0 %v7126
    %11201 = vmatprep.mubr.bf16.mxu0 %v1771
    %11202 = vmatmul.mubr.bf16.gmra.mxu0 %v1770
    %v11203 = vpop.f32.mrf.mxu0
    %v11204 = vadd.f32 %v11163, %v11203
    %v11205 = vpop.f32.mrf.mxu0
    %v11206 = vadd.f32 %v11165, %v11205
    %v11207 = vpop.f32.mrf.mxu0
    %v11208 = vpop.f32.mrf.mxu0
    %11209 = vdwg.mxu0
    %11210 = vmatprep.subr.bf16.mxu0 %v7247
    %11211 = vmatpush1.bf16.msra.mxu0 %v7246
    %11212 = vmatprep.subr.bf16.mxu0 %v7239
    %11213 = vmatpush1.bf16.msra.mxu0 %v7238
    %11214 = vmatprep.subr.bf16.mxu0 %v7231
    %11215 = vmatpush1.bf16.msra.mxu0 %v7230
    %11216 = vmatprep.subr.bf16.mxu0 %v7223
    %11217 = vmatpush1.bf16.msra.mxu0 %v7222
    %11218 = vmatprep.subr.bf16.mxu0 %v7215
    %11219 = vmatpush1.bf16.msra.mxu0 %v7214
    %11220 = vmatprep.subr.bf16.mxu0 %v7207
    %11221 = vmatpush1.bf16.msra.mxu0 %v7206
    %11222 = vmatprep.subr.bf16.mxu0 %v7199
    %11223 = vmatpush1.bf16.msra.mxu0 %v7198
    %11224 = vmatprep.subr.bf16.mxu0 %v7191
    %11225 = vmatpush1.bf16.msra.mxu0 %v7190
    %11226 = vmatprep.subr.bf16.mxu0 %v7311
    %11227 = vmatpush2.bf16.msra.mxu0 %v7310
    %11228 = vmatprep.subr.bf16.mxu0 %v7303
    %11229 = vmatpush2.bf16.msra.mxu0 %v7302
    %11230 = vmatprep.subr.bf16.mxu0 %v7295
    %11231 = vmatpush2.bf16.msra.mxu0 %v7294
    %11232 = vmatprep.subr.bf16.mxu0 %v7287
    %11233 = vmatpush2.bf16.msra.mxu0 %v7286
    %11234 = vmatprep.subr.bf16.mxu0 %v7279
    %11235 = vmatpush2.bf16.msra.mxu0 %v7278
    %11236 = vmatprep.subr.bf16.mxu0 %v7271
    %11237 = vmatpush2.bf16.msra.mxu0 %v7270
    %11238 = vmatprep.subr.bf16.mxu0 %v7263
    %11239 = vmatpush2.bf16.msra.mxu0 %v7262
    %11240 = vmatprep.subr.bf16.mxu0 %v7255
    %11241 = vmatpush2.bf16.msra.mxu0 %v7254
    %11242 = vmatprep.mubr.bf16.mxu0 %v1773
    %11243 = vmatmul.mubr.bf16.gmra.mxu0 %v1772
    %v11244 = vpop.f32.mrf.mxu0
    %v11245 = vadd.f32 %v11204, %v11244
    %v11246 = vpop.f32.mrf.mxu0
    %v11247 = vadd.f32 %v11206, %v11246
    %v11248 = vpop.f32.mrf.mxu0
    %v11249 = vpop.f32.mrf.mxu0
    %11250 = vdwg.mxu0
    %11251 = vmatprep.subr.bf16.mxu0 %v7375
    %11252 = vmatpush1.bf16.msra.mxu0 %v7374
    %11253 = vmatprep.subr.bf16.mxu0 %v7367
    %11254 = vmatpush1.bf16.msra.mxu0 %v7366
    %11255 = vmatprep.subr.bf16.mxu0 %v7359
    %11256 = vmatpush1.bf16.msra.mxu0 %v7358
    %11257 = vmatprep.subr.bf16.mxu0 %v7351
    %11258 = vmatpush1.bf16.msra.mxu0 %v7350
    %11259 = vmatprep.subr.bf16.mxu0 %v7343
    %11260 = vmatpush1.bf16.msra.mxu0 %v7342
    %11261 = vmatprep.subr.bf16.mxu0 %v7335
    %11262 = vmatpush1.bf16.msra.mxu0 %v7334
    %11263 = vmatprep.subr.bf16.mxu0 %v7327
    %11264 = vmatpush1.bf16.msra.mxu0 %v7326
    %11265 = vmatprep.subr.bf16.mxu0 %v7319
    %11266 = vmatpush1.bf16.msra.mxu0 %v7318
    %11267 = vmatprep.subr.bf16.mxu0 %v7439
    %11268 = vmatpush2.bf16.msra.mxu0 %v7438
    %11269 = vmatprep.subr.bf16.mxu0 %v7431
    %11270 = vmatpush2.bf16.msra.mxu0 %v7430
    %11271 = vmatprep.subr.bf16.mxu0 %v7423
    %11272 = vmatpush2.bf16.msra.mxu0 %v7422
    %11273 = vmatprep.subr.bf16.mxu0 %v7415
    %11274 = vmatpush2.bf16.msra.mxu0 %v7414
    %11275 = vmatprep.subr.bf16.mxu0 %v7407
    %11276 = vmatpush2.bf16.msra.mxu0 %v7406
    %11277 = vmatprep.subr.bf16.mxu0 %v7399
    %11278 = vmatpush2.bf16.msra.mxu0 %v7398
    %11279 = vmatprep.subr.bf16.mxu0 %v7391
    %11280 = vmatpush2.bf16.msra.mxu0 %v7390
    %11281 = vmatprep.subr.bf16.mxu0 %v7383
    %11282 = vmatpush2.bf16.msra.mxu0 %v7382
    %11283 = vmatprep.mubr.bf16.mxu0 %v1775
    %11284 = vmatmul.mubr.bf16.gmra.mxu0 %v1774
    %v11285 = vpop.f32.mrf.mxu0
    %v11286 = vadd.f32 %v11245, %v11285
    %v11287 = vpop.f32.mrf.mxu0
    %v11288 = vadd.f32 %v11247, %v11287
    %v11289 = vpop.f32.mrf.mxu0
    %v11290 = vpop.f32.mrf.mxu0
    %11291 = vdwg.mxu0
    %11292 = vmatprep.subr.bf16.mxu0 %v7503
    %11293 = vmatpush1.bf16.msra.mxu0 %v7502
    %11294 = vmatprep.subr.bf16.mxu0 %v7495
    %11295 = vmatpush1.bf16.msra.mxu0 %v7494
    %11296 = vmatprep.subr.bf16.mxu0 %v7487
    %11297 = vmatpush1.bf16.msra.mxu0 %v7486
    %11298 = vmatprep.subr.bf16.mxu0 %v7479
    %11299 = vmatpush1.bf16.msra.mxu0 %v7478
    %11300 = vmatprep.subr.bf16.mxu0 %v7471
    %11301 = vmatpush1.bf16.msra.mxu0 %v7470
    %11302 = vmatprep.subr.bf16.mxu0 %v7463
    %11303 = vmatpush1.bf16.msra.mxu0 %v7462
    %11304 = vmatprep.subr.bf16.mxu0 %v7455
    %11305 = vmatpush1.bf16.msra.mxu0 %v7454
    %11306 = vmatprep.subr.bf16.mxu0 %v7447
    %11307 = vmatpush1.bf16.msra.mxu0 %v7446
    %11308 = vmatprep.subr.bf16.mxu0 %v7567
    %11309 = vmatpush2.bf16.msra.mxu0 %v7566
    %11310 = vmatprep.subr.bf16.mxu0 %v7559
    %11311 = vmatpush2.bf16.msra.mxu0 %v7558
    %11312 = vmatprep.subr.bf16.mxu0 %v7551
    %11313 = vmatpush2.bf16.msra.mxu0 %v7550
    %11314 = vmatprep.subr.bf16.mxu0 %v7543
    %11315 = vmatpush2.bf16.msra.mxu0 %v7542
    %11316 = vmatprep.subr.bf16.mxu0 %v7535
    %11317 = vmatpush2.bf16.msra.mxu0 %v7534
    %11318 = vmatprep.subr.bf16.mxu0 %v7527
    %11319 = vmatpush2.bf16.msra.mxu0 %v7526
    %11320 = vmatprep.subr.bf16.mxu0 %v7519
    %11321 = vmatpush2.bf16.msra.mxu0 %v7518
    %11322 = vmatprep.subr.bf16.mxu0 %v7511
    %11323 = vmatpush2.bf16.msra.mxu0 %v7510
    %11324 = vmatprep.mubr.bf16.mxu0 %v1777
    %11325 = vmatmul.mubr.bf16.gmra.mxu0 %v1776
    %v11326 = vpop.f32.mrf.mxu0
    %v11327 = vadd.f32 %v11286, %v11326
    %v11328 = vpop.f32.mrf.mxu0
    %v11329 = vadd.f32 %v11288, %v11328
    %v11330 = vpop.f32.mrf.mxu0
    %v11331 = vpop.f32.mrf.mxu0
    %11332 = vdwg.mxu0
    %11333 = vmatprep.subr.bf16.mxu0 %v7631
    %11334 = vmatpush1.bf16.msra.mxu0 %v7630
    %11335 = vmatprep.subr.bf16.mxu0 %v7623
    %11336 = vmatpush1.bf16.msra.mxu0 %v7622
    %11337 = vmatprep.subr.bf16.mxu0 %v7615
    %11338 = vmatpush1.bf16.msra.mxu0 %v7614
    %11339 = vmatprep.subr.bf16.mxu0 %v7607
    %11340 = vmatpush1.bf16.msra.mxu0 %v7606
    %11341 = vmatprep.subr.bf16.mxu0 %v7599
    %11342 = vmatpush1.bf16.msra.mxu0 %v7598
    %11343 = vmatprep.subr.bf16.mxu0 %v7591
    %11344 = vmatpush1.bf16.msra.mxu0 %v7590
    %11345 = vmatprep.subr.bf16.mxu0 %v7583
    %11346 = vmatpush1.bf16.msra.mxu0 %v7582
    %11347 = vmatprep.subr.bf16.mxu0 %v7575
    %11348 = vmatpush1.bf16.msra.mxu0 %v7574
    %11349 = vmatprep.subr.bf16.mxu0 %v7695
    %11350 = vmatpush2.bf16.msra.mxu0 %v7694
    %11351 = vmatprep.subr.bf16.mxu0 %v7687
    %11352 = vmatpush2.bf16.msra.mxu0 %v7686
    %11353 = vmatprep.subr.bf16.mxu0 %v7679
    %11354 = vmatpush2.bf16.msra.mxu0 %v7678
    %11355 = vmatprep.subr.bf16.mxu0 %v7671
    %11356 = vmatpush2.bf16.msra.mxu0 %v7670
    %11357 = vmatprep.subr.bf16.mxu0 %v7663
    %11358 = vmatpush2.bf16.msra.mxu0 %v7662
    %11359 = vmatprep.subr.bf16.mxu0 %v7655
    %11360 = vmatpush2.bf16.msra.mxu0 %v7654
    %11361 = vmatprep.subr.bf16.mxu0 %v7647
    %11362 = vmatpush2.bf16.msra.mxu0 %v7646
    %11363 = vmatprep.subr.bf16.mxu0 %v7639
    %11364 = vmatpush2.bf16.msra.mxu0 %v7638
    %11365 = vmatprep.mubr.bf16.mxu0 %v1779
    %11366 = vmatmul.mubr.bf16.gmra.mxu0 %v1778
    %v11367 = vpop.f32.mrf.mxu0
    %v11368 = vadd.f32 %v11327, %v11367
    %v11369 = vpop.f32.mrf.mxu0
    %v11370 = vadd.f32 %v11329, %v11369
    %v11371 = vpop.f32.mrf.mxu0
    %v11372 = vpop.f32.mrf.mxu0
    %11373 = vdwg.mxu0
    %11374 = vmatprep.subr.bf16.mxu0 %v7759
    %11375 = vmatpush1.bf16.msra.mxu0 %v7758
    %11376 = vmatprep.subr.bf16.mxu0 %v7751
    %11377 = vmatpush1.bf16.msra.mxu0 %v7750
    %11378 = vmatprep.subr.bf16.mxu0 %v7743
    %11379 = vmatpush1.bf16.msra.mxu0 %v7742
    %11380 = vmatprep.subr.bf16.mxu0 %v7735
    %11381 = vmatpush1.bf16.msra.mxu0 %v7734
    %11382 = vmatprep.subr.bf16.mxu0 %v7727
    %11383 = vmatpush1.bf16.msra.mxu0 %v7726
    %11384 = vmatprep.subr.bf16.mxu0 %v7719
    %11385 = vmatpush1.bf16.msra.mxu0 %v7718
    %11386 = vmatprep.subr.bf16.mxu0 %v7711
    %11387 = vmatpush1.bf16.msra.mxu0 %v7710
    %11388 = vmatprep.subr.bf16.mxu0 %v7703
    %11389 = vmatpush1.bf16.msra.mxu0 %v7702
    %11390 = vmatprep.subr.bf16.mxu0 %v7823
    %11391 = vmatpush2.bf16.msra.mxu0 %v7822
    %11392 = vmatprep.subr.bf16.mxu0 %v7815
    %11393 = vmatpush2.bf16.msra.mxu0 %v7814
    %11394 = vmatprep.subr.bf16.mxu0 %v7807
    %11395 = vmatpush2.bf16.msra.mxu0 %v7806
    %11396 = vmatprep.subr.bf16.mxu0 %v7799
    %11397 = vmatpush2.bf16.msra.mxu0 %v7798
    %11398 = vmatprep.subr.bf16.mxu0 %v7791
    %11399 = vmatpush2.bf16.msra.mxu0 %v7790
    %11400 = vmatprep.subr.bf16.mxu0 %v7783
    %11401 = vmatpush2.bf16.msra.mxu0 %v7782
    %11402 = vmatprep.subr.bf16.mxu0 %v7775
    %11403 = vmatpush2.bf16.msra.mxu0 %v7774
    %11404 = vmatprep.subr.bf16.mxu0 %v7767
    %11405 = vmatpush2.bf16.msra.mxu0 %v7766
    %11406 = vmatprep.mubr.bf16.mxu0 %v1781
    %11407 = vmatmul.mubr.bf16.gmra.mxu0 %v1780
    %v11408 = vpop.f32.mrf.mxu0
    %v11409 = vadd.f32 %v11368, %v11408
    %v11410 = vpop.f32.mrf.mxu0
    %v11411 = vadd.f32 %v11370, %v11410
    %v11412 = vpop.f32.mrf.mxu0
    %v11413 = vpop.f32.mrf.mxu0
    %11414 = vdwg.mxu0
    %11415 = vmatprep.subr.bf16.mxu0 %v7887
    %11416 = vmatpush1.bf16.msra.mxu0 %v7886
    %11417 = vmatprep.subr.bf16.mxu0 %v7879
    %11418 = vmatpush1.bf16.msra.mxu0 %v7878
    %11419 = vmatprep.subr.bf16.mxu0 %v7871
    %11420 = vmatpush1.bf16.msra.mxu0 %v7870
    %11421 = vmatprep.subr.bf16.mxu0 %v7863
    %11422 = vmatpush1.bf16.msra.mxu0 %v7862
    %11423 = vmatprep.subr.bf16.mxu0 %v7855
    %11424 = vmatpush1.bf16.msra.mxu0 %v7854
    %11425 = vmatprep.subr.bf16.mxu0 %v7847
    %11426 = vmatpush1.bf16.msra.mxu0 %v7846
    %11427 = vmatprep.subr.bf16.mxu0 %v7839
    %11428 = vmatpush1.bf16.msra.mxu0 %v7838
    %11429 = vmatprep.subr.bf16.mxu0 %v7831
    %11430 = vmatpush1.bf16.msra.mxu0 %v7830
    %11431 = vmatprep.subr.bf16.mxu0 %v7951
    %11432 = vmatpush2.bf16.msra.mxu0 %v7950
    %11433 = vmatprep.subr.bf16.mxu0 %v7943
    %11434 = vmatpush2.bf16.msra.mxu0 %v7942
    %11435 = vmatprep.subr.bf16.mxu0 %v7935
    %11436 = vmatpush2.bf16.msra.mxu0 %v7934
    %11437 = vmatprep.subr.bf16.mxu0 %v7927
    %11438 = vmatpush2.bf16.msra.mxu0 %v7926
    %11439 = vmatprep.subr.bf16.mxu0 %v7919
    %11440 = vmatpush2.bf16.msra.mxu0 %v7918
    %11441 = vmatprep.subr.bf16.mxu0 %v7911
    %11442 = vmatpush2.bf16.msra.mxu0 %v7910
    %11443 = vmatprep.subr.bf16.mxu0 %v7903
    %11444 = vmatpush2.bf16.msra.mxu0 %v7902
    %11445 = vmatprep.subr.bf16.mxu0 %v7895
    %11446 = vmatpush2.bf16.msra.mxu0 %v7894
    %11447 = vmatprep.mubr.bf16.mxu0 %v1783
    %11448 = vmatmul.mubr.bf16.gmra.mxu0 %v1782
    %v11449 = vpop.f32.mrf.mxu0
    %v11450 = vadd.f32 %v11409, %v11449
    %v11451 = vpop.f32.mrf.mxu0
    %v11452 = vadd.f32 %v11411, %v11451
    %v11453 = vpop.f32.mrf.mxu0
    %v11454 = vpop.f32.mrf.mxu0
    %11455 = vdwg.mxu0
    %v11456 = vmax.f32 %v9974, 0.0
    %v11457 = vmax.f32 %v9976, 0.0
    %v11458 = vmax.f32 %v10466, 0.0
    %v11459 = vmax.f32 %v10468, 0.0
    %v11460 = vmax.f32 %v10958, 0.0
    %v11461 = vmax.f32 %v10960, 0.0
    %v11462 = vmax.f32 %v11450, 0.0
    %v11463 = vmax.f32 %v11452, 0.0
    %v11464 = vpack.c.bf16 %v11456, %v11456
    %v11465 = vpack.c.bf16 %v11457, %v11457
    %v11466 = vpack.c.bf16 %v11458, %v11458
    %v11467 = vpack.c.bf16 %v11459, %v11459
    %v11468 = vpack.c.bf16 %v11460, %v11460
    %v11469 = vpack.c.bf16 %v11461, %v11461
    %v11470 = vpack.c.bf16 %v11462, %v11462
    %v11471 = vpack.c.bf16 %v11463, %v11463
    %v11472 = vld [vmem:[#allocation6] sm:$0xff]
    %v11473 = vld [vmem:[#allocation6 + $0x8] sm:$0xff]
    %v11474 = vld [vmem:[#allocation6 + $0x10] sm:$0xff]
    %v11475 = vld [vmem:[#allocation6 + $0x18] sm:$0xff]
    %v11476 = vld [vmem:[#allocation6 + $0x20] sm:$0xff]
    %v11477 = vld [vmem:[#allocation6 + $0x28] sm:$0xff]
    %v11478 = vld [vmem:[#allocation6 + $0x30] sm:$0xff]
    %v11479 = vld [vmem:[#allocation6 + $0x38] sm:$0xff]
    %v11480 = vld [vmem:[#allocation6 + $0x40] sm:$0xff]
    %v11481 = vld [vmem:[#allocation6 + $0x48] sm:$0xff]
    %v11482 = vld [vmem:[#allocation6 + $0x50] sm:$0xff]
    %v11483 = vld [vmem:[#allocation6 + $0x58] sm:$0xff]
    %v11484 = vld [vmem:[#allocation6 + $0x60] sm:$0xff]
    %v11485 = vld [vmem:[#allocation6 + $0x68] sm:$0xff]
    %v11486 = vld [vmem:[#allocation6 + $0x70] sm:$0xff]
    %v11487 = vld [vmem:[#allocation6 + $0x78] sm:$0xff]
    %v11488 = vld [vmem:[#allocation6 + $0x80] sm:$0xff]
    %v11489 = vld [vmem:[#allocation6 + $0x88] sm:$0xff]
    %v11490 = vld [vmem:[#allocation6 + $0x90] sm:$0xff]
    %v11491 = vld [vmem:[#allocation6 + $0x98] sm:$0xff]
    %v11492 = vld [vmem:[#allocation6 + $0xa0] sm:$0xff]
    %v11493 = vld [vmem:[#allocation6 + $0xa8] sm:$0xff]
    %v11494 = vld [vmem:[#allocation6 + $0xb0] sm:$0xff]
    %v11495 = vld [vmem:[#allocation6 + $0xb8] sm:$0xff]
    %v11496 = vld [vmem:[#allocation6 + $0xc0] sm:$0xff]
    %v11497 = vld [vmem:[#allocation6 + $0xc8] sm:$0xff]
    %v11498 = vld [vmem:[#allocation6 + $0xd0] sm:$0xff]
    %v11499 = vld [vmem:[#allocation6 + $0xd8] sm:$0xff]
    %v11500 = vld [vmem:[#allocation6 + $0xe0] sm:$0xff]
    %v11501 = vld [vmem:[#allocation6 + $0xe8] sm:$0xff]
    %v11502 = vld [vmem:[#allocation6 + $0xf0] sm:$0xff]
    %v11503 = vld [vmem:[#allocation6 + $0xf8] sm:$0xff]
    %v11504 = vld [vmem:[#allocation6 + $0x100] sm:$0xff]
    %v11505 = vld [vmem:[#allocation6 + $0x108] sm:$0xff]
    %v11506 = vld [vmem:[#allocation6 + $0x110] sm:$0xff]
    %v11507 = vld [vmem:[#allocation6 + $0x118] sm:$0xff]
    %v11508 = vld [vmem:[#allocation6 + $0x120] sm:$0xff]
    %v11509 = vld [vmem:[#allocation6 + $0x128] sm:$0xff]
    %v11510 = vld [vmem:[#allocation6 + $0x130] sm:$0xff]
    %v11511 = vld [vmem:[#allocation6 + $0x138] sm:$0xff]
    %v11512 = vld [vmem:[#allocation6 + $0x140] sm:$0xff]
    %v11513 = vld [vmem:[#allocation6 + $0x148] sm:$0xff]
    %v11514 = vld [vmem:[#allocation6 + $0x150] sm:$0xff]
    %v11515 = vld [vmem:[#allocation6 + $0x158] sm:$0xff]
    %v11516 = vld [vmem:[#allocation6 + $0x160] sm:$0xff]
    %v11517 = vld [vmem:[#allocation6 + $0x168] sm:$0xff]
    %v11518 = vld [vmem:[#allocation6 + $0x170] sm:$0xff]
    %v11519 = vld [vmem:[#allocation6 + $0x178] sm:$0xff]
    %v11520 = vld [vmem:[#allocation6 + $0x180] sm:$0xff]
    %v11521 = vld [vmem:[#allocation6 + $0x188] sm:$0xff]
    %v11522 = vld [vmem:[#allocation6 + $0x190] sm:$0xff]
    %v11523 = vld [vmem:[#allocation6 + $0x198] sm:$0xff]
    %v11524 = vld [vmem:[#allocation6 + $0x1a0] sm:$0xff]
    %v11525 = vld [vmem:[#allocation6 + $0x1a8] sm:$0xff]
    %v11526 = vld [vmem:[#allocation6 + $0x1b0] sm:$0xff]
    %v11527 = vld [vmem:[#allocation6 + $0x1b8] sm:$0xff]
    %v11528 = vld [vmem:[#allocation6 + $0x1c0] sm:$0xff]
    %v11529 = vld [vmem:[#allocation6 + $0x1c8] sm:$0xff]
    %v11530 = vld [vmem:[#allocation6 + $0x1d0] sm:$0xff]
    %v11531 = vld [vmem:[#allocation6 + $0x1d8] sm:$0xff]
    %v11532 = vld [vmem:[#allocation6 + $0x1e0] sm:$0xff]
    %v11533 = vld [vmem:[#allocation6 + $0x1e8] sm:$0xff]
    %v11534 = vld [vmem:[#allocation6 + $0x1f0] sm:$0xff]
    %v11535 = vld [vmem:[#allocation6 + $0x1f8] sm:$0xff]
    %v11536 = vld [vmem:[#allocation6 + $0x200] sm:$0xff]
    %v11537 = vld [vmem:[#allocation6 + $0x208] sm:$0xff]
    %v11538 = vld [vmem:[#allocation6 + $0x210] sm:$0xff]
    %v11539 = vld [vmem:[#allocation6 + $0x218] sm:$0xff]
    %v11540 = vld [vmem:[#allocation6 + $0x220] sm:$0xff]
    %v11541 = vld [vmem:[#allocation6 + $0x228] sm:$0xff]
    %v11542 = vld [vmem:[#allocation6 + $0x230] sm:$0xff]
    %v11543 = vld [vmem:[#allocation6 + $0x238] sm:$0xff]
    %v11544 = vld [vmem:[#allocation6 + $0x240] sm:$0xff]
    %v11545 = vld [vmem:[#allocation6 + $0x248] sm:$0xff]
    %v11546 = vld [vmem:[#allocation6 + $0x250] sm:$0xff]
    %v11547 = vld [vmem:[#allocation6 + $0x258] sm:$0xff]
    %v11548 = vld [vmem:[#allocation6 + $0x260] sm:$0xff]
    %v11549 = vld [vmem:[#allocation6 + $0x268] sm:$0xff]
    %v11550 = vld [vmem:[#allocation6 + $0x270] sm:$0xff]
    %v11551 = vld [vmem:[#allocation6 + $0x278] sm:$0xff]
    %v11552 = vld [vmem:[#allocation6 + $0x280] sm:$0xff]
    %v11553 = vld [vmem:[#allocation6 + $0x288] sm:$0xff]
    %v11554 = vld [vmem:[#allocation6 + $0x290] sm:$0xff]
    %v11555 = vld [vmem:[#allocation6 + $0x298] sm:$0xff]
    %v11556 = vld [vmem:[#allocation6 + $0x2a0] sm:$0xff]
    %v11557 = vld [vmem:[#allocation6 + $0x2a8] sm:$0xff]
    %v11558 = vld [vmem:[#allocation6 + $0x2b0] sm:$0xff]
    %v11559 = vld [vmem:[#allocation6 + $0x2b8] sm:$0xff]
    %v11560 = vld [vmem:[#allocation6 + $0x2c0] sm:$0xff]
    %v11561 = vld [vmem:[#allocation6 + $0x2c8] sm:$0xff]
    %v11562 = vld [vmem:[#allocation6 + $0x2d0] sm:$0xff]
    %v11563 = vld [vmem:[#allocation6 + $0x2d8] sm:$0xff]
    %v11564 = vld [vmem:[#allocation6 + $0x2e0] sm:$0xff]
    %v11565 = vld [vmem:[#allocation6 + $0x2e8] sm:$0xff]
    %v11566 = vld [vmem:[#allocation6 + $0x2f0] sm:$0xff]
    %v11567 = vld [vmem:[#allocation6 + $0x2f8] sm:$0xff]
    %v11568 = vld [vmem:[#allocation6 + $0x300] sm:$0xff]
    %v11569 = vld [vmem:[#allocation6 + $0x308] sm:$0xff]
    %v11570 = vld [vmem:[#allocation6 + $0x310] sm:$0xff]
    %v11571 = vld [vmem:[#allocation6 + $0x318] sm:$0xff]
    %v11572 = vld [vmem:[#allocation6 + $0x320] sm:$0xff]
    %v11573 = vld [vmem:[#allocation6 + $0x328] sm:$0xff]
    %v11574 = vld [vmem:[#allocation6 + $0x330] sm:$0xff]
    %v11575 = vld [vmem:[#allocation6 + $0x338] sm:$0xff]
    %v11576 = vld [vmem:[#allocation6 + $0x340] sm:$0xff]
    %v11577 = vld [vmem:[#allocation6 + $0x348] sm:$0xff]
    %v11578 = vld [vmem:[#allocation6 + $0x350] sm:$0xff]
    %v11579 = vld [vmem:[#allocation6 + $0x358] sm:$0xff]
    %v11580 = vld [vmem:[#allocation6 + $0x360] sm:$0xff]
    %v11581 = vld [vmem:[#allocation6 + $0x368] sm:$0xff]
    %v11582 = vld [vmem:[#allocation6 + $0x370] sm:$0xff]
    %v11583 = vld [vmem:[#allocation6 + $0x378] sm:$0xff]
    %v11584 = vld [vmem:[#allocation6 + $0x380] sm:$0xff]
    %v11585 = vld [vmem:[#allocation6 + $0x388] sm:$0xff]
    %v11586 = vld [vmem:[#allocation6 + $0x390] sm:$0xff]
    %v11587 = vld [vmem:[#allocation6 + $0x398] sm:$0xff]
    %v11588 = vld [vmem:[#allocation6 + $0x3a0] sm:$0xff]
    %v11589 = vld [vmem:[#allocation6 + $0x3a8] sm:$0xff]
    %v11590 = vld [vmem:[#allocation6 + $0x3b0] sm:$0xff]
    %v11591 = vld [vmem:[#allocation6 + $0x3b8] sm:$0xff]
    %v11592 = vld [vmem:[#allocation6 + $0x3c0] sm:$0xff]
    %v11593 = vld [vmem:[#allocation6 + $0x3c8] sm:$0xff]
    %v11594 = vld [vmem:[#allocation6 + $0x3d0] sm:$0xff]
    %v11595 = vld [vmem:[#allocation6 + $0x3d8] sm:$0xff]
    %v11596 = vld [vmem:[#allocation6 + $0x3e0] sm:$0xff]
    %v11597 = vld [vmem:[#allocation6 + $0x3e8] sm:$0xff]
    %v11598 = vld [vmem:[#allocation6 + $0x3f0] sm:$0xff]
    %v11599 = vld [vmem:[#allocation6 + $0x3f8] sm:$0xff]
    %v11600 = vld [vmem:[#allocation6 + $0x400] sm:$0xff]
    %v11601 = vld [vmem:[#allocation6 + $0x408] sm:$0xff]
    %v11602 = vld [vmem:[#allocation6 + $0x410] sm:$0xff]
    %v11603 = vld [vmem:[#allocation6 + $0x418] sm:$0xff]
    %v11604 = vld [vmem:[#allocation6 + $0x420] sm:$0xff]
    %v11605 = vld [vmem:[#allocation6 + $0x428] sm:$0xff]
    %v11606 = vld [vmem:[#allocation6 + $0x430] sm:$0xff]
    %v11607 = vld [vmem:[#allocation6 + $0x438] sm:$0xff]
    %v11608 = vld [vmem:[#allocation6 + $0x440] sm:$0xff]
    %v11609 = vld [vmem:[#allocation6 + $0x448] sm:$0xff]
    %v11610 = vld [vmem:[#allocation6 + $0x450] sm:$0xff]
    %v11611 = vld [vmem:[#allocation6 + $0x458] sm:$0xff]
    %v11612 = vld [vmem:[#allocation6 + $0x460] sm:$0xff]
    %v11613 = vld [vmem:[#allocation6 + $0x468] sm:$0xff]
    %v11614 = vld [vmem:[#allocation6 + $0x470] sm:$0xff]
    %v11615 = vld [vmem:[#allocation6 + $0x478] sm:$0xff]
    %v11616 = vld [vmem:[#allocation6 + $0x480] sm:$0xff]
    %v11617 = vld [vmem:[#allocation6 + $0x488] sm:$0xff]
    %v11618 = vld [vmem:[#allocation6 + $0x490] sm:$0xff]
    %v11619 = vld [vmem:[#allocation6 + $0x498] sm:$0xff]
    %v11620 = vld [vmem:[#allocation6 + $0x4a0] sm:$0xff]
    %v11621 = vld [vmem:[#allocation6 + $0x4a8] sm:$0xff]
    %v11622 = vld [vmem:[#allocation6 + $0x4b0] sm:$0xff]
    %v11623 = vld [vmem:[#allocation6 + $0x4b8] sm:$0xff]
    %v11624 = vld [vmem:[#allocation6 + $0x4c0] sm:$0xff]
    %v11625 = vld [vmem:[#allocation6 + $0x4c8] sm:$0xff]
    %v11626 = vld [vmem:[#allocation6 + $0x4d0] sm:$0xff]
    %v11627 = vld [vmem:[#allocation6 + $0x4d8] sm:$0xff]
    %v11628 = vld [vmem:[#allocation6 + $0x4e0] sm:$0xff]
    %v11629 = vld [vmem:[#allocation6 + $0x4e8] sm:$0xff]
    %v11630 = vld [vmem:[#allocation6 + $0x4f0] sm:$0xff]
    %v11631 = vld [vmem:[#allocation6 + $0x4f8] sm:$0xff]
    %v11632 = vld [vmem:[#allocation6 + $0x500] sm:$0xff]
    %v11633 = vld [vmem:[#allocation6 + $0x508] sm:$0xff]
    %v11634 = vld [vmem:[#allocation6 + $0x510] sm:$0xff]
    %v11635 = vld [vmem:[#allocation6 + $0x518] sm:$0xff]
    %v11636 = vld [vmem:[#allocation6 + $0x520] sm:$0xff]
    %v11637 = vld [vmem:[#allocation6 + $0x528] sm:$0xff]
    %v11638 = vld [vmem:[#allocation6 + $0x530] sm:$0xff]
    %v11639 = vld [vmem:[#allocation6 + $0x538] sm:$0xff]
    %v11640 = vld [vmem:[#allocation6 + $0x540] sm:$0xff]
    %v11641 = vld [vmem:[#allocation6 + $0x548] sm:$0xff]
    %v11642 = vld [vmem:[#allocation6 + $0x550] sm:$0xff]
    %v11643 = vld [vmem:[#allocation6 + $0x558] sm:$0xff]
    %v11644 = vld [vmem:[#allocation6 + $0x560] sm:$0xff]
    %v11645 = vld [vmem:[#allocation6 + $0x568] sm:$0xff]
    %v11646 = vld [vmem:[#allocation6 + $0x570] sm:$0xff]
    %v11647 = vld [vmem:[#allocation6 + $0x578] sm:$0xff]
    %v11648 = vld [vmem:[#allocation6 + $0x580] sm:$0xff]
    %v11649 = vld [vmem:[#allocation6 + $0x588] sm:$0xff]
    %v11650 = vld [vmem:[#allocation6 + $0x590] sm:$0xff]
    %v11651 = vld [vmem:[#allocation6 + $0x598] sm:$0xff]
    %v11652 = vld [vmem:[#allocation6 + $0x5a0] sm:$0xff]
    %v11653 = vld [vmem:[#allocation6 + $0x5a8] sm:$0xff]
    %v11654 = vld [vmem:[#allocation6 + $0x5b0] sm:$0xff]
    %v11655 = vld [vmem:[#allocation6 + $0x5b8] sm:$0xff]
    %v11656 = vld [vmem:[#allocation6 + $0x5c0] sm:$0xff]
    %v11657 = vld [vmem:[#allocation6 + $0x5c8] sm:$0xff]
    %v11658 = vld [vmem:[#allocation6 + $0x5d0] sm:$0xff]
    %v11659 = vld [vmem:[#allocation6 + $0x5d8] sm:$0xff]
    %v11660 = vld [vmem:[#allocation6 + $0x5e0] sm:$0xff]
    %v11661 = vld [vmem:[#allocation6 + $0x5e8] sm:$0xff]
    %v11662 = vld [vmem:[#allocation6 + $0x5f0] sm:$0xff]
    %v11663 = vld [vmem:[#allocation6 + $0x5f8] sm:$0xff]
    %v11664 = vld [vmem:[#allocation6 + $0x600] sm:$0xff]
    %v11665 = vld [vmem:[#allocation6 + $0x608] sm:$0xff]
    %v11666 = vld [vmem:[#allocation6 + $0x610] sm:$0xff]
    %v11667 = vld [vmem:[#allocation6 + $0x618] sm:$0xff]
    %v11668 = vld [vmem:[#allocation6 + $0x620] sm:$0xff]
    %v11669 = vld [vmem:[#allocation6 + $0x628] sm:$0xff]
    %v11670 = vld [vmem:[#allocation6 + $0x630] sm:$0xff]
    %v11671 = vld [vmem:[#allocation6 + $0x638] sm:$0xff]
    %v11672 = vld [vmem:[#allocation6 + $0x640] sm:$0xff]
    %v11673 = vld [vmem:[#allocation6 + $0x648] sm:$0xff]
    %v11674 = vld [vmem:[#allocation6 + $0x650] sm:$0xff]
    %v11675 = vld [vmem:[#allocation6 + $0x658] sm:$0xff]
    %v11676 = vld [vmem:[#allocation6 + $0x660] sm:$0xff]
    %v11677 = vld [vmem:[#allocation6 + $0x668] sm:$0xff]
    %v11678 = vld [vmem:[#allocation6 + $0x670] sm:$0xff]
    %v11679 = vld [vmem:[#allocation6 + $0x678] sm:$0xff]
    %v11680 = vld [vmem:[#allocation6 + $0x680] sm:$0xff]
    %v11681 = vld [vmem:[#allocation6 + $0x688] sm:$0xff]
    %v11682 = vld [vmem:[#allocation6 + $0x690] sm:$0xff]
    %v11683 = vld [vmem:[#allocation6 + $0x698] sm:$0xff]
    %v11684 = vld [vmem:[#allocation6 + $0x6a0] sm:$0xff]
    %v11685 = vld [vmem:[#allocation6 + $0x6a8] sm:$0xff]
    %v11686 = vld [vmem:[#allocation6 + $0x6b0] sm:$0xff]
    %v11687 = vld [vmem:[#allocation6 + $0x6b8] sm:$0xff]
    %v11688 = vld [vmem:[#allocation6 + $0x6c0] sm:$0xff]
    %v11689 = vld [vmem:[#allocation6 + $0x6c8] sm:$0xff]
    %v11690 = vld [vmem:[#allocation6 + $0x6d0] sm:$0xff]
    %v11691 = vld [vmem:[#allocation6 + $0x6d8] sm:$0xff]
    %v11692 = vld [vmem:[#allocation6 + $0x6e0] sm:$0xff]
    %v11693 = vld [vmem:[#allocation6 + $0x6e8] sm:$0xff]
    %v11694 = vld [vmem:[#allocation6 + $0x6f0] sm:$0xff]
    %v11695 = vld [vmem:[#allocation6 + $0x6f8] sm:$0xff]
    %v11696 = vld [vmem:[#allocation6 + $0x700] sm:$0xff]
    %v11697 = vld [vmem:[#allocation6 + $0x708] sm:$0xff]
    %v11698 = vld [vmem:[#allocation6 + $0x710] sm:$0xff]
    %v11699 = vld [vmem:[#allocation6 + $0x718] sm:$0xff]
    %v11700 = vld [vmem:[#allocation6 + $0x720] sm:$0xff]
    %v11701 = vld [vmem:[#allocation6 + $0x728] sm:$0xff]
    %v11702 = vld [vmem:[#allocation6 + $0x730] sm:$0xff]
    %v11703 = vld [vmem:[#allocation6 + $0x738] sm:$0xff]
    %v11704 = vld [vmem:[#allocation6 + $0x740] sm:$0xff]
    %v11705 = vld [vmem:[#allocation6 + $0x748] sm:$0xff]
    %v11706 = vld [vmem:[#allocation6 + $0x750] sm:$0xff]
    %v11707 = vld [vmem:[#allocation6 + $0x758] sm:$0xff]
    %v11708 = vld [vmem:[#allocation6 + $0x760] sm:$0xff]
    %v11709 = vld [vmem:[#allocation6 + $0x768] sm:$0xff]
    %v11710 = vld [vmem:[#allocation6 + $0x770] sm:$0xff]
    %v11711 = vld [vmem:[#allocation6 + $0x778] sm:$0xff]
    %v11712 = vld [vmem:[#allocation6 + $0x780] sm:$0xff]
    %v11713 = vld [vmem:[#allocation6 + $0x788] sm:$0xff]
    %v11714 = vld [vmem:[#allocation6 + $0x790] sm:$0xff]
    %v11715 = vld [vmem:[#allocation6 + $0x798] sm:$0xff]
    %v11716 = vld [vmem:[#allocation6 + $0x7a0] sm:$0xff]
    %v11717 = vld [vmem:[#allocation6 + $0x7a8] sm:$0xff]
    %v11718 = vld [vmem:[#allocation6 + $0x7b0] sm:$0xff]
    %v11719 = vld [vmem:[#allocation6 + $0x7b8] sm:$0xff]
    %v11720 = vld [vmem:[#allocation6 + $0x7c0] sm:$0xff]
    %v11721 = vld [vmem:[#allocation6 + $0x7c8] sm:$0xff]
    %v11722 = vld [vmem:[#allocation6 + $0x7d0] sm:$0xff]
    %v11723 = vld [vmem:[#allocation6 + $0x7d8] sm:$0xff]
    %v11724 = vld [vmem:[#allocation6 + $0x7e0] sm:$0xff]
    %v11725 = vld [vmem:[#allocation6 + $0x7e8] sm:$0xff]
    %v11726 = vld [vmem:[#allocation6 + $0x7f0] sm:$0xff]
    %v11727 = vld [vmem:[#allocation6 + $0x7f8] sm:$0xff]
    %v11728 = vld [vmem:[#allocation7] sm:$0xf]
    %v11730 = vlaneseq
    %v11731 = vshrl.u32 %v11730, 7
    %v11732 = vsub.s32 0, %v11731
    %v11733 = vrot.slane %v11728, %v11732
    %v11734 = vlaneseq
    %v11735 = vshrl.u32 %v11734, 7
    %v11736 = vsub.s32 1, %v11735
    %v11737 = vrot.slane %v11728, %v11736
    %v11738 = vlaneseq
    %v11739 = vshrl.u32 %v11738, 7
    %v11740 = vsub.s32 2, %v11739
    %v11741 = vrot.slane %v11728, %v11740
    %v11742 = vlaneseq
    %v11743 = vshrl.u32 %v11742, 7
    %v11744 = vsub.s32 3, %v11743
    %v11745 = vrot.slane %v11728, %v11744
    %v12006 = vunpack.c.l.b16 %v11472
    %v12007 = vunpack.c.h.b16 %v11472
    %v12008 = vunpack.c.l.b16 %v11473
    %v12009 = vunpack.c.h.b16 %v11473
    %v12010 = vunpack.c.l.b16 %v11474
    %v12011 = vunpack.c.h.b16 %v11474
    %v12012 = vunpack.c.l.b16 %v11475
    %v12013 = vunpack.c.h.b16 %v11475
    %v12014 = vunpack.c.l.b16 %v11476
    %v12015 = vunpack.c.h.b16 %v11476
    %v12016 = vunpack.c.l.b16 %v11477
    %v12017 = vunpack.c.h.b16 %v11477
    %v12018 = vunpack.c.l.b16 %v11478
    %v12019 = vunpack.c.h.b16 %v11478
    %v12020 = vunpack.c.l.b16 %v11479
    %v12021 = vunpack.c.h.b16 %v11479
    %v12022 = vunpack.c.l.b16 %v11480
    %v12023 = vunpack.c.h.b16 %v11480
    %v12024 = vunpack.c.l.b16 %v11481
    %v12025 = vunpack.c.h.b16 %v11481
    %v12026 = vunpack.c.l.b16 %v11482
    %v12027 = vunpack.c.h.b16 %v11482
    %v12028 = vunpack.c.l.b16 %v11483
    %v12029 = vunpack.c.h.b16 %v11483
    %v12030 = vunpack.c.l.b16 %v11484
    %v12031 = vunpack.c.h.b16 %v11484
    %v12032 = vunpack.c.l.b16 %v11485
    %v12033 = vunpack.c.h.b16 %v11485
    %v12034 = vunpack.c.l.b16 %v11486
    %v12035 = vunpack.c.h.b16 %v11486
    %v12036 = vunpack.c.l.b16 %v11487
    %v12037 = vunpack.c.h.b16 %v11487
    %v12038 = vunpack.c.l.b16 %v11488
    %v12039 = vunpack.c.h.b16 %v11488
    %v12040 = vunpack.c.l.b16 %v11489
    %v12041 = vunpack.c.h.b16 %v11489
    %v12042 = vunpack.c.l.b16 %v11490
    %v12043 = vunpack.c.h.b16 %v11490
    %v12044 = vunpack.c.l.b16 %v11491
    %v12045 = vunpack.c.h.b16 %v11491
    %v12046 = vunpack.c.l.b16 %v11492
    %v12047 = vunpack.c.h.b16 %v11492
    %v12048 = vunpack.c.l.b16 %v11493
    %v12049 = vunpack.c.h.b16 %v11493
    %v12050 = vunpack.c.l.b16 %v11494
    %v12051 = vunpack.c.h.b16 %v11494
    %v12052 = vunpack.c.l.b16 %v11495
    %v12053 = vunpack.c.h.b16 %v11495
    %v12054 = vunpack.c.l.b16 %v11496
    %v12055 = vunpack.c.h.b16 %v11496
    %v12056 = vunpack.c.l.b16 %v11497
    %v12057 = vunpack.c.h.b16 %v11497
    %v12058 = vunpack.c.l.b16 %v11498
    %v12059 = vunpack.c.h.b16 %v11498
    %v12060 = vunpack.c.l.b16 %v11499
    %v12061 = vunpack.c.h.b16 %v11499
    %v12062 = vunpack.c.l.b16 %v11500
    %v12063 = vunpack.c.h.b16 %v11500
    %v12064 = vunpack.c.l.b16 %v11501
    %v12065 = vunpack.c.h.b16 %v11501
    %v12066 = vunpack.c.l.b16 %v11502
    %v12067 = vunpack.c.h.b16 %v11502
    %v12068 = vunpack.c.l.b16 %v11503
    %v12069 = vunpack.c.h.b16 %v11503
    %v12070 = vunpack.c.l.b16 %v11504
    %v12071 = vunpack.c.h.b16 %v11504
    %v12072 = vunpack.c.l.b16 %v11505
    %v12073 = vunpack.c.h.b16 %v11505
    %v12074 = vunpack.c.l.b16 %v11506
    %v12075 = vunpack.c.h.b16 %v11506
    %v12076 = vunpack.c.l.b16 %v11507
    %v12077 = vunpack.c.h.b16 %v11507
    %v12078 = vunpack.c.l.b16 %v11508
    %v12079 = vunpack.c.h.b16 %v11508
    %v12080 = vunpack.c.l.b16 %v11509
    %v12081 = vunpack.c.h.b16 %v11509
    %v12082 = vunpack.c.l.b16 %v11510
    %v12083 = vunpack.c.h.b16 %v11510
    %v12084 = vunpack.c.l.b16 %v11511
    %v12085 = vunpack.c.h.b16 %v11511
    %v12086 = vunpack.c.l.b16 %v11512
    %v12087 = vunpack.c.h.b16 %v11512
    %v12088 = vunpack.c.l.b16 %v11513
    %v12089 = vunpack.c.h.b16 %v11513
    %v12090 = vunpack.c.l.b16 %v11514
    %v12091 = vunpack.c.h.b16 %v11514
    %v12092 = vunpack.c.l.b16 %v11515
    %v12093 = vunpack.c.h.b16 %v11515
    %v12094 = vunpack.c.l.b16 %v11516
    %v12095 = vunpack.c.h.b16 %v11516
    %v12096 = vunpack.c.l.b16 %v11517
    %v12097 = vunpack.c.h.b16 %v11517
    %v12098 = vunpack.c.l.b16 %v11518
    %v12099 = vunpack.c.h.b16 %v11518
    %v12100 = vunpack.c.l.b16 %v11519
    %v12101 = vunpack.c.h.b16 %v11519
    %v12102 = vunpack.c.l.b16 %v11520
    %v12103 = vunpack.c.h.b16 %v11520
    %v12104 = vunpack.c.l.b16 %v11521
    %v12105 = vunpack.c.h.b16 %v11521
    %v12106 = vunpack.c.l.b16 %v11522
    %v12107 = vunpack.c.h.b16 %v11522
    %v12108 = vunpack.c.l.b16 %v11523
    %v12109 = vunpack.c.h.b16 %v11523
    %v12110 = vunpack.c.l.b16 %v11524
    %v12111 = vunpack.c.h.b16 %v11524
    %v12112 = vunpack.c.l.b16 %v11525
    %v12113 = vunpack.c.h.b16 %v11525
    %v12114 = vunpack.c.l.b16 %v11526
    %v12115 = vunpack.c.h.b16 %v11526
    %v12116 = vunpack.c.l.b16 %v11527
    %v12117 = vunpack.c.h.b16 %v11527
    %v12118 = vunpack.c.l.b16 %v11528
    %v12119 = vunpack.c.h.b16 %v11528
    %v12120 = vunpack.c.l.b16 %v11529
    %v12121 = vunpack.c.h.b16 %v11529
    %v12122 = vunpack.c.l.b16 %v11530
    %v12123 = vunpack.c.h.b16 %v11530
    %v12124 = vunpack.c.l.b16 %v11531
    %v12125 = vunpack.c.h.b16 %v11531
    %v12126 = vunpack.c.l.b16 %v11532
    %v12127 = vunpack.c.h.b16 %v11532
    %v12128 = vunpack.c.l.b16 %v11533
    %v12129 = vunpack.c.h.b16 %v11533
    %v12130 = vunpack.c.l.b16 %v11534
    %v12131 = vunpack.c.h.b16 %v11534
    %v12132 = vunpack.c.l.b16 %v11535
    %v12133 = vunpack.c.h.b16 %v11535
    %v12134 = vunpack.c.l.b16 %v11536
    %v12135 = vunpack.c.h.b16 %v11536
    %v12136 = vunpack.c.l.b16 %v11537
    %v12137 = vunpack.c.h.b16 %v11537
    %v12138 = vunpack.c.l.b16 %v11538
    %v12139 = vunpack.c.h.b16 %v11538
    %v12140 = vunpack.c.l.b16 %v11539
    %v12141 = vunpack.c.h.b16 %v11539
    %v12142 = vunpack.c.l.b16 %v11540
    %v12143 = vunpack.c.h.b16 %v11540
    %v12144 = vunpack.c.l.b16 %v11541
    %v12145 = vunpack.c.h.b16 %v11541
    %v12146 = vunpack.c.l.b16 %v11542
    %v12147 = vunpack.c.h.b16 %v11542
    %v12148 = vunpack.c.l.b16 %v11543
    %v12149 = vunpack.c.h.b16 %v11543
    %v12150 = vunpack.c.l.b16 %v11544
    %v12151 = vunpack.c.h.b16 %v11544
    %v12152 = vunpack.c.l.b16 %v11545
    %v12153 = vunpack.c.h.b16 %v11545
    %v12154 = vunpack.c.l.b16 %v11546
    %v12155 = vunpack.c.h.b16 %v11546
    %v12156 = vunpack.c.l.b16 %v11547
    %v12157 = vunpack.c.h.b16 %v11547
    %v12158 = vunpack.c.l.b16 %v11548
    %v12159 = vunpack.c.h.b16 %v11548
    %v12160 = vunpack.c.l.b16 %v11549
    %v12161 = vunpack.c.h.b16 %v11549
    %v12162 = vunpack.c.l.b16 %v11550
    %v12163 = vunpack.c.h.b16 %v11550
    %v12164 = vunpack.c.l.b16 %v11551
    %v12165 = vunpack.c.h.b16 %v11551
    %v12166 = vunpack.c.l.b16 %v11552
    %v12167 = vunpack.c.h.b16 %v11552
    %v12168 = vunpack.c.l.b16 %v11553
    %v12169 = vunpack.c.h.b16 %v11553
    %v12170 = vunpack.c.l.b16 %v11554
    %v12171 = vunpack.c.h.b16 %v11554
    %v12172 = vunpack.c.l.b16 %v11555
    %v12173 = vunpack.c.h.b16 %v11555
    %v12174 = vunpack.c.l.b16 %v11556
    %v12175 = vunpack.c.h.b16 %v11556
    %v12176 = vunpack.c.l.b16 %v11557
    %v12177 = vunpack.c.h.b16 %v11557
    %v12178 = vunpack.c.l.b16 %v11558
    %v12179 = vunpack.c.h.b16 %v11558
    %v12180 = vunpack.c.l.b16 %v11559
    %v12181 = vunpack.c.h.b16 %v11559
    %v12182 = vunpack.c.l.b16 %v11560
    %v12183 = vunpack.c.h.b16 %v11560
    %v12184 = vunpack.c.l.b16 %v11561
    %v12185 = vunpack.c.h.b16 %v11561
    %v12186 = vunpack.c.l.b16 %v11562
    %v12187 = vunpack.c.h.b16 %v11562
    %v12188 = vunpack.c.l.b16 %v11563
    %v12189 = vunpack.c.h.b16 %v11563
    %v12190 = vunpack.c.l.b16 %v11564
    %v12191 = vunpack.c.h.b16 %v11564
    %v12192 = vunpack.c.l.b16 %v11565
    %v12193 = vunpack.c.h.b16 %v11565
    %v12194 = vunpack.c.l.b16 %v11566
    %v12195 = vunpack.c.h.b16 %v11566
    %v12196 = vunpack.c.l.b16 %v11567
    %v12197 = vunpack.c.h.b16 %v11567
    %v12198 = vunpack.c.l.b16 %v11568
    %v12199 = vunpack.c.h.b16 %v11568
    %v12200 = vunpack.c.l.b16 %v11569
    %v12201 = vunpack.c.h.b16 %v11569
    %v12202 = vunpack.c.l.b16 %v11570
    %v12203 = vunpack.c.h.b16 %v11570
    %v12204 = vunpack.c.l.b16 %v11571
    %v12205 = vunpack.c.h.b16 %v11571
    %v12206 = vunpack.c.l.b16 %v11572
    %v12207 = vunpack.c.h.b16 %v11572
    %v12208 = vunpack.c.l.b16 %v11573
    %v12209 = vunpack.c.h.b16 %v11573
    %v12210 = vunpack.c.l.b16 %v11574
    %v12211 = vunpack.c.h.b16 %v11574
    %v12212 = vunpack.c.l.b16 %v11575
    %v12213 = vunpack.c.h.b16 %v11575
    %v12214 = vunpack.c.l.b16 %v11576
    %v12215 = vunpack.c.h.b16 %v11576
    %v12216 = vunpack.c.l.b16 %v11577
    %v12217 = vunpack.c.h.b16 %v11577
    %v12218 = vunpack.c.l.b16 %v11578
    %v12219 = vunpack.c.h.b16 %v11578
    %v12220 = vunpack.c.l.b16 %v11579
    %v12221 = vunpack.c.h.b16 %v11579
    %v12222 = vunpack.c.l.b16 %v11580
    %v12223 = vunpack.c.h.b16 %v11580
    %v12224 = vunpack.c.l.b16 %v11581
    %v12225 = vunpack.c.h.b16 %v11581
    %v12226 = vunpack.c.l.b16 %v11582
    %v12227 = vunpack.c.h.b16 %v11582
    %v12228 = vunpack.c.l.b16 %v11583
    %v12229 = vunpack.c.h.b16 %v11583
    %v12230 = vunpack.c.l.b16 %v11584
    %v12231 = vunpack.c.h.b16 %v11584
    %v12232 = vunpack.c.l.b16 %v11585
    %v12233 = vunpack.c.h.b16 %v11585
    %v12234 = vunpack.c.l.b16 %v11586
    %v12235 = vunpack.c.h.b16 %v11586
    %v12236 = vunpack.c.l.b16 %v11587
    %v12237 = vunpack.c.h.b16 %v11587
    %v12238 = vunpack.c.l.b16 %v11588
    %v12239 = vunpack.c.h.b16 %v11588
    %v12240 = vunpack.c.l.b16 %v11589
    %v12241 = vunpack.c.h.b16 %v11589
    %v12242 = vunpack.c.l.b16 %v11590
    %v12243 = vunpack.c.h.b16 %v11590
    %v12244 = vunpack.c.l.b16 %v11591
    %v12245 = vunpack.c.h.b16 %v11591
    %v12246 = vunpack.c.l.b16 %v11592
    %v12247 = vunpack.c.h.b16 %v11592
    %v12248 = vunpack.c.l.b16 %v11593
    %v12249 = vunpack.c.h.b16 %v11593
    %v12250 = vunpack.c.l.b16 %v11594
    %v12251 = vunpack.c.h.b16 %v11594
    %v12252 = vunpack.c.l.b16 %v11595
    %v12253 = vunpack.c.h.b16 %v11595
    %v12254 = vunpack.c.l.b16 %v11596
    %v12255 = vunpack.c.h.b16 %v11596
    %v12256 = vunpack.c.l.b16 %v11597
    %v12257 = vunpack.c.h.b16 %v11597
    %v12258 = vunpack.c.l.b16 %v11598
    %v12259 = vunpack.c.h.b16 %v11598
    %v12260 = vunpack.c.l.b16 %v11599
    %v12261 = vunpack.c.h.b16 %v11599
    %v12262 = vunpack.c.l.b16 %v11600
    %v12263 = vunpack.c.h.b16 %v11600
    %v12264 = vunpack.c.l.b16 %v11601
    %v12265 = vunpack.c.h.b16 %v11601
    %v12266 = vunpack.c.l.b16 %v11602
    %v12267 = vunpack.c.h.b16 %v11602
    %v12268 = vunpack.c.l.b16 %v11603
    %v12269 = vunpack.c.h.b16 %v11603
    %v12270 = vunpack.c.l.b16 %v11604
    %v12271 = vunpack.c.h.b16 %v11604
    %v12272 = vunpack.c.l.b16 %v11605
    %v12273 = vunpack.c.h.b16 %v11605
    %v12274 = vunpack.c.l.b16 %v11606
    %v12275 = vunpack.c.h.b16 %v11606
    %v12276 = vunpack.c.l.b16 %v11607
    %v12277 = vunpack.c.h.b16 %v11607
    %v12278 = vunpack.c.l.b16 %v11608
    %v12279 = vunpack.c.h.b16 %v11608
    %v12280 = vunpack.c.l.b16 %v11609
    %v12281 = vunpack.c.h.b16 %v11609
    %v12282 = vunpack.c.l.b16 %v11610
    %v12283 = vunpack.c.h.b16 %v11610
    %v12284 = vunpack.c.l.b16 %v11611
    %v12285 = vunpack.c.h.b16 %v11611
    %v12286 = vunpack.c.l.b16 %v11612
    %v12287 = vunpack.c.h.b16 %v11612
    %v12288 = vunpack.c.l.b16 %v11613
    %v12289 = vunpack.c.h.b16 %v11613
    %v12290 = vunpack.c.l.b16 %v11614
    %v12291 = vunpack.c.h.b16 %v11614
    %v12292 = vunpack.c.l.b16 %v11615
    %v12293 = vunpack.c.h.b16 %v11615
    %v12294 = vunpack.c.l.b16 %v11616
    %v12295 = vunpack.c.h.b16 %v11616
    %v12296 = vunpack.c.l.b16 %v11617
    %v12297 = vunpack.c.h.b16 %v11617
    %v12298 = vunpack.c.l.b16 %v11618
    %v12299 = vunpack.c.h.b16 %v11618
    %v12300 = vunpack.c.l.b16 %v11619
    %v12301 = vunpack.c.h.b16 %v11619
    %v12302 = vunpack.c.l.b16 %v11620
    %v12303 = vunpack.c.h.b16 %v11620
    %v12304 = vunpack.c.l.b16 %v11621
    %v12305 = vunpack.c.h.b16 %v11621
    %v12306 = vunpack.c.l.b16 %v11622
    %v12307 = vunpack.c.h.b16 %v11622
    %v12308 = vunpack.c.l.b16 %v11623
    %v12309 = vunpack.c.h.b16 %v11623
    %v12310 = vunpack.c.l.b16 %v11624
    %v12311 = vunpack.c.h.b16 %v11624
    %v12312 = vunpack.c.l.b16 %v11625
    %v12313 = vunpack.c.h.b16 %v11625
    %v12314 = vunpack.c.l.b16 %v11626
    %v12315 = vunpack.c.h.b16 %v11626
    %v12316 = vunpack.c.l.b16 %v11627
    %v12317 = vunpack.c.h.b16 %v11627
    %v12318 = vunpack.c.l.b16 %v11628
    %v12319 = vunpack.c.h.b16 %v11628
    %v12320 = vunpack.c.l.b16 %v11629
    %v12321 = vunpack.c.h.b16 %v11629
    %v12322 = vunpack.c.l.b16 %v11630
    %v12323 = vunpack.c.h.b16 %v11630
    %v12324 = vunpack.c.l.b16 %v11631
    %v12325 = vunpack.c.h.b16 %v11631
    %v12326 = vunpack.c.l.b16 %v11632
    %v12327 = vunpack.c.h.b16 %v11632
    %v12328 = vunpack.c.l.b16 %v11633
    %v12329 = vunpack.c.h.b16 %v11633
    %v12330 = vunpack.c.l.b16 %v11634
    %v12331 = vunpack.c.h.b16 %v11634
    %v12332 = vunpack.c.l.b16 %v11635
    %v12333 = vunpack.c.h.b16 %v11635
    %v12334 = vunpack.c.l.b16 %v11636
    %v12335 = vunpack.c.h.b16 %v11636
    %v12336 = vunpack.c.l.b16 %v11637
    %v12337 = vunpack.c.h.b16 %v11637
    %v12338 = vunpack.c.l.b16 %v11638
    %v12339 = vunpack.c.h.b16 %v11638
    %v12340 = vunpack.c.l.b16 %v11639
    %v12341 = vunpack.c.h.b16 %v11639
    %v12342 = vunpack.c.l.b16 %v11640
    %v12343 = vunpack.c.h.b16 %v11640
    %v12344 = vunpack.c.l.b16 %v11641
    %v12345 = vunpack.c.h.b16 %v11641
    %v12346 = vunpack.c.l.b16 %v11642
    %v12347 = vunpack.c.h.b16 %v11642
    %v12348 = vunpack.c.l.b16 %v11643
    %v12349 = vunpack.c.h.b16 %v11643
    %v12350 = vunpack.c.l.b16 %v11644
    %v12351 = vunpack.c.h.b16 %v11644
    %v12352 = vunpack.c.l.b16 %v11645
    %v12353 = vunpack.c.h.b16 %v11645
    %v12354 = vunpack.c.l.b16 %v11646
    %v12355 = vunpack.c.h.b16 %v11646
    %v12356 = vunpack.c.l.b16 %v11647
    %v12357 = vunpack.c.h.b16 %v11647
    %v12358 = vunpack.c.l.b16 %v11648
    %v12359 = vunpack.c.h.b16 %v11648
    %v12360 = vunpack.c.l.b16 %v11649
    %v12361 = vunpack.c.h.b16 %v11649
    %v12362 = vunpack.c.l.b16 %v11650
    %v12363 = vunpack.c.h.b16 %v11650
    %v12364 = vunpack.c.l.b16 %v11651
    %v12365 = vunpack.c.h.b16 %v11651
    %v12366 = vunpack.c.l.b16 %v11652
    %v12367 = vunpack.c.h.b16 %v11652
    %v12368 = vunpack.c.l.b16 %v11653
    %v12369 = vunpack.c.h.b16 %v11653
    %v12370 = vunpack.c.l.b16 %v11654
    %v12371 = vunpack.c.h.b16 %v11654
    %v12372 = vunpack.c.l.b16 %v11655
    %v12373 = vunpack.c.h.b16 %v11655
    %v12374 = vunpack.c.l.b16 %v11656
    %v12375 = vunpack.c.h.b16 %v11656
    %v12376 = vunpack.c.l.b16 %v11657
    %v12377 = vunpack.c.h.b16 %v11657
    %v12378 = vunpack.c.l.b16 %v11658
    %v12379 = vunpack.c.h.b16 %v11658
    %v12380 = vunpack.c.l.b16 %v11659
    %v12381 = vunpack.c.h.b16 %v11659
    %v12382 = vunpack.c.l.b16 %v11660
    %v12383 = vunpack.c.h.b16 %v11660
    %v12384 = vunpack.c.l.b16 %v11661
    %v12385 = vunpack.c.h.b16 %v11661
    %v12386 = vunpack.c.l.b16 %v11662
    %v12387 = vunpack.c.h.b16 %v11662
    %v12388 = vunpack.c.l.b16 %v11663
    %v12389 = vunpack.c.h.b16 %v11663
    %v12390 = vunpack.c.l.b16 %v11664
    %v12391 = vunpack.c.h.b16 %v11664
    %v12392 = vunpack.c.l.b16 %v11665
    %v12393 = vunpack.c.h.b16 %v11665
    %v12394 = vunpack.c.l.b16 %v11666
    %v12395 = vunpack.c.h.b16 %v11666
    %v12396 = vunpack.c.l.b16 %v11667
    %v12397 = vunpack.c.h.b16 %v11667
    %v12398 = vunpack.c.l.b16 %v11668
    %v12399 = vunpack.c.h.b16 %v11668
    %v12400 = vunpack.c.l.b16 %v11669
    %v12401 = vunpack.c.h.b16 %v11669
    %v12402 = vunpack.c.l.b16 %v11670
    %v12403 = vunpack.c.h.b16 %v11670
    %v12404 = vunpack.c.l.b16 %v11671
    %v12405 = vunpack.c.h.b16 %v11671
    %v12406 = vunpack.c.l.b16 %v11672
    %v12407 = vunpack.c.h.b16 %v11672
    %v12408 = vunpack.c.l.b16 %v11673
    %v12409 = vunpack.c.h.b16 %v11673
    %v12410 = vunpack.c.l.b16 %v11674
    %v12411 = vunpack.c.h.b16 %v11674
    %v12412 = vunpack.c.l.b16 %v11675
    %v12413 = vunpack.c.h.b16 %v11675
    %v12414 = vunpack.c.l.b16 %v11676
    %v12415 = vunpack.c.h.b16 %v11676
    %v12416 = vunpack.c.l.b16 %v11677
    %v12417 = vunpack.c.h.b16 %v11677
    %v12418 = vunpack.c.l.b16 %v11678
    %v12419 = vunpack.c.h.b16 %v11678
    %v12420 = vunpack.c.l.b16 %v11679
    %v12421 = vunpack.c.h.b16 %v11679
    %v12422 = vunpack.c.l.b16 %v11680
    %v12423 = vunpack.c.h.b16 %v11680
    %v12424 = vunpack.c.l.b16 %v11681
    %v12425 = vunpack.c.h.b16 %v11681
    %v12426 = vunpack.c.l.b16 %v11682
    %v12427 = vunpack.c.h.b16 %v11682
    %v12428 = vunpack.c.l.b16 %v11683
    %v12429 = vunpack.c.h.b16 %v11683
    %v12430 = vunpack.c.l.b16 %v11684
    %v12431 = vunpack.c.h.b16 %v11684
    %v12432 = vunpack.c.l.b16 %v11685
    %v12433 = vunpack.c.h.b16 %v11685
    %v12434 = vunpack.c.l.b16 %v11686
    %v12435 = vunpack.c.h.b16 %v11686
    %v12436 = vunpack.c.l.b16 %v11687
    %v12437 = vunpack.c.h.b16 %v11687
    %v12438 = vunpack.c.l.b16 %v11688
    %v12439 = vunpack.c.h.b16 %v11688
    %v12440 = vunpack.c.l.b16 %v11689
    %v12441 = vunpack.c.h.b16 %v11689
    %v12442 = vunpack.c.l.b16 %v11690
    %v12443 = vunpack.c.h.b16 %v11690
    %v12444 = vunpack.c.l.b16 %v11691
    %v12445 = vunpack.c.h.b16 %v11691
    %v12446 = vunpack.c.l.b16 %v11692
    %v12447 = vunpack.c.h.b16 %v11692
    %v12448 = vunpack.c.l.b16 %v11693
    %v12449 = vunpack.c.h.b16 %v11693
    %v12450 = vunpack.c.l.b16 %v11694
    %v12451 = vunpack.c.h.b16 %v11694
    %v12452 = vunpack.c.l.b16 %v11695
    %v12453 = vunpack.c.h.b16 %v11695
    %v12454 = vunpack.c.l.b16 %v11696
    %v12455 = vunpack.c.h.b16 %v11696
    %v12456 = vunpack.c.l.b16 %v11697
    %v12457 = vunpack.c.h.b16 %v11697
    %v12458 = vunpack.c.l.b16 %v11698
    %v12459 = vunpack.c.h.b16 %v11698
    %v12460 = vunpack.c.l.b16 %v11699
    %v12461 = vunpack.c.h.b16 %v11699
    %v12462 = vunpack.c.l.b16 %v11700
    %v12463 = vunpack.c.h.b16 %v11700
    %v12464 = vunpack.c.l.b16 %v11701
    %v12465 = vunpack.c.h.b16 %v11701
    %v12466 = vunpack.c.l.b16 %v11702
    %v12467 = vunpack.c.h.b16 %v11702
    %v12468 = vunpack.c.l.b16 %v11703
    %v12469 = vunpack.c.h.b16 %v11703
    %v12470 = vunpack.c.l.b16 %v11704
    %v12471 = vunpack.c.h.b16 %v11704
    %v12472 = vunpack.c.l.b16 %v11705
    %v12473 = vunpack.c.h.b16 %v11705
    %v12474 = vunpack.c.l.b16 %v11706
    %v12475 = vunpack.c.h.b16 %v11706
    %v12476 = vunpack.c.l.b16 %v11707
    %v12477 = vunpack.c.h.b16 %v11707
    %v12478 = vunpack.c.l.b16 %v11708
    %v12479 = vunpack.c.h.b16 %v11708
    %v12480 = vunpack.c.l.b16 %v11709
    %v12481 = vunpack.c.h.b16 %v11709
    %v12482 = vunpack.c.l.b16 %v11710
    %v12483 = vunpack.c.h.b16 %v11710
    %v12484 = vunpack.c.l.b16 %v11711
    %v12485 = vunpack.c.h.b16 %v11711
    %v12486 = vunpack.c.l.b16 %v11712
    %v12487 = vunpack.c.h.b16 %v11712
    %v12488 = vunpack.c.l.b16 %v11713
    %v12489 = vunpack.c.h.b16 %v11713
    %v12490 = vunpack.c.l.b16 %v11714
    %v12491 = vunpack.c.h.b16 %v11714
    %v12492 = vunpack.c.l.b16 %v11715
    %v12493 = vunpack.c.h.b16 %v11715
    %v12494 = vunpack.c.l.b16 %v11716
    %v12495 = vunpack.c.h.b16 %v11716
    %v12496 = vunpack.c.l.b16 %v11717
    %v12497 = vunpack.c.h.b16 %v11717
    %v12498 = vunpack.c.l.b16 %v11718
    %v12499 = vunpack.c.h.b16 %v11718
    %v12500 = vunpack.c.l.b16 %v11719
    %v12501 = vunpack.c.h.b16 %v11719
    %v12502 = vunpack.c.l.b16 %v11720
    %v12503 = vunpack.c.h.b16 %v11720
    %v12504 = vunpack.c.l.b16 %v11721
    %v12505 = vunpack.c.h.b16 %v11721
    %v12506 = vunpack.c.l.b16 %v11722
    %v12507 = vunpack.c.h.b16 %v11722
    %v12508 = vunpack.c.l.b16 %v11723
    %v12509 = vunpack.c.h.b16 %v11723
    %v12510 = vunpack.c.l.b16 %v11724
    %v12511 = vunpack.c.h.b16 %v11724
    %v12512 = vunpack.c.l.b16 %v11725
    %v12513 = vunpack.c.h.b16 %v11725
    %v12514 = vunpack.c.l.b16 %v11726
    %v12515 = vunpack.c.h.b16 %v11726
    %v12516 = vunpack.c.l.b16 %v11727
    %v12517 = vunpack.c.h.b16 %v11727
    %v12518 = vpack.c.b16 %v12010, %v12006
    %v12519 = vpack.c.b16 %v12011, %v12007
    %v12520 = vpack.c.b16 %v12012, %v12008
    %v12521 = vpack.c.b16 %v12013, %v12009
    %v12522 = vpack.c.b16 %v12018, %v12014
    %v12523 = vpack.c.b16 %v12019, %v12015
    %v12524 = vpack.c.b16 %v12020, %v12016
    %v12525 = vpack.c.b16 %v12021, %v12017
    %v12526 = vpack.c.b16 %v12026, %v12022
    %v12527 = vpack.c.b16 %v12027, %v12023
    %v12528 = vpack.c.b16 %v12028, %v12024
    %v12529 = vpack.c.b16 %v12029, %v12025
    %v12530 = vpack.c.b16 %v12034, %v12030
    %v12531 = vpack.c.b16 %v12035, %v12031
    %v12532 = vpack.c.b16 %v12036, %v12032
    %v12533 = vpack.c.b16 %v12037, %v12033
    %v12534 = vpack.c.b16 %v12042, %v12038
    %v12535 = vpack.c.b16 %v12043, %v12039
    %v12536 = vpack.c.b16 %v12044, %v12040
    %v12537 = vpack.c.b16 %v12045, %v12041
    %v12538 = vpack.c.b16 %v12050, %v12046
    %v12539 = vpack.c.b16 %v12051, %v12047
    %v12540 = vpack.c.b16 %v12052, %v12048
    %v12541 = vpack.c.b16 %v12053, %v12049
    %v12542 = vpack.c.b16 %v12058, %v12054
    %v12543 = vpack.c.b16 %v12059, %v12055
    %v12544 = vpack.c.b16 %v12060, %v12056
    %v12545 = vpack.c.b16 %v12061, %v12057
    %v12546 = vpack.c.b16 %v12066, %v12062
    %v12547 = vpack.c.b16 %v12067, %v12063
    %v12548 = vpack.c.b16 %v12068, %v12064
    %v12549 = vpack.c.b16 %v12069, %v12065
    %v12550 = vpack.c.b16 %v12074, %v12070
    %v12551 = vpack.c.b16 %v12075, %v12071
    %v12552 = vpack.c.b16 %v12076, %v12072
    %v12553 = vpack.c.b16 %v12077, %v12073
    %v12554 = vpack.c.b16 %v12082, %v12078
    %v12555 = vpack.c.b16 %v12083, %v12079
    %v12556 = vpack.c.b16 %v12084, %v12080
    %v12557 = vpack.c.b16 %v12085, %v12081
    %v12558 = vpack.c.b16 %v12090, %v12086
    %v12559 = vpack.c.b16 %v12091, %v12087
    %v12560 = vpack.c.b16 %v12092, %v12088
    %v12561 = vpack.c.b16 %v12093, %v12089
    %v12562 = vpack.c.b16 %v12098, %v12094
    %v12563 = vpack.c.b16 %v12099, %v12095
    %v12564 = vpack.c.b16 %v12100, %v12096
    %v12565 = vpack.c.b16 %v12101, %v12097
    %v12566 = vpack.c.b16 %v12106, %v12102
    %v12567 = vpack.c.b16 %v12107, %v12103
    %v12568 = vpack.c.b16 %v12108, %v12104
    %v12569 = vpack.c.b16 %v12109, %v12105
    %v12570 = vpack.c.b16 %v12114, %v12110
    %v12571 = vpack.c.b16 %v12115, %v12111
    %v12572 = vpack.c.b16 %v12116, %v12112
    %v12573 = vpack.c.b16 %v12117, %v12113
    %v12574 = vpack.c.b16 %v12122, %v12118
    %v12575 = vpack.c.b16 %v12123, %v12119
    %v12576 = vpack.c.b16 %v12124, %v12120
    %v12577 = vpack.c.b16 %v12125, %v12121
    %v12578 = vpack.c.b16 %v12130, %v12126
    %v12579 = vpack.c.b16 %v12131, %v12127
    %v12580 = vpack.c.b16 %v12132, %v12128
    %v12581 = vpack.c.b16 %v12133, %v12129
    %v12582 = vpack.c.b16 %v12138, %v12134
    %v12583 = vpack.c.b16 %v12139, %v12135
    %v12584 = vpack.c.b16 %v12140, %v12136
    %v12585 = vpack.c.b16 %v12141, %v12137
    %v12586 = vpack.c.b16 %v12146, %v12142
    %v12587 = vpack.c.b16 %v12147, %v12143
    %v12588 = vpack.c.b16 %v12148, %v12144
    %v12589 = vpack.c.b16 %v12149, %v12145
    %v12590 = vpack.c.b16 %v12154, %v12150
    %v12591 = vpack.c.b16 %v12155, %v12151
    %v12592 = vpack.c.b16 %v12156, %v12152
    %v12593 = vpack.c.b16 %v12157, %v12153
    %v12594 = vpack.c.b16 %v12162, %v12158
    %v12595 = vpack.c.b16 %v12163, %v12159
    %v12596 = vpack.c.b16 %v12164, %v12160
    %v12597 = vpack.c.b16 %v12165, %v12161
    %v12598 = vpack.c.b16 %v12170, %v12166
    %v12599 = vpack.c.b16 %v12171, %v12167
    %v12600 = vpack.c.b16 %v12172, %v12168
    %v12601 = vpack.c.b16 %v12173, %v12169
    %v12602 = vpack.c.b16 %v12178, %v12174
    %v12603 = vpack.c.b16 %v12179, %v12175
    %v12604 = vpack.c.b16 %v12180, %v12176
    %v12605 = vpack.c.b16 %v12181, %v12177
    %v12606 = vpack.c.b16 %v12186, %v12182
    %v12607 = vpack.c.b16 %v12187, %v12183
    %v12608 = vpack.c.b16 %v12188, %v12184
    %v12609 = vpack.c.b16 %v12189, %v12185
    %v12610 = vpack.c.b16 %v12194, %v12190
    %v12611 = vpack.c.b16 %v12195, %v12191
    %v12612 = vpack.c.b16 %v12196, %v12192
    %v12613 = vpack.c.b16 %v12197, %v12193
    %v12614 = vpack.c.b16 %v12202, %v12198
    %v12615 = vpack.c.b16 %v12203, %v12199
    %v12616 = vpack.c.b16 %v12204, %v12200
    %v12617 = vpack.c.b16 %v12205, %v12201
    %v12618 = vpack.c.b16 %v12210, %v12206
    %v12619 = vpack.c.b16 %v12211, %v12207
    %v12620 = vpack.c.b16 %v12212, %v12208
    %v12621 = vpack.c.b16 %v12213, %v12209
    %v12622 = vpack.c.b16 %v12218, %v12214
    %v12623 = vpack.c.b16 %v12219, %v12215
    %v12624 = vpack.c.b16 %v12220, %v12216
    %v12625 = vpack.c.b16 %v12221, %v12217
    %v12626 = vpack.c.b16 %v12226, %v12222
    %v12627 = vpack.c.b16 %v12227, %v12223
    %v12628 = vpack.c.b16 %v12228, %v12224
    %v12629 = vpack.c.b16 %v12229, %v12225
    %v12630 = vpack.c.b16 %v12234, %v12230
    %v12631 = vpack.c.b16 %v12235, %v12231
    %v12632 = vpack.c.b16 %v12236, %v12232
    %v12633 = vpack.c.b16 %v12237, %v12233
    %v12634 = vpack.c.b16 %v12242, %v12238
    %v12635 = vpack.c.b16 %v12243, %v12239
    %v12636 = vpack.c.b16 %v12244, %v12240
    %v12637 = vpack.c.b16 %v12245, %v12241
    %v12638 = vpack.c.b16 %v12250, %v12246
    %v12639 = vpack.c.b16 %v12251, %v12247
    %v12640 = vpack.c.b16 %v12252, %v12248
    %v12641 = vpack.c.b16 %v12253, %v12249
    %v12642 = vpack.c.b16 %v12258, %v12254
    %v12643 = vpack.c.b16 %v12259, %v12255
    %v12644 = vpack.c.b16 %v12260, %v12256
    %v12645 = vpack.c.b16 %v12261, %v12257
    %v12646 = vpack.c.b16 %v12266, %v12262
    %v12647 = vpack.c.b16 %v12267, %v12263
    %v12648 = vpack.c.b16 %v12268, %v12264
    %v12649 = vpack.c.b16 %v12269, %v12265
    %v12650 = vpack.c.b16 %v12274, %v12270
    %v12651 = vpack.c.b16 %v12275, %v12271
    %v12652 = vpack.c.b16 %v12276, %v12272
    %v12653 = vpack.c.b16 %v12277, %v12273
    %v12654 = vpack.c.b16 %v12282, %v12278
    %v12655 = vpack.c.b16 %v12283, %v12279
    %v12656 = vpack.c.b16 %v12284, %v12280
    %v12657 = vpack.c.b16 %v12285, %v12281
    %v12658 = vpack.c.b16 %v12290, %v12286
    %v12659 = vpack.c.b16 %v12291, %v12287
    %v12660 = vpack.c.b16 %v12292, %v12288
    %v12661 = vpack.c.b16 %v12293, %v12289
    %v12662 = vpack.c.b16 %v12298, %v12294
    %v12663 = vpack.c.b16 %v12299, %v12295
    %v12664 = vpack.c.b16 %v12300, %v12296
    %v12665 = vpack.c.b16 %v12301, %v12297
    %v12666 = vpack.c.b16 %v12306, %v12302
    %v12667 = vpack.c.b16 %v12307, %v12303
    %v12668 = vpack.c.b16 %v12308, %v12304
    %v12669 = vpack.c.b16 %v12309, %v12305
    %v12670 = vpack.c.b16 %v12314, %v12310
    %v12671 = vpack.c.b16 %v12315, %v12311
    %v12672 = vpack.c.b16 %v12316, %v12312
    %v12673 = vpack.c.b16 %v12317, %v12313
    %v12674 = vpack.c.b16 %v12322, %v12318
    %v12675 = vpack.c.b16 %v12323, %v12319
    %v12676 = vpack.c.b16 %v12324, %v12320
    %v12677 = vpack.c.b16 %v12325, %v12321
    %v12678 = vpack.c.b16 %v12330, %v12326
    %v12679 = vpack.c.b16 %v12331, %v12327
    %v12680 = vpack.c.b16 %v12332, %v12328
    %v12681 = vpack.c.b16 %v12333, %v12329
    %v12682 = vpack.c.b16 %v12338, %v12334
    %v12683 = vpack.c.b16 %v12339, %v12335
    %v12684 = vpack.c.b16 %v12340, %v12336
    %v12685 = vpack.c.b16 %v12341, %v12337
    %v12686 = vpack.c.b16 %v12346, %v12342
    %v12687 = vpack.c.b16 %v12347, %v12343
    %v12688 = vpack.c.b16 %v12348, %v12344
    %v12689 = vpack.c.b16 %v12349, %v12345
    %v12690 = vpack.c.b16 %v12354, %v12350
    %v12691 = vpack.c.b16 %v12355, %v12351
    %v12692 = vpack.c.b16 %v12356, %v12352
    %v12693 = vpack.c.b16 %v12357, %v12353
    %v12694 = vpack.c.b16 %v12362, %v12358
    %v12695 = vpack.c.b16 %v12363, %v12359
    %v12696 = vpack.c.b16 %v12364, %v12360
    %v12697 = vpack.c.b16 %v12365, %v12361
    %v12698 = vpack.c.b16 %v12370, %v12366
    %v12699 = vpack.c.b16 %v12371, %v12367
    %v12700 = vpack.c.b16 %v12372, %v12368
    %v12701 = vpack.c.b16 %v12373, %v12369
    %v12702 = vpack.c.b16 %v12378, %v12374
    %v12703 = vpack.c.b16 %v12379, %v12375
    %v12704 = vpack.c.b16 %v12380, %v12376
    %v12705 = vpack.c.b16 %v12381, %v12377
    %v12706 = vpack.c.b16 %v12386, %v12382
    %v12707 = vpack.c.b16 %v12387, %v12383
    %v12708 = vpack.c.b16 %v12388, %v12384
    %v12709 = vpack.c.b16 %v12389, %v12385
    %v12710 = vpack.c.b16 %v12394, %v12390
    %v12711 = vpack.c.b16 %v12395, %v12391
    %v12712 = vpack.c.b16 %v12396, %v12392
    %v12713 = vpack.c.b16 %v12397, %v12393
    %v12714 = vpack.c.b16 %v12402, %v12398
    %v12715 = vpack.c.b16 %v12403, %v12399
    %v12716 = vpack.c.b16 %v12404, %v12400
    %v12717 = vpack.c.b16 %v12405, %v12401
    %v12718 = vpack.c.b16 %v12410, %v12406
    %v12719 = vpack.c.b16 %v12411, %v12407
    %v12720 = vpack.c.b16 %v12412, %v12408
    %v12721 = vpack.c.b16 %v12413, %v12409
    %v12722 = vpack.c.b16 %v12418, %v12414
    %v12723 = vpack.c.b16 %v12419, %v12415
    %v12724 = vpack.c.b16 %v12420, %v12416
    %v12725 = vpack.c.b16 %v12421, %v12417
    %v12726 = vpack.c.b16 %v12426, %v12422
    %v12727 = vpack.c.b16 %v12427, %v12423
    %v12728 = vpack.c.b16 %v12428, %v12424
    %v12729 = vpack.c.b16 %v12429, %v12425
    %v12730 = vpack.c.b16 %v12434, %v12430
    %v12731 = vpack.c.b16 %v12435, %v12431
    %v12732 = vpack.c.b16 %v12436, %v12432
    %v12733 = vpack.c.b16 %v12437, %v12433
    %v12734 = vpack.c.b16 %v12442, %v12438
    %v12735 = vpack.c.b16 %v12443, %v12439
    %v12736 = vpack.c.b16 %v12444, %v12440
    %v12737 = vpack.c.b16 %v12445, %v12441
    %v12738 = vpack.c.b16 %v12450, %v12446
    %v12739 = vpack.c.b16 %v12451, %v12447
    %v12740 = vpack.c.b16 %v12452, %v12448
    %v12741 = vpack.c.b16 %v12453, %v12449
    %v12742 = vpack.c.b16 %v12458, %v12454
    %v12743 = vpack.c.b16 %v12459, %v12455
    %v12744 = vpack.c.b16 %v12460, %v12456
    %v12745 = vpack.c.b16 %v12461, %v12457
    %v12746 = vpack.c.b16 %v12466, %v12462
    %v12747 = vpack.c.b16 %v12467, %v12463
    %v12748 = vpack.c.b16 %v12468, %v12464
    %v12749 = vpack.c.b16 %v12469, %v12465
    %v12750 = vpack.c.b16 %v12474, %v12470
    %v12751 = vpack.c.b16 %v12475, %v12471
    %v12752 = vpack.c.b16 %v12476, %v12472
    %v12753 = vpack.c.b16 %v12477, %v12473
    %v12754 = vpack.c.b16 %v12482, %v12478
    %v12755 = vpack.c.b16 %v12483, %v12479
    %v12756 = vpack.c.b16 %v12484, %v12480
    %v12757 = vpack.c.b16 %v12485, %v12481
    %v12758 = vpack.c.b16 %v12490, %v12486
    %v12759 = vpack.c.b16 %v12491, %v12487
    %v12760 = vpack.c.b16 %v12492, %v12488
    %v12761 = vpack.c.b16 %v12493, %v12489
    %v12762 = vpack.c.b16 %v12498, %v12494
    %v12763 = vpack.c.b16 %v12499, %v12495
    %v12764 = vpack.c.b16 %v12500, %v12496
    %v12765 = vpack.c.b16 %v12501, %v12497
    %v12766 = vpack.c.b16 %v12506, %v12502
    %v12767 = vpack.c.b16 %v12507, %v12503
    %v12768 = vpack.c.b16 %v12508, %v12504
    %v12769 = vpack.c.b16 %v12509, %v12505
    %v12770 = vpack.c.b16 %v12514, %v12510
    %v12771 = vpack.c.b16 %v12515, %v12511
    %v12772 = vpack.c.b16 %v12516, %v12512
    %v12773 = vpack.c.b16 %v12517, %v12513
    %13030 = vmatprep.subr.bf16.mxu0 %v12547
    %13031 = vmatpush1.bf16.msra.mxu0 %v12546
    %13032 = vmatprep.subr.bf16.mxu0 %v12543
    %13033 = vmatpush1.bf16.msra.mxu0 %v12542
    %13034 = vmatprep.subr.bf16.mxu0 %v12539
    %13035 = vmatpush1.bf16.msra.mxu0 %v12538
    %13036 = vmatprep.subr.bf16.mxu0 %v12535
    %13037 = vmatpush1.bf16.msra.mxu0 %v12534
    %13038 = vmatprep.subr.bf16.mxu0 %v12531
    %13039 = vmatpush1.bf16.msra.mxu0 %v12530
    %13040 = vmatprep.subr.bf16.mxu0 %v12527
    %13041 = vmatpush1.bf16.msra.mxu0 %v12526
    %13042 = vmatprep.subr.bf16.mxu0 %v12523
    %13043 = vmatpush1.bf16.msra.mxu0 %v12522
    %13044 = vmatprep.subr.bf16.mxu0 %v12519
    %13045 = vmatpush1.bf16.msra.mxu0 %v12518
    %13046 = vmatprep.subr.bf16.mxu0 %v12579
    %13047 = vmatpush2.bf16.msra.mxu0 %v12578
    %13048 = vmatprep.subr.bf16.mxu0 %v12575
    %13049 = vmatpush2.bf16.msra.mxu0 %v12574
    %13050 = vmatprep.subr.bf16.mxu0 %v12571
    %13051 = vmatpush2.bf16.msra.mxu0 %v12570
    %13052 = vmatprep.subr.bf16.mxu0 %v12567
    %13053 = vmatpush2.bf16.msra.mxu0 %v12566
    %13054 = vmatprep.subr.bf16.mxu0 %v12563
    %13055 = vmatpush2.bf16.msra.mxu0 %v12562
    %13056 = vmatprep.subr.bf16.mxu0 %v12559
    %13057 = vmatpush2.bf16.msra.mxu0 %v12558
    %13058 = vmatprep.subr.bf16.mxu0 %v12555
    %13059 = vmatpush2.bf16.msra.mxu0 %v12554
    %13060 = vmatprep.subr.bf16.mxu0 %v12551
    %13061 = vmatpush2.bf16.msra.mxu0 %v12550
    %13062 = vmatprep.mubr.bf16.mxu0 %v11465
    %13063 = vmatmul.mubr.bf16.gmra.mxu0 %v11464
    %v13064 = vpop.f32.mrf.mxu0
    %v13065 = vadd.f32 %v11733, %v13064
    %v13066 = vpop.f32.mrf.mxu0
    %v13067 = vadd.f32 %v11737, %v13066
    %v13068 = vpop.f32.mrf.mxu0
    %v13069 = vpop.f32.mrf.mxu0
    %13070 = vdwg.mxu0
    %13071 = vmatprep.subr.bf16.mxu0 %v12611
    %13072 = vmatpush1.bf16.msra.mxu0 %v12610
    %13073 = vmatprep.subr.bf16.mxu0 %v12607
    %13074 = vmatpush1.bf16.msra.mxu0 %v12606
    %13075 = vmatprep.subr.bf16.mxu0 %v12603
    %13076 = vmatpush1.bf16.msra.mxu0 %v12602
    %13077 = vmatprep.subr.bf16.mxu0 %v12599
    %13078 = vmatpush1.bf16.msra.mxu0 %v12598
    %13079 = vmatprep.subr.bf16.mxu0 %v12595
    %13080 = vmatpush1.bf16.msra.mxu0 %v12594
    %13081 = vmatprep.subr.bf16.mxu0 %v12591
    %13082 = vmatpush1.bf16.msra.mxu0 %v12590
    %13083 = vmatprep.subr.bf16.mxu0 %v12587
    %13084 = vmatpush1.bf16.msra.mxu0 %v12586
    %13085 = vmatprep.subr.bf16.mxu0 %v12583
    %13086 = vmatpush1.bf16.msra.mxu0 %v12582
    %13087 = vmatprep.subr.bf16.mxu0 %v12643
    %13088 = vmatpush2.bf16.msra.mxu0 %v12642
    %13089 = vmatprep.subr.bf16.mxu0 %v12639
    %13090 = vmatpush2.bf16.msra.mxu0 %v12638
    %13091 = vmatprep.subr.bf16.mxu0 %v12635
    %13092 = vmatpush2.bf16.msra.mxu0 %v12634
    %13093 = vmatprep.subr.bf16.mxu0 %v12631
    %13094 = vmatpush2.bf16.msra.mxu0 %v12630
    %13095 = vmatprep.subr.bf16.mxu0 %v12627
    %13096 = vmatpush2.bf16.msra.mxu0 %v12626
    %13097 = vmatprep.subr.bf16.mxu0 %v12623
    %13098 = vmatpush2.bf16.msra.mxu0 %v12622
    %13099 = vmatprep.subr.bf16.mxu0 %v12619
    %13100 = vmatpush2.bf16.msra.mxu0 %v12618
    %13101 = vmatprep.subr.bf16.mxu0 %v12615
    %13102 = vmatpush2.bf16.msra.mxu0 %v12614
    %13103 = vmatprep.mubr.bf16.mxu0 %v11467
    %13104 = vmatmul.mubr.bf16.gmra.mxu0 %v11466
    %v13105 = vpop.f32.mrf.mxu0
    %v13106 = vadd.f32 %v13065, %v13105
    %v13107 = vpop.f32.mrf.mxu0
    %v13108 = vadd.f32 %v13067, %v13107
    %v13109 = vpop.f32.mrf.mxu0
    %v13110 = vpop.f32.mrf.mxu0
    %13111 = vdwg.mxu0
    %13112 = vmatprep.subr.bf16.mxu0 %v12675
    %13113 = vmatpush1.bf16.msra.mxu0 %v12674
    %13114 = vmatprep.subr.bf16.mxu0 %v12671
    %13115 = vmatpush1.bf16.msra.mxu0 %v12670
    %13116 = vmatprep.subr.bf16.mxu0 %v12667
    %13117 = vmatpush1.bf16.msra.mxu0 %v12666
    %13118 = vmatprep.subr.bf16.mxu0 %v12663
    %13119 = vmatpush1.bf16.msra.mxu0 %v12662
    %13120 = vmatprep.subr.bf16.mxu0 %v12659
    %13121 = vmatpush1.bf16.msra.mxu0 %v12658
    %13122 = vmatprep.subr.bf16.mxu0 %v12655
    %13123 = vmatpush1.bf16.msra.mxu0 %v12654
    %13124 = vmatprep.subr.bf16.mxu0 %v12651
    %13125 = vmatpush1.bf16.msra.mxu0 %v12650
    %13126 = vmatprep.subr.bf16.mxu0 %v12647
    %13127 = vmatpush1.bf16.msra.mxu0 %v12646
    %13128 = vmatprep.subr.bf16.mxu0 %v12707
    %13129 = vmatpush2.bf16.msra.mxu0 %v12706
    %13130 = vmatprep.subr.bf16.mxu0 %v12703
    %13131 = vmatpush2.bf16.msra.mxu0 %v12702
    %13132 = vmatprep.subr.bf16.mxu0 %v12699
    %13133 = vmatpush2.bf16.msra.mxu0 %v12698
    %13134 = vmatprep.subr.bf16.mxu0 %v12695
    %13135 = vmatpush2.bf16.msra.mxu0 %v12694
    %13136 = vmatprep.subr.bf16.mxu0 %v12691
    %13137 = vmatpush2.bf16.msra.mxu0 %v12690
    %13138 = vmatprep.subr.bf16.mxu0 %v12687
    %13139 = vmatpush2.bf16.msra.mxu0 %v12686
    %13140 = vmatprep.subr.bf16.mxu0 %v12683
    %13141 = vmatpush2.bf16.msra.mxu0 %v12682
    %13142 = vmatprep.subr.bf16.mxu0 %v12679
    %13143 = vmatpush2.bf16.msra.mxu0 %v12678
    %13144 = vmatprep.mubr.bf16.mxu0 %v11469
    %13145 = vmatmul.mubr.bf16.gmra.mxu0 %v11468
    %v13146 = vpop.f32.mrf.mxu0
    %v13147 = vadd.f32 %v13106, %v13146
    %v13148 = vpop.f32.mrf.mxu0
    %v13149 = vadd.f32 %v13108, %v13148
    %v13150 = vpop.f32.mrf.mxu0
    %v13151 = vpop.f32.mrf.mxu0
    %13152 = vdwg.mxu0
    %13153 = vmatprep.subr.bf16.mxu0 %v12739
    %13154 = vmatpush1.bf16.msra.mxu0 %v12738
    %13155 = vmatprep.subr.bf16.mxu0 %v12735
    %13156 = vmatpush1.bf16.msra.mxu0 %v12734
    %13157 = vmatprep.subr.bf16.mxu0 %v12731
    %13158 = vmatpush1.bf16.msra.mxu0 %v12730
    %13159 = vmatprep.subr.bf16.mxu0 %v12727
    %13160 = vmatpush1.bf16.msra.mxu0 %v12726
    %13161 = vmatprep.subr.bf16.mxu0 %v12723
    %13162 = vmatpush1.bf16.msra.mxu0 %v12722
    %13163 = vmatprep.subr.bf16.mxu0 %v12719
    %13164 = vmatpush1.bf16.msra.mxu0 %v12718
    %13165 = vmatprep.subr.bf16.mxu0 %v12715
    %13166 = vmatpush1.bf16.msra.mxu0 %v12714
    %13167 = vmatprep.subr.bf16.mxu0 %v12711
    %13168 = vmatpush1.bf16.msra.mxu0 %v12710
    %13169 = vmatprep.subr.bf16.mxu0 %v12771
    %13170 = vmatpush2.bf16.msra.mxu0 %v12770
    %13171 = vmatprep.subr.bf16.mxu0 %v12767
    %13172 = vmatpush2.bf16.msra.mxu0 %v12766
    %13173 = vmatprep.subr.bf16.mxu0 %v12763
    %13174 = vmatpush2.bf16.msra.mxu0 %v12762
    %13175 = vmatprep.subr.bf16.mxu0 %v12759
    %13176 = vmatpush2.bf16.msra.mxu0 %v12758
    %13177 = vmatprep.subr.bf16.mxu0 %v12755
    %13178 = vmatpush2.bf16.msra.mxu0 %v12754
    %13179 = vmatprep.subr.bf16.mxu0 %v12751
    %13180 = vmatpush2.bf16.msra.mxu0 %v12750
    %13181 = vmatprep.subr.bf16.mxu0 %v12747
    %13182 = vmatpush2.bf16.msra.mxu0 %v12746
    %13183 = vmatprep.subr.bf16.mxu0 %v12743
    %13184 = vmatpush2.bf16.msra.mxu0 %v12742
    %13185 = vmatprep.mubr.bf16.mxu0 %v11471
    %13186 = vmatmul.mubr.bf16.gmra.mxu0 %v11470
    %v13187 = vpop.f32.mrf.mxu0
    %v13188 = vadd.f32 %v13147, %v13187
    %v13189 = vpop.f32.mrf.mxu0
    %v13190 = vadd.f32 %v13149, %v13189
    %v13191 = vpop.f32.mrf.mxu0
    %v13192 = vpop.f32.mrf.mxu0
    %13193 = vdwg.mxu0
    %13194 = vmatprep.subr.bf16.mxu0 %v12549
    %13195 = vmatpush1.bf16.msra.mxu0 %v12548
    %13196 = vmatprep.subr.bf16.mxu0 %v12545
    %13197 = vmatpush1.bf16.msra.mxu0 %v12544
    %13198 = vmatprep.subr.bf16.mxu0 %v12541
    %13199 = vmatpush1.bf16.msra.mxu0 %v12540
    %13200 = vmatprep.subr.bf16.mxu0 %v12537
    %13201 = vmatpush1.bf16.msra.mxu0 %v12536
    %13202 = vmatprep.subr.bf16.mxu0 %v12533
    %13203 = vmatpush1.bf16.msra.mxu0 %v12532
    %13204 = vmatprep.subr.bf16.mxu0 %v12529
    %13205 = vmatpush1.bf16.msra.mxu0 %v12528
    %13206 = vmatprep.subr.bf16.mxu0 %v12525
    %13207 = vmatpush1.bf16.msra.mxu0 %v12524
    %13208 = vmatprep.subr.bf16.mxu0 %v12521
    %13209 = vmatpush1.bf16.msra.mxu0 %v12520
    %13210 = vmatprep.subr.bf16.mxu0 %v12581
    %13211 = vmatpush2.bf16.msra.mxu0 %v12580
    %13212 = vmatprep.subr.bf16.mxu0 %v12577
    %13213 = vmatpush2.bf16.msra.mxu0 %v12576
    %13214 = vmatprep.subr.bf16.mxu0 %v12573
    %13215 = vmatpush2.bf16.msra.mxu0 %v12572
    %13216 = vmatprep.subr.bf16.mxu0 %v12569
    %13217 = vmatpush2.bf16.msra.mxu0 %v12568
    %13218 = vmatprep.subr.bf16.mxu0 %v12565
    %13219 = vmatpush2.bf16.msra.mxu0 %v12564
    %13220 = vmatprep.subr.bf16.mxu0 %v12561
    %13221 = vmatpush2.bf16.msra.mxu0 %v12560
    %13222 = vmatprep.subr.bf16.mxu0 %v12557
    %13223 = vmatpush2.bf16.msra.mxu0 %v12556
    %13224 = vmatprep.subr.bf16.mxu0 %v12553
    %13225 = vmatpush2.bf16.msra.mxu0 %v12552
    %13226 = vmatprep.mubr.bf16.mxu0 %v11465
    %13227 = vmatmul.mubr.bf16.gmra.mxu0 %v11464
    %v13228 = vpop.f32.mrf.mxu0
    %v13229 = vadd.f32 %v11741, %v13228
    %v13230 = vpop.f32.mrf.mxu0
    %v13231 = vadd.f32 %v11745, %v13230
    %v13232 = vpop.f32.mrf.mxu0
    %v13233 = vpop.f32.mrf.mxu0
    %13234 = vdwg.mxu0
    %13235 = vmatprep.subr.bf16.mxu0 %v12613
    %13236 = vmatpush1.bf16.msra.mxu0 %v12612
    %13237 = vmatprep.subr.bf16.mxu0 %v12609
    %13238 = vmatpush1.bf16.msra.mxu0 %v12608
    %13239 = vmatprep.subr.bf16.mxu0 %v12605
    %13240 = vmatpush1.bf16.msra.mxu0 %v12604
    %13241 = vmatprep.subr.bf16.mxu0 %v12601
    %13242 = vmatpush1.bf16.msra.mxu0 %v12600
    %13243 = vmatprep.subr.bf16.mxu0 %v12597
    %13244 = vmatpush1.bf16.msra.mxu0 %v12596
    %13245 = vmatprep.subr.bf16.mxu0 %v12593
    %13246 = vmatpush1.bf16.msra.mxu0 %v12592
    %13247 = vmatprep.subr.bf16.mxu0 %v12589
    %13248 = vmatpush1.bf16.msra.mxu0 %v12588
    %13249 = vmatprep.subr.bf16.mxu0 %v12585
    %13250 = vmatpush1.bf16.msra.mxu0 %v12584
    %13251 = vmatprep.subr.bf16.mxu0 %v12645
    %13252 = vmatpush2.bf16.msra.mxu0 %v12644
    %13253 = vmatprep.subr.bf16.mxu0 %v12641
    %13254 = vmatpush2.bf16.msra.mxu0 %v12640
    %13255 = vmatprep.subr.bf16.mxu0 %v12637
    %13256 = vmatpush2.bf16.msra.mxu0 %v12636
    %13257 = vmatprep.subr.bf16.mxu0 %v12633
    %13258 = vmatpush2.bf16.msra.mxu0 %v12632
    %13259 = vmatprep.subr.bf16.mxu0 %v12629
    %13260 = vmatpush2.bf16.msra.mxu0 %v12628
    %13261 = vmatprep.subr.bf16.mxu0 %v12625
    %13262 = vmatpush2.bf16.msra.mxu0 %v12624
    %13263 = vmatprep.subr.bf16.mxu0 %v12621
    %13264 = vmatpush2.bf16.msra.mxu0 %v12620
    %13265 = vmatprep.subr.bf16.mxu0 %v12617
    %13266 = vmatpush2.bf16.msra.mxu0 %v12616
    %13267 = vmatprep.mubr.bf16.mxu0 %v11467
    %13268 = vmatmul.mubr.bf16.gmra.mxu0 %v11466
    %v13269 = vpop.f32.mrf.mxu0
    %v13270 = vadd.f32 %v13229, %v13269
    %v13271 = vpop.f32.mrf.mxu0
    %v13272 = vadd.f32 %v13231, %v13271
    %v13273 = vpop.f32.mrf.mxu0
    %v13274 = vpop.f32.mrf.mxu0
    %13275 = vdwg.mxu0
    %13276 = vmatprep.subr.bf16.mxu0 %v12677
    %13277 = vmatpush1.bf16.msra.mxu0 %v12676
    %13278 = vmatprep.subr.bf16.mxu0 %v12673
    %13279 = vmatpush1.bf16.msra.mxu0 %v12672
    %13280 = vmatprep.subr.bf16.mxu0 %v12669
    %13281 = vmatpush1.bf16.msra.mxu0 %v12668
    %13282 = vmatprep.subr.bf16.mxu0 %v12665
    %13283 = vmatpush1.bf16.msra.mxu0 %v12664
    %13284 = vmatprep.subr.bf16.mxu0 %v12661
    %13285 = vmatpush1.bf16.msra.mxu0 %v12660
    %13286 = vmatprep.subr.bf16.mxu0 %v12657
    %13287 = vmatpush1.bf16.msra.mxu0 %v12656
    %13288 = vmatprep.subr.bf16.mxu0 %v12653
    %13289 = vmatpush1.bf16.msra.mxu0 %v12652
    %13290 = vmatprep.subr.bf16.mxu0 %v12649
    %13291 = vmatpush1.bf16.msra.mxu0 %v12648
    %13292 = vmatprep.subr.bf16.mxu0 %v12709
    %13293 = vmatpush2.bf16.msra.mxu0 %v12708
    %13294 = vmatprep.subr.bf16.mxu0 %v12705
    %13295 = vmatpush2.bf16.msra.mxu0 %v12704
    %13296 = vmatprep.subr.bf16.mxu0 %v12701
    %13297 = vmatpush2.bf16.msra.mxu0 %v12700
    %13298 = vmatprep.subr.bf16.mxu0 %v12697
    %13299 = vmatpush2.bf16.msra.mxu0 %v12696
    %13300 = vmatprep.subr.bf16.mxu0 %v12693
    %13301 = vmatpush2.bf16.msra.mxu0 %v12692
    %13302 = vmatprep.subr.bf16.mxu0 %v12689
    %13303 = vmatpush2.bf16.msra.mxu0 %v12688
    %13304 = vmatprep.subr.bf16.mxu0 %v12685
    %13305 = vmatpush2.bf16.msra.mxu0 %v12684
    %13306 = vmatprep.subr.bf16.mxu0 %v12681
    %13307 = vmatpush2.bf16.msra.mxu0 %v12680
    %13308 = vmatprep.mubr.bf16.mxu0 %v11469
    %13309 = vmatmul.mubr.bf16.gmra.mxu0 %v11468
    %v13310 = vpop.f32.mrf.mxu0
    %v13311 = vadd.f32 %v13270, %v13310
    %v13312 = vpop.f32.mrf.mxu0
    %v13313 = vadd.f32 %v13272, %v13312
    %v13314 = vpop.f32.mrf.mxu0
    %v13315 = vpop.f32.mrf.mxu0
    %13316 = vdwg.mxu0
    %13317 = vmatprep.subr.bf16.mxu0 %v12741
    %13318 = vmatpush1.bf16.msra.mxu0 %v12740
    %13319 = vmatprep.subr.bf16.mxu0 %v12737
    %13320 = vmatpush1.bf16.msra.mxu0 %v12736
    %13321 = vmatprep.subr.bf16.mxu0 %v12733
    %13322 = vmatpush1.bf16.msra.mxu0 %v12732
    %13323 = vmatprep.subr.bf16.mxu0 %v12729
    %13324 = vmatpush1.bf16.msra.mxu0 %v12728
    %13325 = vmatprep.subr.bf16.mxu0 %v12725
    %13326 = vmatpush1.bf16.msra.mxu0 %v12724
    %13327 = vmatprep.subr.bf16.mxu0 %v12721
    %13328 = vmatpush1.bf16.msra.mxu0 %v12720
    %13329 = vmatprep.subr.bf16.mxu0 %v12717
    %13330 = vmatpush1.bf16.msra.mxu0 %v12716
    %13331 = vmatprep.subr.bf16.mxu0 %v12713
    %13332 = vmatpush1.bf16.msra.mxu0 %v12712
    %13333 = vmatprep.subr.bf16.mxu0 %v12773
    %13334 = vmatpush2.bf16.msra.mxu0 %v12772
    %13335 = vmatprep.subr.bf16.mxu0 %v12769
    %13336 = vmatpush2.bf16.msra.mxu0 %v12768
    %13337 = vmatprep.subr.bf16.mxu0 %v12765
    %13338 = vmatpush2.bf16.msra.mxu0 %v12764
    %13339 = vmatprep.subr.bf16.mxu0 %v12761
    %13340 = vmatpush2.bf16.msra.mxu0 %v12760
    %13341 = vmatprep.subr.bf16.mxu0 %v12757
    %13342 = vmatpush2.bf16.msra.mxu0 %v12756
    %13343 = vmatprep.subr.bf16.mxu0 %v12753
    %13344 = vmatpush2.bf16.msra.mxu0 %v12752
    %13345 = vmatprep.subr.bf16.mxu0 %v12749
    %13346 = vmatpush2.bf16.msra.mxu0 %v12748
    %13347 = vmatprep.subr.bf16.mxu0 %v12745
    %13348 = vmatpush2.bf16.msra.mxu0 %v12744
    %13349 = vmatprep.mubr.bf16.mxu0 %v11471
    %13350 = vmatmul.mubr.bf16.gmra.mxu0 %v11470
    %v13351 = vpop.f32.mrf.mxu0
    %v13352 = vadd.f32 %v13311, %v13351
    %v13353 = vpop.f32.mrf.mxu0
    %v13354 = vadd.f32 %v13313, %v13353
    %v13355 = vpop.f32.mrf.mxu0
    %v13356 = vpop.f32.mrf.mxu0
    %13357 = vdwg.mxu0
    %v13358 = vtanh.pop %v13188
    %v13359 = vtanh.pop %v13190
    %v13360 = vtanh.pop %v13352
    %v13361 = vtanh.pop %v13354
    %v13362 = vpack.c.bf16 %v13358, %v13358
    %v13363 = vpack.c.bf16 %v13359, %v13359
    %v13364 = vpack.c.bf16 %v13360, %v13360
    %v13365 = vpack.c.bf16 %v13361, %v13361
    %v13366 = vld [vmem:[#allocation9] sm:$0xff]
    %v13367 = vld [vmem:[#allocation9 + $0x8] sm:$0xff]
    %v13368 = vld [vmem:[#allocation9 + $0x10] sm:$0xff]
    %v13369 = vld [vmem:[#allocation9 + $0x18] sm:$0xff]
    %v13370 = vld [vmem:[#allocation9 + $0x20] sm:$0xff]
    %v13371 = vld [vmem:[#allocation9 + $0x28] sm:$0xff]
    %v13372 = vld [vmem:[#allocation9 + $0x30] sm:$0xff]
    %v13373 = vld [vmem:[#allocation9 + $0x38] sm:$0xff]
    %v13374 = vld [vmem:[#allocation9 + $0x40] sm:$0xff]
    %v13375 = vld [vmem:[#allocation9 + $0x48] sm:$0xff]
    %v13376 = vld [vmem:[#allocation9 + $0x50] sm:$0xff]
    %v13377 = vld [vmem:[#allocation9 + $0x58] sm:$0xff]
    %v13378 = vld [vmem:[#allocation9 + $0x60] sm:$0xff]
    %v13379 = vld [vmem:[#allocation9 + $0x68] sm:$0xff]
    %v13380 = vld [vmem:[#allocation9 + $0x70] sm:$0xff]
    %v13381 = vld [vmem:[#allocation9 + $0x78] sm:$0xff]
    %v13382 = vld [vmem:[#allocation9 + $0x80] sm:$0xff]
    %v13383 = vld [vmem:[#allocation9 + $0x88] sm:$0xff]
    %v13384 = vld [vmem:[#allocation9 + $0x90] sm:$0xff]
    %v13385 = vld [vmem:[#allocation9 + $0x98] sm:$0xff]
    %v13386 = vld [vmem:[#allocation9 + $0xa0] sm:$0xff]
    %v13387 = vld [vmem:[#allocation9 + $0xa8] sm:$0xff]
    %v13388 = vld [vmem:[#allocation9 + $0xb0] sm:$0xff]
    %v13389 = vld [vmem:[#allocation9 + $0xb8] sm:$0xff]
    %v13390 = vld [vmem:[#allocation9 + $0xc0] sm:$0xff]
    %v13391 = vld [vmem:[#allocation9 + $0xc8] sm:$0xff]
    %v13392 = vld [vmem:[#allocation9 + $0xd0] sm:$0xff]
    %v13393 = vld [vmem:[#allocation9 + $0xd8] sm:$0xff]
    %v13394 = vld [vmem:[#allocation9 + $0xe0] sm:$0xff]
    %v13395 = vld [vmem:[#allocation9 + $0xe8] sm:$0xff]
    %v13396 = vld [vmem:[#allocation9 + $0xf0] sm:$0xff]
    %v13397 = vld [vmem:[#allocation9 + $0xf8] sm:$0xff]
    %v13398 = vld [vmem:[#allocation9 + $0x100] sm:$0xff]
    %v13399 = vld [vmem:[#allocation9 + $0x108] sm:$0xff]
    %v13400 = vld [vmem:[#allocation9 + $0x110] sm:$0xff]
    %v13401 = vld [vmem:[#allocation9 + $0x118] sm:$0xff]
    %v13402 = vld [vmem:[#allocation9 + $0x120] sm:$0xff]
    %v13403 = vld [vmem:[#allocation9 + $0x128] sm:$0xff]
    %v13404 = vld [vmem:[#allocation9 + $0x130] sm:$0xff]
    %v13405 = vld [vmem:[#allocation9 + $0x138] sm:$0xff]
    %v13406 = vld [vmem:[#allocation9 + $0x140] sm:$0xff]
    %v13407 = vld [vmem:[#allocation9 + $0x148] sm:$0xff]
    %v13408 = vld [vmem:[#allocation9 + $0x150] sm:$0xff]
    %v13409 = vld [vmem:[#allocation9 + $0x158] sm:$0xff]
    %v13410 = vld [vmem:[#allocation9 + $0x160] sm:$0xff]
    %v13411 = vld [vmem:[#allocation9 + $0x168] sm:$0xff]
    %v13412 = vld [vmem:[#allocation9 + $0x170] sm:$0xff]
    %v13413 = vld [vmem:[#allocation9 + $0x178] sm:$0xff]
    %v13414 = vld [vmem:[#allocation9 + $0x180] sm:$0xff]
    %v13415 = vld [vmem:[#allocation9 + $0x188] sm:$0xff]
    %v13416 = vld [vmem:[#allocation9 + $0x190] sm:$0xff]
    %v13417 = vld [vmem:[#allocation9 + $0x198] sm:$0xff]
    %v13418 = vld [vmem:[#allocation9 + $0x1a0] sm:$0xff]
    %v13419 = vld [vmem:[#allocation9 + $0x1a8] sm:$0xff]
    %v13420 = vld [vmem:[#allocation9 + $0x1b0] sm:$0xff]
    %v13421 = vld [vmem:[#allocation9 + $0x1b8] sm:$0xff]
    %v13422 = vld [vmem:[#allocation9 + $0x1c0] sm:$0xff]
    %v13423 = vld [vmem:[#allocation9 + $0x1c8] sm:$0xff]
    %v13424 = vld [vmem:[#allocation9 + $0x1d0] sm:$0xff]
    %v13425 = vld [vmem:[#allocation9 + $0x1d8] sm:$0xff]
    %v13426 = vld [vmem:[#allocation9 + $0x1e0] sm:$0xff]
    %v13427 = vld [vmem:[#allocation9 + $0x1e8] sm:$0xff]
    %v13428 = vld [vmem:[#allocation9 + $0x1f0] sm:$0xff]
    %v13429 = vld [vmem:[#allocation9 + $0x1f8] sm:$0xff]
    %v13430 = vld [vmem:[#allocation10] sm:$0x3]
    %v13432 = vlaneseq
    %v13433 = vshrl.u32 %v13432, 7
    %v13434 = vsub.s32 0, %v13433
    %v13435 = vrot.slane %v13430, %v13434
    %v13436 = vlaneseq
    %v13437 = vshrl.u32 %v13436, 7
    %v13438 = vsub.s32 1, %v13437
    %v13439 = vrot.slane %v13430, %v13438
    %v13506 = vunpack.c.l.b16 %v13366
    %v13507 = vunpack.c.h.b16 %v13366
    %v13508 = vunpack.c.l.b16 %v13367
    %v13509 = vunpack.c.h.b16 %v13367
    %v13510 = vunpack.c.l.b16 %v13368
    %v13511 = vunpack.c.h.b16 %v13368
    %v13512 = vunpack.c.l.b16 %v13369
    %v13513 = vunpack.c.h.b16 %v13369
    %v13514 = vunpack.c.l.b16 %v13370
    %v13515 = vunpack.c.h.b16 %v13370
    %v13516 = vunpack.c.l.b16 %v13371
    %v13517 = vunpack.c.h.b16 %v13371
    %v13518 = vunpack.c.l.b16 %v13372
    %v13519 = vunpack.c.h.b16 %v13372
    %v13520 = vunpack.c.l.b16 %v13373
    %v13521 = vunpack.c.h.b16 %v13373
    %v13522 = vunpack.c.l.b16 %v13374
    %v13523 = vunpack.c.h.b16 %v13374
    %v13524 = vunpack.c.l.b16 %v13375
    %v13525 = vunpack.c.h.b16 %v13375
    %v13526 = vunpack.c.l.b16 %v13376
    %v13527 = vunpack.c.h.b16 %v13376
    %v13528 = vunpack.c.l.b16 %v13377
    %v13529 = vunpack.c.h.b16 %v13377
    %v13530 = vunpack.c.l.b16 %v13378
    %v13531 = vunpack.c.h.b16 %v13378
    %v13532 = vunpack.c.l.b16 %v13379
    %v13533 = vunpack.c.h.b16 %v13379
    %v13534 = vunpack.c.l.b16 %v13380
    %v13535 = vunpack.c.h.b16 %v13380
    %v13536 = vunpack.c.l.b16 %v13381
    %v13537 = vunpack.c.h.b16 %v13381
    %v13538 = vunpack.c.l.b16 %v13382
    %v13539 = vunpack.c.h.b16 %v13382
    %v13540 = vunpack.c.l.b16 %v13383
    %v13541 = vunpack.c.h.b16 %v13383
    %v13542 = vunpack.c.l.b16 %v13384
    %v13543 = vunpack.c.h.b16 %v13384
    %v13544 = vunpack.c.l.b16 %v13385
    %v13545 = vunpack.c.h.b16 %v13385
    %v13546 = vunpack.c.l.b16 %v13386
    %v13547 = vunpack.c.h.b16 %v13386
    %v13548 = vunpack.c.l.b16 %v13387
    %v13549 = vunpack.c.h.b16 %v13387
    %v13550 = vunpack.c.l.b16 %v13388
    %v13551 = vunpack.c.h.b16 %v13388
    %v13552 = vunpack.c.l.b16 %v13389
    %v13553 = vunpack.c.h.b16 %v13389
    %v13554 = vunpack.c.l.b16 %v13390
    %v13555 = vunpack.c.h.b16 %v13390
    %v13556 = vunpack.c.l.b16 %v13391
    %v13557 = vunpack.c.h.b16 %v13391
    %v13558 = vunpack.c.l.b16 %v13392
    %v13559 = vunpack.c.h.b16 %v13392
    %v13560 = vunpack.c.l.b16 %v13393
    %v13561 = vunpack.c.h.b16 %v13393
    %v13562 = vunpack.c.l.b16 %v13394
    %v13563 = vunpack.c.h.b16 %v13394
    %v13564 = vunpack.c.l.b16 %v13395
    %v13565 = vunpack.c.h.b16 %v13395
    %v13566 = vunpack.c.l.b16 %v13396
    %v13567 = vunpack.c.h.b16 %v13396
    %v13568 = vunpack.c.l.b16 %v13397
    %v13569 = vunpack.c.h.b16 %v13397
    %v13570 = vunpack.c.l.b16 %v13398
    %v13571 = vunpack.c.h.b16 %v13398
    %v13572 = vunpack.c.l.b16 %v13399
    %v13573 = vunpack.c.h.b16 %v13399
    %v13574 = vunpack.c.l.b16 %v13400
    %v13575 = vunpack.c.h.b16 %v13400
    %v13576 = vunpack.c.l.b16 %v13401
    %v13577 = vunpack.c.h.b16 %v13401
    %v13578 = vunpack.c.l.b16 %v13402
    %v13579 = vunpack.c.h.b16 %v13402
    %v13580 = vunpack.c.l.b16 %v13403
    %v13581 = vunpack.c.h.b16 %v13403
    %v13582 = vunpack.c.l.b16 %v13404
    %v13583 = vunpack.c.h.b16 %v13404
    %v13584 = vunpack.c.l.b16 %v13405
    %v13585 = vunpack.c.h.b16 %v13405
    %v13586 = vunpack.c.l.b16 %v13406
    %v13587 = vunpack.c.h.b16 %v13406
    %v13588 = vunpack.c.l.b16 %v13407
    %v13589 = vunpack.c.h.b16 %v13407
    %v13590 = vunpack.c.l.b16 %v13408
    %v13591 = vunpack.c.h.b16 %v13408
    %v13592 = vunpack.c.l.b16 %v13409
    %v13593 = vunpack.c.h.b16 %v13409
    %v13594 = vunpack.c.l.b16 %v13410
    %v13595 = vunpack.c.h.b16 %v13410
    %v13596 = vunpack.c.l.b16 %v13411
    %v13597 = vunpack.c.h.b16 %v13411
    %v13598 = vunpack.c.l.b16 %v13412
    %v13599 = vunpack.c.h.b16 %v13412
    %v13600 = vunpack.c.l.b16 %v13413
    %v13601 = vunpack.c.h.b16 %v13413
    %v13602 = vunpack.c.l.b16 %v13414
    %v13603 = vunpack.c.h.b16 %v13414
    %v13604 = vunpack.c.l.b16 %v13415
    %v13605 = vunpack.c.h.b16 %v13415
    %v13606 = vunpack.c.l.b16 %v13416
    %v13607 = vunpack.c.h.b16 %v13416
    %v13608 = vunpack.c.l.b16 %v13417
    %v13609 = vunpack.c.h.b16 %v13417
    %v13610 = vunpack.c.l.b16 %v13418
    %v13611 = vunpack.c.h.b16 %v13418
    %v13612 = vunpack.c.l.b16 %v13419
    %v13613 = vunpack.c.h.b16 %v13419
    %v13614 = vunpack.c.l.b16 %v13420
    %v13615 = vunpack.c.h.b16 %v13420
    %v13616 = vunpack.c.l.b16 %v13421
    %v13617 = vunpack.c.h.b16 %v13421
    %v13618 = vunpack.c.l.b16 %v13422
    %v13619 = vunpack.c.h.b16 %v13422
    %v13620 = vunpack.c.l.b16 %v13423
    %v13621 = vunpack.c.h.b16 %v13423
    %v13622 = vunpack.c.l.b16 %v13424
    %v13623 = vunpack.c.h.b16 %v13424
    %v13624 = vunpack.c.l.b16 %v13425
    %v13625 = vunpack.c.h.b16 %v13425
    %v13626 = vunpack.c.l.b16 %v13426
    %v13627 = vunpack.c.h.b16 %v13426
    %v13628 = vunpack.c.l.b16 %v13427
    %v13629 = vunpack.c.h.b16 %v13427
    %v13630 = vunpack.c.l.b16 %v13428
    %v13631 = vunpack.c.h.b16 %v13428
    %v13632 = vunpack.c.l.b16 %v13429
    %v13633 = vunpack.c.h.b16 %v13429
    %v13634 = vpack.c.b16 %v13508, %v13506
    %v13635 = vpack.c.b16 %v13509, %v13507
    %v13636 = vpack.c.b16 %v13512, %v13510
    %v13637 = vpack.c.b16 %v13513, %v13511
    %v13638 = vpack.c.b16 %v13516, %v13514
    %v13639 = vpack.c.b16 %v13517, %v13515
    %v13640 = vpack.c.b16 %v13520, %v13518
    %v13641 = vpack.c.b16 %v13521, %v13519
    %v13642 = vpack.c.b16 %v13524, %v13522
    %v13643 = vpack.c.b16 %v13525, %v13523
    %v13644 = vpack.c.b16 %v13528, %v13526
    %v13645 = vpack.c.b16 %v13529, %v13527
    %v13646 = vpack.c.b16 %v13532, %v13530
    %v13647 = vpack.c.b16 %v13533, %v13531
    %v13648 = vpack.c.b16 %v13536, %v13534
    %v13649 = vpack.c.b16 %v13537, %v13535
    %v13650 = vpack.c.b16 %v13540, %v13538
    %v13651 = vpack.c.b16 %v13541, %v13539
    %v13652 = vpack.c.b16 %v13544, %v13542
    %v13653 = vpack.c.b16 %v13545, %v13543
    %v13654 = vpack.c.b16 %v13548, %v13546
    %v13655 = vpack.c.b16 %v13549, %v13547
    %v13656 = vpack.c.b16 %v13552, %v13550
    %v13657 = vpack.c.b16 %v13553, %v13551
    %v13658 = vpack.c.b16 %v13556, %v13554
    %v13659 = vpack.c.b16 %v13557, %v13555
    %v13660 = vpack.c.b16 %v13560, %v13558
    %v13661 = vpack.c.b16 %v13561, %v13559
    %v13662 = vpack.c.b16 %v13564, %v13562
    %v13663 = vpack.c.b16 %v13565, %v13563
    %v13664 = vpack.c.b16 %v13568, %v13566
    %v13665 = vpack.c.b16 %v13569, %v13567
    %v13666 = vpack.c.b16 %v13572, %v13570
    %v13667 = vpack.c.b16 %v13573, %v13571
    %v13668 = vpack.c.b16 %v13576, %v13574
    %v13669 = vpack.c.b16 %v13577, %v13575
    %v13670 = vpack.c.b16 %v13580, %v13578
    %v13671 = vpack.c.b16 %v13581, %v13579
    %v13672 = vpack.c.b16 %v13584, %v13582
    %v13673 = vpack.c.b16 %v13585, %v13583
    %v13674 = vpack.c.b16 %v13588, %v13586
    %v13675 = vpack.c.b16 %v13589, %v13587
    %v13676 = vpack.c.b16 %v13592, %v13590
    %v13677 = vpack.c.b16 %v13593, %v13591
    %v13678 = vpack.c.b16 %v13596, %v13594
    %v13679 = vpack.c.b16 %v13597, %v13595
    %v13680 = vpack.c.b16 %v13600, %v13598
    %v13681 = vpack.c.b16 %v13601, %v13599
    %v13682 = vpack.c.b16 %v13604, %v13602
    %v13683 = vpack.c.b16 %v13605, %v13603
    %v13684 = vpack.c.b16 %v13608, %v13606
    %v13685 = vpack.c.b16 %v13609, %v13607
    %v13686 = vpack.c.b16 %v13612, %v13610
    %v13687 = vpack.c.b16 %v13613, %v13611
    %v13688 = vpack.c.b16 %v13616, %v13614
    %v13689 = vpack.c.b16 %v13617, %v13615
    %v13690 = vpack.c.b16 %v13620, %v13618
    %v13691 = vpack.c.b16 %v13621, %v13619
    %v13692 = vpack.c.b16 %v13624, %v13622
    %v13693 = vpack.c.b16 %v13625, %v13623
    %v13694 = vpack.c.b16 %v13628, %v13626
    %v13695 = vpack.c.b16 %v13629, %v13627
    %v13696 = vpack.c.b16 %v13632, %v13630
    %v13697 = vpack.c.b16 %v13633, %v13631
    %13762 = vmatprep.subr.bf16.mxu0 %v13649
    %13763 = vmatpush1.bf16.msra.mxu0 %v13648
    %13764 = vmatprep.subr.bf16.mxu0 %v13647
    %13765 = vmatpush1.bf16.msra.mxu0 %v13646
    %13766 = vmatprep.subr.bf16.mxu0 %v13645
    %13767 = vmatpush1.bf16.msra.mxu0 %v13644
    %13768 = vmatprep.subr.bf16.mxu0 %v13643
    %13769 = vmatpush1.bf16.msra.mxu0 %v13642
    %13770 = vmatprep.subr.bf16.mxu0 %v13641
    %13771 = vmatpush1.bf16.msra.mxu0 %v13640
    %13772 = vmatprep.subr.bf16.mxu0 %v13639
    %13773 = vmatpush1.bf16.msra.mxu0 %v13638
    %13774 = vmatprep.subr.bf16.mxu0 %v13637
    %13775 = vmatpush1.bf16.msra.mxu0 %v13636
    %13776 = vmatprep.subr.bf16.mxu0 %v13635
    %13777 = vmatpush1.bf16.msra.mxu0 %v13634
    %13778 = vmatprep.subr.bf16.mxu0 %v13665
    %13779 = vmatpush2.bf16.msra.mxu0 %v13664
    %13780 = vmatprep.subr.bf16.mxu0 %v13663
    %13781 = vmatpush2.bf16.msra.mxu0 %v13662
    %13782 = vmatprep.subr.bf16.mxu0 %v13661
    %13783 = vmatpush2.bf16.msra.mxu0 %v13660
    %13784 = vmatprep.subr.bf16.mxu0 %v13659
    %13785 = vmatpush2.bf16.msra.mxu0 %v13658
    %13786 = vmatprep.subr.bf16.mxu0 %v13657
    %13787 = vmatpush2.bf16.msra.mxu0 %v13656
    %13788 = vmatprep.subr.bf16.mxu0 %v13655
    %13789 = vmatpush2.bf16.msra.mxu0 %v13654
    %13790 = vmatprep.subr.bf16.mxu0 %v13653
    %13791 = vmatpush2.bf16.msra.mxu0 %v13652
    %13792 = vmatprep.subr.bf16.mxu0 %v13651
    %13793 = vmatpush2.bf16.msra.mxu0 %v13650
    %13794 = vmatprep.mubr.bf16.mxu0 %v13363
    %13795 = vmatmul.mubr.bf16.gmra.mxu0 %v13362
    %v13796 = vpop.f32.mrf.mxu0
    %v13797 = vadd.f32 %v13435, %v13796
    %v13798 = vpop.f32.mrf.mxu0
    %v13799 = vadd.f32 %v13439, %v13798
    %v13800 = vpop.f32.mrf.mxu0
    %v13801 = vpop.f32.mrf.mxu0
    %13802 = vdwg.mxu0
    %13803 = vmatprep.subr.bf16.mxu0 %v13681
    %13804 = vmatpush1.bf16.msra.mxu0 %v13680
    %13805 = vmatprep.subr.bf16.mxu0 %v13679
    %13806 = vmatpush1.bf16.msra.mxu0 %v13678
    %13807 = vmatprep.subr.bf16.mxu0 %v13677
    %13808 = vmatpush1.bf16.msra.mxu0 %v13676
    %13809 = vmatprep.subr.bf16.mxu0 %v13675
    %13810 = vmatpush1.bf16.msra.mxu0 %v13674
    %13811 = vmatprep.subr.bf16.mxu0 %v13673
    %13812 = vmatpush1.bf16.msra.mxu0 %v13672
    %13813 = vmatprep.subr.bf16.mxu0 %v13671
    %13814 = vmatpush1.bf16.msra.mxu0 %v13670
    %13815 = vmatprep.subr.bf16.mxu0 %v13669
    %13816 = vmatpush1.bf16.msra.mxu0 %v13668
    %13817 = vmatprep.subr.bf16.mxu0 %v13667
    %13818 = vmatpush1.bf16.msra.mxu0 %v13666
    %13819 = vmatprep.subr.bf16.mxu0 %v13697
    %13820 = vmatpush2.bf16.msra.mxu0 %v13696
    %13821 = vmatprep.subr.bf16.mxu0 %v13695
    %13822 = vmatpush2.bf16.msra.mxu0 %v13694
    %13823 = vmatprep.subr.bf16.mxu0 %v13693
    %13824 = vmatpush2.bf16.msra.mxu0 %v13692
    %13825 = vmatprep.subr.bf16.mxu0 %v13691
    %13826 = vmatpush2.bf16.msra.mxu0 %v13690
    %13827 = vmatprep.subr.bf16.mxu0 %v13689
    %13828 = vmatpush2.bf16.msra.mxu0 %v13688
    %13829 = vmatprep.subr.bf16.mxu0 %v13687
    %13830 = vmatpush2.bf16.msra.mxu0 %v13686
    %13831 = vmatprep.subr.bf16.mxu0 %v13685
    %13832 = vmatpush2.bf16.msra.mxu0 %v13684
    %13833 = vmatprep.subr.bf16.mxu0 %v13683
    %13834 = vmatpush2.bf16.msra.mxu0 %v13682
    %13835 = vmatprep.mubr.bf16.mxu0 %v13365
    %13836 = vmatmul.mubr.bf16.gmra.mxu0 %v13364
    %v13837 = vpop.f32.mrf.mxu0
    %v13838 = vadd.f32 %v13797, %v13837
    %v13839 = vpop.f32.mrf.mxu0
    %v13840 = vadd.f32 %v13799, %v13839
    %v13841 = vpop.f32.mrf.mxu0
    %v13842 = vpop.f32.mrf.mxu0
    %13843 = vdwg.mxu0
    %v13844 = vxor.u32 %v13838, 2147483648
    %v13845 = vxor.u32 %v13840, 2147483648
    %v13846 = vmul.f32 %v13844, 1.442695
    %v13847 = vpow.pop %v13846
    %v13848 = vmul.f32 %v13845, 1.442695
    %v13849 = vpow.pop %v13848
    %v13850 = vadd.f32 %v13847, 1.0
    %v13851 = vadd.f32 %v13849, 1.0
    %v13852 = vrcp.pop %v13850
    %v13853 = vmul.f32 1.0, %v13852
    %v13854 = vrcp.pop %v13851
    %v13855 = vmul.f32 1.0, %v13854
    %v13856 = vpack.c.bf16 %v13853, %v13853
    %v13857 = vpack.c.bf16 %v13855, %v13855
    %v13858 = vld [vmem:[#allocation12] sm:$0xf]
    %v13859 = vld [vmem:[#allocation12 + $0x4] sm:$0xf]
    %v13860 = vld [vmem:[#allocation12 + $0x8] sm:$0xf]
    %v13861 = vld [vmem:[#allocation12 + $0xc] sm:$0xf]
    %v13862 = vld [vmem:[#allocation12 + $0x10] sm:$0xf]
    %v13863 = vld [vmem:[#allocation12 + $0x14] sm:$0xf]
    %v13864 = vld [vmem:[#allocation12 + $0x18] sm:$0xf]
    %v13865 = vld [vmem:[#allocation12 + $0x1c] sm:$0xf]
    %v13866 = vld [vmem:[#allocation12 + $0x20] sm:$0xf]
    %v13867 = vld [vmem:[#allocation12 + $0x24] sm:$0xf]
    %v13868 = vld [vmem:[#allocation12 + $0x28] sm:$0xf]
    %v13869 = vld [vmem:[#allocation12 + $0x2c] sm:$0xf]
    %v13870 = vld [vmem:[#allocation12 + $0x30] sm:$0xf]
    %v13871 = vld [vmem:[#allocation12 + $0x34] sm:$0xf]
    %v13872 = vld [vmem:[#allocation12 + $0x38] sm:$0xf]
    %v13873 = vld [vmem:[#allocation12 + $0x3c] sm:$0xf]
    %v13874 = vld [vmem:[#allocation12 + $0x40] sm:$0xf]
    %v13875 = vld [vmem:[#allocation12 + $0x44] sm:$0xf]
    %v13876 = vld [vmem:[#allocation12 + $0x48] sm:$0xf]
    %v13877 = vld [vmem:[#allocation12 + $0x4c] sm:$0xf]
    %v13878 = vld [vmem:[#allocation12 + $0x50] sm:$0xf]
    %v13879 = vld [vmem:[#allocation12 + $0x54] sm:$0xf]
    %v13880 = vld [vmem:[#allocation12 + $0x58] sm:$0xf]
    %v13881 = vld [vmem:[#allocation12 + $0x5c] sm:$0xf]
    %v13882 = vld [vmem:[#allocation12 + $0x60] sm:$0xf]
    %v13883 = vld [vmem:[#allocation12 + $0x64] sm:$0xf]
    %v13884 = vld [vmem:[#allocation12 + $0x68] sm:$0xf]
    %v13885 = vld [vmem:[#allocation12 + $0x6c] sm:$0xf]
    %v13886 = vld [vmem:[#allocation12 + $0x70] sm:$0xf]
    %v13887 = vld [vmem:[#allocation12 + $0x74] sm:$0xf]
    %v13888 = vld [vmem:[#allocation12 + $0x78] sm:$0xf]
    %v13889 = vld [vmem:[#allocation12 + $0x7c] sm:$0xf]
    %v13890 = vld [vmem:[#allocation13] sm:$0x1]
    %v13892 = vlaneseq
    %v13893 = vshrl.u32 %v13892, 7
    %v13894 = vsub.s32 0, %v13893
    %v13895 = vrot.slane %v13890, %v13894
    %v13929 = vunpack.c.l.b16 %v13858
    %v13930 = vunpack.c.l.b16 %v13859
    %v13931 = vunpack.c.l.b16 %v13860
    %v13932 = vunpack.c.l.b16 %v13861
    %v13933 = vunpack.c.l.b16 %v13862
    %v13934 = vunpack.c.l.b16 %v13863
    %v13935 = vunpack.c.l.b16 %v13864
    %v13936 = vunpack.c.l.b16 %v13865
    %v13937 = vunpack.c.l.b16 %v13866
    %v13938 = vunpack.c.l.b16 %v13867
    %v13939 = vunpack.c.l.b16 %v13868
    %v13940 = vunpack.c.l.b16 %v13869
    %v13941 = vunpack.c.l.b16 %v13870
    %v13942 = vunpack.c.l.b16 %v13871
    %v13943 = vunpack.c.l.b16 %v13872
    %v13944 = vunpack.c.l.b16 %v13873
    %v13945 = vunpack.c.l.b16 %v13874
    %v13946 = vunpack.c.l.b16 %v13875
    %v13947 = vunpack.c.l.b16 %v13876
    %v13948 = vunpack.c.l.b16 %v13877
    %v13949 = vunpack.c.l.b16 %v13878
    %v13950 = vunpack.c.l.b16 %v13879
    %v13951 = vunpack.c.l.b16 %v13880
    %v13952 = vunpack.c.l.b16 %v13881
    %v13953 = vunpack.c.l.b16 %v13882
    %v13954 = vunpack.c.l.b16 %v13883
    %v13955 = vunpack.c.l.b16 %v13884
    %v13956 = vunpack.c.l.b16 %v13885
    %v13957 = vunpack.c.l.b16 %v13886
    %v13958 = vunpack.c.l.b16 %v13887
    %v13959 = vunpack.c.l.b16 %v13888
    %v13960 = vunpack.c.l.b16 %v13889
    %v13961 = vpack.c.b16 %v13930, %v13929
    %v13962 = vpack.c.b16 %v13932, %v13931
    %v13963 = vpack.c.b16 %v13934, %v13933
    %v13964 = vpack.c.b16 %v13936, %v13935
    %v13965 = vpack.c.b16 %v13938, %v13937
    %v13966 = vpack.c.b16 %v13940, %v13939
    %v13967 = vpack.c.b16 %v13942, %v13941
    %v13968 = vpack.c.b16 %v13944, %v13943
    %v13969 = vpack.c.b16 %v13946, %v13945
    %v13970 = vpack.c.b16 %v13948, %v13947
    %v13971 = vpack.c.b16 %v13950, %v13949
    %v13972 = vpack.c.b16 %v13952, %v13951
    %v13973 = vpack.c.b16 %v13954, %v13953
    %v13974 = vpack.c.b16 %v13956, %v13955
    %v13975 = vpack.c.b16 %v13958, %v13957
    %v13976 = vpack.c.b16 %v13960, %v13959
    %13993 = vmatprep.subr.bf16.mxu0 0
    %13994 = vmatpush1.bf16.msra.mxu0 %v13968
    %13995 = vmatprep.subr.bf16.mxu0 0
    %13996 = vmatpush1.bf16.msra.mxu0 %v13967
    %13997 = vmatprep.subr.bf16.mxu0 0
    %13998 = vmatpush1.bf16.msra.mxu0 %v13966
    %13999 = vmatprep.subr.bf16.mxu0 0
    %14000 = vmatpush1.bf16.msra.mxu0 %v13965
    %14001 = vmatprep.subr.bf16.mxu0 0
    %14002 = vmatpush1.bf16.msra.mxu0 %v13964
    %14003 = vmatprep.subr.bf16.mxu0 0
    %14004 = vmatpush1.bf16.msra.mxu0 %v13963
    %14005 = vmatprep.subr.bf16.mxu0 0
    %14006 = vmatpush1.bf16.msra.mxu0 %v13962
    %14007 = vmatprep.subr.bf16.mxu0 0
    %14008 = vmatpush1.bf16.msra.mxu0 %v13961
    %14009 = vmatprep.subr.bf16.mxu0 0
    %14010 = vmatpush2.bf16.msra.mxu0 %v13976
    %14011 = vmatprep.subr.bf16.mxu0 0
    %14012 = vmatpush2.bf16.msra.mxu0 %v13975
    %14013 = vmatprep.subr.bf16.mxu0 0
    %14014 = vmatpush2.bf16.msra.mxu0 %v13974
    %14015 = vmatprep.subr.bf16.mxu0 0
    %14016 = vmatpush2.bf16.msra.mxu0 %v13973
    %14017 = vmatprep.subr.bf16.mxu0 0
    %14018 = vmatpush2.bf16.msra.mxu0 %v13972
    %14019 = vmatprep.subr.bf16.mxu0 0
    %14020 = vmatpush2.bf16.msra.mxu0 %v13971
    %14021 = vmatprep.subr.bf16.mxu0 0
    %14022 = vmatpush2.bf16.msra.mxu0 %v13970
    %14023 = vmatprep.subr.bf16.mxu0 0
    %14024 = vmatpush2.bf16.msra.mxu0 %v13969
    %14025 = vmatprep.mubr.bf16.mxu0 %v13857
    %14026 = vmatmul.mubr.bf16.gmra.mxu0 %v13856
    %v14027 = vpop.f32.mrf.mxu0
    %v14028 = vadd.f32 %v13895, %v14027
    %v14029 = vpop.f32.mrf.mxu0
    %v14030 = vpop.f32.mrf.mxu0
    %v14031 = vpop.f32.mrf.mxu0
    %14032 = vdwg.mxu0
    %v14033 = vmax.f32 %v14028, 0.0
    %v14034 = vlaneseq
    %v14035 = vand.u32 %v14034, 127
    %vm14036 = vcmp.lt.s32.totalorder %v14035, 10
    %v14037 = vsel %vm14036, %v14033, -1e+30
    %14038 = vmax.xlane.f32.xlu0 %v14037
    %v14039 = vpop.xlane.xlu0 %14038
    %v14040 = vsub.f32 %v14037, %v14039
    %v14041 = vmul.f32 %v14040, 1.442695
    %v14042 = vpow.pop %v14041
    %14043 = vadd.xlane.f32.xlu0 %v14042
    %v14044 = vpop.xlane.xlu0 %14043
    %v14045 = vlog2.pop %v14044
    %v14046 = vmul.f32 %v14045, 0.6931472
    %v14047 = vsub.f32 %v14040, %v14046
    %14048 = vst [vmem:[%s9] sm:$0xff] %v14047
    // Predicated region
    $region70: #{mlpnet_modified_forward.1} parent=1 // pred_check
      _
    $region71: #{mlpnet_modified_forward.1} parent=1 // pred_check_branch
      %14050 = sbr.rel (0) target = $region73
    $region72: #{mlpnet_modified_forward.1} parent=1 // pred_region
      _
    $region73: #{mlpnet_modified_forward.1} parent=1 // pred_fallthru
      _
    // Predicated region
    $region74: #{mlpnet_modified_forward.1} parent=1 // pred_check
      _
    $region75: #{mlpnet_modified_forward.1} parent=1 // pred_check_branch
      %14052 = sbr.rel (0) target = $region77
    $region76: #{mlpnet_modified_forward.1} parent=1 // pred_region
      _
    $region77: #{mlpnet_modified_forward.1} parent=1 // pred_fallthru
      _
    %14053 = vsyncpa [#allocation3], 1
    %14054 = vsyncpa [#allocation5], 1
    %14055 = vsyncpa [#allocation8], 1
    %14056 = vsyncpa [#allocation11], 1
    %14057 = vsyncpa [#allocation14], 1

</llo_original>
